<compile_context>
chip_gen: v6e
topology: v6e:2x2x1
jax: 0.10.0
libtpu: 0.0.40
codegen_flags: <defaults>
</compile_context>

<pallas_src>
import jax
import jax.numpy as jnp
from jax import lax
from jax.experimental import pallas as pl
from jax.experimental.pallas import tpu as pltpu


def _round_up(v, m):
    return -(-v // m) * m


# ---------------------------------------------------------------------------
# Wrapper-side weight / constant prepacking (pure layout plumbing).
# ---------------------------------------------------------------------------

def _conv_band_cat(w_hwio, w_in, lanes_in):
    """K-concatenated banded conv matrix.

    Input rows are laid out as lanes [w*Cin + ci] (w < w_in), zero-padded to
    `lanes_in` lanes.  Row kh*lanes_in + (w+kw)*Cin + ci carries
    w_hwio[kh, kw, ci, co] into output lane w*Cout + co, so that
        conv[h, w*Cout + co] = concat_kh(x[h + kh, :]) @ T_cat
    """
    KH, KW, Cin, Cout = w_hwio.shape
    Wo = w_in - KW + 1
    kh = jnp.arange(KH)[:, None, None, None, None]
    w = jnp.arange(Wo)[None, :, None, None, None]
    kw = jnp.arange(KW)[None, None, :, None, None]
    ci = jnp.arange(Cin)[None, None, None, :, None]
    co = jnp.arange(Cout)[None, None, None, None, :]
    shape = (KH, Wo, KW, Cin, Cout)
    rows = jnp.broadcast_to(kh * lanes_in + (w + kw) * Cin + ci, shape).reshape(-1)
    cols = jnp.broadcast_to(w * Cout + co, shape).reshape(-1)
    vals = jnp.broadcast_to(w_hwio.astype(jnp.float32)[:, None], shape).reshape(-1)
    return jnp.zeros((KH * lanes_in, Wo * Cout),
                     jnp.float32).at[rows, cols].set(vals)


def _pool_compact_even(Wo, C, lanes_out):
    """0/1 matrix selecting even W blocks: out lane wp*C+c <- in lane (2*wp)*C+c.

    Extra output lanes (beyond (Wo//2)*C) stay zero, which zero-fills the padded
    lanes of the stage-1 intermediate.
    """
    Wp = Wo // 2
    wp = jnp.arange(Wp)[:, None]
    c = jnp.arange(C)[None, :]
    rows = (2 * wp * C + c).reshape(-1)
    cols = (wp * C + c).reshape(-1)
    return jnp.zeros((Wo * C, lanes_out), jnp.float32).at[rows, cols].set(1.0)


def _shift(x, d, axis):
    """result[i] = x[(i + d) % n] along `axis` (static roll via slice+concat).

    The wrapped positions are only ever read by outputs that get discarded, so
    their contents are irrelevant (but always finite).
    """
    n = x.shape[axis]
    return jnp.concatenate([lax.slice_in_dim(x, d, n, axis=axis),
                            lax.slice_in_dim(x, 0, d, axis=axis)], axis=axis)


# ---------------------------------------------------------------------------
# Fused kernel: B images per grid step, both conv+pool stages fused.
# ---------------------------------------------------------------------------

def _make_kernel(B, KH1, C1, R1d, KH2, C2, R2d):
    def kernel(x_ref, t1_ref, b1_ref, r1_ref, t2_ref, b2_ref, r2_ref,
               o_ref, p1_ref):
        f32, bf16 = jnp.float32, jnp.bfloat16
        L1 = x_ref.shape[2]            # padded input lanes  (W*Cin -> 128)
        P1L = r1_ref.shape[1]          # padded stage-1 lanes (Wp1*C1 -> 384)
        OL = r2_ref.shape[1]           # output lanes (Wp2*C2)

        # -------- stage 1: conv1 + 2x2 max-pool + bias + ReLU --------
        xb = x_ref[...]                                               # (B,Hpad,L1) bf16
        lhs1 = jnp.concatenate(
            [xb[:, kh:kh + R1d, :] for kh in range(KH1)], axis=-1)    # (B,R1d,KH1*L1)
        lhs1 = lhs1.reshape(B * R1d, KH1 * L1)
        y1 = jnp.dot(lhs1, t1_ref[...], preferred_element_type=f32)   # (B*R1d, Wo1*C1)
        # dense row pool: q1[h] = max(conv[h], conv[h+1])
        q1 = jnp.maximum(y1, _shift(y1, 1, axis=0))
        # W pool: pair W block w with w+1 (lane shift by C1)
        m1 = jnp.maximum(q1, _shift(q1, C1, axis=1))
        # keep even W blocks via ONE 0/1 compaction matmul, then bias + ReLU
        p1 = jnp.dot(m1.astype(bf16), r1_ref[...], preferred_element_type=f32)
        p1 = jnp.maximum(p1 + b1_ref[...], 0.0)                       # (B*R1d, P1L)
        p1_ref[...] = p1.reshape(B, R1d, P1L).astype(bf16)            # stays in VMEM

        # -------- stage 2: conv2 + 2x2 max-pool + bias + ReLU --------
        p1b = p1_ref[...]                                             # (B,R1d,P1L) bf16
        # stage-1 rows are dense (real pooled row r == dense row 2r), so conv2's
        # kh-windows step by 2 dense rows.
        lhs2 = jnp.concatenate(
            [p1b[:, 2 * kh:2 * kh + R2d, :] for kh in range(KH2)], axis=-1)
        lhs2 = lhs2.reshape(B * R2d, KH2 * P1L)
        y2 = jnp.dot(lhs2, t2_ref[...], preferred_element_type=f32)   # (B*R2d, Wo2*C2)
        # dense rows are at stride 2 -> row pool pairs dense rows h and h+2
        q2 = jnp.maximum(y2, _shift(y2, 2, axis=0))
        m2 = jnp.maximum(q2, _shift(q2, C2, axis=1))
        o = jnp.dot(m2.astype(bf16), r2_ref[...], preferred_element_type=f32)
        o = jnp.maximum(o + b2_ref[...], 0.0)                         # (B*R2d, OL)
        o_ref[...] = o.reshape(B, R2d, OL)
    return kernel


@jax.jit
def encoder_block_forward(x_nchw, params):
    w1, b1, w2, b2 = params            # HWIO conv weights, per-channel biases
    N, Cin, H, W = x_nchw.shape
    KH1, KW1, _, C1 = w1.shape
    KH2, KW2, _, C2 = w2.shape
    Ho1, Wo1 = H - KH1 + 1, W - KW1 + 1
    Hp1, Wp1 = Ho1 // 2, Wo1 // 2
    Ho2, Wo2 = Hp1 - KH2 + 1, Wp1 - KW2 + 1
    Hp2, Wp2 = Ho2 // 2, Wo2 // 2
    assert Ho1 % 2 == 0 and Wo1 % 2 == 0 and Ho2 % 2 == 0 and Wo2 % 2 == 0

    # ---------------- static tiling ----------------
    B = min(8, N)                                  # images per grid step
    Npad = _round_up(N, B)
    L1 = _round_up(W * Cin, 128)                   # padded input lanes (96 -> 128)
    R2d = _round_up(4 * Hp2 - 1, 8)                # dense conv2 rows computed (24)
    R1d = _round_up(R2d + 2 * (KH2 - 1), 8)        # dense conv1/pool1 rows (32)
    Hpad = _round_up(max(H, R1d + KH1 - 1), 8)     # padded input rows (40)
    P1L = _round_up(Wp1 * C1, 128)                 # padded stage-1 lanes (384)
    OL = Wp2 * C2                                  # output lanes (360)

    # ------ input layout: NCHW -> (Npad, Hpad, L1) bf16, channels in lanes ------
    x2 = jnp.transpose(x_nchw, (0, 2, 3, 1)).astype(jnp.float32).reshape(N, H, W * Cin)
    x2 = jnp.pad(x2, ((0, Npad - N), (0, Hpad - H), (0, L1 - W * Cin)))
    x2 = x2.astype(jnp.bfloat16)

    # ------ constant prepacking (pure layout plumbing, bf16 MXU operands) ------
    T1 = _conv_band_cat(w1, W, L1).astype(jnp.bfloat16)          # (KH1*L1,  Wo1*C1)
    T2 = _conv_band_cat(w2, Wp1, P1L).astype(jnp.bfloat16)       # (KH2*P1L, Wo2*C2)
    R1 = _pool_compact_even(Wo1, C1, P1L).astype(jnp.bfloat16)   # (Wo1*C1, P1L) 0/1
    R2 = _pool_compact_even(Wo2, C2, OL).astype(jnp.bfloat16)    # (Wo2*C2, OL)  0/1
    b1t = jnp.pad(jnp.tile(b1.astype(jnp.float32), Wp1),
                  (0, P1L - Wp1 * C1)).reshape(1, P1L)
    b2t = jnp.tile(b2.astype(jnp.float32), Wp2).reshape(1, OL)

    kernel = _make_kernel(B, KH1, C1, R1d, KH2, C2, R2d)

    out = pl.pallas_call(
        kernel,
        out_shape=jax.ShapeDtypeStruct((Npad, R2d, OL), jnp.float32),
        grid_spec=pltpu.PrefetchScalarGridSpec(
            num_scalar_prefetch=0,
            grid=(Npad // B,),
            in_specs=[
                pl.BlockSpec((B, Hpad, L1), lambda n: (n, 0, 0)),
                # Constant operands: block index (0,0) every step (re-used tiles).
                pl.BlockSpec(T1.shape, lambda n: (0, 0)),
                pl.BlockSpec(b1t.shape, lambda n: (0, 0)),
                pl.BlockSpec(R1.shape, lambda n: (0, 0)),
                pl.BlockSpec(T2.shape, lambda n: (0, 0)),
                pl.BlockSpec(b2t.shape, lambda n: (0, 0)),
                pl.BlockSpec(R2.shape, lambda n: (0, 0)),
            ],
            out_specs=pl.BlockSpec((B, R2d, OL), lambda n: (n, 0, 0)),
            scratch_shapes=[pltpu.VMEM((B, R1d, P1L), jnp.bfloat16)],
        ),
        compiler_params=pltpu.CompilerParams(
            dimension_semantics=("parallel",),
            vmem_limit_bytes=40 * 1024 * 1024),
    )(x2, T1, b1t, R1, T2, b2t, R2)

    # Dense rows -> real pooled rows {0,4,8,...}, then torch.flatten(NCHW) order.
    out = out[:N, ::4, :][:, :Hp2, :]                              # (N, Hp2, Wp2*C2)
    out = out.reshape(N, Hp2, Wp2, C2).transpose(0, 3, 1, 2).reshape(N, -1)
    return out


# ---------------------------------------------------------------------------
# Pure-JAX reference matching the PyTorch forward pass.
# ---------------------------------------------------------------------------

def reference_forward(x_nchw, params):
    w1, b1, w2, b2 = params

    def conv_relu(x, w, b):
        y = lax.conv_general_dilated(
            x, w, window_strides=(1, 1), padding="VALID",
            dimension_numbers=("NHWC", "HWIO", "NHWC"),
            precision=lax.Precision.HIGHEST)
        return jnp.maximum(y + b, 0.0)

    def pool(x):
        return lax.reduce_window(x, -jnp.inf, lax.max,
                                 (1, 2, 2, 1), (1, 2, 2, 1), "VALID")

    x = jnp.transpose(x_nchw, (0, 2, 3, 1))
    x = pool(conv_relu(x, w1, b1))
    x = pool(conv_relu(x, w2, b2))
    x = jnp.transpose(x, (0, 3, 1, 2))
    return x.reshape(x.shape[0], -1)


if __name__ == "__main__":
    key = jax.random.PRNGKey(0)
    kx, kw1, kb1, kw2, kb2 = jax.random.split(key, 5)

    # EncoderBlock parameters (HWIO layout): conv1: 3->24 5x5, conv2: 24->72 5x5
    w1 = 0.1 * jax.random.normal(kw1, (5, 5, 3, 24), jnp.float32)
    b1 = 0.05 * jax.random.normal(kb1, (24,), jnp.float32)
    w2 = 0.05 * jax.random.normal(kw2, (5, 5, 24, 72), jnp.float32)
    b2 = 0.05 * jax.random.normal(kb2, (72,), jnp.float32)
    params = (w1, b1, w2, b2)

    # NCHW input, as the PyTorch module expects (3-channel, 32x32 images)
    x = jax.random.normal(kx, (2, 3, 32, 32), jnp.float32)

    out = jax.block_until_ready(encoder_block_forward(x, params))
    assert out.shape == (2, 72 * 5 * 5), out.shape

    ref = jax.block_until_ready(reference_forward(x, params))
    # bf16 MXU operands (f32 accumulation) -> expect ~1e-2 max abs deviation.
    max_err = float(jnp.max(jnp.abs(out - ref)))
    assert max_err < 5e-2, f"max abs error too large: {max_err}"

    print("KERNEL_OK")
</pallas_src>

<mosaic_0001>
module attributes {stable_mosaic.version = 11 : i64} {
  func.func @kernel(%arg0: i32, %arg1: memref<2x40x128xbf16, #tpu.memory_space<vmem>>, %arg2: memref<640x672xbf16, #tpu.memory_space<vmem>>, %arg3: memref<1x384xf32, #tpu.memory_space<vmem>>, %arg4: memref<672x384xbf16, #tpu.memory_space<vmem>>, %arg5: memref<1920x720xbf16, #tpu.memory_space<vmem>>, %arg6: memref<1x360xf32, #tpu.memory_space<vmem>>, %arg7: memref<720x360xbf16, #tpu.memory_space<vmem>>, %arg8: memref<2x24x360xf32, #tpu.memory_space<vmem>>, %arg9: memref<2x32x384xbf16, #tpu.memory_space<vmem>>) attributes {dimension_semantics = [#tpu.dimension_semantics<parallel>], iteration_bounds = array<i64: 1>, scalar_prefetch = 0 : i64, scratch_operands = 1 : i64, tpu.core_type = #tpu.core_type<tc>, window_params = [{transform_indices = @transform_0, window_bounds = array<i64: 2, 40, 128>}, {pipeline_mode = #tpu.pipeline_mode<synchronous>, transform_indices = @transform_1, window_bounds = array<i64: 640, 672>}, {pipeline_mode = #tpu.pipeline_mode<synchronous>, transform_indices = @transform_2, window_bounds = array<i64: 1, 384>}, {pipeline_mode = #tpu.pipeline_mode<synchronous>, transform_indices = @transform_3, window_bounds = array<i64: 672, 384>}, {pipeline_mode = #tpu.pipeline_mode<synchronous>, transform_indices = @transform_4, window_bounds = array<i64: 1920, 720>}, {pipeline_mode = #tpu.pipeline_mode<synchronous>, transform_indices = @transform_5, window_bounds = array<i64: 1, 360>}, {pipeline_mode = #tpu.pipeline_mode<synchronous>, transform_indices = @transform_6, window_bounds = array<i64: 720, 360>}, {transform_indices = @transform_7, window_bounds = array<i64: 2, 24, 360>}]} {
    %c0 = arith.constant 0 : index
    %c0_0 = arith.constant 0 : index
    %c0_1 = arith.constant 0 : index
    %0 = vector.load %arg1[%c0, %c0_0, %c0_1] : memref<2x40x128xbf16, #tpu.memory_space<vmem>>, vector<2x40x128xbf16>
    %1 = vector.extract_strided_slice %0 {offsets = [0, 0, 0], sizes = [2, 32, 128], strides = [1, 1, 1]} : vector<2x40x128xbf16> to vector<2x32x128xbf16>
    %2 = vector.extract_strided_slice %0 {offsets = [0, 1, 0], sizes = [2, 32, 128], strides = [1, 1, 1]} : vector<2x40x128xbf16> to vector<2x32x128xbf16>
    %3 = vector.extract_strided_slice %0 {offsets = [0, 2, 0], sizes = [2, 32, 128], strides = [1, 1, 1]} : vector<2x40x128xbf16> to vector<2x32x128xbf16>
    %4 = vector.extract_strided_slice %0 {offsets = [0, 3, 0], sizes = [2, 32, 128], strides = [1, 1, 1]} : vector<2x40x128xbf16> to vector<2x32x128xbf16>
    %5 = vector.extract_strided_slice %0 {offsets = [0, 4, 0], sizes = [2, 32, 128], strides = [1, 1, 1]} : vector<2x40x128xbf16> to vector<2x32x128xbf16>
    %6 = tpu.concatenate %1, %2, %3, %4, %5 in 2 : vector<2x32x128xbf16>, vector<2x32x128xbf16>, vector<2x32x128xbf16>, vector<2x32x128xbf16>, vector<2x32x128xbf16> -> vector<2x32x640xbf16>
    %7 = vector.shape_cast %6 : vector<2x32x640xbf16> to vector<64x640xbf16>
    %c0_2 = arith.constant 0 : index
    %c0_3 = arith.constant 0 : index
    %8 = vector.load %arg2[%c0_2, %c0_3] : memref<640x672xbf16, #tpu.memory_space<vmem>>, vector<640x672xbf16>
    %cst = arith.constant dense<0.000000e+00> : vector<64x672xf32>
    %9 = tpu.matmul %7, %8, %cst {dimension_numbers = #tpu.dot_dimension_numbers<[1], [0], [0], [1], [0, 0, 1, 1], [], []>} : vector<64x640xbf16>, vector<640x672xbf16>, vector<64x672xf32> -> vector<64x672xf32>
    %10 = vector.extract_strided_slice %9 {offsets = [1, 0], sizes = [63, 672], strides = [1, 1]} : vector<64x672xf32> to vector<63x672xf32>
    %11 = vector.extract_strided_slice %9 {offsets = [0, 0], sizes = [1, 672], strides = [1, 1]} : vector<64x672xf32> to vector<1x672xf32>
    %12 = tpu.concatenate %10, %11 in 0 : vector<63x672xf32>, vector<1x672xf32> -> vector<64x672xf32>
    %13 = arith.maximumf %9, %12 : vector<64x672xf32>
    %14 = vector.extract_strided_slice %13 {offsets = [0, 24], sizes = [64, 648], strides = [1, 1]} : vector<64x672xf32> to vector<64x648xf32>
    %15 = vector.extract_strided_slice %13 {offsets = [0, 0], sizes = [64, 24], strides = [1, 1]} : vector<64x672xf32> to vector<64x24xf32>
    %16 = tpu.concatenate %14, %15 in 1 : vector<64x648xf32>, vector<64x24xf32> -> vector<64x672xf32>
    %17 = arith.maximumf %13, %16 : vector<64x672xf32>
    %18 = arith.truncf %17 : vector<64x672xf32> to vector<64x672xbf16>
    %c0_4 = arith.constant 0 : index
    %c0_5 = arith.constant 0 : index
    %19 = vector.load %arg4[%c0_4, %c0_5] : memref<672x384xbf16, #tpu.memory_space<vmem>>, vector<672x384xbf16>
    %cst_6 = arith.constant dense<0.000000e+00> : vector<64x384xf32>
    %20 = tpu.matmul %18, %19, %cst_6 {dimension_numbers = #tpu.dot_dimension_numbers<[1], [0], [0], [1], [0, 0, 1, 1], [], []>} : vector<64x672xbf16>, vector<672x384xbf16>, vector<64x384xf32> -> vector<64x384xf32>
    %c0_7 = arith.constant 0 : index
    %c0_8 = arith.constant 0 : index
    %21 = vector.load %arg3[%c0_7, %c0_8] : memref<1x384xf32, #tpu.memory_space<vmem>>, vector<1x384xf32>
    %22 = vector.broadcast %21 : vector<1x384xf32> to vector<64x384xf32>
    %23 = arith.addf %20, %22 : vector<64x384xf32>
    %cst_9 = arith.constant 0.000000e+00 : f32
    %24 = vector.broadcast %cst_9 : f32 to vector<64x384xf32>
    %25 = arith.maximumf %23, %24 : vector<64x384xf32>
    %26 = vector.shape_cast %25 : vector<64x384xf32> to vector<2x32x384xf32>
    %27 = arith.truncf %26 : vector<2x32x384xf32> to vector<2x32x384xbf16>
    %c0_10 = arith.constant 0 : index
    %c0_11 = arith.constant 0 : index
    %c0_12 = arith.constant 0 : index
    %28 = vector.load %arg9[%c0_10, %c0_11, %c0_12] : memref<2x32x384xbf16, #tpu.memory_space<vmem>>, vector<2x32x384xbf16>
    tpu.vector_store %arg9[%c0_10, %c0_11, %c0_12], %27 {strides = array<i32>} : memref<2x32x384xbf16, #tpu.memory_space<vmem>>, vector<2x32x384xbf16>,
    %c0_13 = arith.constant 0 : index
    %c0_14 = arith.constant 0 : index
    %c0_15 = arith.constant 0 : index
    %29 = vector.load %arg9[%c0_13, %c0_14, %c0_15] : memref<2x32x384xbf16, #tpu.memory_space<vmem>>, vector<2x32x384xbf16>
    %30 = vector.extract_strided_slice %29 {offsets = [0, 0, 0], sizes = [2, 24, 384], strides = [1, 1, 1]} : vector<2x32x384xbf16> to vector<2x24x384xbf16>
    %31 = vector.extract_strided_slice %29 {offsets = [0, 2, 0], sizes = [2, 24, 384], strides = [1, 1, 1]} : vector<2x32x384xbf16> to vector<2x24x384xbf16>
    %32 = vector.extract_strided_slice %29 {offsets = [0, 4, 0], sizes = [2, 24, 384], strides = [1, 1, 1]} : vector<2x32x384xbf16> to vector<2x24x384xbf16>
    %33 = vector.extract_strided_slice %29 {offsets = [0, 6, 0], sizes = [2, 24, 384], strides = [1, 1, 1]} : vector<2x32x384xbf16> to vector<2x24x384xbf16>
    %34 = vector.extract_strided_slice %29 {offsets = [0, 8, 0], sizes = [2, 24, 384], strides = [1, 1, 1]} : vector<2x32x384xbf16> to vector<2x24x384xbf16>
    %35 = tpu.concatenate %30, %31, %32, %33, %34 in 2 : vector<2x24x384xbf16>, vector<2x24x384xbf16>, vector<2x24x384xbf16>, vector<2x24x384xbf16>, vector<2x24x384xbf16> -> vector<2x24x1920xbf16>
    %36 = vector.shape_cast %35 : vector<2x24x1920xbf16> to vector<48x1920xbf16>
    %c0_16 = arith.constant 0 : index
    %c0_17 = arith.constant 0 : index
    %37 = vector.load %arg5[%c0_16, %c0_17] : memref<1920x720xbf16, #tpu.memory_space<vmem>>, vector<1920x720xbf16>
    %cst_18 = arith.constant dense<0.000000e+00> : vector<48x720xf32>
    %38 = tpu.matmul %36, %37, %cst_18 {dimension_numbers = #tpu.dot_dimension_numbers<[1], [0], [0], [1], [0, 0, 1, 1], [], []>} : vector<48x1920xbf16>, vector<1920x720xbf16>, vector<48x720xf32> -> vector<48x720xf32>
    %39 = vector.extract_strided_slice %38 {offsets = [2, 0], sizes = [46, 720], strides = [1, 1]} : vector<48x720xf32> to vector<46x720xf32>
    %40 = vector.extract_strided_slice %38 {offsets = [0, 0], sizes = [2, 720], strides = [1, 1]} : vector<48x720xf32> to vector<2x720xf32>
    %41 = tpu.concatenate %39, %40 in 0 : vector<46x720xf32>, vector<2x720xf32> -> vector<48x720xf32>
    %42 = arith.maximumf %38, %41 : vector<48x720xf32>
    %43 = vector.extract_strided_slice %42 {offsets = [0, 72], sizes = [48, 648], strides = [1, 1]} : vector<48x720xf32> to vector<48x648xf32>
    %44 = vector.extract_strided_slice %42 {offsets = [0, 0], sizes = [48, 72], strides = [1, 1]} : vector<48x720xf32> to vector<48x72xf32>
    %45 = tpu.concatenate %43, %44 in 1 : vector<48x648xf32>, vector<48x72xf32> -> vector<48x720xf32>
    %46 = arith.maximumf %42, %45 : vector<48x720xf32>
    %47 = arith.truncf %46 : vector<48x720xf32> to vector<48x720xbf16>
    %c0_19 = arith.constant 0 : index
    %c0_20 = arith.constant 0 : index
    %48 = vector.load %arg7[%c0_19, %c0_20] : memref<720x360xbf16, #tpu.memory_space<vmem>>, vector<720x360xbf16>
    %cst_21 = arith.constant dense<0.000000e+00> : vector<48x360xf32>
    %49 = tpu.matmul %47, %48, %cst_21 {dimension_numbers = #tpu.dot_dimension_numbers<[1], [0], [0], [1], [0, 0, 1, 1], [], []>} : vector<48x720xbf16>, vector<720x360xbf16>, vector<48x360xf32> -> vector<48x360xf32>
    %c0_22 = arith.constant 0 : index
    %c0_23 = arith.constant 0 : index
    %50 = vector.load %arg6[%c0_22, %c0_23] : memref<1x360xf32, #tpu.memory_space<vmem>>, vector<1x360xf32>
    %51 = vector.broadcast %50 : vector<1x360xf32> to vector<48x360xf32>
    %52 = arith.addf %49, %51 : vector<48x360xf32>
    %cst_24 = arith.constant 0.000000e+00 : f32
    %53 = vector.broadcast %cst_24 : f32 to vector<48x360xf32>
    %54 = arith.maximumf %52, %53 : vector<48x360xf32>
    %55 = vector.shape_cast %54 : vector<48x360xf32> to vector<2x24x360xf32>
    %c0_25 = arith.constant 0 : index
    %c0_26 = arith.constant 0 : index
    %c0_27 = arith.constant 0 : index
    %56 = vector.load %arg8[%c0_25, %c0_26, %c0_27] : memref<2x24x360xf32, #tpu.memory_space<vmem>>, vector<2x24x360xf32>
    tpu.vector_store %arg8[%c0_25, %c0_26, %c0_27], %55 {strides = array<i32>} : memref<2x24x360xf32, #tpu.memory_space<vmem>>, vector<2x24x360xf32>,
    return
  }
  func.func @transform_0(%arg0: i32) -> (i32, i32, i32) {
    %c0_i32 = arith.constant 0 : i32
    %c0_i32_0 = arith.constant 0 : i32
    %c0_i32_1 = arith.constant 0 : i32
    return %arg0, %c0_i32, %c0_i32_0 : i32, i32, i32
  }
  func.func @transform_1(%arg0: i32) -> (i32, i32) {
    %c0_i32 = arith.constant 0 : i32
    %c0_i32_0 = arith.constant 0 : i32
    %c0_i32_1 = arith.constant 0 : i32
    return %c0_i32, %c0_i32_0 : i32, i32
  }
  func.func @transform_2(%arg0: i32) -> (i32, i32) {
    %c0_i32 = arith.constant 0 : i32
    %c0_i32_0 = arith.constant 0 : i32
    %c0_i32_1 = arith.constant 0 : i32
    return %c0_i32, %c0_i32_0 : i32, i32
  }
  func.func @transform_3(%arg0: i32) -> (i32, i32) {
    %c0_i32 = arith.constant 0 : i32
    %c0_i32_0 = arith.constant 0 : i32
    %c0_i32_1 = arith.constant 0 : i32
    return %c0_i32, %c0_i32_0 : i32, i32
  }
  func.func @transform_4(%arg0: i32) -> (i32, i32) {
    %c0_i32 = arith.constant 0 : i32
    %c0_i32_0 = arith.constant 0 : i32
    %c0_i32_1 = arith.constant 0 : i32
    return %c0_i32, %c0_i32_0 : i32, i32
  }
  func.func @transform_5(%arg0: i32) -> (i32, i32) {
    %c0_i32 = arith.constant 0 : i32
    %c0_i32_0 = arith.constant 0 : i32
    %c0_i32_1 = arith.constant 0 : i32
    return %c0_i32, %c0_i32_0 : i32, i32
  }
  func.func @transform_6(%arg0: i32) -> (i32, i32) {
    %c0_i32 = arith.constant 0 : i32
    %c0_i32_0 = arith.constant 0 : i32
    %c0_i32_1 = arith.constant 0 : i32
    return %c0_i32, %c0_i32_0 : i32, i32
  }
  func.func @transform_7(%arg0: i32) -> (i32, i32, i32) {
    %c0_i32 = arith.constant 0 : i32
    %c0_i32_0 = arith.constant 0 : i32
    %c0_i32_1 = arith.constant 0 : i32
    return %arg0, %c0_i32, %c0_i32_0 : i32, i32, i32
  }
}

</mosaic_0001>

<llo_original>
// kernel: tile.13
$region0: #{tile.13}
  #allocation0 [shape = 's32[1]{0}', space=sflag, size = 0x4, scoped, tag = 'scoped memory for tile.13']
  %s0 = inlined_call_operand.vmem [shape: f32[24], index: 0, kind: input, shape index: {}]
  %s1 = inlined_call_operand.vmem [shape: f32[14,24], index: 1, kind: output, shape index: {}]
  // Predicated region
  $region2: #{tile.13} parent=0 // pred_check
    _
  $region3: #{tile.13} parent=0 // pred_check_branch
    %3 = sbr.rel (0) target = $region5
  $region4: #{tile.13} parent=0 // pred_region
    _
  $region5: #{tile.13} parent=0 // pred_fallthru
    _
  %v4 = vld [vmem:[%s0] ss:$0 sm:$0xff]
  %5 = vst [vmem:[%s1] sm:$0xff] %v4
  %s6 = scalar_lea.vmem %s1, 8
  %7 = vst [vmem:[%s6] sm:$0xff] %v4

// kernel: tile.14
$region0: #{tile.14}
  %s0 = inlined_call_operand.vmem [shape: f32[14,24], index: 0, kind: input, shape index: {}]
  %s1 = inlined_call_operand.vmem [shape: f32[336], index: 1, kind: output, shape index: {}]
  $region1: #{tile.14} parent=0
    #allocation0 [shape = 'u8[4096]{0}', space=vmem, size = 0x1000, scoped, tag = 'scoped mem for output reshape']
    %v2 = vld [vmem:[%s0] sm:$0x1]
    %vm3 = vcmask 195584
    %4 = vst.msk [vmem:[#allocation0] sm:$0x1] %vm3, %v2
    %s5 = scalar_lea.vmem %s0, 5
    %v6 = vld [vmem:[%s5] sm:$0x1]
    %s7 = scalar_lea.vmem %s0, 5
    %v8 = vld [vmem:[%s7] sm:$0x1]
    %vm9 = vcmask 64512
    %v10 = vsel %vm9, %v8, %v6
    %11 = vrot.lane.b32.xlu0 %v10, 120
    %v12 = vpop.permute.xlu0 %11
    %vm13 = vcmask 130048
    %s14 = scalar_lea.vmem [#allocation0], 1
    %15 = vst.msk [vmem:[%s14] sm:$0x1] %vm13, %v12
    %vm16 = vcmask 1048512
    %17 = vst.msk [vmem:[#allocation0] sm:$0x1] %vm16, %v12
    %s18 = scalar_lea.vmem %s0, 10
    %v19 = vld [vmem:[%s18] sm:$0x1]
    %s20 = scalar_lea.vmem %s0, 10
    %v21 = vld [vmem:[%s20] sm:$0x1]
    %vm22 = vcmask 130048
    %v23 = vsel %vm22, %v21, %v19
    %24 = vrot.lane.b32.xlu0 %v23, 112
    %v25 = vpop.permute.xlu0 %24
    %vm26 = vcmask 64512
    %s27 = scalar_lea.vmem [#allocation0], 2
    %28 = vst.msk [vmem:[%s27] sm:$0x1] %vm26, %v25
    %vm29 = vcmask 1048448
    %s30 = scalar_lea.vmem [#allocation0], 1
    %31 = vst.msk [vmem:[%s30] sm:$0x1] %vm29, %v25
    %s32 = scalar_lea.vmem %s0, 4
    %v33 = vld [vmem:[%s32] sm:$0x1]
    %34 = vrot.lane.b32.xlu0 %v33, 96
    %v35 = vpop.permute.xlu0 %34
    %vm36 = vcmask 982784
    %37 = vst.msk [vmem:[#allocation0] sm:$0x1] %vm36, %v35
    %s38 = scalar_lea.vmem %s0, 9
    %v39 = vld [vmem:[%s38] sm:$0x1]
    %40 = vrot.lane.b32.xlu0 %v39, 88
    %v41 = vpop.permute.xlu0 %40
    %vm42 = vcmask 917184
    %s43 = scalar_lea.vmem [#allocation0], 1
    %44 = vst.msk [vmem:[%s43] sm:$0x1] %vm42, %v41
    %s45 = scalar_lea.vmem %s0, 3
    %v46 = vld [vmem:[%s45] sm:$0x1]
    %47 = vrot.lane.b32.xlu0 %v46, 72
    %v48 = vpop.permute.xlu0 %47
    %vm49 = vcmask 785984
    %50 = vst.msk [vmem:[#allocation0] sm:$0x1] %vm49, %v48
    %s51 = scalar_lea.vmem %s0, 8
    %v52 = vld [vmem:[%s51] sm:$0x1]
    %53 = vrot.lane.b32.xlu0 %v52, 64
    %v54 = vpop.permute.xlu0 %53
    %vm55 = vcmask 720384
    %s56 = scalar_lea.vmem [#allocation0], 1
    %57 = vst.msk [vmem:[%s56] sm:$0x1] %vm55, %v54
    %s58 = scalar_lea.vmem %s0, 13
    %v59 = vld [vmem:[%s58] sm:$0x1]
    %60 = vrot.lane.b32.xlu0 %v59, 56
    %v61 = vpop.permute.xlu0 %60
    %vm62 = vcmask 654784
    %s63 = scalar_lea.vmem [#allocation0], 2
    %64 = vst.msk [vmem:[%s63] sm:$0x1] %vm62, %v61
    %s65 = scalar_lea.vmem %s0, 2
    %v66 = vld [vmem:[%s65] sm:$0x1]
    %67 = vrot.lane.b32.xlu0 %v66, 48
    %v68 = vpop.permute.xlu0 %67
    %vm69 = vcmask 589184
    %70 = vst.msk [vmem:[#allocation0] sm:$0x1] %vm69, %v68
    %s71 = scalar_lea.vmem %s0, 7
    %v72 = vld [vmem:[%s71] sm:$0x1]
    %73 = vrot.lane.b32.xlu0 %v72, 40
    %v74 = vpop.permute.xlu0 %73
    %vm75 = vcmask 523584
    %s76 = scalar_lea.vmem [#allocation0], 1
    %77 = vst.msk [vmem:[%s76] sm:$0x1] %vm75, %v74
    %s78 = scalar_lea.vmem %s0, 12
    %v79 = vld [vmem:[%s78] sm:$0x1]
    %80 = vrot.lane.b32.xlu0 %v79, 32
    %v81 = vpop.permute.xlu0 %80
    %vm82 = vcmask 457984
    %s83 = scalar_lea.vmem [#allocation0], 2
    %84 = vst.msk [vmem:[%s83] sm:$0x1] %vm82, %v81
    %s85 = scalar_lea.vmem %s0, 1
    %v86 = vld [vmem:[%s85] sm:$0x1]
    %87 = vrot.lane.b32.xlu0 %v86, 24
    %v88 = vpop.permute.xlu0 %87
    %vm89 = vcmask 392384
    %90 = vst.msk [vmem:[#allocation0] sm:$0x1] %vm89, %v88
    %s91 = scalar_lea.vmem %s0, 6
    %v92 = vld [vmem:[%s91] sm:$0x1]
    %93 = vrot.lane.b32.xlu0 %v92, 16
    %v94 = vpop.permute.xlu0 %93
    %vm95 = vcmask 326784
    %s96 = scalar_lea.vmem [#allocation0], 1
    %97 = vst.msk [vmem:[%s96] sm:$0x1] %vm95, %v94
    %s98 = scalar_lea.vmem %s0, 11
    %v99 = vld [vmem:[%s98] sm:$0x1]
    %100 = vrot.lane.b32.xlu0 %v99, 8
    %v101 = vpop.permute.xlu0 %100
    %vm102 = vcmask 261184
    %s103 = scalar_lea.vmem [#allocation0], 2
    %104 = vst.msk [vmem:[%s103] sm:$0x1] %vm102, %v101
    %s106 = sshll.u32 1, 4
    %s107 = ssub.s32 %s106, 1
    %v109 = vld [vmem:[#allocation0] sm:%s107]
    %s110 = sshll.u32 1, 4
    %s111 = ssub.s32 %s110, 1
    %112 = vst [vmem:[%s1] sm:%s111] %v109

// kernel: tile.18
$region0: #{tile.18}
  #allocation0 [shape = 's32[1]{0}', space=sflag, size = 0x4, scoped, tag = 'scoped memory for tile.18']
  %s0 = inlined_call_operand.vmem [shape: f32[72], index: 0, kind: input, shape index: {}]
  %s1 = inlined_call_operand.vmem [shape: f32[5,72], index: 1, kind: output, shape index: {}]
  // Predicated region
  $region2: #{tile.18} parent=0 // pred_check
    _
  $region3: #{tile.18} parent=0 // pred_check_branch
    %3 = sbr.rel (0) target = $region5
  $region4: #{tile.18} parent=0 // pred_region
    _
  $region5: #{tile.18} parent=0 // pred_fallthru
    _
  %v4 = vld [vmem:[%s0] ss:$0 sm:$0xff]
  %5 = vst [vmem:[%s1] sm:$0xff] %v4

// kernel: tile.19
$region0: #{tile.19}
  %s0 = inlined_call_operand.vmem [shape: f32[5,72], index: 0, kind: input, shape index: {}]
  %s1 = inlined_call_operand.vmem [shape: f32[1,360], index: 1, kind: output, shape index: {}]
  $region1: #{tile.19} parent=0
    #allocation0 [shape = 'u8[12288]{0}', space=vmem, size = 0x3000, scoped, tag = 'scoped mem for output reshape']
    %v2 = vld [vmem:[%s0] sm:$0x1]
    %vm3 = vcmask 588800
    %4 = vst.msk [vmem:[#allocation0] sm:$0x1] %vm3, %v2
    %s5 = scalar_lea.vmem %s0, 3
    %v6 = vld [vmem:[%s5] sm:$0x1]
    %s7 = scalar_lea.vmem %s0, 3
    %v8 = vld [vmem:[%s7] sm:$0x1]
    %vm9 = vcmask 326656
    %v10 = vsel %vm9, %v8, %v6
    %11 = vrot.lane.b32.xlu0 %v10, 88
    %v12 = vpop.permute.xlu0 %11
    %vm13 = vcmask 261120
    %s14 = scalar_lea.vmem [#allocation0], 16
    %15 = vst.msk [vmem:[%s14] sm:$0x1] %vm13, %v12
    %vm16 = vcmask 1048256
    %s17 = scalar_lea.vmem [#allocation0], 8
    %18 = vst.msk [vmem:[%s17] sm:$0x1] %vm16, %v12
    %s19 = scalar_lea.vmem %s0, 1
    %v20 = vld [vmem:[%s19] sm:$0x1]
    %s21 = scalar_lea.vmem %s0, 1
    %v22 = vld [vmem:[%s21] sm:$0x1]
    %vm23 = vcmask 457728
    %v24 = vsel %vm23, %v22, %v20
    %25 = vrot.lane.b32.xlu0 %v24, 72
    %v26 = vpop.permute.xlu0 %25
    %vm27 = vcmask 130048
    %s28 = scalar_lea.vmem [#allocation0], 8
    %29 = vst.msk [vmem:[%s28] sm:$0x1] %vm27, %v26
    %vm30 = vcmask 1048128
    %31 = vst.msk [vmem:[#allocation0] sm:$0x1] %vm30, %v26
    %s32 = scalar_lea.vmem %s0, 4
    %v33 = vld [vmem:[%s32] sm:$0x1]
    %34 = vrot.lane.b32.xlu0 %v33, 32
    %v35 = vpop.permute.xlu0 %34
    %vm36 = vcmask 851200
    %s37 = scalar_lea.vmem [#allocation0], 16
    %38 = vst.msk [vmem:[%s37] sm:$0x1] %vm36, %v35
    %s39 = scalar_lea.vmem %s0, 2
    %v40 = vld [vmem:[%s39] sm:$0x1]
    %41 = vrot.lane.b32.xlu0 %v40, 16
    %v42 = vpop.permute.xlu0 %41
    %vm43 = vcmask 720000
    %s44 = scalar_lea.vmem [#allocation0], 8
    %45 = vst.msk [vmem:[%s44] sm:$0x1] %vm43, %v42
    %s47 = sshll.u32 1, 1
    %s48 = ssub.s32 %s47, 1
    %v50 = vld [vmem:[#allocation0] sm:%s48]
    %s51 = sshll.u32 1, 1
    %s52 = ssub.s32 %s51, 1
    %53 = vst [vmem:[%s1] sm:%s52] %v50
    %s54 = scalar_lea.vmem [#allocation0], 8
    %v55 = vld [vmem:[%s54] sm:%s48]
    %s56 = sshll.u32 1, 1
    %s57 = ssub.s32 %s56, 1
    %s58 = scalar_lea.vmem %s1, 1
    %59 = vst [vmem:[%s58] sm:%s57] %v55
    %s60 = scalar_lea.vmem [#allocation0], 16
    %v61 = vld [vmem:[%s60] sm:%s48]
    %s62 = sshll.u32 1, 1
    %s63 = ssub.s32 %s62, 1
    %s64 = smul.addr 1, 2
    %s65 = scalar_lea.vmem %s1, %s64
    %66 = vst [vmem:[%s65] sm:%s63] %v61

// kernel: encoder_block_forward.1
$region0: #{encoder_block_forward.1}
  #allocation0 [shape = 'u32[]', space=smem, size = 0x4, offset = 0x4, fixed_abs, tag = 'smem constant byte address 0x4 - core index']
  #allocation1 [shape = 'u32[144,128]{1,0:T(1,128)}', space=vmem, size = 0x12000, scoped, tag = 'internal scratch']
  #allocation2 [shape = 'bf16[2,32,384]{2,1,0:T(8,128)(2,1)}', space=vmem, size = 0xc000, scoped, tag = 'scratch operand']
  %s0 = inlined_call_operand.vmem [shape: bf16[2,40,128], index: 0, kind: input, shape index: {}]
  %s1 = inlined_call_operand.vmem [shape: bf16[640,672], index: 1, kind: input, shape index: {}]
  %s2 = inlined_call_operand.vmem [shape: f32[1,384], index: 2, kind: input, shape index: {}]
  %s3 = inlined_call_operand.vmem [shape: bf16[672,384], index: 3, kind: input, shape index: {}]
  %s4 = inlined_call_operand.vmem [shape: bf16[1920,720], index: 4, kind: input, shape index: {}]
  %s5 = inlined_call_operand.vmem [shape: f32[1,360], index: 5, kind: input, shape index: {}]
  %s6 = inlined_call_operand.vmem [shape: bf16[720,360], index: 6, kind: input, shape index: {}]
  %s7 = inlined_call_operand.vmem [shape: f32[2,24,360], index: 7, kind: output, shape index: {}]
  %s8 = sld [smem:[#allocation0]]
  $region38: #{encoder_block_forward.1} parent=0
    _
  %s10 = ssub.s32 1, %s8
  %s11 = scalar_select 0, %s10, %s8
  // Predicated region
  $region2: #{encoder_block_forward.1} parent=0 // pred_check
    _
  $region3: #{encoder_block_forward.1} parent=0 // pred_check_branch
    %13 = sbr.rel (0) target = $region5
  $region4: #{encoder_block_forward.1} parent=0 // pred_region
    _
  $region5: #{encoder_block_forward.1} parent=0 // pred_fallthru
    _
  // Predicated region
  $region6: #{encoder_block_forward.1} parent=0 // pred_check
    _
  $region7: #{encoder_block_forward.1} parent=0 // pred_check_branch
    %15 = sbr.rel (0) target = $region9
  $region8: #{encoder_block_forward.1} parent=0 // pred_region
    _
  $region9: #{encoder_block_forward.1} parent=0 // pred_fallthru
    _
  // Predicated region
  $region10: #{encoder_block_forward.1} parent=0 // pred_check
    _
  $region11: #{encoder_block_forward.1} parent=0 // pred_check_branch
    %17 = sbr.rel (0) target = $region13
  $region12: #{encoder_block_forward.1} parent=0 // pred_region
    _
  $region13: #{encoder_block_forward.1} parent=0 // pred_fallthru
    _
  // Predicated region
  $region14: #{encoder_block_forward.1} parent=0 // pred_check
    _
  $region15: #{encoder_block_forward.1} parent=0 // pred_check_branch
    %19 = sbr.rel (0) target = $region17
  $region16: #{encoder_block_forward.1} parent=0 // pred_region
    _
  $region17: #{encoder_block_forward.1} parent=0 // pred_fallthru
    _
  // Predicated region
  $region18: #{encoder_block_forward.1} parent=0 // pred_check
    _
  $region19: #{encoder_block_forward.1} parent=0 // pred_check_branch
    %21 = sbr.rel (0) target = $region21
  $region20: #{encoder_block_forward.1} parent=0 // pred_region
    _
  $region21: #{encoder_block_forward.1} parent=0 // pred_fallthru
    _
  // Predicated region
  $region22: #{encoder_block_forward.1} parent=0 // pred_check
    _
  $region23: #{encoder_block_forward.1} parent=0 // pred_check_branch
    %23 = sbr.rel (0) target = $region25
  $region24: #{encoder_block_forward.1} parent=0 // pred_region
    _
  $region25: #{encoder_block_forward.1} parent=0 // pred_fallthru
    _
  // Predicated region
  $region26: #{encoder_block_forward.1} parent=0 // pred_check
    _
  $region27: #{encoder_block_forward.1} parent=0 // pred_check_branch
    %25 = sbr.rel (0) target = $region29
  $region28: #{encoder_block_forward.1} parent=0 // pred_region
    _
  $region29: #{encoder_block_forward.1} parent=0 // pred_fallthru
    _
  %v27 = vld [vmem:[%s0] sm:$0xf]
  %v28 = vld [vmem:[%s0 + $0x4] sm:$0xf]
  %v29 = vld [vmem:[%s0 + $0x8] sm:$0xf]
  %v30 = vld [vmem:[%s0 + $0xc] sm:$0xf]
  %v31 = vld [vmem:[%s0 + $0x10] sm:$0xf]
  %v32 = vld [vmem:[%s0 + $0x14] sm:$0xf]
  %v33 = vld [vmem:[%s0 + $0x18] sm:$0xf]
  %v34 = vld [vmem:[%s0 + $0x1c] sm:$0xf]
  %v35 = vld [vmem:[%s0 + $0x20] sm:$0xf]
  %v36 = vld [vmem:[%s0 + $0x24] sm:$0xf]
  %v45 = vunpack.c.l.b16 %v27
  %v46 = vunpack.c.l.b16 %v28
  %v47 = vunpack.c.l.b16 %v29
  %v48 = vunpack.c.l.b16 %v30
  %v49 = vunpack.c.l.b16 %v32
  %v50 = vunpack.c.l.b16 %v33
  %v51 = vunpack.c.l.b16 %v34
  %v52 = vunpack.c.l.b16 %v35
  %v53 = vpack.c.b16 %v46, %v45
  %v54 = vpack.c.b16 %v48, %v47
  %v55 = vpack.c.b16 %v50, %v49
  %v56 = vpack.c.b16 %v52, %v51
  %v63 = vunpack.c.l.b16 %v31
  %v64 = vunpack.c.l.b16 %v36
  %v65 = vpack.c.b16 %v63, %v63
  %v66 = vpack.c.b16 %v64, %v64
  %vm67 = vsmask.f32 7424
  %v69 = vshrl.u32 %v53, 16
  %v71 = vshll.u32 %v53, 16
  %v73 = vrot.slane %v71, 1
  %v74 = vor.u32 %v69, %v73
  %v76 = vshll.u32 %v54, 16
  %v78 = vrot.slane %v76, 1
  %v79 = vsel %vm67, %v74, %v78
  %v80 = vshrl.u32 %v54, 16
  %v82 = vor.u32 %v80, %v78
  %v84 = vshll.u32 %v65, 16
  %v86 = vrot.slane %v84, 1
  %v87 = vsel %vm67, %v82, %v86
  %v89 = vshrl.u32 %v55, 16
  %v91 = vshll.u32 %v55, 16
  %v93 = vrot.slane %v91, 1
  %v94 = vor.u32 %v89, %v93
  %v96 = vshll.u32 %v56, 16
  %v98 = vrot.slane %v96, 1
  %v99 = vsel %vm67, %v94, %v98
  %v100 = vshrl.u32 %v56, 16
  %v102 = vor.u32 %v100, %v98
  %v104 = vshll.u32 %v66, 16
  %v106 = vrot.slane %v104, 1
  %v107 = vsel %vm67, %v102, %v106
  %vm112 = vcmask 1046528
  %v113 = vrot.slane %v53, 1
  %v114 = vrot.slane %v54, 1
  %v115 = vsel %vm112, %v113, %v114
  %v116 = vrot.slane %v65, 1
  %v117 = vsel %vm112, %v114, %v116
  %v118 = vrot.slane %v55, 1
  %v119 = vrot.slane %v56, 1
  %v120 = vsel %vm112, %v118, %v119
  %v121 = vrot.slane %v66, 1
  %v122 = vsel %vm112, %v119, %v121
  %vm127 = vsmask.f32 6400
  %v128 = vrot.slane %v69, 1
  %v129 = vrot.slane %v71, 2
  %v130 = vor.u32 %v128, %v129
  %v131 = vrot.slane %v80, 1
  %v132 = vrot.slane %v76, 2
  %v133 = vor.u32 %v131, %v132
  %v134 = vsel %vm127, %v130, %v133
  %v135 = vshrl.u32 %v65, 16
  %v137 = vrot.slane %v135, 1
  %v138 = vrot.slane %v84, 2
  %v139 = vor.u32 %v137, %v138
  %v140 = vsel %vm127, %v133, %v139
  %v141 = vrot.slane %v89, 1
  %v142 = vrot.slane %v91, 2
  %v143 = vor.u32 %v141, %v142
  %v144 = vrot.slane %v100, 1
  %v145 = vrot.slane %v96, 2
  %v146 = vor.u32 %v144, %v145
  %v147 = vsel %vm127, %v143, %v146
  %v148 = vshrl.u32 %v66, 16
  %v150 = vrot.slane %v148, 1
  %v151 = vrot.slane %v104, 2
  %v152 = vor.u32 %v150, %v151
  %v153 = vsel %vm127, %v146, %v152
  %vm158 = vcmask 1045504
  %v159 = vrot.slane %v53, 2
  %v160 = vrot.slane %v54, 2
  %v161 = vsel %vm158, %v159, %v160
  %v162 = vrot.slane %v65, 2
  %v163 = vsel %vm158, %v160, %v162
  %v164 = vrot.slane %v55, 2
  %v165 = vrot.slane %v56, 2
  %v166 = vsel %vm158, %v164, %v165
  %v167 = vrot.slane %v66, 2
  %v168 = vsel %vm158, %v165, %v167
  %v173 = vld [vmem:[%s1] sm:$0xff]
  %v174 = vld [vmem:[%s1 + $0x8] sm:$0xff]
  %v175 = vld [vmem:[%s1 + $0x10] sm:$0xff]
  %v176 = vld [vmem:[%s1 + $0x18] sm:$0xff]
  %v177 = vld [vmem:[%s1 + $0x20] sm:$0xff]
  %v178 = vld [vmem:[%s1 + $0x28] sm:$0xff]
  %v179 = vld [vmem:[%s1 + $0x30] sm:$0xff]
  %v180 = vld [vmem:[%s1 + $0x38] sm:$0xff]
  %v181 = vld [vmem:[%s1 + $0x40] sm:$0xff]
  %v182 = vld [vmem:[%s1 + $0x48] sm:$0xff]
  %v183 = vld [vmem:[%s1 + $0x50] sm:$0xff]
  %v184 = vld [vmem:[%s1 + $0x58] sm:$0xff]
  %v185 = vld [vmem:[%s1 + $0x60] sm:$0xff]
  %v186 = vld [vmem:[%s1 + $0x68] sm:$0xff]
  %v187 = vld [vmem:[%s1 + $0x70] sm:$0xff]
  %v188 = vld [vmem:[%s1 + $0x78] sm:$0xff]
  %v189 = vld [vmem:[%s1 + $0x80] sm:$0xff]
  %v190 = vld [vmem:[%s1 + $0x88] sm:$0xff]
  %v191 = vld [vmem:[%s1 + $0x90] sm:$0xff]
  %v192 = vld [vmem:[%s1 + $0x98] sm:$0xff]
  %v193 = vld [vmem:[%s1 + $0xa0] sm:$0xff]
  %v194 = vld [vmem:[%s1 + $0xa8] sm:$0xff]
  %v195 = vld [vmem:[%s1 + $0xb0] sm:$0xff]
  %v196 = vld [vmem:[%s1 + $0xb8] sm:$0xff]
  %v197 = vld [vmem:[%s1 + $0xc0] sm:$0xff]
  %v198 = vld [vmem:[%s1 + $0xc8] sm:$0xff]
  %v199 = vld [vmem:[%s1 + $0xd0] sm:$0xff]
  %v200 = vld [vmem:[%s1 + $0xd8] sm:$0xff]
  %v201 = vld [vmem:[%s1 + $0xe0] sm:$0xff]
  %v202 = vld [vmem:[%s1 + $0xe8] sm:$0xff]
  %v203 = vld [vmem:[%s1 + $0xf0] sm:$0xff]
  %v204 = vld [vmem:[%s1 + $0xf8] sm:$0xff]
  %v205 = vld [vmem:[%s1 + $0x100] sm:$0xff]
  %v206 = vld [vmem:[%s1 + $0x108] sm:$0xff]
  %v207 = vld [vmem:[%s1 + $0x110] sm:$0xff]
  %v208 = vld [vmem:[%s1 + $0x118] sm:$0xff]
  %v209 = vld [vmem:[%s1 + $0x120] sm:$0xff]
  %v210 = vld [vmem:[%s1 + $0x128] sm:$0xff]
  %v211 = vld [vmem:[%s1 + $0x130] sm:$0xff]
  %v212 = vld [vmem:[%s1 + $0x138] sm:$0xff]
  %v213 = vld [vmem:[%s1 + $0x140] sm:$0xff]
  %v214 = vld [vmem:[%s1 + $0x148] sm:$0xff]
  %v215 = vld [vmem:[%s1 + $0x150] sm:$0xff]
  %v216 = vld [vmem:[%s1 + $0x158] sm:$0xff]
  %v217 = vld [vmem:[%s1 + $0x160] sm:$0xff]
  %v218 = vld [vmem:[%s1 + $0x168] sm:$0xff]
  %v219 = vld [vmem:[%s1 + $0x170] sm:$0xff]
  %v220 = vld [vmem:[%s1 + $0x178] sm:$0xff]
  %v221 = vld [vmem:[%s1 + $0x180] sm:$0xff]
  %v222 = vld [vmem:[%s1 + $0x188] sm:$0xff]
  %v223 = vld [vmem:[%s1 + $0x190] sm:$0xff]
  %v224 = vld [vmem:[%s1 + $0x198] sm:$0xff]
  %v225 = vld [vmem:[%s1 + $0x1a0] sm:$0xff]
  %v226 = vld [vmem:[%s1 + $0x1a8] sm:$0xff]
  %v227 = vld [vmem:[%s1 + $0x1b0] sm:$0xff]
  %v228 = vld [vmem:[%s1 + $0x1b8] sm:$0xff]
  %v229 = vld [vmem:[%s1 + $0x1c0] sm:$0xff]
  %v230 = vld [vmem:[%s1 + $0x1c8] sm:$0xff]
  %v231 = vld [vmem:[%s1 + $0x1d0] sm:$0xff]
  %v232 = vld [vmem:[%s1 + $0x1d8] sm:$0xff]
  %v233 = vld [vmem:[%s1 + $0x1e0] sm:$0xff]
  %v234 = vld [vmem:[%s1 + $0x1e8] sm:$0xff]
  %v235 = vld [vmem:[%s1 + $0x1f0] sm:$0xff]
  %v236 = vld [vmem:[%s1 + $0x1f8] sm:$0xff]
  %v237 = vld [vmem:[%s1 + $0x200] sm:$0xff]
  %v238 = vld [vmem:[%s1 + $0x208] sm:$0xff]
  %v239 = vld [vmem:[%s1 + $0x210] sm:$0xff]
  %v240 = vld [vmem:[%s1 + $0x218] sm:$0xff]
  %v241 = vld [vmem:[%s1 + $0x220] sm:$0xff]
  %v242 = vld [vmem:[%s1 + $0x228] sm:$0xff]
  %v243 = vld [vmem:[%s1 + $0x230] sm:$0xff]
  %v244 = vld [vmem:[%s1 + $0x238] sm:$0xff]
  %v245 = vld [vmem:[%s1 + $0x240] sm:$0xff]
  %v246 = vld [vmem:[%s1 + $0x248] sm:$0xff]
  %v247 = vld [vmem:[%s1 + $0x250] sm:$0xff]
  %v248 = vld [vmem:[%s1 + $0x258] sm:$0xff]
  %v249 = vld [vmem:[%s1 + $0x260] sm:$0xff]
  %v250 = vld [vmem:[%s1 + $0x268] sm:$0xff]
  %v251 = vld [vmem:[%s1 + $0x270] sm:$0xff]
  %v252 = vld [vmem:[%s1 + $0x278] sm:$0xff]
  %v253 = vld [vmem:[%s1 + $0x280] sm:$0xff]
  %v254 = vld [vmem:[%s1 + $0x288] sm:$0xff]
  %v255 = vld [vmem:[%s1 + $0x290] sm:$0xff]
  %v256 = vld [vmem:[%s1 + $0x298] sm:$0xff]
  %v257 = vld [vmem:[%s1 + $0x2a0] sm:$0xff]
  %v258 = vld [vmem:[%s1 + $0x2a8] sm:$0xff]
  %v259 = vld [vmem:[%s1 + $0x2b0] sm:$0xff]
  %v260 = vld [vmem:[%s1 + $0x2b8] sm:$0xff]
  %v261 = vld [vmem:[%s1 + $0x2c0] sm:$0xff]
  %v262 = vld [vmem:[%s1 + $0x2c8] sm:$0xff]
  %v263 = vld [vmem:[%s1 + $0x2d0] sm:$0xff]
  %v264 = vld [vmem:[%s1 + $0x2d8] sm:$0xff]
  %v265 = vld [vmem:[%s1 + $0x2e0] sm:$0xff]
  %v266 = vld [vmem:[%s1 + $0x2e8] sm:$0xff]
  %v267 = vld [vmem:[%s1 + $0x2f0] sm:$0xff]
  %v268 = vld [vmem:[%s1 + $0x2f8] sm:$0xff]
  %v269 = vld [vmem:[%s1 + $0x300] sm:$0xff]
  %v270 = vld [vmem:[%s1 + $0x308] sm:$0xff]
  %v271 = vld [vmem:[%s1 + $0x310] sm:$0xff]
  %v272 = vld [vmem:[%s1 + $0x318] sm:$0xff]
  %v273 = vld [vmem:[%s1 + $0x320] sm:$0xff]
  %v274 = vld [vmem:[%s1 + $0x328] sm:$0xff]
  %v275 = vld [vmem:[%s1 + $0x330] sm:$0xff]
  %v276 = vld [vmem:[%s1 + $0x338] sm:$0xff]
  %v277 = vld [vmem:[%s1 + $0x340] sm:$0xff]
  %v278 = vld [vmem:[%s1 + $0x348] sm:$0xff]
  %v279 = vld [vmem:[%s1 + $0x350] sm:$0xff]
  %v280 = vld [vmem:[%s1 + $0x358] sm:$0xff]
  %v281 = vld [vmem:[%s1 + $0x360] sm:$0xff]
  %v282 = vld [vmem:[%s1 + $0x368] sm:$0xff]
  %v283 = vld [vmem:[%s1 + $0x370] sm:$0xff]
  %v284 = vld [vmem:[%s1 + $0x378] sm:$0xff]
  %v285 = vld [vmem:[%s1 + $0x380] sm:$0xff]
  %v286 = vld [vmem:[%s1 + $0x388] sm:$0xff]
  %v287 = vld [vmem:[%s1 + $0x390] sm:$0xff]
  %v288 = vld [vmem:[%s1 + $0x398] sm:$0xff]
  %v289 = vld [vmem:[%s1 + $0x3a0] sm:$0xff]
  %v290 = vld [vmem:[%s1 + $0x3a8] sm:$0xff]
  %v291 = vld [vmem:[%s1 + $0x3b0] sm:$0xff]
  %v292 = vld [vmem:[%s1 + $0x3b8] sm:$0xff]
  %v293 = vld [vmem:[%s1 + $0x3c0] sm:$0xff]
  %v294 = vld [vmem:[%s1 + $0x3c8] sm:$0xff]
  %v295 = vld [vmem:[%s1 + $0x3d0] sm:$0xff]
  %v296 = vld [vmem:[%s1 + $0x3d8] sm:$0xff]
  %v297 = vld [vmem:[%s1 + $0x3e0] sm:$0xff]
  %v298 = vld [vmem:[%s1 + $0x3e8] sm:$0xff]
  %v299 = vld [vmem:[%s1 + $0x3f0] sm:$0xff]
  %v300 = vld [vmem:[%s1 + $0x3f8] sm:$0xff]
  %v301 = vld [vmem:[%s1 + $0x400] sm:$0xff]
  %v302 = vld [vmem:[%s1 + $0x408] sm:$0xff]
  %v303 = vld [vmem:[%s1 + $0x410] sm:$0xff]
  %v304 = vld [vmem:[%s1 + $0x418] sm:$0xff]
  %v305 = vld [vmem:[%s1 + $0x420] sm:$0xff]
  %v306 = vld [vmem:[%s1 + $0x428] sm:$0xff]
  %v307 = vld [vmem:[%s1 + $0x430] sm:$0xff]
  %v308 = vld [vmem:[%s1 + $0x438] sm:$0xff]
  %v309 = vld [vmem:[%s1 + $0x440] sm:$0xff]
  %v310 = vld [vmem:[%s1 + $0x448] sm:$0xff]
  %v311 = vld [vmem:[%s1 + $0x450] sm:$0xff]
  %v312 = vld [vmem:[%s1 + $0x458] sm:$0xff]
  %v313 = vld [vmem:[%s1 + $0x460] sm:$0xff]
  %v314 = vld [vmem:[%s1 + $0x468] sm:$0xff]
  %v315 = vld [vmem:[%s1 + $0x470] sm:$0xff]
  %v316 = vld [vmem:[%s1 + $0x478] sm:$0xff]
  %v317 = vld [vmem:[%s1 + $0x480] sm:$0xff]
  %v318 = vld [vmem:[%s1 + $0x488] sm:$0xff]
  %v319 = vld [vmem:[%s1 + $0x490] sm:$0xff]
  %v320 = vld [vmem:[%s1 + $0x498] sm:$0xff]
  %v321 = vld [vmem:[%s1 + $0x4a0] sm:$0xff]
  %v322 = vld [vmem:[%s1 + $0x4a8] sm:$0xff]
  %v323 = vld [vmem:[%s1 + $0x4b0] sm:$0xff]
  %v324 = vld [vmem:[%s1 + $0x4b8] sm:$0xff]
  %v325 = vld [vmem:[%s1 + $0x4c0] sm:$0xff]
  %v326 = vld [vmem:[%s1 + $0x4c8] sm:$0xff]
  %v327 = vld [vmem:[%s1 + $0x4d0] sm:$0xff]
  %v328 = vld [vmem:[%s1 + $0x4d8] sm:$0xff]
  %v329 = vld [vmem:[%s1 + $0x4e0] sm:$0xff]
  %v330 = vld [vmem:[%s1 + $0x4e8] sm:$0xff]
  %v331 = vld [vmem:[%s1 + $0x4f0] sm:$0xff]
  %v332 = vld [vmem:[%s1 + $0x4f8] sm:$0xff]
  %v333 = vld [vmem:[%s1 + $0x500] sm:$0xff]
  %v334 = vld [vmem:[%s1 + $0x508] sm:$0xff]
  %v335 = vld [vmem:[%s1 + $0x510] sm:$0xff]
  %v336 = vld [vmem:[%s1 + $0x518] sm:$0xff]
  %v337 = vld [vmem:[%s1 + $0x520] sm:$0xff]
  %v338 = vld [vmem:[%s1 + $0x528] sm:$0xff]
  %v339 = vld [vmem:[%s1 + $0x530] sm:$0xff]
  %v340 = vld [vmem:[%s1 + $0x538] sm:$0xff]
  %v341 = vld [vmem:[%s1 + $0x540] sm:$0xff]
  %v342 = vld [vmem:[%s1 + $0x548] sm:$0xff]
  %v343 = vld [vmem:[%s1 + $0x550] sm:$0xff]
  %v344 = vld [vmem:[%s1 + $0x558] sm:$0xff]
  %v345 = vld [vmem:[%s1 + $0x560] sm:$0xff]
  %v346 = vld [vmem:[%s1 + $0x568] sm:$0xff]
  %v347 = vld [vmem:[%s1 + $0x570] sm:$0xff]
  %v348 = vld [vmem:[%s1 + $0x578] sm:$0xff]
  %v349 = vld [vmem:[%s1 + $0x580] sm:$0xff]
  %v350 = vld [vmem:[%s1 + $0x588] sm:$0xff]
  %v351 = vld [vmem:[%s1 + $0x590] sm:$0xff]
  %v352 = vld [vmem:[%s1 + $0x598] sm:$0xff]
  %v353 = vld [vmem:[%s1 + $0x5a0] sm:$0xff]
  %v354 = vld [vmem:[%s1 + $0x5a8] sm:$0xff]
  %v355 = vld [vmem:[%s1 + $0x5b0] sm:$0xff]
  %v356 = vld [vmem:[%s1 + $0x5b8] sm:$0xff]
  %v357 = vld [vmem:[%s1 + $0x5c0] sm:$0xff]
  %v358 = vld [vmem:[%s1 + $0x5c8] sm:$0xff]
  %v359 = vld [vmem:[%s1 + $0x5d0] sm:$0xff]
  %v360 = vld [vmem:[%s1 + $0x5d8] sm:$0xff]
  %v361 = vld [vmem:[%s1 + $0x5e0] sm:$0xff]
  %v362 = vld [vmem:[%s1 + $0x5e8] sm:$0xff]
  %v363 = vld [vmem:[%s1 + $0x5f0] sm:$0xff]
  %v364 = vld [vmem:[%s1 + $0x5f8] sm:$0xff]
  %v365 = vld [vmem:[%s1 + $0x600] sm:$0xff]
  %v366 = vld [vmem:[%s1 + $0x608] sm:$0xff]
  %v367 = vld [vmem:[%s1 + $0x610] sm:$0xff]
  %v368 = vld [vmem:[%s1 + $0x618] sm:$0xff]
  %v369 = vld [vmem:[%s1 + $0x620] sm:$0xff]
  %v370 = vld [vmem:[%s1 + $0x628] sm:$0xff]
  %v371 = vld [vmem:[%s1 + $0x630] sm:$0xff]
  %v372 = vld [vmem:[%s1 + $0x638] sm:$0xff]
  %v373 = vld [vmem:[%s1 + $0x640] sm:$0xff]
  %v374 = vld [vmem:[%s1 + $0x648] sm:$0xff]
  %v375 = vld [vmem:[%s1 + $0x650] sm:$0xff]
  %v376 = vld [vmem:[%s1 + $0x658] sm:$0xff]
  %v377 = vld [vmem:[%s1 + $0x660] sm:$0xff]
  %v378 = vld [vmem:[%s1 + $0x668] sm:$0xff]
  %v379 = vld [vmem:[%s1 + $0x670] sm:$0xff]
  %v380 = vld [vmem:[%s1 + $0x678] sm:$0xff]
  %v381 = vld [vmem:[%s1 + $0x680] sm:$0xff]
  %v382 = vld [vmem:[%s1 + $0x688] sm:$0xff]
  %v383 = vld [vmem:[%s1 + $0x690] sm:$0xff]
  %v384 = vld [vmem:[%s1 + $0x698] sm:$0xff]
  %v385 = vld [vmem:[%s1 + $0x6a0] sm:$0xff]
  %v386 = vld [vmem:[%s1 + $0x6a8] sm:$0xff]
  %v387 = vld [vmem:[%s1 + $0x6b0] sm:$0xff]
  %v388 = vld [vmem:[%s1 + $0x6b8] sm:$0xff]
  %v389 = vld [vmem:[%s1 + $0x6c0] sm:$0xff]
  %v390 = vld [vmem:[%s1 + $0x6c8] sm:$0xff]
  %v391 = vld [vmem:[%s1 + $0x6d0] sm:$0xff]
  %v392 = vld [vmem:[%s1 + $0x6d8] sm:$0xff]
  %v393 = vld [vmem:[%s1 + $0x6e0] sm:$0xff]
  %v394 = vld [vmem:[%s1 + $0x6e8] sm:$0xff]
  %v395 = vld [vmem:[%s1 + $0x6f0] sm:$0xff]
  %v396 = vld [vmem:[%s1 + $0x6f8] sm:$0xff]
  %v397 = vld [vmem:[%s1 + $0x700] sm:$0xff]
  %v398 = vld [vmem:[%s1 + $0x708] sm:$0xff]
  %v399 = vld [vmem:[%s1 + $0x710] sm:$0xff]
  %v400 = vld [vmem:[%s1 + $0x718] sm:$0xff]
  %v401 = vld [vmem:[%s1 + $0x720] sm:$0xff]
  %v402 = vld [vmem:[%s1 + $0x728] sm:$0xff]
  %v403 = vld [vmem:[%s1 + $0x730] sm:$0xff]
  %v404 = vld [vmem:[%s1 + $0x738] sm:$0xff]
  %v405 = vld [vmem:[%s1 + $0x740] sm:$0xff]
  %v406 = vld [vmem:[%s1 + $0x748] sm:$0xff]
  %v407 = vld [vmem:[%s1 + $0x750] sm:$0xff]
  %v408 = vld [vmem:[%s1 + $0x758] sm:$0xff]
  %v409 = vld [vmem:[%s1 + $0x760] sm:$0xff]
  %v410 = vld [vmem:[%s1 + $0x768] sm:$0xff]
  %v411 = vld [vmem:[%s1 + $0x770] sm:$0xff]
  %v412 = vld [vmem:[%s1 + $0x778] sm:$0xff]
  %v653 = vunpack.c.l.b16 %v173
  %v654 = vunpack.c.h.b16 %v173
  %v655 = vunpack.c.l.b16 %v174
  %v656 = vunpack.c.h.b16 %v174
  %v657 = vunpack.c.l.b16 %v175
  %v658 = vunpack.c.h.b16 %v175
  %v659 = vunpack.c.l.b16 %v176
  %v660 = vunpack.c.h.b16 %v176
  %v661 = vunpack.c.l.b16 %v177
  %v662 = vunpack.c.h.b16 %v177
  %v663 = vunpack.c.l.b16 %v178
  %v664 = vunpack.c.h.b16 %v178
  %v665 = vunpack.c.l.b16 %v179
  %v666 = vunpack.c.h.b16 %v179
  %v667 = vunpack.c.l.b16 %v180
  %v668 = vunpack.c.h.b16 %v180
  %v669 = vunpack.c.l.b16 %v181
  %v670 = vunpack.c.h.b16 %v181
  %v671 = vunpack.c.l.b16 %v182
  %v672 = vunpack.c.h.b16 %v182
  %v673 = vunpack.c.l.b16 %v183
  %v674 = vunpack.c.h.b16 %v183
  %v675 = vunpack.c.l.b16 %v184
  %v676 = vunpack.c.h.b16 %v184
  %v677 = vunpack.c.l.b16 %v185
  %v678 = vunpack.c.h.b16 %v185
  %v679 = vunpack.c.l.b16 %v186
  %v680 = vunpack.c.h.b16 %v186
  %v681 = vunpack.c.l.b16 %v187
  %v682 = vunpack.c.h.b16 %v187
  %v683 = vunpack.c.l.b16 %v188
  %v684 = vunpack.c.h.b16 %v188
  %v685 = vunpack.c.l.b16 %v189
  %v686 = vunpack.c.h.b16 %v189
  %v687 = vunpack.c.l.b16 %v190
  %v688 = vunpack.c.h.b16 %v190
  %v689 = vunpack.c.l.b16 %v191
  %v690 = vunpack.c.h.b16 %v191
  %v691 = vunpack.c.l.b16 %v192
  %v692 = vunpack.c.h.b16 %v192
  %v693 = vunpack.c.l.b16 %v193
  %v694 = vunpack.c.h.b16 %v193
  %v695 = vunpack.c.l.b16 %v194
  %v696 = vunpack.c.h.b16 %v194
  %v697 = vunpack.c.l.b16 %v195
  %v698 = vunpack.c.h.b16 %v195
  %v699 = vunpack.c.l.b16 %v196
  %v700 = vunpack.c.h.b16 %v196
  %v701 = vunpack.c.l.b16 %v197
  %v702 = vunpack.c.h.b16 %v197
  %v703 = vunpack.c.l.b16 %v198
  %v704 = vunpack.c.h.b16 %v198
  %v705 = vunpack.c.l.b16 %v199
  %v706 = vunpack.c.h.b16 %v199
  %v707 = vunpack.c.l.b16 %v200
  %v708 = vunpack.c.h.b16 %v200
  %v709 = vunpack.c.l.b16 %v201
  %v710 = vunpack.c.h.b16 %v201
  %v711 = vunpack.c.l.b16 %v202
  %v712 = vunpack.c.h.b16 %v202
  %v713 = vunpack.c.l.b16 %v203
  %v714 = vunpack.c.h.b16 %v203
  %v715 = vunpack.c.l.b16 %v204
  %v716 = vunpack.c.h.b16 %v204
  %v717 = vunpack.c.l.b16 %v205
  %v718 = vunpack.c.h.b16 %v205
  %v719 = vunpack.c.l.b16 %v206
  %v720 = vunpack.c.h.b16 %v206
  %v721 = vunpack.c.l.b16 %v207
  %v722 = vunpack.c.h.b16 %v207
  %v723 = vunpack.c.l.b16 %v208
  %v724 = vunpack.c.h.b16 %v208
  %v725 = vunpack.c.l.b16 %v209
  %v726 = vunpack.c.h.b16 %v209
  %v727 = vunpack.c.l.b16 %v210
  %v728 = vunpack.c.h.b16 %v210
  %v729 = vunpack.c.l.b16 %v211
  %v730 = vunpack.c.h.b16 %v211
  %v731 = vunpack.c.l.b16 %v212
  %v732 = vunpack.c.h.b16 %v212
  %v733 = vunpack.c.l.b16 %v213
  %v734 = vunpack.c.h.b16 %v213
  %v735 = vunpack.c.l.b16 %v214
  %v736 = vunpack.c.h.b16 %v214
  %v737 = vunpack.c.l.b16 %v215
  %v738 = vunpack.c.h.b16 %v215
  %v739 = vunpack.c.l.b16 %v216
  %v740 = vunpack.c.h.b16 %v216
  %v741 = vunpack.c.l.b16 %v217
  %v742 = vunpack.c.h.b16 %v217
  %v743 = vunpack.c.l.b16 %v218
  %v744 = vunpack.c.h.b16 %v218
  %v745 = vunpack.c.l.b16 %v219
  %v746 = vunpack.c.h.b16 %v219
  %v747 = vunpack.c.l.b16 %v220
  %v748 = vunpack.c.h.b16 %v220
  %v749 = vunpack.c.l.b16 %v221
  %v750 = vunpack.c.h.b16 %v221
  %v751 = vunpack.c.l.b16 %v222
  %v752 = vunpack.c.h.b16 %v222
  %v753 = vunpack.c.l.b16 %v223
  %v754 = vunpack.c.h.b16 %v223
  %v755 = vunpack.c.l.b16 %v224
  %v756 = vunpack.c.h.b16 %v224
  %v757 = vunpack.c.l.b16 %v225
  %v758 = vunpack.c.h.b16 %v225
  %v759 = vunpack.c.l.b16 %v226
  %v760 = vunpack.c.h.b16 %v226
  %v761 = vunpack.c.l.b16 %v227
  %v762 = vunpack.c.h.b16 %v227
  %v763 = vunpack.c.l.b16 %v228
  %v764 = vunpack.c.h.b16 %v228
  %v765 = vunpack.c.l.b16 %v229
  %v766 = vunpack.c.h.b16 %v229
  %v767 = vunpack.c.l.b16 %v230
  %v768 = vunpack.c.h.b16 %v230
  %v769 = vunpack.c.l.b16 %v231
  %v770 = vunpack.c.h.b16 %v231
  %v771 = vunpack.c.l.b16 %v232
  %v772 = vunpack.c.h.b16 %v232
  %v773 = vunpack.c.l.b16 %v233
  %v774 = vunpack.c.h.b16 %v233
  %v775 = vunpack.c.l.b16 %v234
  %v776 = vunpack.c.h.b16 %v234
  %v777 = vunpack.c.l.b16 %v235
  %v778 = vunpack.c.h.b16 %v235
  %v779 = vunpack.c.l.b16 %v236
  %v780 = vunpack.c.h.b16 %v236
  %v781 = vunpack.c.l.b16 %v237
  %v782 = vunpack.c.h.b16 %v237
  %v783 = vunpack.c.l.b16 %v238
  %v784 = vunpack.c.h.b16 %v238
  %v785 = vunpack.c.l.b16 %v239
  %v786 = vunpack.c.h.b16 %v239
  %v787 = vunpack.c.l.b16 %v240
  %v788 = vunpack.c.h.b16 %v240
  %v789 = vunpack.c.l.b16 %v241
  %v790 = vunpack.c.h.b16 %v241
  %v791 = vunpack.c.l.b16 %v242
  %v792 = vunpack.c.h.b16 %v242
  %v793 = vunpack.c.l.b16 %v243
  %v794 = vunpack.c.h.b16 %v243
  %v795 = vunpack.c.l.b16 %v244
  %v796 = vunpack.c.h.b16 %v244
  %v797 = vunpack.c.l.b16 %v245
  %v798 = vunpack.c.h.b16 %v245
  %v799 = vunpack.c.l.b16 %v246
  %v800 = vunpack.c.h.b16 %v246
  %v801 = vunpack.c.l.b16 %v247
  %v802 = vunpack.c.h.b16 %v247
  %v803 = vunpack.c.l.b16 %v248
  %v804 = vunpack.c.h.b16 %v248
  %v805 = vunpack.c.l.b16 %v249
  %v806 = vunpack.c.h.b16 %v249
  %v807 = vunpack.c.l.b16 %v250
  %v808 = vunpack.c.h.b16 %v250
  %v809 = vunpack.c.l.b16 %v251
  %v810 = vunpack.c.h.b16 %v251
  %v811 = vunpack.c.l.b16 %v252
  %v812 = vunpack.c.h.b16 %v252
  %v813 = vunpack.c.l.b16 %v253
  %v814 = vunpack.c.h.b16 %v253
  %v815 = vunpack.c.l.b16 %v254
  %v816 = vunpack.c.h.b16 %v254
  %v817 = vunpack.c.l.b16 %v255
  %v818 = vunpack.c.h.b16 %v255
  %v819 = vunpack.c.l.b16 %v256
  %v820 = vunpack.c.h.b16 %v256
  %v821 = vunpack.c.l.b16 %v257
  %v822 = vunpack.c.h.b16 %v257
  %v823 = vunpack.c.l.b16 %v258
  %v824 = vunpack.c.h.b16 %v258
  %v825 = vunpack.c.l.b16 %v259
  %v826 = vunpack.c.h.b16 %v259
  %v827 = vunpack.c.l.b16 %v260
  %v828 = vunpack.c.h.b16 %v260
  %v829 = vunpack.c.l.b16 %v261
  %v830 = vunpack.c.h.b16 %v261
  %v831 = vunpack.c.l.b16 %v262
  %v832 = vunpack.c.h.b16 %v262
  %v833 = vunpack.c.l.b16 %v263
  %v834 = vunpack.c.h.b16 %v263
  %v835 = vunpack.c.l.b16 %v264
  %v836 = vunpack.c.h.b16 %v264
  %v837 = vunpack.c.l.b16 %v265
  %v838 = vunpack.c.h.b16 %v265
  %v839 = vunpack.c.l.b16 %v266
  %v840 = vunpack.c.h.b16 %v266
  %v841 = vunpack.c.l.b16 %v267
  %v842 = vunpack.c.h.b16 %v267
  %v843 = vunpack.c.l.b16 %v268
  %v844 = vunpack.c.h.b16 %v268
  %v845 = vunpack.c.l.b16 %v269
  %v846 = vunpack.c.h.b16 %v269
  %v847 = vunpack.c.l.b16 %v270
  %v848 = vunpack.c.h.b16 %v270
  %v849 = vunpack.c.l.b16 %v271
  %v850 = vunpack.c.h.b16 %v271
  %v851 = vunpack.c.l.b16 %v272
  %v852 = vunpack.c.h.b16 %v272
  %v853 = vunpack.c.l.b16 %v273
  %v854 = vunpack.c.h.b16 %v273
  %v855 = vunpack.c.l.b16 %v274
  %v856 = vunpack.c.h.b16 %v274
  %v857 = vunpack.c.l.b16 %v275
  %v858 = vunpack.c.h.b16 %v275
  %v859 = vunpack.c.l.b16 %v276
  %v860 = vunpack.c.h.b16 %v276
  %v861 = vunpack.c.l.b16 %v277
  %v862 = vunpack.c.h.b16 %v277
  %v863 = vunpack.c.l.b16 %v278
  %v864 = vunpack.c.h.b16 %v278
  %v865 = vunpack.c.l.b16 %v279
  %v866 = vunpack.c.h.b16 %v279
  %v867 = vunpack.c.l.b16 %v280
  %v868 = vunpack.c.h.b16 %v280
  %v869 = vunpack.c.l.b16 %v281
  %v870 = vunpack.c.h.b16 %v281
  %v871 = vunpack.c.l.b16 %v282
  %v872 = vunpack.c.h.b16 %v282
  %v873 = vunpack.c.l.b16 %v283
  %v874 = vunpack.c.h.b16 %v283
  %v875 = vunpack.c.l.b16 %v284
  %v876 = vunpack.c.h.b16 %v284
  %v877 = vunpack.c.l.b16 %v285
  %v878 = vunpack.c.h.b16 %v285
  %v879 = vunpack.c.l.b16 %v286
  %v880 = vunpack.c.h.b16 %v286
  %v881 = vunpack.c.l.b16 %v287
  %v882 = vunpack.c.h.b16 %v287
  %v883 = vunpack.c.l.b16 %v288
  %v884 = vunpack.c.h.b16 %v288
  %v885 = vunpack.c.l.b16 %v289
  %v886 = vunpack.c.h.b16 %v289
  %v887 = vunpack.c.l.b16 %v290
  %v888 = vunpack.c.h.b16 %v290
  %v889 = vunpack.c.l.b16 %v291
  %v890 = vunpack.c.h.b16 %v291
  %v891 = vunpack.c.l.b16 %v292
  %v892 = vunpack.c.h.b16 %v292
  %v893 = vunpack.c.l.b16 %v293
  %v894 = vunpack.c.h.b16 %v293
  %v895 = vunpack.c.l.b16 %v294
  %v896 = vunpack.c.h.b16 %v294
  %v897 = vunpack.c.l.b16 %v295
  %v898 = vunpack.c.h.b16 %v295
  %v899 = vunpack.c.l.b16 %v296
  %v900 = vunpack.c.h.b16 %v296
  %v901 = vunpack.c.l.b16 %v297
  %v902 = vunpack.c.h.b16 %v297
  %v903 = vunpack.c.l.b16 %v298
  %v904 = vunpack.c.h.b16 %v298
  %v905 = vunpack.c.l.b16 %v299
  %v906 = vunpack.c.h.b16 %v299
  %v907 = vunpack.c.l.b16 %v300
  %v908 = vunpack.c.h.b16 %v300
  %v909 = vunpack.c.l.b16 %v301
  %v910 = vunpack.c.h.b16 %v301
  %v911 = vunpack.c.l.b16 %v302
  %v912 = vunpack.c.h.b16 %v302
  %v913 = vunpack.c.l.b16 %v303
  %v914 = vunpack.c.h.b16 %v303
  %v915 = vunpack.c.l.b16 %v304
  %v916 = vunpack.c.h.b16 %v304
  %v917 = vunpack.c.l.b16 %v305
  %v918 = vunpack.c.h.b16 %v305
  %v919 = vunpack.c.l.b16 %v306
  %v920 = vunpack.c.h.b16 %v306
  %v921 = vunpack.c.l.b16 %v307
  %v922 = vunpack.c.h.b16 %v307
  %v923 = vunpack.c.l.b16 %v308
  %v924 = vunpack.c.h.b16 %v308
  %v925 = vunpack.c.l.b16 %v309
  %v926 = vunpack.c.h.b16 %v309
  %v927 = vunpack.c.l.b16 %v310
  %v928 = vunpack.c.h.b16 %v310
  %v929 = vunpack.c.l.b16 %v311
  %v930 = vunpack.c.h.b16 %v311
  %v931 = vunpack.c.l.b16 %v312
  %v932 = vunpack.c.h.b16 %v312
  %v933 = vunpack.c.l.b16 %v313
  %v934 = vunpack.c.h.b16 %v313
  %v935 = vunpack.c.l.b16 %v314
  %v936 = vunpack.c.h.b16 %v314
  %v937 = vunpack.c.l.b16 %v315
  %v938 = vunpack.c.h.b16 %v315
  %v939 = vunpack.c.l.b16 %v316
  %v940 = vunpack.c.h.b16 %v316
  %v941 = vunpack.c.l.b16 %v317
  %v942 = vunpack.c.h.b16 %v317
  %v943 = vunpack.c.l.b16 %v318
  %v944 = vunpack.c.h.b16 %v318
  %v945 = vunpack.c.l.b16 %v319
  %v946 = vunpack.c.h.b16 %v319
  %v947 = vunpack.c.l.b16 %v320
  %v948 = vunpack.c.h.b16 %v320
  %v949 = vunpack.c.l.b16 %v321
  %v950 = vunpack.c.h.b16 %v321
  %v951 = vunpack.c.l.b16 %v322
  %v952 = vunpack.c.h.b16 %v322
  %v953 = vunpack.c.l.b16 %v323
  %v954 = vunpack.c.h.b16 %v323
  %v955 = vunpack.c.l.b16 %v324
  %v956 = vunpack.c.h.b16 %v324
  %v957 = vunpack.c.l.b16 %v325
  %v958 = vunpack.c.h.b16 %v325
  %v959 = vunpack.c.l.b16 %v326
  %v960 = vunpack.c.h.b16 %v326
  %v961 = vunpack.c.l.b16 %v327
  %v962 = vunpack.c.h.b16 %v327
  %v963 = vunpack.c.l.b16 %v328
  %v964 = vunpack.c.h.b16 %v328
  %v965 = vunpack.c.l.b16 %v329
  %v966 = vunpack.c.h.b16 %v329
  %v967 = vunpack.c.l.b16 %v330
  %v968 = vunpack.c.h.b16 %v330
  %v969 = vunpack.c.l.b16 %v331
  %v970 = vunpack.c.h.b16 %v331
  %v971 = vunpack.c.l.b16 %v332
  %v972 = vunpack.c.h.b16 %v332
  %v973 = vunpack.c.l.b16 %v333
  %v974 = vunpack.c.h.b16 %v333
  %v975 = vunpack.c.l.b16 %v334
  %v976 = vunpack.c.h.b16 %v334
  %v977 = vunpack.c.l.b16 %v335
  %v978 = vunpack.c.h.b16 %v335
  %v979 = vunpack.c.l.b16 %v336
  %v980 = vunpack.c.h.b16 %v336
  %v981 = vunpack.c.l.b16 %v337
  %v982 = vunpack.c.h.b16 %v337
  %v983 = vunpack.c.l.b16 %v338
  %v984 = vunpack.c.h.b16 %v338
  %v985 = vunpack.c.l.b16 %v339
  %v986 = vunpack.c.h.b16 %v339
  %v987 = vunpack.c.l.b16 %v340
  %v988 = vunpack.c.h.b16 %v340
  %v989 = vunpack.c.l.b16 %v341
  %v990 = vunpack.c.h.b16 %v341
  %v991 = vunpack.c.l.b16 %v342
  %v992 = vunpack.c.h.b16 %v342
  %v993 = vunpack.c.l.b16 %v343
  %v994 = vunpack.c.h.b16 %v343
  %v995 = vunpack.c.l.b16 %v344
  %v996 = vunpack.c.h.b16 %v344
  %v997 = vunpack.c.l.b16 %v345
  %v998 = vunpack.c.h.b16 %v345
  %v999 = vunpack.c.l.b16 %v346
  %v1000 = vunpack.c.h.b16 %v346
  %v1001 = vunpack.c.l.b16 %v347
  %v1002 = vunpack.c.h.b16 %v347
  %v1003 = vunpack.c.l.b16 %v348
  %v1004 = vunpack.c.h.b16 %v348
  %v1005 = vunpack.c.l.b16 %v349
  %v1006 = vunpack.c.h.b16 %v349
  %v1007 = vunpack.c.l.b16 %v350
  %v1008 = vunpack.c.h.b16 %v350
  %v1009 = vunpack.c.l.b16 %v351
  %v1010 = vunpack.c.h.b16 %v351
  %v1011 = vunpack.c.l.b16 %v352
  %v1012 = vunpack.c.h.b16 %v352
  %v1013 = vunpack.c.l.b16 %v353
  %v1014 = vunpack.c.h.b16 %v353
  %v1015 = vunpack.c.l.b16 %v354
  %v1016 = vunpack.c.h.b16 %v354
  %v1017 = vunpack.c.l.b16 %v355
  %v1018 = vunpack.c.h.b16 %v355
  %v1019 = vunpack.c.l.b16 %v356
  %v1020 = vunpack.c.h.b16 %v356
  %v1021 = vunpack.c.l.b16 %v357
  %v1022 = vunpack.c.h.b16 %v357
  %v1023 = vunpack.c.l.b16 %v358
  %v1024 = vunpack.c.h.b16 %v358
  %v1025 = vunpack.c.l.b16 %v359
  %v1026 = vunpack.c.h.b16 %v359
  %v1027 = vunpack.c.l.b16 %v360
  %v1028 = vunpack.c.h.b16 %v360
  %v1029 = vunpack.c.l.b16 %v361
  %v1030 = vunpack.c.h.b16 %v361
  %v1031 = vunpack.c.l.b16 %v362
  %v1032 = vunpack.c.h.b16 %v362
  %v1033 = vunpack.c.l.b16 %v363
  %v1034 = vunpack.c.h.b16 %v363
  %v1035 = vunpack.c.l.b16 %v364
  %v1036 = vunpack.c.h.b16 %v364
  %v1037 = vunpack.c.l.b16 %v365
  %v1038 = vunpack.c.h.b16 %v365
  %v1039 = vunpack.c.l.b16 %v366
  %v1040 = vunpack.c.h.b16 %v366
  %v1041 = vunpack.c.l.b16 %v367
  %v1042 = vunpack.c.h.b16 %v367
  %v1043 = vunpack.c.l.b16 %v368
  %v1044 = vunpack.c.h.b16 %v368
  %v1045 = vunpack.c.l.b16 %v369
  %v1046 = vunpack.c.h.b16 %v369
  %v1047 = vunpack.c.l.b16 %v370
  %v1048 = vunpack.c.h.b16 %v370
  %v1049 = vunpack.c.l.b16 %v371
  %v1050 = vunpack.c.h.b16 %v371
  %v1051 = vunpack.c.l.b16 %v372
  %v1052 = vunpack.c.h.b16 %v372
  %v1053 = vunpack.c.l.b16 %v373
  %v1054 = vunpack.c.h.b16 %v373
  %v1055 = vunpack.c.l.b16 %v374
  %v1056 = vunpack.c.h.b16 %v374
  %v1057 = vunpack.c.l.b16 %v375
  %v1058 = vunpack.c.h.b16 %v375
  %v1059 = vunpack.c.l.b16 %v376
  %v1060 = vunpack.c.h.b16 %v376
  %v1061 = vunpack.c.l.b16 %v377
  %v1062 = vunpack.c.h.b16 %v377
  %v1063 = vunpack.c.l.b16 %v378
  %v1064 = vunpack.c.h.b16 %v378
  %v1065 = vunpack.c.l.b16 %v379
  %v1066 = vunpack.c.h.b16 %v379
  %v1067 = vunpack.c.l.b16 %v380
  %v1068 = vunpack.c.h.b16 %v380
  %v1069 = vunpack.c.l.b16 %v381
  %v1070 = vunpack.c.h.b16 %v381
  %v1071 = vunpack.c.l.b16 %v382
  %v1072 = vunpack.c.h.b16 %v382
  %v1073 = vunpack.c.l.b16 %v383
  %v1074 = vunpack.c.h.b16 %v383
  %v1075 = vunpack.c.l.b16 %v384
  %v1076 = vunpack.c.h.b16 %v384
  %v1077 = vunpack.c.l.b16 %v385
  %v1078 = vunpack.c.h.b16 %v385
  %v1079 = vunpack.c.l.b16 %v386
  %v1080 = vunpack.c.h.b16 %v386
  %v1081 = vunpack.c.l.b16 %v387
  %v1082 = vunpack.c.h.b16 %v387
  %v1083 = vunpack.c.l.b16 %v388
  %v1084 = vunpack.c.h.b16 %v388
  %v1085 = vunpack.c.l.b16 %v389
  %v1086 = vunpack.c.h.b16 %v389
  %v1087 = vunpack.c.l.b16 %v390
  %v1088 = vunpack.c.h.b16 %v390
  %v1089 = vunpack.c.l.b16 %v391
  %v1090 = vunpack.c.h.b16 %v391
  %v1091 = vunpack.c.l.b16 %v392
  %v1092 = vunpack.c.h.b16 %v392
  %v1093 = vunpack.c.l.b16 %v393
  %v1094 = vunpack.c.h.b16 %v393
  %v1095 = vunpack.c.l.b16 %v394
  %v1096 = vunpack.c.h.b16 %v394
  %v1097 = vunpack.c.l.b16 %v395
  %v1098 = vunpack.c.h.b16 %v395
  %v1099 = vunpack.c.l.b16 %v396
  %v1100 = vunpack.c.h.b16 %v396
  %v1101 = vunpack.c.l.b16 %v397
  %v1102 = vunpack.c.h.b16 %v397
  %v1103 = vunpack.c.l.b16 %v398
  %v1104 = vunpack.c.h.b16 %v398
  %v1105 = vunpack.c.l.b16 %v399
  %v1106 = vunpack.c.h.b16 %v399
  %v1107 = vunpack.c.l.b16 %v400
  %v1108 = vunpack.c.h.b16 %v400
  %v1109 = vunpack.c.l.b16 %v401
  %v1110 = vunpack.c.h.b16 %v401
  %v1111 = vunpack.c.l.b16 %v402
  %v1112 = vunpack.c.h.b16 %v402
  %v1113 = vunpack.c.l.b16 %v403
  %v1114 = vunpack.c.h.b16 %v403
  %v1115 = vunpack.c.l.b16 %v404
  %v1116 = vunpack.c.h.b16 %v404
  %v1117 = vunpack.c.l.b16 %v405
  %v1118 = vunpack.c.h.b16 %v405
  %v1119 = vunpack.c.l.b16 %v406
  %v1120 = vunpack.c.h.b16 %v406
  %v1121 = vunpack.c.l.b16 %v407
  %v1122 = vunpack.c.h.b16 %v407
  %v1123 = vunpack.c.l.b16 %v408
  %v1124 = vunpack.c.h.b16 %v408
  %v1125 = vunpack.c.l.b16 %v409
  %v1126 = vunpack.c.h.b16 %v409
  %v1127 = vunpack.c.l.b16 %v410
  %v1128 = vunpack.c.h.b16 %v410
  %v1129 = vunpack.c.l.b16 %v411
  %v1130 = vunpack.c.h.b16 %v411
  %v1131 = vunpack.c.l.b16 %v412
  %v1132 = vunpack.c.h.b16 %v412
  %v1133 = vpack.c.b16 %v659, %v653
  %v1134 = vpack.c.b16 %v660, %v654
  %v1135 = vpack.c.b16 %v661, %v655
  %v1136 = vpack.c.b16 %v662, %v656
  %v1137 = vpack.c.b16 %v663, %v657
  %v1138 = vpack.c.b16 %v664, %v658
  %v1139 = vpack.c.b16 %v671, %v665
  %v1140 = vpack.c.b16 %v672, %v666
  %v1141 = vpack.c.b16 %v673, %v667
  %v1142 = vpack.c.b16 %v674, %v668
  %v1143 = vpack.c.b16 %v675, %v669
  %v1144 = vpack.c.b16 %v676, %v670
  %v1145 = vpack.c.b16 %v683, %v677
  %v1146 = vpack.c.b16 %v684, %v678
  %v1147 = vpack.c.b16 %v685, %v679
  %v1148 = vpack.c.b16 %v686, %v680
  %v1149 = vpack.c.b16 %v687, %v681
  %v1150 = vpack.c.b16 %v688, %v682
  %v1151 = vpack.c.b16 %v695, %v689
  %v1152 = vpack.c.b16 %v696, %v690
  %v1153 = vpack.c.b16 %v697, %v691
  %v1154 = vpack.c.b16 %v698, %v692
  %v1155 = vpack.c.b16 %v699, %v693
  %v1156 = vpack.c.b16 %v700, %v694
  %v1157 = vpack.c.b16 %v707, %v701
  %v1158 = vpack.c.b16 %v708, %v702
  %v1159 = vpack.c.b16 %v709, %v703
  %v1160 = vpack.c.b16 %v710, %v704
  %v1161 = vpack.c.b16 %v711, %v705
  %v1162 = vpack.c.b16 %v712, %v706
  %v1163 = vpack.c.b16 %v719, %v713
  %v1164 = vpack.c.b16 %v720, %v714
  %v1165 = vpack.c.b16 %v721, %v715
  %v1166 = vpack.c.b16 %v722, %v716
  %v1167 = vpack.c.b16 %v723, %v717
  %v1168 = vpack.c.b16 %v724, %v718
  %v1169 = vpack.c.b16 %v731, %v725
  %v1170 = vpack.c.b16 %v732, %v726
  %v1171 = vpack.c.b16 %v733, %v727
  %v1172 = vpack.c.b16 %v734, %v728
  %v1173 = vpack.c.b16 %v735, %v729
  %v1174 = vpack.c.b16 %v736, %v730
  %v1175 = vpack.c.b16 %v743, %v737
  %v1176 = vpack.c.b16 %v744, %v738
  %v1177 = vpack.c.b16 %v745, %v739
  %v1178 = vpack.c.b16 %v746, %v740
  %v1179 = vpack.c.b16 %v747, %v741
  %v1180 = vpack.c.b16 %v748, %v742
  %v1181 = vpack.c.b16 %v755, %v749
  %v1182 = vpack.c.b16 %v756, %v750
  %v1183 = vpack.c.b16 %v757, %v751
  %v1184 = vpack.c.b16 %v758, %v752
  %v1185 = vpack.c.b16 %v759, %v753
  %v1186 = vpack.c.b16 %v760, %v754
  %v1187 = vpack.c.b16 %v767, %v761
  %v1188 = vpack.c.b16 %v768, %v762
  %v1189 = vpack.c.b16 %v769, %v763
  %v1190 = vpack.c.b16 %v770, %v764
  %v1191 = vpack.c.b16 %v771, %v765
  %v1192 = vpack.c.b16 %v772, %v766
  %v1193 = vpack.c.b16 %v779, %v773
  %v1194 = vpack.c.b16 %v780, %v774
  %v1195 = vpack.c.b16 %v781, %v775
  %v1196 = vpack.c.b16 %v782, %v776
  %v1197 = vpack.c.b16 %v783, %v777
  %v1198 = vpack.c.b16 %v784, %v778
  %v1199 = vpack.c.b16 %v791, %v785
  %v1200 = vpack.c.b16 %v792, %v786
  %v1201 = vpack.c.b16 %v793, %v787
  %v1202 = vpack.c.b16 %v794, %v788
  %v1203 = vpack.c.b16 %v795, %v789
  %v1204 = vpack.c.b16 %v796, %v790
  %v1205 = vpack.c.b16 %v803, %v797
  %v1206 = vpack.c.b16 %v804, %v798
  %v1207 = vpack.c.b16 %v805, %v799
  %v1208 = vpack.c.b16 %v806, %v800
  %v1209 = vpack.c.b16 %v807, %v801
  %v1210 = vpack.c.b16 %v808, %v802
  %v1211 = vpack.c.b16 %v815, %v809
  %v1212 = vpack.c.b16 %v816, %v810
  %v1213 = vpack.c.b16 %v817, %v811
  %v1214 = vpack.c.b16 %v818, %v812
  %v1215 = vpack.c.b16 %v819, %v813
  %v1216 = vpack.c.b16 %v820, %v814
  %v1217 = vpack.c.b16 %v827, %v821
  %v1218 = vpack.c.b16 %v828, %v822
  %v1219 = vpack.c.b16 %v829, %v823
  %v1220 = vpack.c.b16 %v830, %v824
  %v1221 = vpack.c.b16 %v831, %v825
  %v1222 = vpack.c.b16 %v832, %v826
  %v1223 = vpack.c.b16 %v839, %v833
  %v1224 = vpack.c.b16 %v840, %v834
  %v1225 = vpack.c.b16 %v841, %v835
  %v1226 = vpack.c.b16 %v842, %v836
  %v1227 = vpack.c.b16 %v843, %v837
  %v1228 = vpack.c.b16 %v844, %v838
  %v1229 = vpack.c.b16 %v851, %v845
  %v1230 = vpack.c.b16 %v852, %v846
  %v1231 = vpack.c.b16 %v853, %v847
  %v1232 = vpack.c.b16 %v854, %v848
  %v1233 = vpack.c.b16 %v855, %v849
  %v1234 = vpack.c.b16 %v856, %v850
  %v1235 = vpack.c.b16 %v863, %v857
  %v1236 = vpack.c.b16 %v864, %v858
  %v1237 = vpack.c.b16 %v865, %v859
  %v1238 = vpack.c.b16 %v866, %v860
  %v1239 = vpack.c.b16 %v867, %v861
  %v1240 = vpack.c.b16 %v868, %v862
  %v1241 = vpack.c.b16 %v875, %v869
  %v1242 = vpack.c.b16 %v876, %v870
  %v1243 = vpack.c.b16 %v877, %v871
  %v1244 = vpack.c.b16 %v878, %v872
  %v1245 = vpack.c.b16 %v879, %v873
  %v1246 = vpack.c.b16 %v880, %v874
  %v1247 = vpack.c.b16 %v887, %v881
  %v1248 = vpack.c.b16 %v888, %v882
  %v1249 = vpack.c.b16 %v889, %v883
  %v1250 = vpack.c.b16 %v890, %v884
  %v1251 = vpack.c.b16 %v891, %v885
  %v1252 = vpack.c.b16 %v892, %v886
  %v1253 = vpack.c.b16 %v899, %v893
  %v1254 = vpack.c.b16 %v900, %v894
  %v1255 = vpack.c.b16 %v901, %v895
  %v1256 = vpack.c.b16 %v902, %v896
  %v1257 = vpack.c.b16 %v903, %v897
  %v1258 = vpack.c.b16 %v904, %v898
  %v1259 = vpack.c.b16 %v911, %v905
  %v1260 = vpack.c.b16 %v912, %v906
  %v1261 = vpack.c.b16 %v913, %v907
  %v1262 = vpack.c.b16 %v914, %v908
  %v1263 = vpack.c.b16 %v915, %v909
  %v1264 = vpack.c.b16 %v916, %v910
  %v1265 = vpack.c.b16 %v923, %v917
  %v1266 = vpack.c.b16 %v924, %v918
  %v1267 = vpack.c.b16 %v925, %v919
  %v1268 = vpack.c.b16 %v926, %v920
  %v1269 = vpack.c.b16 %v927, %v921
  %v1270 = vpack.c.b16 %v928, %v922
  %v1271 = vpack.c.b16 %v935, %v929
  %v1272 = vpack.c.b16 %v936, %v930
  %v1273 = vpack.c.b16 %v937, %v931
  %v1274 = vpack.c.b16 %v938, %v932
  %v1275 = vpack.c.b16 %v939, %v933
  %v1276 = vpack.c.b16 %v940, %v934
  %v1277 = vpack.c.b16 %v947, %v941
  %v1278 = vpack.c.b16 %v948, %v942
  %v1279 = vpack.c.b16 %v949, %v943
  %v1280 = vpack.c.b16 %v950, %v944
  %v1281 = vpack.c.b16 %v951, %v945
  %v1282 = vpack.c.b16 %v952, %v946
  %v1283 = vpack.c.b16 %v959, %v953
  %v1284 = vpack.c.b16 %v960, %v954
  %v1285 = vpack.c.b16 %v961, %v955
  %v1286 = vpack.c.b16 %v962, %v956
  %v1287 = vpack.c.b16 %v963, %v957
  %v1288 = vpack.c.b16 %v964, %v958
  %v1289 = vpack.c.b16 %v971, %v965
  %v1290 = vpack.c.b16 %v972, %v966
  %v1291 = vpack.c.b16 %v973, %v967
  %v1292 = vpack.c.b16 %v974, %v968
  %v1293 = vpack.c.b16 %v975, %v969
  %v1294 = vpack.c.b16 %v976, %v970
  %v1295 = vpack.c.b16 %v983, %v977
  %v1296 = vpack.c.b16 %v984, %v978
  %v1297 = vpack.c.b16 %v985, %v979
  %v1298 = vpack.c.b16 %v986, %v980
  %v1299 = vpack.c.b16 %v987, %v981
  %v1300 = vpack.c.b16 %v988, %v982
  %v1301 = vpack.c.b16 %v995, %v989
  %v1302 = vpack.c.b16 %v996, %v990
  %v1303 = vpack.c.b16 %v997, %v991
  %v1304 = vpack.c.b16 %v998, %v992
  %v1305 = vpack.c.b16 %v999, %v993
  %v1306 = vpack.c.b16 %v1000, %v994
  %v1307 = vpack.c.b16 %v1007, %v1001
  %v1308 = vpack.c.b16 %v1008, %v1002
  %v1309 = vpack.c.b16 %v1009, %v1003
  %v1310 = vpack.c.b16 %v1010, %v1004
  %v1311 = vpack.c.b16 %v1011, %v1005
  %v1312 = vpack.c.b16 %v1012, %v1006
  %v1313 = vpack.c.b16 %v1019, %v1013
  %v1314 = vpack.c.b16 %v1020, %v1014
  %v1315 = vpack.c.b16 %v1021, %v1015
  %v1316 = vpack.c.b16 %v1022, %v1016
  %v1317 = vpack.c.b16 %v1023, %v1017
  %v1318 = vpack.c.b16 %v1024, %v1018
  %v1319 = vpack.c.b16 %v1031, %v1025
  %v1320 = vpack.c.b16 %v1032, %v1026
  %v1321 = vpack.c.b16 %v1033, %v1027
  %v1322 = vpack.c.b16 %v1034, %v1028
  %v1323 = vpack.c.b16 %v1035, %v1029
  %v1324 = vpack.c.b16 %v1036, %v1030
  %v1325 = vpack.c.b16 %v1043, %v1037
  %v1326 = vpack.c.b16 %v1044, %v1038
  %v1327 = vpack.c.b16 %v1045, %v1039
  %v1328 = vpack.c.b16 %v1046, %v1040
  %v1329 = vpack.c.b16 %v1047, %v1041
  %v1330 = vpack.c.b16 %v1048, %v1042
  %v1331 = vpack.c.b16 %v1055, %v1049
  %v1332 = vpack.c.b16 %v1056, %v1050
  %v1333 = vpack.c.b16 %v1057, %v1051
  %v1334 = vpack.c.b16 %v1058, %v1052
  %v1335 = vpack.c.b16 %v1059, %v1053
  %v1336 = vpack.c.b16 %v1060, %v1054
  %v1337 = vpack.c.b16 %v1067, %v1061
  %v1338 = vpack.c.b16 %v1068, %v1062
  %v1339 = vpack.c.b16 %v1069, %v1063
  %v1340 = vpack.c.b16 %v1070, %v1064
  %v1341 = vpack.c.b16 %v1071, %v1065
  %v1342 = vpack.c.b16 %v1072, %v1066
  %v1343 = vpack.c.b16 %v1079, %v1073
  %v1344 = vpack.c.b16 %v1080, %v1074
  %v1345 = vpack.c.b16 %v1081, %v1075
  %v1346 = vpack.c.b16 %v1082, %v1076
  %v1347 = vpack.c.b16 %v1083, %v1077
  %v1348 = vpack.c.b16 %v1084, %v1078
  %v1349 = vpack.c.b16 %v1091, %v1085
  %v1350 = vpack.c.b16 %v1092, %v1086
  %v1351 = vpack.c.b16 %v1093, %v1087
  %v1352 = vpack.c.b16 %v1094, %v1088
  %v1353 = vpack.c.b16 %v1095, %v1089
  %v1354 = vpack.c.b16 %v1096, %v1090
  %v1355 = vpack.c.b16 %v1103, %v1097
  %v1356 = vpack.c.b16 %v1104, %v1098
  %v1357 = vpack.c.b16 %v1105, %v1099
  %v1358 = vpack.c.b16 %v1106, %v1100
  %v1359 = vpack.c.b16 %v1107, %v1101
  %v1360 = vpack.c.b16 %v1108, %v1102
  %v1361 = vpack.c.b16 %v1115, %v1109
  %v1362 = vpack.c.b16 %v1116, %v1110
  %v1363 = vpack.c.b16 %v1117, %v1111
  %v1364 = vpack.c.b16 %v1118, %v1112
  %v1365 = vpack.c.b16 %v1119, %v1113
  %v1366 = vpack.c.b16 %v1120, %v1114
  %v1367 = vpack.c.b16 %v1127, %v1121
  %v1368 = vpack.c.b16 %v1128, %v1122
  %v1369 = vpack.c.b16 %v1129, %v1123
  %v1370 = vpack.c.b16 %v1130, %v1124
  %v1371 = vpack.c.b16 %v1131, %v1125
  %v1372 = vpack.c.b16 %v1132, %v1126
  %1613 = vmatprep.subr.bf16.mxu0 %v1176
  %1614 = vmatpush1.bf16.msra.mxu0 %v1175
  %1615 = vmatprep.subr.bf16.mxu0 %v1170
  %1616 = vmatpush1.bf16.msra.mxu0 %v1169
  %1617 = vmatprep.subr.bf16.mxu0 %v1164
  %1618 = vmatpush1.bf16.msra.mxu0 %v1163
  %1619 = vmatprep.subr.bf16.mxu0 %v1158
  %1620 = vmatpush1.bf16.msra.mxu0 %v1157
  %1621 = vmatprep.subr.bf16.mxu0 %v1152
  %1622 = vmatpush1.bf16.msra.mxu0 %v1151
  %1623 = vmatprep.subr.bf16.mxu0 %v1146
  %1624 = vmatpush1.bf16.msra.mxu0 %v1145
  %1625 = vmatprep.subr.bf16.mxu0 %v1140
  %1626 = vmatpush1.bf16.msra.mxu0 %v1139
  %1627 = vmatprep.subr.bf16.mxu0 %v1134
  %1628 = vmatpush1.bf16.msra.mxu0 %v1133
  %1629 = vmatprep.subr.bf16.mxu0 %v1224
  %1630 = vmatpush2.bf16.msra.mxu0 %v1223
  %1631 = vmatprep.subr.bf16.mxu0 %v1218
  %1632 = vmatpush2.bf16.msra.mxu0 %v1217
  %1633 = vmatprep.subr.bf16.mxu0 %v1212
  %1634 = vmatpush2.bf16.msra.mxu0 %v1211
  %1635 = vmatprep.subr.bf16.mxu0 %v1206
  %1636 = vmatpush2.bf16.msra.mxu0 %v1205
  %1637 = vmatprep.subr.bf16.mxu0 %v1200
  %1638 = vmatpush2.bf16.msra.mxu0 %v1199
  %1639 = vmatprep.subr.bf16.mxu0 %v1194
  %1640 = vmatpush2.bf16.msra.mxu0 %v1193
  %1641 = vmatprep.subr.bf16.mxu0 %v1188
  %1642 = vmatpush2.bf16.msra.mxu0 %v1187
  %1643 = vmatprep.subr.bf16.mxu0 %v1182
  %1644 = vmatpush2.bf16.msra.mxu0 %v1181
  %1645 = vmatprep.mubr.bf16.mxu0 %v79
  %1646 = vmatmul.mubr.bf16.gmra.mxu0 %v53
  %v1647 = vpop.f32.mrf.mxu0
  %v1648 = vadd.f32 0.0, %v1647
  %v1649 = vpop.f32.mrf.mxu0
  %v1650 = vadd.f32 0.0, %v1649
  %v1651 = vpop.f32.mrf.mxu0
  %v1652 = vadd.f32 0.0, %v1651
  %v1653 = vpop.f32.mrf.mxu0
  %v1654 = vadd.f32 0.0, %v1653
  %1655 = vmatprep.mubr.bf16.mxu0 %v87
  %1656 = vmatmul.mubr.bf16.gmra.mxu0 %v54
  %v1657 = vpop.f32.mrf.mxu0
  %v1658 = vadd.f32 0.0, %v1657
  %v1659 = vpop.f32.mrf.mxu0
  %v1660 = vadd.f32 0.0, %v1659
  %v1661 = vpop.f32.mrf.mxu0
  %v1662 = vadd.f32 0.0, %v1661
  %v1663 = vpop.f32.mrf.mxu0
  %v1664 = vadd.f32 0.0, %v1663
  %1665 = vmatprep.mubr.bf16.mxu0 %v99
  %1666 = vmatmul.mubr.bf16.gmra.mxu0 %v55
  %v1667 = vpop.f32.mrf.mxu0
  %v1668 = vadd.f32 0.0, %v1667
  %v1669 = vpop.f32.mrf.mxu0
  %v1670 = vadd.f32 0.0, %v1669
  %v1671 = vpop.f32.mrf.mxu0
  %v1672 = vadd.f32 0.0, %v1671
  %v1673 = vpop.f32.mrf.mxu0
  %v1674 = vadd.f32 0.0, %v1673
  %1675 = vmatprep.mubr.bf16.mxu0 %v107
  %1676 = vmatmul.mubr.bf16.gmra.mxu0 %v56
  %v1677 = vpop.f32.mrf.mxu0
  %v1678 = vadd.f32 0.0, %v1677
  %v1679 = vpop.f32.mrf.mxu0
  %v1680 = vadd.f32 0.0, %v1679
  %v1681 = vpop.f32.mrf.mxu0
  %v1682 = vadd.f32 0.0, %v1681
  %v1683 = vpop.f32.mrf.mxu0
  %v1684 = vadd.f32 0.0, %v1683
  %1685 = vdwg.mxu0
  %1686 = vmatprep.subr.bf16.mxu0 %v1272
  %1687 = vmatpush1.bf16.msra.mxu0 %v1271
  %1688 = vmatprep.subr.bf16.mxu0 %v1266
  %1689 = vmatpush1.bf16.msra.mxu0 %v1265
  %1690 = vmatprep.subr.bf16.mxu0 %v1260
  %1691 = vmatpush1.bf16.msra.mxu0 %v1259
  %1692 = vmatprep.subr.bf16.mxu0 %v1254
  %1693 = vmatpush1.bf16.msra.mxu0 %v1253
  %1694 = vmatprep.subr.bf16.mxu0 %v1248
  %1695 = vmatpush1.bf16.msra.mxu0 %v1247
  %1696 = vmatprep.subr.bf16.mxu0 %v1242
  %1697 = vmatpush1.bf16.msra.mxu0 %v1241
  %1698 = vmatprep.subr.bf16.mxu0 %v1236
  %1699 = vmatpush1.bf16.msra.mxu0 %v1235
  %1700 = vmatprep.subr.bf16.mxu0 %v1230
  %1701 = vmatpush1.bf16.msra.mxu0 %v1229
  %1702 = vmatprep.subr.bf16.mxu0 %v1320
  %1703 = vmatpush2.bf16.msra.mxu0 %v1319
  %1704 = vmatprep.subr.bf16.mxu0 %v1314
  %1705 = vmatpush2.bf16.msra.mxu0 %v1313
  %1706 = vmatprep.subr.bf16.mxu0 %v1308
  %1707 = vmatpush2.bf16.msra.mxu0 %v1307
  %1708 = vmatprep.subr.bf16.mxu0 %v1302
  %1709 = vmatpush2.bf16.msra.mxu0 %v1301
  %1710 = vmatprep.subr.bf16.mxu0 %v1296
  %1711 = vmatpush2.bf16.msra.mxu0 %v1295
  %1712 = vmatprep.subr.bf16.mxu0 %v1290
  %1713 = vmatpush2.bf16.msra.mxu0 %v1289
  %1714 = vmatprep.subr.bf16.mxu0 %v1284
  %1715 = vmatpush2.bf16.msra.mxu0 %v1283
  %1716 = vmatprep.subr.bf16.mxu0 %v1278
  %1717 = vmatpush2.bf16.msra.mxu0 %v1277
  %1718 = vmatprep.mubr.bf16.mxu0 %v134
  %1719 = vmatmul.mubr.bf16.gmra.mxu0 %v115
  %v1720 = vpop.f32.mrf.mxu0
  %v1721 = vadd.f32 %v1648, %v1720
  %v1722 = vpop.f32.mrf.mxu0
  %v1723 = vadd.f32 %v1650, %v1722
  %v1724 = vpop.f32.mrf.mxu0
  %v1725 = vadd.f32 %v1652, %v1724
  %v1726 = vpop.f32.mrf.mxu0
  %v1727 = vadd.f32 %v1654, %v1726
  %1728 = vmatprep.mubr.bf16.mxu0 %v140
  %1729 = vmatmul.mubr.bf16.gmra.mxu0 %v117
  %v1730 = vpop.f32.mrf.mxu0
  %v1731 = vadd.f32 %v1658, %v1730
  %v1732 = vpop.f32.mrf.mxu0
  %v1733 = vadd.f32 %v1660, %v1732
  %v1734 = vpop.f32.mrf.mxu0
  %v1735 = vadd.f32 %v1662, %v1734
  %v1736 = vpop.f32.mrf.mxu0
  %v1737 = vadd.f32 %v1664, %v1736
  %1738 = vmatprep.mubr.bf16.mxu0 %v147
  %1739 = vmatmul.mubr.bf16.gmra.mxu0 %v120
  %v1740 = vpop.f32.mrf.mxu0
  %v1741 = vadd.f32 %v1668, %v1740
  %v1742 = vpop.f32.mrf.mxu0
  %v1743 = vadd.f32 %v1670, %v1742
  %v1744 = vpop.f32.mrf.mxu0
  %v1745 = vadd.f32 %v1672, %v1744
  %v1746 = vpop.f32.mrf.mxu0
  %v1747 = vadd.f32 %v1674, %v1746
  %1748 = vmatprep.mubr.bf16.mxu0 %v153
  %1749 = vmatmul.mubr.bf16.gmra.mxu0 %v122
  %v1750 = vpop.f32.mrf.mxu0
  %v1751 = vadd.f32 %v1678, %v1750
  %v1752 = vpop.f32.mrf.mxu0
  %v1753 = vadd.f32 %v1680, %v1752
  %v1754 = vpop.f32.mrf.mxu0
  %v1755 = vadd.f32 %v1682, %v1754
  %v1756 = vpop.f32.mrf.mxu0
  %v1757 = vadd.f32 %v1684, %v1756
  %1758 = vdwg.mxu0
  %1759 = vmatprep.subr.bf16.mxu0 %v1368
  %1760 = vmatpush1.bf16.msra.mxu0 %v1367
  %1761 = vmatprep.subr.bf16.mxu0 %v1362
  %1762 = vmatpush1.bf16.msra.mxu0 %v1361
  %1763 = vmatprep.subr.bf16.mxu0 %v1356
  %1764 = vmatpush1.bf16.msra.mxu0 %v1355
  %1765 = vmatprep.subr.bf16.mxu0 %v1350
  %1766 = vmatpush1.bf16.msra.mxu0 %v1349
  %1767 = vmatprep.subr.bf16.mxu0 %v1344
  %1768 = vmatpush1.bf16.msra.mxu0 %v1343
  %1769 = vmatprep.subr.bf16.mxu0 %v1338
  %1770 = vmatpush1.bf16.msra.mxu0 %v1337
  %1771 = vmatprep.subr.bf16.mxu0 %v1332
  %1772 = vmatpush1.bf16.msra.mxu0 %v1331
  %1773 = vmatprep.subr.bf16.mxu0 %v1326
  %1774 = vmatpush1.bf16.msra.mxu0 %v1325
  %1775 = vmatprep.subr.bf16.mxu0 0
  %1776 = vmatpush2.bf16.msra.mxu0 0
  %1777 = vmatprep.subr.bf16.mxu0 0
  %1778 = vmatpush2.bf16.msra.mxu0 0
  %1779 = vmatprep.subr.bf16.mxu0 0
  %1780 = vmatpush2.bf16.msra.mxu0 0
  %1781 = vmatprep.subr.bf16.mxu0 0
  %1782 = vmatpush2.bf16.msra.mxu0 0
  %1783 = vmatprep.subr.bf16.mxu0 0
  %1784 = vmatpush2.bf16.msra.mxu0 0
  %1785 = vmatprep.subr.bf16.mxu0 0
  %1786 = vmatpush2.bf16.msra.mxu0 0
  %1787 = vmatprep.subr.bf16.mxu0 0
  %1788 = vmatpush2.bf16.msra.mxu0 0
  %1789 = vmatprep.subr.bf16.mxu0 0
  %1790 = vmatpush2.bf16.msra.mxu0 0
  %1791 = vmatprep.mubr.bf16.mxu0 0
  %1792 = vmatmul.mubr.bf16.gmra.mxu0 %v161
  %v1793 = vpop.f32.mrf.mxu0
  %v1794 = vadd.f32 %v1721, %v1793
  %v1795 = vpop.f32.mrf.mxu0
  %v1796 = vadd.f32 %v1723, %v1795
  %v1797 = vpop.f32.mrf.mxu0
  %v1798 = vadd.f32 %v1725, %v1797
  %v1799 = vpop.f32.mrf.mxu0
  %v1800 = vadd.f32 %v1727, %v1799
  %1801 = vmatprep.mubr.bf16.mxu0 0
  %1802 = vmatmul.mubr.bf16.gmra.mxu0 %v163
  %v1803 = vpop.f32.mrf.mxu0
  %v1804 = vadd.f32 %v1731, %v1803
  %v1805 = vpop.f32.mrf.mxu0
  %v1806 = vadd.f32 %v1733, %v1805
  %v1807 = vpop.f32.mrf.mxu0
  %v1808 = vadd.f32 %v1735, %v1807
  %v1809 = vpop.f32.mrf.mxu0
  %v1810 = vadd.f32 %v1737, %v1809
  %1811 = vmatprep.mubr.bf16.mxu0 0
  %1812 = vmatmul.mubr.bf16.gmra.mxu0 %v166
  %v1813 = vpop.f32.mrf.mxu0
  %v1814 = vadd.f32 %v1741, %v1813
  %v1815 = vpop.f32.mrf.mxu0
  %v1816 = vadd.f32 %v1743, %v1815
  %v1817 = vpop.f32.mrf.mxu0
  %v1818 = vadd.f32 %v1745, %v1817
  %v1819 = vpop.f32.mrf.mxu0
  %v1820 = vadd.f32 %v1747, %v1819
  %1821 = vmatprep.mubr.bf16.mxu0 0
  %1822 = vmatmul.mubr.bf16.gmra.mxu0 %v168
  %v1823 = vpop.f32.mrf.mxu0
  %v1824 = vadd.f32 %v1751, %v1823
  %v1825 = vpop.f32.mrf.mxu0
  %v1826 = vadd.f32 %v1753, %v1825
  %v1827 = vpop.f32.mrf.mxu0
  %v1828 = vadd.f32 %v1755, %v1827
  %v1829 = vpop.f32.mrf.mxu0
  %v1830 = vadd.f32 %v1757, %v1829
  %1831 = vdwg.mxu0
  %1832 = vmatprep.subr.bf16.mxu0 %v1178
  %1833 = vmatpush1.bf16.msra.mxu0 %v1177
  %1834 = vmatprep.subr.bf16.mxu0 %v1172
  %1835 = vmatpush1.bf16.msra.mxu0 %v1171
  %1836 = vmatprep.subr.bf16.mxu0 %v1166
  %1837 = vmatpush1.bf16.msra.mxu0 %v1165
  %1838 = vmatprep.subr.bf16.mxu0 %v1160
  %1839 = vmatpush1.bf16.msra.mxu0 %v1159
  %1840 = vmatprep.subr.bf16.mxu0 %v1154
  %1841 = vmatpush1.bf16.msra.mxu0 %v1153
  %1842 = vmatprep.subr.bf16.mxu0 %v1148
  %1843 = vmatpush1.bf16.msra.mxu0 %v1147
  %1844 = vmatprep.subr.bf16.mxu0 %v1142
  %1845 = vmatpush1.bf16.msra.mxu0 %v1141
  %1846 = vmatprep.subr.bf16.mxu0 %v1136
  %1847 = vmatpush1.bf16.msra.mxu0 %v1135
  %1848 = vmatprep.subr.bf16.mxu0 %v1226
  %1849 = vmatpush2.bf16.msra.mxu0 %v1225
  %1850 = vmatprep.subr.bf16.mxu0 %v1220
  %1851 = vmatpush2.bf16.msra.mxu0 %v1219
  %1852 = vmatprep.subr.bf16.mxu0 %v1214
  %1853 = vmatpush2.bf16.msra.mxu0 %v1213
  %1854 = vmatprep.subr.bf16.mxu0 %v1208
  %1855 = vmatpush2.bf16.msra.mxu0 %v1207
  %1856 = vmatprep.subr.bf16.mxu0 %v1202
  %1857 = vmatpush2.bf16.msra.mxu0 %v1201
  %1858 = vmatprep.subr.bf16.mxu0 %v1196
  %1859 = vmatpush2.bf16.msra.mxu0 %v1195
  %1860 = vmatprep.subr.bf16.mxu0 %v1190
  %1861 = vmatpush2.bf16.msra.mxu0 %v1189
  %1862 = vmatprep.subr.bf16.mxu0 %v1184
  %1863 = vmatpush2.bf16.msra.mxu0 %v1183
  %1864 = vmatprep.mubr.bf16.mxu0 %v79
  %1865 = vmatmul.mubr.bf16.gmra.mxu0 %v53
  %v1866 = vpop.f32.mrf.mxu0
  %v1867 = vadd.f32 0.0, %v1866
  %v1868 = vpop.f32.mrf.mxu0
  %v1869 = vadd.f32 0.0, %v1868
  %v1870 = vpop.f32.mrf.mxu0
  %v1871 = vadd.f32 0.0, %v1870
  %v1872 = vpop.f32.mrf.mxu0
  %v1873 = vadd.f32 0.0, %v1872
  %1874 = vmatprep.mubr.bf16.mxu0 %v87
  %1875 = vmatmul.mubr.bf16.gmra.mxu0 %v54
  %v1876 = vpop.f32.mrf.mxu0
  %v1877 = vadd.f32 0.0, %v1876
  %v1878 = vpop.f32.mrf.mxu0
  %v1879 = vadd.f32 0.0, %v1878
  %v1880 = vpop.f32.mrf.mxu0
  %v1881 = vadd.f32 0.0, %v1880
  %v1882 = vpop.f32.mrf.mxu0
  %v1883 = vadd.f32 0.0, %v1882
  %1884 = vmatprep.mubr.bf16.mxu0 %v99
  %1885 = vmatmul.mubr.bf16.gmra.mxu0 %v55
  %v1886 = vpop.f32.mrf.mxu0
  %v1887 = vadd.f32 0.0, %v1886
  %v1888 = vpop.f32.mrf.mxu0
  %v1889 = vadd.f32 0.0, %v1888
  %v1890 = vpop.f32.mrf.mxu0
  %v1891 = vadd.f32 0.0, %v1890
  %v1892 = vpop.f32.mrf.mxu0
  %v1893 = vadd.f32 0.0, %v1892
  %1894 = vmatprep.mubr.bf16.mxu0 %v107
  %1895 = vmatmul.mubr.bf16.gmra.mxu0 %v56
  %v1896 = vpop.f32.mrf.mxu0
  %v1897 = vadd.f32 0.0, %v1896
  %v1898 = vpop.f32.mrf.mxu0
  %v1899 = vadd.f32 0.0, %v1898
  %v1900 = vpop.f32.mrf.mxu0
  %v1901 = vadd.f32 0.0, %v1900
  %v1902 = vpop.f32.mrf.mxu0
  %v1903 = vadd.f32 0.0, %v1902
  %1904 = vdwg.mxu0
  %1905 = vmatprep.subr.bf16.mxu0 %v1274
  %1906 = vmatpush1.bf16.msra.mxu0 %v1273
  %1907 = vmatprep.subr.bf16.mxu0 %v1268
  %1908 = vmatpush1.bf16.msra.mxu0 %v1267
  %1909 = vmatprep.subr.bf16.mxu0 %v1262
  %1910 = vmatpush1.bf16.msra.mxu0 %v1261
  %1911 = vmatprep.subr.bf16.mxu0 %v1256
  %1912 = vmatpush1.bf16.msra.mxu0 %v1255
  %1913 = vmatprep.subr.bf16.mxu0 %v1250
  %1914 = vmatpush1.bf16.msra.mxu0 %v1249
  %1915 = vmatprep.subr.bf16.mxu0 %v1244
  %1916 = vmatpush1.bf16.msra.mxu0 %v1243
  %1917 = vmatprep.subr.bf16.mxu0 %v1238
  %1918 = vmatpush1.bf16.msra.mxu0 %v1237
  %1919 = vmatprep.subr.bf16.mxu0 %v1232
  %1920 = vmatpush1.bf16.msra.mxu0 %v1231
  %1921 = vmatprep.subr.bf16.mxu0 %v1322
  %1922 = vmatpush2.bf16.msra.mxu0 %v1321
  %1923 = vmatprep.subr.bf16.mxu0 %v1316
  %1924 = vmatpush2.bf16.msra.mxu0 %v1315
  %1925 = vmatprep.subr.bf16.mxu0 %v1310
  %1926 = vmatpush2.bf16.msra.mxu0 %v1309
  %1927 = vmatprep.subr.bf16.mxu0 %v1304
  %1928 = vmatpush2.bf16.msra.mxu0 %v1303
  %1929 = vmatprep.subr.bf16.mxu0 %v1298
  %1930 = vmatpush2.bf16.msra.mxu0 %v1297
  %1931 = vmatprep.subr.bf16.mxu0 %v1292
  %1932 = vmatpush2.bf16.msra.mxu0 %v1291
  %1933 = vmatprep.subr.bf16.mxu0 %v1286
  %1934 = vmatpush2.bf16.msra.mxu0 %v1285
  %1935 = vmatprep.subr.bf16.mxu0 %v1280
  %1936 = vmatpush2.bf16.msra.mxu0 %v1279
  %1937 = vmatprep.mubr.bf16.mxu0 %v134
  %1938 = vmatmul.mubr.bf16.gmra.mxu0 %v115
  %v1939 = vpop.f32.mrf.mxu0
  %v1940 = vadd.f32 %v1867, %v1939
  %v1941 = vpop.f32.mrf.mxu0
  %v1942 = vadd.f32 %v1869, %v1941
  %v1943 = vpop.f32.mrf.mxu0
  %v1944 = vadd.f32 %v1871, %v1943
  %v1945 = vpop.f32.mrf.mxu0
  %v1946 = vadd.f32 %v1873, %v1945
  %1947 = vmatprep.mubr.bf16.mxu0 %v140
  %1948 = vmatmul.mubr.bf16.gmra.mxu0 %v117
  %v1949 = vpop.f32.mrf.mxu0
  %v1950 = vadd.f32 %v1877, %v1949
  %v1951 = vpop.f32.mrf.mxu0
  %v1952 = vadd.f32 %v1879, %v1951
  %v1953 = vpop.f32.mrf.mxu0
  %v1954 = vadd.f32 %v1881, %v1953
  %v1955 = vpop.f32.mrf.mxu0
  %v1956 = vadd.f32 %v1883, %v1955
  %1957 = vmatprep.mubr.bf16.mxu0 %v147
  %1958 = vmatmul.mubr.bf16.gmra.mxu0 %v120
  %v1959 = vpop.f32.mrf.mxu0
  %v1960 = vadd.f32 %v1887, %v1959
  %v1961 = vpop.f32.mrf.mxu0
  %v1962 = vadd.f32 %v1889, %v1961
  %v1963 = vpop.f32.mrf.mxu0
  %v1964 = vadd.f32 %v1891, %v1963
  %v1965 = vpop.f32.mrf.mxu0
  %v1966 = vadd.f32 %v1893, %v1965
  %1967 = vmatprep.mubr.bf16.mxu0 %v153
  %1968 = vmatmul.mubr.bf16.gmra.mxu0 %v122
  %v1969 = vpop.f32.mrf.mxu0
  %v1970 = vadd.f32 %v1897, %v1969
  %v1971 = vpop.f32.mrf.mxu0
  %v1972 = vadd.f32 %v1899, %v1971
  %v1973 = vpop.f32.mrf.mxu0
  %v1974 = vadd.f32 %v1901, %v1973
  %v1975 = vpop.f32.mrf.mxu0
  %v1976 = vadd.f32 %v1903, %v1975
  %1977 = vdwg.mxu0
  %1978 = vmatprep.subr.bf16.mxu0 %v1370
  %1979 = vmatpush1.bf16.msra.mxu0 %v1369
  %1980 = vmatprep.subr.bf16.mxu0 %v1364
  %1981 = vmatpush1.bf16.msra.mxu0 %v1363
  %1982 = vmatprep.subr.bf16.mxu0 %v1358
  %1983 = vmatpush1.bf16.msra.mxu0 %v1357
  %1984 = vmatprep.subr.bf16.mxu0 %v1352
  %1985 = vmatpush1.bf16.msra.mxu0 %v1351
  %1986 = vmatprep.subr.bf16.mxu0 %v1346
  %1987 = vmatpush1.bf16.msra.mxu0 %v1345
  %1988 = vmatprep.subr.bf16.mxu0 %v1340
  %1989 = vmatpush1.bf16.msra.mxu0 %v1339
  %1990 = vmatprep.subr.bf16.mxu0 %v1334
  %1991 = vmatpush1.bf16.msra.mxu0 %v1333
  %1992 = vmatprep.subr.bf16.mxu0 %v1328
  %1993 = vmatpush1.bf16.msra.mxu0 %v1327
  %1994 = vmatprep.subr.bf16.mxu0 0
  %1995 = vmatpush2.bf16.msra.mxu0 0
  %1996 = vmatprep.subr.bf16.mxu0 0
  %1997 = vmatpush2.bf16.msra.mxu0 0
  %1998 = vmatprep.subr.bf16.mxu0 0
  %1999 = vmatpush2.bf16.msra.mxu0 0
  %2000 = vmatprep.subr.bf16.mxu0 0
  %2001 = vmatpush2.bf16.msra.mxu0 0
  %2002 = vmatprep.subr.bf16.mxu0 0
  %2003 = vmatpush2.bf16.msra.mxu0 0
  %2004 = vmatprep.subr.bf16.mxu0 0
  %2005 = vmatpush2.bf16.msra.mxu0 0
  %2006 = vmatprep.subr.bf16.mxu0 0
  %2007 = vmatpush2.bf16.msra.mxu0 0
  %2008 = vmatprep.subr.bf16.mxu0 0
  %2009 = vmatpush2.bf16.msra.mxu0 0
  %2010 = vmatprep.mubr.bf16.mxu0 0
  %2011 = vmatmul.mubr.bf16.gmra.mxu0 %v161
  %v2012 = vpop.f32.mrf.mxu0
  %v2013 = vadd.f32 %v1940, %v2012
  %v2014 = vpop.f32.mrf.mxu0
  %v2015 = vadd.f32 %v1942, %v2014
  %v2016 = vpop.f32.mrf.mxu0
  %v2017 = vadd.f32 %v1944, %v2016
  %v2018 = vpop.f32.mrf.mxu0
  %v2019 = vadd.f32 %v1946, %v2018
  %2020 = vmatprep.mubr.bf16.mxu0 0
  %2021 = vmatmul.mubr.bf16.gmra.mxu0 %v163
  %v2022 = vpop.f32.mrf.mxu0
  %v2023 = vadd.f32 %v1950, %v2022
  %v2024 = vpop.f32.mrf.mxu0
  %v2025 = vadd.f32 %v1952, %v2024
  %v2026 = vpop.f32.mrf.mxu0
  %v2027 = vadd.f32 %v1954, %v2026
  %v2028 = vpop.f32.mrf.mxu0
  %v2029 = vadd.f32 %v1956, %v2028
  %2030 = vmatprep.mubr.bf16.mxu0 0
  %2031 = vmatmul.mubr.bf16.gmra.mxu0 %v166
  %v2032 = vpop.f32.mrf.mxu0
  %v2033 = vadd.f32 %v1960, %v2032
  %v2034 = vpop.f32.mrf.mxu0
  %v2035 = vadd.f32 %v1962, %v2034
  %v2036 = vpop.f32.mrf.mxu0
  %v2037 = vadd.f32 %v1964, %v2036
  %v2038 = vpop.f32.mrf.mxu0
  %v2039 = vadd.f32 %v1966, %v2038
  %2040 = vmatprep.mubr.bf16.mxu0 0
  %2041 = vmatmul.mubr.bf16.gmra.mxu0 %v168
  %v2042 = vpop.f32.mrf.mxu0
  %v2043 = vadd.f32 %v1970, %v2042
  %v2044 = vpop.f32.mrf.mxu0
  %v2045 = vadd.f32 %v1972, %v2044
  %v2046 = vpop.f32.mrf.mxu0
  %v2047 = vadd.f32 %v1974, %v2046
  %v2048 = vpop.f32.mrf.mxu0
  %v2049 = vadd.f32 %v1976, %v2048
  %2050 = vdwg.mxu0
  %2051 = vmatprep.subr.bf16.mxu0 %v1180
  %2052 = vmatpush1.bf16.msra.mxu0 %v1179
  %2053 = vmatprep.subr.bf16.mxu0 %v1174
  %2054 = vmatpush1.bf16.msra.mxu0 %v1173
  %2055 = vmatprep.subr.bf16.mxu0 %v1168
  %2056 = vmatpush1.bf16.msra.mxu0 %v1167
  %2057 = vmatprep.subr.bf16.mxu0 %v1162
  %2058 = vmatpush1.bf16.msra.mxu0 %v1161
  %2059 = vmatprep.subr.bf16.mxu0 %v1156
  %2060 = vmatpush1.bf16.msra.mxu0 %v1155
  %2061 = vmatprep.subr.bf16.mxu0 %v1150
  %2062 = vmatpush1.bf16.msra.mxu0 %v1149
  %2063 = vmatprep.subr.bf16.mxu0 %v1144
  %2064 = vmatpush1.bf16.msra.mxu0 %v1143
  %2065 = vmatprep.subr.bf16.mxu0 %v1138
  %2066 = vmatpush1.bf16.msra.mxu0 %v1137
  %2067 = vmatprep.subr.bf16.mxu0 %v1228
  %2068 = vmatpush2.bf16.msra.mxu0 %v1227
  %2069 = vmatprep.subr.bf16.mxu0 %v1222
  %2070 = vmatpush2.bf16.msra.mxu0 %v1221
  %2071 = vmatprep.subr.bf16.mxu0 %v1216
  %2072 = vmatpush2.bf16.msra.mxu0 %v1215
  %2073 = vmatprep.subr.bf16.mxu0 %v1210
  %2074 = vmatpush2.bf16.msra.mxu0 %v1209
  %2075 = vmatprep.subr.bf16.mxu0 %v1204
  %2076 = vmatpush2.bf16.msra.mxu0 %v1203
  %2077 = vmatprep.subr.bf16.mxu0 %v1198
  %2078 = vmatpush2.bf16.msra.mxu0 %v1197
  %2079 = vmatprep.subr.bf16.mxu0 %v1192
  %2080 = vmatpush2.bf16.msra.mxu0 %v1191
  %2081 = vmatprep.subr.bf16.mxu0 %v1186
  %2082 = vmatpush2.bf16.msra.mxu0 %v1185
  %2083 = vmatprep.mubr.bf16.mxu0 %v79
  %2084 = vmatmul.mubr.bf16.gmra.mxu0 %v53
  %v2085 = vpop.f32.mrf.mxu0
  %v2086 = vadd.f32 0.0, %v2085
  %v2087 = vpop.f32.mrf.mxu0
  %v2088 = vadd.f32 0.0, %v2087
  %v2089 = vpop.f32.mrf.mxu0
  %v2090 = vadd.f32 0.0, %v2089
  %v2091 = vpop.f32.mrf.mxu0
  %v2092 = vadd.f32 0.0, %v2091
  %2093 = vmatprep.mubr.bf16.mxu0 %v87
  %2094 = vmatmul.mubr.bf16.gmra.mxu0 %v54
  %v2095 = vpop.f32.mrf.mxu0
  %v2096 = vadd.f32 0.0, %v2095
  %v2097 = vpop.f32.mrf.mxu0
  %v2098 = vadd.f32 0.0, %v2097
  %v2099 = vpop.f32.mrf.mxu0
  %v2100 = vadd.f32 0.0, %v2099
  %v2101 = vpop.f32.mrf.mxu0
  %v2102 = vadd.f32 0.0, %v2101
  %2103 = vmatprep.mubr.bf16.mxu0 %v99
  %2104 = vmatmul.mubr.bf16.gmra.mxu0 %v55
  %v2105 = vpop.f32.mrf.mxu0
  %v2106 = vadd.f32 0.0, %v2105
  %v2107 = vpop.f32.mrf.mxu0
  %v2108 = vadd.f32 0.0, %v2107
  %v2109 = vpop.f32.mrf.mxu0
  %v2110 = vadd.f32 0.0, %v2109
  %v2111 = vpop.f32.mrf.mxu0
  %v2112 = vadd.f32 0.0, %v2111
  %2113 = vmatprep.mubr.bf16.mxu0 %v107
  %2114 = vmatmul.mubr.bf16.gmra.mxu0 %v56
  %v2115 = vpop.f32.mrf.mxu0
  %v2116 = vadd.f32 0.0, %v2115
  %v2117 = vpop.f32.mrf.mxu0
  %v2118 = vadd.f32 0.0, %v2117
  %v2119 = vpop.f32.mrf.mxu0
  %v2120 = vadd.f32 0.0, %v2119
  %v2121 = vpop.f32.mrf.mxu0
  %v2122 = vadd.f32 0.0, %v2121
  %2123 = vdwg.mxu0
  %2124 = vmatprep.subr.bf16.mxu0 %v1276
  %2125 = vmatpush1.bf16.msra.mxu0 %v1275
  %2126 = vmatprep.subr.bf16.mxu0 %v1270
  %2127 = vmatpush1.bf16.msra.mxu0 %v1269
  %2128 = vmatprep.subr.bf16.mxu0 %v1264
  %2129 = vmatpush1.bf16.msra.mxu0 %v1263
  %2130 = vmatprep.subr.bf16.mxu0 %v1258
  %2131 = vmatpush1.bf16.msra.mxu0 %v1257
  %2132 = vmatprep.subr.bf16.mxu0 %v1252
  %2133 = vmatpush1.bf16.msra.mxu0 %v1251
  %2134 = vmatprep.subr.bf16.mxu0 %v1246
  %2135 = vmatpush1.bf16.msra.mxu0 %v1245
  %2136 = vmatprep.subr.bf16.mxu0 %v1240
  %2137 = vmatpush1.bf16.msra.mxu0 %v1239
  %2138 = vmatprep.subr.bf16.mxu0 %v1234
  %2139 = vmatpush1.bf16.msra.mxu0 %v1233
  %2140 = vmatprep.subr.bf16.mxu0 %v1324
  %2141 = vmatpush2.bf16.msra.mxu0 %v1323
  %2142 = vmatprep.subr.bf16.mxu0 %v1318
  %2143 = vmatpush2.bf16.msra.mxu0 %v1317
  %2144 = vmatprep.subr.bf16.mxu0 %v1312
  %2145 = vmatpush2.bf16.msra.mxu0 %v1311
  %2146 = vmatprep.subr.bf16.mxu0 %v1306
  %2147 = vmatpush2.bf16.msra.mxu0 %v1305
  %2148 = vmatprep.subr.bf16.mxu0 %v1300
  %2149 = vmatpush2.bf16.msra.mxu0 %v1299
  %2150 = vmatprep.subr.bf16.mxu0 %v1294
  %2151 = vmatpush2.bf16.msra.mxu0 %v1293
  %2152 = vmatprep.subr.bf16.mxu0 %v1288
  %2153 = vmatpush2.bf16.msra.mxu0 %v1287
  %2154 = vmatprep.subr.bf16.mxu0 %v1282
  %2155 = vmatpush2.bf16.msra.mxu0 %v1281
  %2156 = vmatprep.mubr.bf16.mxu0 %v134
  %2157 = vmatmul.mubr.bf16.gmra.mxu0 %v115
  %v2158 = vpop.f32.mrf.mxu0
  %v2159 = vadd.f32 %v2086, %v2158
  %v2160 = vpop.f32.mrf.mxu0
  %v2161 = vadd.f32 %v2088, %v2160
  %v2162 = vpop.f32.mrf.mxu0
  %v2163 = vadd.f32 %v2090, %v2162
  %v2164 = vpop.f32.mrf.mxu0
  %v2165 = vadd.f32 %v2092, %v2164
  %2166 = vmatprep.mubr.bf16.mxu0 %v140
  %2167 = vmatmul.mubr.bf16.gmra.mxu0 %v117
  %v2168 = vpop.f32.mrf.mxu0
  %v2169 = vadd.f32 %v2096, %v2168
  %v2170 = vpop.f32.mrf.mxu0
  %v2171 = vadd.f32 %v2098, %v2170
  %v2172 = vpop.f32.mrf.mxu0
  %v2173 = vadd.f32 %v2100, %v2172
  %v2174 = vpop.f32.mrf.mxu0
  %v2175 = vadd.f32 %v2102, %v2174
  %2176 = vmatprep.mubr.bf16.mxu0 %v147
  %2177 = vmatmul.mubr.bf16.gmra.mxu0 %v120
  %v2178 = vpop.f32.mrf.mxu0
  %v2179 = vadd.f32 %v2106, %v2178
  %v2180 = vpop.f32.mrf.mxu0
  %v2181 = vadd.f32 %v2108, %v2180
  %v2182 = vpop.f32.mrf.mxu0
  %v2183 = vadd.f32 %v2110, %v2182
  %v2184 = vpop.f32.mrf.mxu0
  %v2185 = vadd.f32 %v2112, %v2184
  %2186 = vmatprep.mubr.bf16.mxu0 %v153
  %2187 = vmatmul.mubr.bf16.gmra.mxu0 %v122
  %v2188 = vpop.f32.mrf.mxu0
  %v2189 = vadd.f32 %v2116, %v2188
  %v2190 = vpop.f32.mrf.mxu0
  %v2191 = vadd.f32 %v2118, %v2190
  %v2192 = vpop.f32.mrf.mxu0
  %v2193 = vadd.f32 %v2120, %v2192
  %v2194 = vpop.f32.mrf.mxu0
  %v2195 = vadd.f32 %v2122, %v2194
  %2196 = vdwg.mxu0
  %2197 = vmatprep.subr.bf16.mxu0 %v1372
  %2198 = vmatpush1.bf16.msra.mxu0 %v1371
  %2199 = vmatprep.subr.bf16.mxu0 %v1366
  %2200 = vmatpush1.bf16.msra.mxu0 %v1365
  %2201 = vmatprep.subr.bf16.mxu0 %v1360
  %2202 = vmatpush1.bf16.msra.mxu0 %v1359
  %2203 = vmatprep.subr.bf16.mxu0 %v1354
  %2204 = vmatpush1.bf16.msra.mxu0 %v1353
  %2205 = vmatprep.subr.bf16.mxu0 %v1348
  %2206 = vmatpush1.bf16.msra.mxu0 %v1347
  %2207 = vmatprep.subr.bf16.mxu0 %v1342
  %2208 = vmatpush1.bf16.msra.mxu0 %v1341
  %2209 = vmatprep.subr.bf16.mxu0 %v1336
  %2210 = vmatpush1.bf16.msra.mxu0 %v1335
  %2211 = vmatprep.subr.bf16.mxu0 %v1330
  %2212 = vmatpush1.bf16.msra.mxu0 %v1329
  %2213 = vmatprep.subr.bf16.mxu0 0
  %2214 = vmatpush2.bf16.msra.mxu0 0
  %2215 = vmatprep.subr.bf16.mxu0 0
  %2216 = vmatpush2.bf16.msra.mxu0 0
  %2217 = vmatprep.subr.bf16.mxu0 0
  %2218 = vmatpush2.bf16.msra.mxu0 0
  %2219 = vmatprep.subr.bf16.mxu0 0
  %2220 = vmatpush2.bf16.msra.mxu0 0
  %2221 = vmatprep.subr.bf16.mxu0 0
  %2222 = vmatpush2.bf16.msra.mxu0 0
  %2223 = vmatprep.subr.bf16.mxu0 0
  %2224 = vmatpush2.bf16.msra.mxu0 0
  %2225 = vmatprep.subr.bf16.mxu0 0
  %2226 = vmatpush2.bf16.msra.mxu0 0
  %2227 = vmatprep.subr.bf16.mxu0 0
  %2228 = vmatpush2.bf16.msra.mxu0 0
  %2229 = vmatprep.mubr.bf16.mxu0 0
  %2230 = vmatmul.mubr.bf16.gmra.mxu0 %v161
  %v2231 = vpop.f32.mrf.mxu0
  %v2232 = vadd.f32 %v2159, %v2231
  %v2233 = vpop.f32.mrf.mxu0
  %v2234 = vadd.f32 %v2161, %v2233
  %v2235 = vpop.f32.mrf.mxu0
  %v2236 = vadd.f32 %v2163, %v2235
  %v2237 = vpop.f32.mrf.mxu0
  %v2238 = vadd.f32 %v2165, %v2237
  %2239 = vmatprep.mubr.bf16.mxu0 0
  %2240 = vmatmul.mubr.bf16.gmra.mxu0 %v163
  %v2241 = vpop.f32.mrf.mxu0
  %v2242 = vadd.f32 %v2169, %v2241
  %v2243 = vpop.f32.mrf.mxu0
  %v2244 = vadd.f32 %v2171, %v2243
  %v2245 = vpop.f32.mrf.mxu0
  %v2246 = vadd.f32 %v2173, %v2245
  %v2247 = vpop.f32.mrf.mxu0
  %v2248 = vadd.f32 %v2175, %v2247
  %2249 = vmatprep.mubr.bf16.mxu0 0
  %2250 = vmatmul.mubr.bf16.gmra.mxu0 %v166
  %v2251 = vpop.f32.mrf.mxu0
  %v2252 = vadd.f32 %v2179, %v2251
  %v2253 = vpop.f32.mrf.mxu0
  %v2254 = vadd.f32 %v2181, %v2253
  %v2255 = vpop.f32.mrf.mxu0
  %v2256 = vadd.f32 %v2183, %v2255
  %v2257 = vpop.f32.mrf.mxu0
  %v2258 = vadd.f32 %v2185, %v2257
  %2259 = vmatprep.mubr.bf16.mxu0 0
  %2260 = vmatmul.mubr.bf16.gmra.mxu0 %v168
  %v2261 = vpop.f32.mrf.mxu0
  %v2262 = vadd.f32 %v2189, %v2261
  %v2263 = vpop.f32.mrf.mxu0
  %v2264 = vadd.f32 %v2191, %v2263
  %v2265 = vpop.f32.mrf.mxu0
  %v2266 = vadd.f32 %v2193, %v2265
  %v2267 = vpop.f32.mrf.mxu0
  %v2268 = vadd.f32 %v2195, %v2267
  %2269 = vdwg.mxu0
  %vm2318 = vcmask 1046528
  %v2319 = vrot.slane %v1794, 1
  %v2320 = vrot.slane %v1798, 1
  %v2321 = vsel %vm2318, %v2319, %v2320
  %v2322 = vrot.slane %v1796, 1
  %v2323 = vrot.slane %v1800, 1
  %v2324 = vsel %vm2318, %v2322, %v2323
  %v2325 = vrot.slane %v2013, 1
  %v2326 = vrot.slane %v2017, 1
  %v2327 = vsel %vm2318, %v2325, %v2326
  %v2328 = vrot.slane %v2015, 1
  %v2329 = vrot.slane %v2019, 1
  %v2330 = vsel %vm2318, %v2328, %v2329
  %v2331 = vrot.slane %v2232, 1
  %v2332 = vrot.slane %v2236, 1
  %v2333 = vsel %vm2318, %v2331, %v2332
  %v2334 = vrot.slane %v2234, 1
  %v2335 = vrot.slane %v2238, 1
  %v2336 = vsel %vm2318, %v2334, %v2335
  %v2337 = vrot.slane %v1804, 1
  %v2338 = vsel %vm2318, %v2320, %v2337
  %v2339 = vrot.slane %v1806, 1
  %v2340 = vsel %vm2318, %v2323, %v2339
  %v2341 = vrot.slane %v2023, 1
  %v2342 = vsel %vm2318, %v2326, %v2341
  %v2343 = vrot.slane %v2025, 1
  %v2344 = vsel %vm2318, %v2329, %v2343
  %v2345 = vrot.slane %v2242, 1
  %v2346 = vsel %vm2318, %v2332, %v2345
  %v2347 = vrot.slane %v2244, 1
  %v2348 = vsel %vm2318, %v2335, %v2347
  %v2349 = vrot.slane %v1808, 1
  %v2350 = vsel %vm2318, %v2337, %v2349
  %v2351 = vrot.slane %v1810, 1
  %v2352 = vsel %vm2318, %v2339, %v2351
  %v2353 = vrot.slane %v2027, 1
  %v2354 = vsel %vm2318, %v2341, %v2353
  %v2355 = vrot.slane %v2029, 1
  %v2356 = vsel %vm2318, %v2343, %v2355
  %v2357 = vrot.slane %v2246, 1
  %v2358 = vsel %vm2318, %v2345, %v2357
  %v2359 = vrot.slane %v2248, 1
  %v2360 = vsel %vm2318, %v2347, %v2359
  %v2361 = vrot.slane %v1814, 1
  %v2362 = vsel %vm2318, %v2349, %v2361
  %v2363 = vrot.slane %v1816, 1
  %v2364 = vsel %vm2318, %v2351, %v2363
  %v2365 = vrot.slane %v2033, 1
  %v2366 = vsel %vm2318, %v2353, %v2365
  %v2367 = vrot.slane %v2035, 1
  %v2368 = vsel %vm2318, %v2355, %v2367
  %v2369 = vrot.slane %v2252, 1
  %v2370 = vsel %vm2318, %v2357, %v2369
  %v2371 = vrot.slane %v2254, 1
  %v2372 = vsel %vm2318, %v2359, %v2371
  %v2373 = vrot.slane %v1818, 1
  %v2374 = vsel %vm2318, %v2361, %v2373
  %v2375 = vrot.slane %v1820, 1
  %v2376 = vsel %vm2318, %v2363, %v2375
  %v2377 = vrot.slane %v2037, 1
  %v2378 = vsel %vm2318, %v2365, %v2377
  %v2379 = vrot.slane %v2039, 1
  %v2380 = vsel %vm2318, %v2367, %v2379
  %v2381 = vrot.slane %v2256, 1
  %v2382 = vsel %vm2318, %v2369, %v2381
  %v2383 = vrot.slane %v2258, 1
  %v2384 = vsel %vm2318, %v2371, %v2383
  %v2385 = vrot.slane %v1824, 1
  %v2386 = vsel %vm2318, %v2373, %v2385
  %v2387 = vrot.slane %v1826, 1
  %v2388 = vsel %vm2318, %v2375, %v2387
  %v2389 = vrot.slane %v2043, 1
  %v2390 = vsel %vm2318, %v2377, %v2389
  %v2391 = vrot.slane %v2045, 1
  %v2392 = vsel %vm2318, %v2379, %v2391
  %v2393 = vrot.slane %v2262, 1
  %v2394 = vsel %vm2318, %v2381, %v2393
  %v2395 = vrot.slane %v2264, 1
  %v2396 = vsel %vm2318, %v2383, %v2395
  %v2397 = vrot.slane %v1828, 1
  %v2398 = vsel %vm2318, %v2385, %v2397
  %v2399 = vrot.slane %v1830, 1
  %v2400 = vsel %vm2318, %v2387, %v2399
  %v2401 = vrot.slane %v2047, 1
  %v2402 = vsel %vm2318, %v2389, %v2401
  %v2403 = vrot.slane %v2049, 1
  %v2404 = vsel %vm2318, %v2391, %v2403
  %v2405 = vrot.slane %v2266, 1
  %v2406 = vsel %vm2318, %v2393, %v2405
  %v2407 = vrot.slane %v2268, 1
  %v2408 = vsel %vm2318, %v2395, %v2407
  %v2463 = vsel %vm2318, %v2397, %v2319
  %v2464 = vsel %vm2318, %v2399, %v2322
  %v2465 = vsel %vm2318, %v2401, %v2325
  %v2466 = vsel %vm2318, %v2403, %v2328
  %v2467 = vsel %vm2318, %v2405, %v2331
  %v2468 = vsel %vm2318, %v2407, %v2334
  %v2469 = vmax.f32 %v1794, %v2321
  %v2470 = vmax.f32 %v1796, %v2324
  %v2471 = vmax.f32 %v2013, %v2327
  %v2472 = vmax.f32 %v2015, %v2330
  %v2473 = vmax.f32 %v2232, %v2333
  %v2474 = vmax.f32 %v2234, %v2336
  %v2475 = vmax.f32 %v1798, %v2338
  %v2476 = vmax.f32 %v1800, %v2340
  %v2477 = vmax.f32 %v2017, %v2342
  %v2478 = vmax.f32 %v2019, %v2344
  %v2479 = vmax.f32 %v2236, %v2346
  %v2480 = vmax.f32 %v2238, %v2348
  %v2481 = vmax.f32 %v1804, %v2350
  %v2482 = vmax.f32 %v1806, %v2352
  %v2483 = vmax.f32 %v2023, %v2354
  %v2484 = vmax.f32 %v2025, %v2356
  %v2485 = vmax.f32 %v2242, %v2358
  %v2486 = vmax.f32 %v2244, %v2360
  %v2487 = vmax.f32 %v1808, %v2362
  %v2488 = vmax.f32 %v1810, %v2364
  %v2489 = vmax.f32 %v2027, %v2366
  %v2490 = vmax.f32 %v2029, %v2368
  %v2491 = vmax.f32 %v2246, %v2370
  %v2492 = vmax.f32 %v2248, %v2372
  %v2493 = vmax.f32 %v1814, %v2374
  %v2494 = vmax.f32 %v1816, %v2376
  %v2495 = vmax.f32 %v2033, %v2378
  %v2496 = vmax.f32 %v2035, %v2380
  %v2497 = vmax.f32 %v2252, %v2382
  %v2498 = vmax.f32 %v2254, %v2384
  %v2499 = vmax.f32 %v1818, %v2386
  %v2500 = vmax.f32 %v1820, %v2388
  %v2501 = vmax.f32 %v2037, %v2390
  %v2502 = vmax.f32 %v2039, %v2392
  %v2503 = vmax.f32 %v2256, %v2394
  %v2504 = vmax.f32 %v2258, %v2396
  %v2505 = vmax.f32 %v1824, %v2398
  %v2506 = vmax.f32 %v1826, %v2400
  %v2507 = vmax.f32 %v2043, %v2402
  %v2508 = vmax.f32 %v2045, %v2404
  %v2509 = vmax.f32 %v2262, %v2406
  %v2510 = vmax.f32 %v2264, %v2408
  %v2511 = vmax.f32 %v1828, %v2463
  %v2512 = vmax.f32 %v1830, %v2464
  %v2513 = vmax.f32 %v2047, %v2465
  %v2514 = vmax.f32 %v2049, %v2466
  %v2515 = vmax.f32 %v2266, %v2467
  %v2516 = vmax.f32 %v2268, %v2468
  %2565 = vrot.lane.b32.xlu0 %v2469, 104
  %v2566 = vpop.permute.xlu0 %2565
  %2567 = vrot.lane.b32.xlu0 %v2470, 104
  %v2568 = vpop.permute.xlu0 %2567
  %2569 = vrot.lane.b32.xlu0 %v2471, 104
  %v2570 = vpop.permute.xlu0 %2569
  %2571 = vrot.lane.b32.xlu0 %v2472, 104
  %v2572 = vpop.permute.xlu0 %2571
  %2573 = vrot.lane.b32.xlu0 %v2473, 104
  %v2574 = vpop.permute.xlu0 %2573
  %2575 = vrot.lane.b32.xlu0 %v2474, 104
  %v2576 = vpop.permute.xlu0 %2575
  %2577 = vrot.lane.b32.xlu0 %v2475, 104
  %v2578 = vpop.permute.xlu0 %2577
  %2579 = vrot.lane.b32.xlu0 %v2476, 104
  %v2580 = vpop.permute.xlu0 %2579
  %2581 = vrot.lane.b32.xlu0 %v2477, 104
  %v2582 = vpop.permute.xlu0 %2581
  %2583 = vrot.lane.b32.xlu0 %v2478, 104
  %v2584 = vpop.permute.xlu0 %2583
  %2585 = vrot.lane.b32.xlu0 %v2479, 104
  %v2586 = vpop.permute.xlu0 %2585
  %2587 = vrot.lane.b32.xlu0 %v2480, 104
  %v2588 = vpop.permute.xlu0 %2587
  %2589 = vrot.lane.b32.xlu0 %v2481, 104
  %v2590 = vpop.permute.xlu0 %2589
  %2591 = vrot.lane.b32.xlu0 %v2482, 104
  %v2592 = vpop.permute.xlu0 %2591
  %2593 = vrot.lane.b32.xlu0 %v2483, 104
  %v2594 = vpop.permute.xlu0 %2593
  %2595 = vrot.lane.b32.xlu0 %v2484, 104
  %v2596 = vpop.permute.xlu0 %2595
  %2597 = vrot.lane.b32.xlu0 %v2485, 104
  %v2598 = vpop.permute.xlu0 %2597
  %2599 = vrot.lane.b32.xlu0 %v2486, 104
  %v2600 = vpop.permute.xlu0 %2599
  %2601 = vrot.lane.b32.xlu0 %v2487, 104
  %v2602 = vpop.permute.xlu0 %2601
  %2603 = vrot.lane.b32.xlu0 %v2488, 104
  %v2604 = vpop.permute.xlu0 %2603
  %2605 = vrot.lane.b32.xlu0 %v2489, 104
  %v2606 = vpop.permute.xlu0 %2605
  %2607 = vrot.lane.b32.xlu0 %v2490, 104
  %v2608 = vpop.permute.xlu0 %2607
  %2609 = vrot.lane.b32.xlu0 %v2491, 104
  %v2610 = vpop.permute.xlu0 %2609
  %2611 = vrot.lane.b32.xlu0 %v2492, 104
  %v2612 = vpop.permute.xlu0 %2611
  %2613 = vrot.lane.b32.xlu0 %v2493, 104
  %v2614 = vpop.permute.xlu0 %2613
  %2615 = vrot.lane.b32.xlu0 %v2494, 104
  %v2616 = vpop.permute.xlu0 %2615
  %2617 = vrot.lane.b32.xlu0 %v2495, 104
  %v2618 = vpop.permute.xlu0 %2617
  %2619 = vrot.lane.b32.xlu0 %v2496, 104
  %v2620 = vpop.permute.xlu0 %2619
  %2621 = vrot.lane.b32.xlu0 %v2497, 104
  %v2622 = vpop.permute.xlu0 %2621
  %2623 = vrot.lane.b32.xlu0 %v2498, 104
  %v2624 = vpop.permute.xlu0 %2623
  %2625 = vrot.lane.b32.xlu0 %v2499, 104
  %v2626 = vpop.permute.xlu0 %2625
  %2627 = vrot.lane.b32.xlu0 %v2500, 104
  %v2628 = vpop.permute.xlu0 %2627
  %2629 = vrot.lane.b32.xlu0 %v2501, 104
  %v2630 = vpop.permute.xlu0 %2629
  %2631 = vrot.lane.b32.xlu0 %v2502, 104
  %v2632 = vpop.permute.xlu0 %2631
  %2633 = vrot.lane.b32.xlu0 %v2503, 104
  %v2634 = vpop.permute.xlu0 %2633
  %2635 = vrot.lane.b32.xlu0 %v2504, 104
  %v2636 = vpop.permute.xlu0 %2635
  %2637 = vrot.lane.b32.xlu0 %v2505, 104
  %v2638 = vpop.permute.xlu0 %2637
  %2639 = vrot.lane.b32.xlu0 %v2506, 104
  %v2640 = vpop.permute.xlu0 %2639
  %2641 = vrot.lane.b32.xlu0 %v2507, 104
  %v2642 = vpop.permute.xlu0 %2641
  %2643 = vrot.lane.b32.xlu0 %v2508, 104
  %v2644 = vpop.permute.xlu0 %2643
  %2645 = vrot.lane.b32.xlu0 %v2509, 104
  %v2646 = vpop.permute.xlu0 %2645
  %2647 = vrot.lane.b32.xlu0 %v2510, 104
  %v2648 = vpop.permute.xlu0 %2647
  %2649 = vrot.lane.b32.xlu0 %v2511, 104
  %v2650 = vpop.permute.xlu0 %2649
  %2651 = vrot.lane.b32.xlu0 %v2512, 104
  %v2652 = vpop.permute.xlu0 %2651
  %2653 = vrot.lane.b32.xlu0 %v2513, 104
  %v2654 = vpop.permute.xlu0 %2653
  %2655 = vrot.lane.b32.xlu0 %v2514, 104
  %v2656 = vpop.permute.xlu0 %2655
  %2657 = vrot.lane.b32.xlu0 %v2515, 104
  %v2658 = vpop.permute.xlu0 %2657
  %2659 = vrot.lane.b32.xlu0 %v2516, 104
  %v2660 = vpop.permute.xlu0 %2659
  %vm2661 = vcmask 850944
  %v2662 = vsel %vm2661, %v2566, %v2568
  %v2663 = vsel %vm2661, %v2568, %v2570
  %v2664 = vsel %vm2661, %v2570, %v2572
  %v2665 = vsel %vm2661, %v2572, %v2574
  %v2666 = vsel %vm2661, %v2574, %v2576
  %v2667 = vsel %vm2661, %v2578, %v2580
  %v2668 = vsel %vm2661, %v2580, %v2582
  %v2669 = vsel %vm2661, %v2582, %v2584
  %v2670 = vsel %vm2661, %v2584, %v2586
  %v2671 = vsel %vm2661, %v2586, %v2588
  %v2672 = vsel %vm2661, %v2590, %v2592
  %v2673 = vsel %vm2661, %v2592, %v2594
  %v2674 = vsel %vm2661, %v2594, %v2596
  %v2675 = vsel %vm2661, %v2596, %v2598
  %v2676 = vsel %vm2661, %v2598, %v2600
  %v2677 = vsel %vm2661, %v2602, %v2604
  %v2678 = vsel %vm2661, %v2604, %v2606
  %v2679 = vsel %vm2661, %v2606, %v2608
  %v2680 = vsel %vm2661, %v2608, %v2610
  %v2681 = vsel %vm2661, %v2610, %v2612
  %v2682 = vsel %vm2661, %v2614, %v2616
  %v2683 = vsel %vm2661, %v2616, %v2618
  %v2684 = vsel %vm2661, %v2618, %v2620
  %v2685 = vsel %vm2661, %v2620, %v2622
  %v2686 = vsel %vm2661, %v2622, %v2624
  %v2687 = vsel %vm2661, %v2626, %v2628
  %v2688 = vsel %vm2661, %v2628, %v2630
  %v2689 = vsel %vm2661, %v2630, %v2632
  %v2690 = vsel %vm2661, %v2632, %v2634
  %v2691 = vsel %vm2661, %v2634, %v2636
  %v2692 = vsel %vm2661, %v2638, %v2640
  %v2693 = vsel %vm2661, %v2640, %v2642
  %v2694 = vsel %vm2661, %v2642, %v2644
  %v2695 = vsel %vm2661, %v2644, %v2646
  %v2696 = vsel %vm2661, %v2646, %v2648
  %v2697 = vsel %vm2661, %v2650, %v2652
  %v2698 = vsel %vm2661, %v2652, %v2654
  %v2699 = vsel %vm2661, %v2654, %v2656
  %v2700 = vsel %vm2661, %v2656, %v2658
  %v2701 = vsel %vm2661, %v2658, %v2660
  %2750 = vrot.lane.b32.xlu0 %v2469, 8
  %v2751 = vpop.permute.xlu0 %2750
  %2752 = vrot.lane.b32.xlu0 %v2475, 8
  %v2753 = vpop.permute.xlu0 %2752
  %2754 = vrot.lane.b32.xlu0 %v2481, 8
  %v2755 = vpop.permute.xlu0 %2754
  %2756 = vrot.lane.b32.xlu0 %v2487, 8
  %v2757 = vpop.permute.xlu0 %2756
  %2758 = vrot.lane.b32.xlu0 %v2493, 8
  %v2759 = vpop.permute.xlu0 %2758
  %2760 = vrot.lane.b32.xlu0 %v2499, 8
  %v2761 = vpop.permute.xlu0 %2760
  %2762 = vrot.lane.b32.xlu0 %v2505, 8
  %v2763 = vpop.permute.xlu0 %2762
  %2764 = vrot.lane.b32.xlu0 %v2511, 8
  %v2765 = vpop.permute.xlu0 %2764
  %vm2774 = vcmask 64512
  %v2775 = vsel %vm2774, %v2576, %v2751
  %v2776 = vsel %vm2774, %v2588, %v2753
  %v2777 = vsel %vm2774, %v2600, %v2755
  %v2778 = vsel %vm2774, %v2612, %v2757
  %v2779 = vsel %vm2774, %v2624, %v2759
  %v2780 = vsel %vm2774, %v2636, %v2761
  %v2781 = vsel %vm2774, %v2648, %v2763
  %v2782 = vsel %vm2774, %v2660, %v2765
  %v2783 = vmax.f32 %v2469, %v2662
  %v2784 = vmax.f32 %v2470, %v2663
  %v2785 = vmax.f32 %v2471, %v2664
  %v2786 = vmax.f32 %v2472, %v2665
  %v2787 = vmax.f32 %v2473, %v2666
  %v2788 = vmax.f32 %v2474, %v2775
  %v2789 = vmax.f32 %v2475, %v2667
  %v2790 = vmax.f32 %v2476, %v2668
  %v2791 = vmax.f32 %v2477, %v2669
  %v2792 = vmax.f32 %v2478, %v2670
  %v2793 = vmax.f32 %v2479, %v2671
  %v2794 = vmax.f32 %v2480, %v2776
  %v2795 = vmax.f32 %v2481, %v2672
  %v2796 = vmax.f32 %v2482, %v2673
  %v2797 = vmax.f32 %v2483, %v2674
  %v2798 = vmax.f32 %v2484, %v2675
  %v2799 = vmax.f32 %v2485, %v2676
  %v2800 = vmax.f32 %v2486, %v2777
  %v2801 = vmax.f32 %v2487, %v2677
  %v2802 = vmax.f32 %v2488, %v2678
  %v2803 = vmax.f32 %v2489, %v2679
  %v2804 = vmax.f32 %v2490, %v2680
  %v2805 = vmax.f32 %v2491, %v2681
  %v2806 = vmax.f32 %v2492, %v2778
  %v2807 = vmax.f32 %v2493, %v2682
  %v2808 = vmax.f32 %v2494, %v2683
  %v2809 = vmax.f32 %v2495, %v2684
  %v2810 = vmax.f32 %v2496, %v2685
  %v2811 = vmax.f32 %v2497, %v2686
  %v2812 = vmax.f32 %v2498, %v2779
  %v2813 = vmax.f32 %v2499, %v2687
  %v2814 = vmax.f32 %v2500, %v2688
  %v2815 = vmax.f32 %v2501, %v2689
  %v2816 = vmax.f32 %v2502, %v2690
  %v2817 = vmax.f32 %v2503, %v2691
  %v2818 = vmax.f32 %v2504, %v2780
  %v2819 = vmax.f32 %v2505, %v2692
  %v2820 = vmax.f32 %v2506, %v2693
  %v2821 = vmax.f32 %v2507, %v2694
  %v2822 = vmax.f32 %v2508, %v2695
  %v2823 = vmax.f32 %v2509, %v2696
  %v2824 = vmax.f32 %v2510, %v2781
  %v2825 = vmax.f32 %v2511, %v2697
  %v2826 = vmax.f32 %v2512, %v2698
  %v2827 = vmax.f32 %v2513, %v2699
  %v2828 = vmax.f32 %v2514, %v2700
  %v2829 = vmax.f32 %v2515, %v2701
  %v2830 = vmax.f32 %v2516, %v2782
  %v2831 = vpack.c.bf16 %v2789, %v2783
  %v2832 = vpack.c.bf16 %v2790, %v2784
  %v2833 = vpack.c.bf16 %v2791, %v2785
  %v2834 = vpack.c.bf16 %v2792, %v2786
  %v2835 = vpack.c.bf16 %v2793, %v2787
  %v2836 = vpack.c.bf16 %v2794, %v2788
  %v2837 = vpack.c.bf16 %v2801, %v2795
  %v2838 = vpack.c.bf16 %v2802, %v2796
  %v2839 = vpack.c.bf16 %v2803, %v2797
  %v2840 = vpack.c.bf16 %v2804, %v2798
  %v2841 = vpack.c.bf16 %v2805, %v2799
  %v2842 = vpack.c.bf16 %v2806, %v2800
  %v2843 = vpack.c.bf16 %v2813, %v2807
  %v2844 = vpack.c.bf16 %v2814, %v2808
  %v2845 = vpack.c.bf16 %v2815, %v2809
  %v2846 = vpack.c.bf16 %v2816, %v2810
  %v2847 = vpack.c.bf16 %v2817, %v2811
  %v2848 = vpack.c.bf16 %v2818, %v2812
  %v2849 = vpack.c.bf16 %v2825, %v2819
  %v2850 = vpack.c.bf16 %v2826, %v2820
  %v2851 = vpack.c.bf16 %v2827, %v2821
  %v2852 = vpack.c.bf16 %v2828, %v2822
  %v2853 = vpack.c.bf16 %v2829, %v2823
  %v2854 = vpack.c.bf16 %v2830, %v2824
  %v2855 = vld [vmem:[%s3] sm:$0xff]
  %v2856 = vld [vmem:[%s3 + $0x8] sm:$0xf]
  %v2857 = vld [vmem:[%s3 + $0xc] sm:$0xff]
  %v2858 = vld [vmem:[%s3 + $0x14] sm:$0xf]
  %v2859 = vld [vmem:[%s3 + $0x18] sm:$0xff]
  %v2860 = vld [vmem:[%s3 + $0x20] sm:$0xf]
  %v2861 = vld [vmem:[%s3 + $0x24] sm:$0xff]
  %v2862 = vld [vmem:[%s3 + $0x2c] sm:$0xf]
  %v2863 = vld [vmem:[%s3 + $0x30] sm:$0xff]
  %v2864 = vld [vmem:[%s3 + $0x38] sm:$0xf]
  %v2865 = vld [vmem:[%s3 + $0x3c] sm:$0xff]
  %v2866 = vld [vmem:[%s3 + $0x44] sm:$0xf]
  %v2867 = vld [vmem:[%s3 + $0x48] sm:$0xff]
  %v2868 = vld [vmem:[%s3 + $0x50] sm:$0xf]
  %v2869 = vld [vmem:[%s3 + $0x54] sm:$0xff]
  %v2870 = vld [vmem:[%s3 + $0x5c] sm:$0xf]
  %v2871 = vld [vmem:[%s3 + $0x60] sm:$0xff]
  %v2872 = vld [vmem:[%s3 + $0x68] sm:$0xf]
  %v2873 = vld [vmem:[%s3 + $0x6c] sm:$0xff]
  %v2874 = vld [vmem:[%s3 + $0x74] sm:$0xf]
  %v2875 = vld [vmem:[%s3 + $0x78] sm:$0xff]
  %v2876 = vld [vmem:[%s3 + $0x80] sm:$0xf]
  %v2877 = vld [vmem:[%s3 + $0x84] sm:$0xff]
  %v2878 = vld [vmem:[%s3 + $0x8c] sm:$0xf]
  %v2879 = vld [vmem:[%s3 + $0x90] sm:$0xff]
  %v2880 = vld [vmem:[%s3 + $0x98] sm:$0xf]
  %v2881 = vld [vmem:[%s3 + $0x9c] sm:$0xff]
  %v2882 = vld [vmem:[%s3 + $0xa4] sm:$0xf]
  %v2883 = vld [vmem:[%s3 + $0xa8] sm:$0xff]
  %v2884 = vld [vmem:[%s3 + $0xb0] sm:$0xf]
  %v2885 = vld [vmem:[%s3 + $0xb4] sm:$0xff]
  %v2886 = vld [vmem:[%s3 + $0xbc] sm:$0xf]
  %v2887 = vld [vmem:[%s3 + $0xc0] sm:$0xff]
  %v2888 = vld [vmem:[%s3 + $0xc8] sm:$0xf]
  %v2889 = vld [vmem:[%s3 + $0xcc] sm:$0xff]
  %v2890 = vld [vmem:[%s3 + $0xd4] sm:$0xf]
  %v2891 = vld [vmem:[%s3 + $0xd8] sm:$0xff]
  %v2892 = vld [vmem:[%s3 + $0xe0] sm:$0xf]
  %v2893 = vld [vmem:[%s3 + $0xe4] sm:$0xff]
  %v2894 = vld [vmem:[%s3 + $0xec] sm:$0xf]
  %v2895 = vld [vmem:[%s3 + $0xf0] sm:$0xff]
  %v2896 = vld [vmem:[%s3 + $0xf8] sm:$0xf]
  %v2897 = vld [vmem:[%s3 + $0xfc] sm:$0xff]
  %v2898 = vld [vmem:[%s3 + $0x104] sm:$0xf]
  %v2899 = vld [vmem:[%s3 + $0x108] sm:$0xff]
  %v2900 = vld [vmem:[%s3 + $0x110] sm:$0xf]
  %v2901 = vld [vmem:[%s3 + $0x114] sm:$0xff]
  %v2902 = vld [vmem:[%s3 + $0x11c] sm:$0xf]
  %v2903 = vld [vmem:[%s3 + $0x120] sm:$0xff]
  %v2904 = vld [vmem:[%s3 + $0x128] sm:$0xf]
  %v2905 = vld [vmem:[%s3 + $0x12c] sm:$0xff]
  %v2906 = vld [vmem:[%s3 + $0x134] sm:$0xf]
  %v2907 = vld [vmem:[%s3 + $0x138] sm:$0xff]
  %v2908 = vld [vmem:[%s3 + $0x140] sm:$0xf]
  %v2909 = vld [vmem:[%s3 + $0x144] sm:$0xff]
  %v2910 = vld [vmem:[%s3 + $0x14c] sm:$0xf]
  %v2911 = vld [vmem:[%s3 + $0x150] sm:$0xff]
  %v2912 = vld [vmem:[%s3 + $0x158] sm:$0xf]
  %v2913 = vld [vmem:[%s3 + $0x15c] sm:$0xff]
  %v2914 = vld [vmem:[%s3 + $0x164] sm:$0xf]
  %v2915 = vld [vmem:[%s3 + $0x168] sm:$0xff]
  %v2916 = vld [vmem:[%s3 + $0x170] sm:$0xf]
  %v2917 = vld [vmem:[%s3 + $0x174] sm:$0xff]
  %v2918 = vld [vmem:[%s3 + $0x17c] sm:$0xf]
  %v2919 = vld [vmem:[%s3 + $0x180] sm:$0xff]
  %v2920 = vld [vmem:[%s3 + $0x188] sm:$0xf]
  %v2921 = vld [vmem:[%s3 + $0x18c] sm:$0xff]
  %v2922 = vld [vmem:[%s3 + $0x194] sm:$0xf]
  %v2923 = vld [vmem:[%s3 + $0x198] sm:$0xff]
  %v2924 = vld [vmem:[%s3 + $0x1a0] sm:$0xf]
  %v2925 = vld [vmem:[%s3 + $0x1a4] sm:$0xff]
  %v2926 = vld [vmem:[%s3 + $0x1ac] sm:$0xf]
  %v2927 = vld [vmem:[%s3 + $0x1b0] sm:$0xff]
  %v2928 = vld [vmem:[%s3 + $0x1b8] sm:$0xf]
  %v2929 = vld [vmem:[%s3 + $0x1bc] sm:$0xff]
  %v2930 = vld [vmem:[%s3 + $0x1c4] sm:$0xf]
  %v2931 = vld [vmem:[%s3 + $0x1c8] sm:$0xff]
  %v2932 = vld [vmem:[%s3 + $0x1d0] sm:$0xf]
  %v2933 = vld [vmem:[%s3 + $0x1d4] sm:$0xff]
  %v2934 = vld [vmem:[%s3 + $0x1dc] sm:$0xf]
  %v2935 = vld [vmem:[%s3 + $0x1e0] sm:$0xff]
  %v2936 = vld [vmem:[%s3 + $0x1e8] sm:$0xf]
  %v2937 = vld [vmem:[%s3 + $0x1ec] sm:$0xff]
  %v2938 = vld [vmem:[%s3 + $0x1f4] sm:$0xf]
  %v2939 = vld [vmem:[%s3 + $0x1f8] sm:$0xff]
  %v2940 = vld [vmem:[%s3 + $0x200] sm:$0xf]
  %v2941 = vld [vmem:[%s3 + $0x204] sm:$0xff]
  %v2942 = vld [vmem:[%s3 + $0x20c] sm:$0xf]
  %v2943 = vld [vmem:[%s3 + $0x210] sm:$0xff]
  %v2944 = vld [vmem:[%s3 + $0x218] sm:$0xf]
  %v2945 = vld [vmem:[%s3 + $0x21c] sm:$0xff]
  %v2946 = vld [vmem:[%s3 + $0x224] sm:$0xf]
  %v2947 = vld [vmem:[%s3 + $0x228] sm:$0xff]
  %v2948 = vld [vmem:[%s3 + $0x230] sm:$0xf]
  %v2949 = vld [vmem:[%s3 + $0x234] sm:$0xff]
  %v2950 = vld [vmem:[%s3 + $0x23c] sm:$0xf]
  %v2951 = vld [vmem:[%s3 + $0x240] sm:$0xff]
  %v2952 = vld [vmem:[%s3 + $0x248] sm:$0xf]
  %v2953 = vld [vmem:[%s3 + $0x24c] sm:$0xff]
  %v2954 = vld [vmem:[%s3 + $0x254] sm:$0xf]
  %v2955 = vld [vmem:[%s3 + $0x258] sm:$0xff]
  %v2956 = vld [vmem:[%s3 + $0x260] sm:$0xf]
  %v2957 = vld [vmem:[%s3 + $0x264] sm:$0xff]
  %v2958 = vld [vmem:[%s3 + $0x26c] sm:$0xf]
  %v2959 = vld [vmem:[%s3 + $0x270] sm:$0xff]
  %v2960 = vld [vmem:[%s3 + $0x278] sm:$0xf]
  %v2961 = vld [vmem:[%s3 + $0x27c] sm:$0xff]
  %v2962 = vld [vmem:[%s3 + $0x284] sm:$0xf]
  %v2963 = vld [vmem:[%s3 + $0x288] sm:$0xff]
  %v2964 = vld [vmem:[%s3 + $0x290] sm:$0xf]
  %v2965 = vld [vmem:[%s3 + $0x294] sm:$0xff]
  %v2966 = vld [vmem:[%s3 + $0x29c] sm:$0xf]
  %v2967 = vld [vmem:[%s3 + $0x2a0] sm:$0xff]
  %v2968 = vld [vmem:[%s3 + $0x2a8] sm:$0xf]
  %v2969 = vld [vmem:[%s3 + $0x2ac] sm:$0xff]
  %v2970 = vld [vmem:[%s3 + $0x2b4] sm:$0xf]
  %v2971 = vld [vmem:[%s3 + $0x2b8] sm:$0xff]
  %v2972 = vld [vmem:[%s3 + $0x2c0] sm:$0xf]
  %v2973 = vld [vmem:[%s3 + $0x2c4] sm:$0xff]
  %v2974 = vld [vmem:[%s3 + $0x2cc] sm:$0xf]
  %v2975 = vld [vmem:[%s3 + $0x2d0] sm:$0xff]
  %v2976 = vld [vmem:[%s3 + $0x2d8] sm:$0xf]
  %v2977 = vld [vmem:[%s3 + $0x2dc] sm:$0xff]
  %v2978 = vld [vmem:[%s3 + $0x2e4] sm:$0xf]
  %v2979 = vld [vmem:[%s3 + $0x2e8] sm:$0xff]
  %v2980 = vld [vmem:[%s3 + $0x2f0] sm:$0xf]
  %v2981 = vld [vmem:[%s3 + $0x2f4] sm:$0xff]
  %v2982 = vld [vmem:[%s3 + $0x2fc] sm:$0xf]
  %v2983 = vld [vmem:[%s3 + $0x300] sm:$0xff]
  %v2984 = vld [vmem:[%s3 + $0x308] sm:$0xf]
  %v2985 = vld [vmem:[%s3 + $0x30c] sm:$0xff]
  %v2986 = vld [vmem:[%s3 + $0x314] sm:$0xf]
  %v2987 = vld [vmem:[%s3 + $0x318] sm:$0xff]
  %v2988 = vld [vmem:[%s3 + $0x320] sm:$0xf]
  %v2989 = vld [vmem:[%s3 + $0x324] sm:$0xff]
  %v2990 = vld [vmem:[%s3 + $0x32c] sm:$0xf]
  %v2991 = vld [vmem:[%s3 + $0x330] sm:$0xff]
  %v2992 = vld [vmem:[%s3 + $0x338] sm:$0xf]
  %v2993 = vld [vmem:[%s3 + $0x33c] sm:$0xff]
  %v2994 = vld [vmem:[%s3 + $0x344] sm:$0xf]
  %v2995 = vld [vmem:[%s3 + $0x348] sm:$0xff]
  %v2996 = vld [vmem:[%s3 + $0x350] sm:$0xf]
  %v2997 = vld [vmem:[%s3 + $0x354] sm:$0xff]
  %v2998 = vld [vmem:[%s3 + $0x35c] sm:$0xf]
  %v2999 = vld [vmem:[%s3 + $0x360] sm:$0xff]
  %v3000 = vld [vmem:[%s3 + $0x368] sm:$0xf]
  %v3001 = vld [vmem:[%s3 + $0x36c] sm:$0xff]
  %v3002 = vld [vmem:[%s3 + $0x374] sm:$0xf]
  %v3003 = vld [vmem:[%s3 + $0x378] sm:$0xff]
  %v3004 = vld [vmem:[%s3 + $0x380] sm:$0xf]
  %v3005 = vld [vmem:[%s3 + $0x384] sm:$0xff]
  %v3006 = vld [vmem:[%s3 + $0x38c] sm:$0xf]
  %v3007 = vld [vmem:[%s3 + $0x390] sm:$0xff]
  %v3008 = vld [vmem:[%s3 + $0x398] sm:$0xf]
  %v3009 = vld [vmem:[%s3 + $0x39c] sm:$0xff]
  %v3010 = vld [vmem:[%s3 + $0x3a4] sm:$0xf]
  %v3011 = vld [vmem:[%s3 + $0x3a8] sm:$0xff]
  %v3012 = vld [vmem:[%s3 + $0x3b0] sm:$0xf]
  %v3013 = vld [vmem:[%s3 + $0x3b4] sm:$0xff]
  %v3014 = vld [vmem:[%s3 + $0x3bc] sm:$0xf]
  %v3015 = vld [vmem:[%s3 + $0x3c0] sm:$0xff]
  %v3016 = vld [vmem:[%s3 + $0x3c8] sm:$0xf]
  %v3017 = vld [vmem:[%s3 + $0x3cc] sm:$0xff]
  %v3018 = vld [vmem:[%s3 + $0x3d4] sm:$0xf]
  %v3019 = vld [vmem:[%s3 + $0x3d8] sm:$0xff]
  %v3020 = vld [vmem:[%s3 + $0x3e0] sm:$0xf]
  %v3021 = vld [vmem:[%s3 + $0x3e4] sm:$0xff]
  %v3022 = vld [vmem:[%s3 + $0x3ec] sm:$0xf]
  %v3023 = vld [vmem:[%s2] sm:$0x7]
  %v3025 = vlaneseq
  %v3026 = vshrl.u32 %v3025, 7
  %v3027 = vsub.s32 0, %v3026
  %v3028 = vrot.slane %v3023, %v3027
  %v3029 = vlaneseq
  %v3030 = vshrl.u32 %v3029, 7
  %v3031 = vsub.s32 1, %v3030
  %v3032 = vrot.slane %v3023, %v3031
  %v3033 = vlaneseq
  %v3034 = vshrl.u32 %v3033, 7
  %v3035 = vsub.s32 2, %v3034
  %v3036 = vrot.slane %v3023, %v3035
  %v3208 = vunpack.c.l.b16 %v2855
  %v3209 = vunpack.c.h.b16 %v2855
  %v3210 = vunpack.c.l.b16 %v2856
  %v3211 = vunpack.c.l.b16 %v2857
  %v3212 = vunpack.c.h.b16 %v2857
  %v3213 = vunpack.c.l.b16 %v2858
  %v3214 = vunpack.c.l.b16 %v2859
  %v3215 = vunpack.c.h.b16 %v2859
  %v3216 = vunpack.c.l.b16 %v2860
  %v3217 = vunpack.c.l.b16 %v2861
  %v3218 = vunpack.c.h.b16 %v2861
  %v3219 = vunpack.c.l.b16 %v2862
  %v3220 = vunpack.c.l.b16 %v2863
  %v3221 = vunpack.c.h.b16 %v2863
  %v3222 = vunpack.c.l.b16 %v2864
  %v3223 = vunpack.c.l.b16 %v2865
  %v3224 = vunpack.c.h.b16 %v2865
  %v3225 = vunpack.c.l.b16 %v2866
  %v3226 = vunpack.c.l.b16 %v2867
  %v3227 = vunpack.c.h.b16 %v2867
  %v3228 = vunpack.c.l.b16 %v2868
  %v3229 = vunpack.c.l.b16 %v2869
  %v3230 = vunpack.c.h.b16 %v2869
  %v3231 = vunpack.c.l.b16 %v2870
  %v3232 = vunpack.c.l.b16 %v2871
  %v3233 = vunpack.c.h.b16 %v2871
  %v3234 = vunpack.c.l.b16 %v2872
  %v3235 = vunpack.c.l.b16 %v2873
  %v3236 = vunpack.c.h.b16 %v2873
  %v3237 = vunpack.c.l.b16 %v2874
  %v3238 = vunpack.c.l.b16 %v2875
  %v3239 = vunpack.c.h.b16 %v2875
  %v3240 = vunpack.c.l.b16 %v2876
  %v3241 = vunpack.c.l.b16 %v2877
  %v3242 = vunpack.c.h.b16 %v2877
  %v3243 = vunpack.c.l.b16 %v2878
  %v3244 = vunpack.c.l.b16 %v2879
  %v3245 = vunpack.c.h.b16 %v2879
  %v3246 = vunpack.c.l.b16 %v2880
  %v3247 = vunpack.c.l.b16 %v2881
  %v3248 = vunpack.c.h.b16 %v2881
  %v3249 = vunpack.c.l.b16 %v2882
  %v3250 = vunpack.c.l.b16 %v2883
  %v3251 = vunpack.c.h.b16 %v2883
  %v3252 = vunpack.c.l.b16 %v2884
  %v3253 = vunpack.c.l.b16 %v2885
  %v3254 = vunpack.c.h.b16 %v2885
  %v3255 = vunpack.c.l.b16 %v2886
  %v3256 = vunpack.c.l.b16 %v2887
  %v3257 = vunpack.c.h.b16 %v2887
  %v3258 = vunpack.c.l.b16 %v2888
  %v3259 = vunpack.c.l.b16 %v2889
  %v3260 = vunpack.c.h.b16 %v2889
  %v3261 = vunpack.c.l.b16 %v2890
  %v3262 = vunpack.c.l.b16 %v2891
  %v3263 = vunpack.c.h.b16 %v2891
  %v3264 = vunpack.c.l.b16 %v2892
  %v3265 = vunpack.c.l.b16 %v2893
  %v3266 = vunpack.c.h.b16 %v2893
  %v3267 = vunpack.c.l.b16 %v2894
  %v3268 = vunpack.c.l.b16 %v2895
  %v3269 = vunpack.c.h.b16 %v2895
  %v3270 = vunpack.c.l.b16 %v2896
  %v3271 = vunpack.c.l.b16 %v2897
  %v3272 = vunpack.c.h.b16 %v2897
  %v3273 = vunpack.c.l.b16 %v2898
  %v3274 = vunpack.c.l.b16 %v2899
  %v3275 = vunpack.c.h.b16 %v2899
  %v3276 = vunpack.c.l.b16 %v2900
  %v3277 = vunpack.c.l.b16 %v2901
  %v3278 = vunpack.c.h.b16 %v2901
  %v3279 = vunpack.c.l.b16 %v2902
  %v3280 = vunpack.c.l.b16 %v2903
  %v3281 = vunpack.c.h.b16 %v2903
  %v3282 = vunpack.c.l.b16 %v2904
  %v3283 = vunpack.c.l.b16 %v2905
  %v3284 = vunpack.c.h.b16 %v2905
  %v3285 = vunpack.c.l.b16 %v2906
  %v3286 = vunpack.c.l.b16 %v2907
  %v3287 = vunpack.c.h.b16 %v2907
  %v3288 = vunpack.c.l.b16 %v2908
  %v3289 = vunpack.c.l.b16 %v2909
  %v3290 = vunpack.c.h.b16 %v2909
  %v3291 = vunpack.c.l.b16 %v2910
  %v3292 = vunpack.c.l.b16 %v2911
  %v3293 = vunpack.c.h.b16 %v2911
  %v3294 = vunpack.c.l.b16 %v2912
  %v3295 = vunpack.c.l.b16 %v2913
  %v3296 = vunpack.c.h.b16 %v2913
  %v3297 = vunpack.c.l.b16 %v2914
  %v3298 = vunpack.c.l.b16 %v2915
  %v3299 = vunpack.c.h.b16 %v2915
  %v3300 = vunpack.c.l.b16 %v2916
  %v3301 = vunpack.c.l.b16 %v2917
  %v3302 = vunpack.c.h.b16 %v2917
  %v3303 = vunpack.c.l.b16 %v2918
  %v3304 = vunpack.c.l.b16 %v2919
  %v3305 = vunpack.c.h.b16 %v2919
  %v3306 = vunpack.c.l.b16 %v2920
  %v3307 = vunpack.c.l.b16 %v2921
  %v3308 = vunpack.c.h.b16 %v2921
  %v3309 = vunpack.c.l.b16 %v2922
  %v3310 = vunpack.c.l.b16 %v2923
  %v3311 = vunpack.c.h.b16 %v2923
  %v3312 = vunpack.c.l.b16 %v2924
  %v3313 = vunpack.c.l.b16 %v2925
  %v3314 = vunpack.c.h.b16 %v2925
  %v3315 = vunpack.c.l.b16 %v2926
  %v3316 = vunpack.c.l.b16 %v2927
  %v3317 = vunpack.c.h.b16 %v2927
  %v3318 = vunpack.c.l.b16 %v2928
  %v3319 = vunpack.c.l.b16 %v2929
  %v3320 = vunpack.c.h.b16 %v2929
  %v3321 = vunpack.c.l.b16 %v2930
  %v3322 = vunpack.c.l.b16 %v2931
  %v3323 = vunpack.c.h.b16 %v2931
  %v3324 = vunpack.c.l.b16 %v2932
  %v3325 = vunpack.c.l.b16 %v2933
  %v3326 = vunpack.c.h.b16 %v2933
  %v3327 = vunpack.c.l.b16 %v2934
  %v3328 = vunpack.c.l.b16 %v2935
  %v3329 = vunpack.c.h.b16 %v2935
  %v3330 = vunpack.c.l.b16 %v2936
  %v3331 = vunpack.c.l.b16 %v2937
  %v3332 = vunpack.c.h.b16 %v2937
  %v3333 = vunpack.c.l.b16 %v2938
  %v3334 = vunpack.c.l.b16 %v2939
  %v3335 = vunpack.c.h.b16 %v2939
  %v3336 = vunpack.c.l.b16 %v2940
  %v3337 = vunpack.c.l.b16 %v2941
  %v3338 = vunpack.c.h.b16 %v2941
  %v3339 = vunpack.c.l.b16 %v2942
  %v3340 = vunpack.c.l.b16 %v2943
  %v3341 = vunpack.c.h.b16 %v2943
  %v3342 = vunpack.c.l.b16 %v2944
  %v3343 = vunpack.c.l.b16 %v2945
  %v3344 = vunpack.c.h.b16 %v2945
  %v3345 = vunpack.c.l.b16 %v2946
  %v3346 = vunpack.c.l.b16 %v2947
  %v3347 = vunpack.c.h.b16 %v2947
  %v3348 = vunpack.c.l.b16 %v2948
  %v3349 = vunpack.c.l.b16 %v2949
  %v3350 = vunpack.c.h.b16 %v2949
  %v3351 = vunpack.c.l.b16 %v2950
  %v3352 = vunpack.c.l.b16 %v2951
  %v3353 = vunpack.c.h.b16 %v2951
  %v3354 = vunpack.c.l.b16 %v2952
  %v3355 = vunpack.c.l.b16 %v2953
  %v3356 = vunpack.c.h.b16 %v2953
  %v3357 = vunpack.c.l.b16 %v2954
  %v3358 = vunpack.c.l.b16 %v2955
  %v3359 = vunpack.c.h.b16 %v2955
  %v3360 = vunpack.c.l.b16 %v2956
  %v3361 = vunpack.c.l.b16 %v2957
  %v3362 = vunpack.c.h.b16 %v2957
  %v3363 = vunpack.c.l.b16 %v2958
  %v3364 = vunpack.c.l.b16 %v2959
  %v3365 = vunpack.c.h.b16 %v2959
  %v3366 = vunpack.c.l.b16 %v2960
  %v3367 = vunpack.c.l.b16 %v2961
  %v3368 = vunpack.c.h.b16 %v2961
  %v3369 = vunpack.c.l.b16 %v2962
  %v3370 = vunpack.c.l.b16 %v2963
  %v3371 = vunpack.c.h.b16 %v2963
  %v3372 = vunpack.c.l.b16 %v2964
  %v3373 = vunpack.c.l.b16 %v2965
  %v3374 = vunpack.c.h.b16 %v2965
  %v3375 = vunpack.c.l.b16 %v2966
  %v3376 = vunpack.c.l.b16 %v2967
  %v3377 = vunpack.c.h.b16 %v2967
  %v3378 = vunpack.c.l.b16 %v2968
  %v3379 = vunpack.c.l.b16 %v2969
  %v3380 = vunpack.c.h.b16 %v2969
  %v3381 = vunpack.c.l.b16 %v2970
  %v3382 = vunpack.c.l.b16 %v2971
  %v3383 = vunpack.c.h.b16 %v2971
  %v3384 = vunpack.c.l.b16 %v2972
  %v3385 = vunpack.c.l.b16 %v2973
  %v3386 = vunpack.c.h.b16 %v2973
  %v3387 = vunpack.c.l.b16 %v2974
  %v3388 = vunpack.c.l.b16 %v2975
  %v3389 = vunpack.c.h.b16 %v2975
  %v3390 = vunpack.c.l.b16 %v2976
  %v3391 = vunpack.c.l.b16 %v2977
  %v3392 = vunpack.c.h.b16 %v2977
  %v3393 = vunpack.c.l.b16 %v2978
  %v3394 = vunpack.c.l.b16 %v2979
  %v3395 = vunpack.c.h.b16 %v2979
  %v3396 = vunpack.c.l.b16 %v2980
  %v3397 = vunpack.c.l.b16 %v2981
  %v3398 = vunpack.c.h.b16 %v2981
  %v3399 = vunpack.c.l.b16 %v2982
  %v3400 = vunpack.c.l.b16 %v2983
  %v3401 = vunpack.c.h.b16 %v2983
  %v3402 = vunpack.c.l.b16 %v2984
  %v3403 = vunpack.c.l.b16 %v2985
  %v3404 = vunpack.c.h.b16 %v2985
  %v3405 = vunpack.c.l.b16 %v2986
  %v3406 = vunpack.c.l.b16 %v2987
  %v3407 = vunpack.c.h.b16 %v2987
  %v3408 = vunpack.c.l.b16 %v2988
  %v3409 = vunpack.c.l.b16 %v2989
  %v3410 = vunpack.c.h.b16 %v2989
  %v3411 = vunpack.c.l.b16 %v2990
  %v3412 = vunpack.c.l.b16 %v2991
  %v3413 = vunpack.c.h.b16 %v2991
  %v3414 = vunpack.c.l.b16 %v2992
  %v3415 = vunpack.c.l.b16 %v2993
  %v3416 = vunpack.c.h.b16 %v2993
  %v3417 = vunpack.c.l.b16 %v2994
  %v3418 = vunpack.c.l.b16 %v2995
  %v3419 = vunpack.c.h.b16 %v2995
  %v3420 = vunpack.c.l.b16 %v2996
  %v3421 = vunpack.c.l.b16 %v2997
  %v3422 = vunpack.c.h.b16 %v2997
  %v3423 = vunpack.c.l.b16 %v2998
  %v3424 = vunpack.c.l.b16 %v2999
  %v3425 = vunpack.c.h.b16 %v2999
  %v3426 = vunpack.c.l.b16 %v3000
  %v3427 = vunpack.c.l.b16 %v3001
  %v3428 = vunpack.c.h.b16 %v3001
  %v3429 = vunpack.c.l.b16 %v3002
  %v3430 = vunpack.c.l.b16 %v3003
  %v3431 = vunpack.c.h.b16 %v3003
  %v3432 = vunpack.c.l.b16 %v3004
  %v3433 = vunpack.c.l.b16 %v3005
  %v3434 = vunpack.c.h.b16 %v3005
  %v3435 = vunpack.c.l.b16 %v3006
  %v3436 = vunpack.c.l.b16 %v3007
  %v3437 = vunpack.c.h.b16 %v3007
  %v3438 = vunpack.c.l.b16 %v3008
  %v3439 = vunpack.c.l.b16 %v3009
  %v3440 = vunpack.c.h.b16 %v3009
  %v3441 = vunpack.c.l.b16 %v3010
  %v3442 = vunpack.c.l.b16 %v3011
  %v3443 = vunpack.c.h.b16 %v3011
  %v3444 = vunpack.c.l.b16 %v3012
  %v3445 = vunpack.c.l.b16 %v3013
  %v3446 = vunpack.c.h.b16 %v3013
  %v3447 = vunpack.c.l.b16 %v3014
  %v3448 = vunpack.c.l.b16 %v3015
  %v3449 = vunpack.c.h.b16 %v3015
  %v3450 = vunpack.c.l.b16 %v3016
  %v3451 = vunpack.c.l.b16 %v3017
  %v3452 = vunpack.c.h.b16 %v3017
  %v3453 = vunpack.c.l.b16 %v3018
  %v3454 = vunpack.c.l.b16 %v3019
  %v3455 = vunpack.c.h.b16 %v3019
  %v3456 = vunpack.c.l.b16 %v3020
  %v3457 = vunpack.c.l.b16 %v3021
  %v3458 = vunpack.c.h.b16 %v3021
  %v3459 = vunpack.c.l.b16 %v3022
  %v3460 = vpack.c.b16 %v3211, %v3208
  %v3461 = vpack.c.b16 %v3212, %v3209
  %v3462 = vpack.c.b16 %v3213, %v3210
  %v3463 = vpack.c.b16 %v3217, %v3214
  %v3464 = vpack.c.b16 %v3218, %v3215
  %v3465 = vpack.c.b16 %v3219, %v3216
  %v3466 = vpack.c.b16 %v3223, %v3220
  %v3467 = vpack.c.b16 %v3224, %v3221
  %v3468 = vpack.c.b16 %v3225, %v3222
  %v3469 = vpack.c.b16 %v3229, %v3226
  %v3470 = vpack.c.b16 %v3230, %v3227
  %v3471 = vpack.c.b16 %v3231, %v3228
  %v3472 = vpack.c.b16 %v3235, %v3232
  %v3473 = vpack.c.b16 %v3236, %v3233
  %v3474 = vpack.c.b16 %v3237, %v3234
  %v3475 = vpack.c.b16 %v3241, %v3238
  %v3476 = vpack.c.b16 %v3242, %v3239
  %v3477 = vpack.c.b16 %v3243, %v3240
  %v3478 = vpack.c.b16 %v3247, %v3244
  %v3479 = vpack.c.b16 %v3248, %v3245
  %v3480 = vpack.c.b16 %v3249, %v3246
  %v3481 = vpack.c.b16 %v3253, %v3250
  %v3482 = vpack.c.b16 %v3254, %v3251
  %v3483 = vpack.c.b16 %v3255, %v3252
  %v3484 = vpack.c.b16 %v3259, %v3256
  %v3485 = vpack.c.b16 %v3260, %v3257
  %v3486 = vpack.c.b16 %v3261, %v3258
  %v3487 = vpack.c.b16 %v3265, %v3262
  %v3488 = vpack.c.b16 %v3266, %v3263
  %v3489 = vpack.c.b16 %v3267, %v3264
  %v3490 = vpack.c.b16 %v3271, %v3268
  %v3491 = vpack.c.b16 %v3272, %v3269
  %v3492 = vpack.c.b16 %v3273, %v3270
  %v3493 = vpack.c.b16 %v3277, %v3274
  %v3494 = vpack.c.b16 %v3278, %v3275
  %v3495 = vpack.c.b16 %v3279, %v3276
  %v3496 = vpack.c.b16 %v3283, %v3280
  %v3497 = vpack.c.b16 %v3284, %v3281
  %v3498 = vpack.c.b16 %v3285, %v3282
  %v3499 = vpack.c.b16 %v3289, %v3286
  %v3500 = vpack.c.b16 %v3290, %v3287
  %v3501 = vpack.c.b16 %v3291, %v3288
  %v3502 = vpack.c.b16 %v3295, %v3292
  %v3503 = vpack.c.b16 %v3296, %v3293
  %v3504 = vpack.c.b16 %v3297, %v3294
  %v3505 = vpack.c.b16 %v3301, %v3298
  %v3506 = vpack.c.b16 %v3302, %v3299
  %v3507 = vpack.c.b16 %v3303, %v3300
  %v3508 = vpack.c.b16 %v3307, %v3304
  %v3509 = vpack.c.b16 %v3308, %v3305
  %v3510 = vpack.c.b16 %v3309, %v3306
  %v3511 = vpack.c.b16 %v3313, %v3310
  %v3512 = vpack.c.b16 %v3314, %v3311
  %v3513 = vpack.c.b16 %v3315, %v3312
  %v3514 = vpack.c.b16 %v3319, %v3316
  %v3515 = vpack.c.b16 %v3320, %v3317
  %v3516 = vpack.c.b16 %v3321, %v3318
  %v3517 = vpack.c.b16 %v3325, %v3322
  %v3518 = vpack.c.b16 %v3326, %v3323
  %v3519 = vpack.c.b16 %v3327, %v3324
  %v3520 = vpack.c.b16 %v3331, %v3328
  %v3521 = vpack.c.b16 %v3332, %v3329
  %v3522 = vpack.c.b16 %v3333, %v3330
  %v3523 = vpack.c.b16 %v3337, %v3334
  %v3524 = vpack.c.b16 %v3338, %v3335
  %v3525 = vpack.c.b16 %v3339, %v3336
  %v3526 = vpack.c.b16 %v3343, %v3340
  %v3527 = vpack.c.b16 %v3344, %v3341
  %v3528 = vpack.c.b16 %v3345, %v3342
  %v3529 = vpack.c.b16 %v3349, %v3346
  %v3530 = vpack.c.b16 %v3350, %v3347
  %v3531 = vpack.c.b16 %v3351, %v3348
  %v3532 = vpack.c.b16 %v3355, %v3352
  %v3533 = vpack.c.b16 %v3356, %v3353
  %v3534 = vpack.c.b16 %v3357, %v3354
  %v3535 = vpack.c.b16 %v3361, %v3358
  %v3536 = vpack.c.b16 %v3362, %v3359
  %v3537 = vpack.c.b16 %v3363, %v3360
  %v3538 = vpack.c.b16 %v3367, %v3364
  %v3539 = vpack.c.b16 %v3368, %v3365
  %v3540 = vpack.c.b16 %v3369, %v3366
  %v3541 = vpack.c.b16 %v3373, %v3370
  %v3542 = vpack.c.b16 %v3374, %v3371
  %v3543 = vpack.c.b16 %v3375, %v3372
  %v3544 = vpack.c.b16 %v3379, %v3376
  %v3545 = vpack.c.b16 %v3380, %v3377
  %v3546 = vpack.c.b16 %v3381, %v3378
  %v3547 = vpack.c.b16 %v3385, %v3382
  %v3548 = vpack.c.b16 %v3386, %v3383
  %v3549 = vpack.c.b16 %v3387, %v3384
  %v3550 = vpack.c.b16 %v3391, %v3388
  %v3551 = vpack.c.b16 %v3392, %v3389
  %v3552 = vpack.c.b16 %v3393, %v3390
  %v3553 = vpack.c.b16 %v3397, %v3394
  %v3554 = vpack.c.b16 %v3398, %v3395
  %v3555 = vpack.c.b16 %v3399, %v3396
  %v3556 = vpack.c.b16 %v3403, %v3400
  %v3557 = vpack.c.b16 %v3404, %v3401
  %v3558 = vpack.c.b16 %v3405, %v3402
  %v3559 = vpack.c.b16 %v3409, %v3406
  %v3560 = vpack.c.b16 %v3410, %v3407
  %v3561 = vpack.c.b16 %v3411, %v3408
  %v3562 = vpack.c.b16 %v3415, %v3412
  %v3563 = vpack.c.b16 %v3416, %v3413
  %v3564 = vpack.c.b16 %v3417, %v3414
  %v3565 = vpack.c.b16 %v3421, %v3418
  %v3566 = vpack.c.b16 %v3422, %v3419
  %v3567 = vpack.c.b16 %v3423, %v3420
  %v3568 = vpack.c.b16 %v3427, %v3424
  %v3569 = vpack.c.b16 %v3428, %v3425
  %v3570 = vpack.c.b16 %v3429, %v3426
  %v3571 = vpack.c.b16 %v3433, %v3430
  %v3572 = vpack.c.b16 %v3434, %v3431
  %v3573 = vpack.c.b16 %v3435, %v3432
  %v3574 = vpack.c.b16 %v3439, %v3436
  %v3575 = vpack.c.b16 %v3440, %v3437
  %v3576 = vpack.c.b16 %v3441, %v3438
  %v3577 = vpack.c.b16 %v3445, %v3442
  %v3578 = vpack.c.b16 %v3446, %v3443
  %v3579 = vpack.c.b16 %v3447, %v3444
  %v3580 = vpack.c.b16 %v3451, %v3448
  %v3581 = vpack.c.b16 %v3452, %v3449
  %v3582 = vpack.c.b16 %v3453, %v3450
  %v3583 = vpack.c.b16 %v3457, %v3454
  %v3584 = vpack.c.b16 %v3458, %v3455
  %v3585 = vpack.c.b16 %v3459, %v3456
  %vm3712 = vcmask 261120
  %v3714 = vsel %vm3712, %v2836, 0
  %v3717 = vsel %vm3712, %v2842, 0
  %v3720 = vsel %vm3712, %v2848, 0
  %v3723 = vsel %vm3712, %v2854, 0
  %3725 = vmatprep.subr.bf16.mxu0 %v3482
  %3726 = vmatpush1.bf16.msra.mxu0 %v3481
  %3727 = vmatprep.subr.bf16.mxu0 %v3479
  %3728 = vmatpush1.bf16.msra.mxu0 %v3478
  %3729 = vmatprep.subr.bf16.mxu0 %v3476
  %3730 = vmatpush1.bf16.msra.mxu0 %v3475
  %3731 = vmatprep.subr.bf16.mxu0 %v3473
  %3732 = vmatpush1.bf16.msra.mxu0 %v3472
  %3733 = vmatprep.subr.bf16.mxu0 %v3470
  %3734 = vmatpush1.bf16.msra.mxu0 %v3469
  %3735 = vmatprep.subr.bf16.mxu0 %v3467
  %3736 = vmatpush1.bf16.msra.mxu0 %v3466
  %3737 = vmatprep.subr.bf16.mxu0 %v3464
  %3738 = vmatpush1.bf16.msra.mxu0 %v3463
  %3739 = vmatprep.subr.bf16.mxu0 %v3461
  %3740 = vmatpush1.bf16.msra.mxu0 %v3460
  %3741 = vmatprep.subr.bf16.mxu0 %v3506
  %3742 = vmatpush2.bf16.msra.mxu0 %v3505
  %3743 = vmatprep.subr.bf16.mxu0 %v3503
  %3744 = vmatpush2.bf16.msra.mxu0 %v3502
  %3745 = vmatprep.subr.bf16.mxu0 %v3500
  %3746 = vmatpush2.bf16.msra.mxu0 %v3499
  %3747 = vmatprep.subr.bf16.mxu0 %v3497
  %3748 = vmatpush2.bf16.msra.mxu0 %v3496
  %3749 = vmatprep.subr.bf16.mxu0 %v3494
  %3750 = vmatpush2.bf16.msra.mxu0 %v3493
  %3751 = vmatprep.subr.bf16.mxu0 %v3491
  %3752 = vmatpush2.bf16.msra.mxu0 %v3490
  %3753 = vmatprep.subr.bf16.mxu0 %v3488
  %3754 = vmatpush2.bf16.msra.mxu0 %v3487
  %3755 = vmatprep.subr.bf16.mxu0 %v3485
  %3756 = vmatpush2.bf16.msra.mxu0 %v3484
  %3757 = vmatprep.mubr.bf16.mxu0 %v2832
  %3758 = vmatmul.mubr.bf16.gmra.mxu0 %v2831
  %v3759 = vpop.f32.mrf.mxu0
  %v3760 = vadd.f32 %v3028, %v3759
  %v3761 = vpop.f32.mrf.mxu0
  %v3762 = vadd.f32 %v3032, %v3761
  %v3763 = vpop.f32.mrf.mxu0
  %v3764 = vadd.f32 %v3028, %v3763
  %v3765 = vpop.f32.mrf.mxu0
  %v3766 = vadd.f32 %v3032, %v3765
  %3767 = vmatprep.mubr.bf16.mxu0 %v2838
  %3768 = vmatmul.mubr.bf16.gmra.mxu0 %v2837
  %v3769 = vpop.f32.mrf.mxu0
  %v3770 = vadd.f32 %v3028, %v3769
  %v3771 = vpop.f32.mrf.mxu0
  %v3772 = vadd.f32 %v3032, %v3771
  %v3773 = vpop.f32.mrf.mxu0
  %v3774 = vadd.f32 %v3028, %v3773
  %v3775 = vpop.f32.mrf.mxu0
  %v3776 = vadd.f32 %v3032, %v3775
  %3777 = vmatprep.mubr.bf16.mxu0 %v2844
  %3778 = vmatmul.mubr.bf16.gmra.mxu0 %v2843
  %v3779 = vpop.f32.mrf.mxu0
  %v3780 = vadd.f32 %v3028, %v3779
  %v3781 = vpop.f32.mrf.mxu0
  %v3782 = vadd.f32 %v3032, %v3781
  %v3783 = vpop.f32.mrf.mxu0
  %v3784 = vadd.f32 %v3028, %v3783
  %v3785 = vpop.f32.mrf.mxu0
  %v3786 = vadd.f32 %v3032, %v3785
  %3787 = vmatprep.mubr.bf16.mxu0 %v2850
  %3788 = vmatmul.mubr.bf16.gmra.mxu0 %v2849
  %v3789 = vpop.f32.mrf.mxu0
  %v3790 = vadd.f32 %v3028, %v3789
  %v3791 = vpop.f32.mrf.mxu0
  %v3792 = vadd.f32 %v3032, %v3791
  %v3793 = vpop.f32.mrf.mxu0
  %v3794 = vadd.f32 %v3028, %v3793
  %v3795 = vpop.f32.mrf.mxu0
  %v3796 = vadd.f32 %v3032, %v3795
  %3797 = vdwg.mxu0
  %3798 = vmatprep.subr.bf16.mxu0 %v3530
  %3799 = vmatpush1.bf16.msra.mxu0 %v3529
  %3800 = vmatprep.subr.bf16.mxu0 %v3527
  %3801 = vmatpush1.bf16.msra.mxu0 %v3526
  %3802 = vmatprep.subr.bf16.mxu0 %v3524
  %3803 = vmatpush1.bf16.msra.mxu0 %v3523
  %3804 = vmatprep.subr.bf16.mxu0 %v3521
  %3805 = vmatpush1.bf16.msra.mxu0 %v3520
  %3806 = vmatprep.subr.bf16.mxu0 %v3518
  %3807 = vmatpush1.bf16.msra.mxu0 %v3517
  %3808 = vmatprep.subr.bf16.mxu0 %v3515
  %3809 = vmatpush1.bf16.msra.mxu0 %v3514
  %3810 = vmatprep.subr.bf16.mxu0 %v3512
  %3811 = vmatpush1.bf16.msra.mxu0 %v3511
  %3812 = vmatprep.subr.bf16.mxu0 %v3509
  %3813 = vmatpush1.bf16.msra.mxu0 %v3508
  %3814 = vmatprep.subr.bf16.mxu0 %v3554
  %3815 = vmatpush2.bf16.msra.mxu0 %v3553
  %3816 = vmatprep.subr.bf16.mxu0 %v3551
  %3817 = vmatpush2.bf16.msra.mxu0 %v3550
  %3818 = vmatprep.subr.bf16.mxu0 %v3548
  %3819 = vmatpush2.bf16.msra.mxu0 %v3547
  %3820 = vmatprep.subr.bf16.mxu0 %v3545
  %3821 = vmatpush2.bf16.msra.mxu0 %v3544
  %3822 = vmatprep.subr.bf16.mxu0 %v3542
  %3823 = vmatpush2.bf16.msra.mxu0 %v3541
  %3824 = vmatprep.subr.bf16.mxu0 %v3539
  %3825 = vmatpush2.bf16.msra.mxu0 %v3538
  %3826 = vmatprep.subr.bf16.mxu0 %v3536
  %3827 = vmatpush2.bf16.msra.mxu0 %v3535
  %3828 = vmatprep.subr.bf16.mxu0 %v3533
  %3829 = vmatpush2.bf16.msra.mxu0 %v3532
  %3830 = vmatprep.mubr.bf16.mxu0 %v2834
  %3831 = vmatmul.mubr.bf16.gmra.mxu0 %v2833
  %v3832 = vpop.f32.mrf.mxu0
  %v3833 = vadd.f32 %v3760, %v3832
  %v3834 = vpop.f32.mrf.mxu0
  %v3835 = vadd.f32 %v3762, %v3834
  %v3836 = vpop.f32.mrf.mxu0
  %v3837 = vadd.f32 %v3764, %v3836
  %v3838 = vpop.f32.mrf.mxu0
  %v3839 = vadd.f32 %v3766, %v3838
  %3840 = vmatprep.mubr.bf16.mxu0 %v2840
  %3841 = vmatmul.mubr.bf16.gmra.mxu0 %v2839
  %v3842 = vpop.f32.mrf.mxu0
  %v3843 = vadd.f32 %v3770, %v3842
  %v3844 = vpop.f32.mrf.mxu0
  %v3845 = vadd.f32 %v3772, %v3844
  %v3846 = vpop.f32.mrf.mxu0
  %v3847 = vadd.f32 %v3774, %v3846
  %v3848 = vpop.f32.mrf.mxu0
  %v3849 = vadd.f32 %v3776, %v3848
  %3850 = vmatprep.mubr.bf16.mxu0 %v2846
  %3851 = vmatmul.mubr.bf16.gmra.mxu0 %v2845
  %v3852 = vpop.f32.mrf.mxu0
  %v3853 = vadd.f32 %v3780, %v3852
  %v3854 = vpop.f32.mrf.mxu0
  %v3855 = vadd.f32 %v3782, %v3854
  %v3856 = vpop.f32.mrf.mxu0
  %v3857 = vadd.f32 %v3784, %v3856
  %v3858 = vpop.f32.mrf.mxu0
  %v3859 = vadd.f32 %v3786, %v3858
  %3860 = vmatprep.mubr.bf16.mxu0 %v2852
  %3861 = vmatmul.mubr.bf16.gmra.mxu0 %v2851
  %v3862 = vpop.f32.mrf.mxu0
  %v3863 = vadd.f32 %v3790, %v3862
  %v3864 = vpop.f32.mrf.mxu0
  %v3865 = vadd.f32 %v3792, %v3864
  %v3866 = vpop.f32.mrf.mxu0
  %v3867 = vadd.f32 %v3794, %v3866
  %v3868 = vpop.f32.mrf.mxu0
  %v3869 = vadd.f32 %v3796, %v3868
  %3870 = vdwg.mxu0
  %3871 = vmatprep.subr.bf16.mxu0 %v3578
  %3872 = vmatpush1.bf16.msra.mxu0 %v3577
  %3873 = vmatprep.subr.bf16.mxu0 %v3575
  %3874 = vmatpush1.bf16.msra.mxu0 %v3574
  %3875 = vmatprep.subr.bf16.mxu0 %v3572
  %3876 = vmatpush1.bf16.msra.mxu0 %v3571
  %3877 = vmatprep.subr.bf16.mxu0 %v3569
  %3878 = vmatpush1.bf16.msra.mxu0 %v3568
  %3879 = vmatprep.subr.bf16.mxu0 %v3566
  %3880 = vmatpush1.bf16.msra.mxu0 %v3565
  %3881 = vmatprep.subr.bf16.mxu0 %v3563
  %3882 = vmatpush1.bf16.msra.mxu0 %v3562
  %3883 = vmatprep.subr.bf16.mxu0 %v3560
  %3884 = vmatpush1.bf16.msra.mxu0 %v3559
  %3885 = vmatprep.subr.bf16.mxu0 %v3557
  %3886 = vmatpush1.bf16.msra.mxu0 %v3556
  %3887 = vmatprep.subr.bf16.mxu0 0
  %3888 = vmatpush2.bf16.msra.mxu0 0
  %3889 = vmatprep.subr.bf16.mxu0 0
  %3890 = vmatpush2.bf16.msra.mxu0 0
  %3891 = vmatprep.subr.bf16.mxu0 0
  %3892 = vmatpush2.bf16.msra.mxu0 0
  %3893 = vmatprep.subr.bf16.mxu0 0
  %3894 = vmatpush2.bf16.msra.mxu0 0
  %3895 = vmatprep.subr.bf16.mxu0 0
  %3896 = vmatpush2.bf16.msra.mxu0 0
  %3897 = vmatprep.subr.bf16.mxu0 0
  %3898 = vmatpush2.bf16.msra.mxu0 0
  %3899 = vmatprep.subr.bf16.mxu0 %v3584
  %3900 = vmatpush2.bf16.msra.mxu0 %v3583
  %3901 = vmatprep.subr.bf16.mxu0 %v3581
  %3902 = vmatpush2.bf16.msra.mxu0 %v3580
  %3903 = vmatprep.mubr.bf16.mxu0 %v3714
  %3904 = vmatmul.mubr.bf16.gmra.mxu0 %v2835
  %v3905 = vpop.f32.mrf.mxu0
  %v3906 = vadd.f32 %v3833, %v3905
  %v3907 = vpop.f32.mrf.mxu0
  %v3908 = vadd.f32 %v3835, %v3907
  %v3909 = vpop.f32.mrf.mxu0
  %v3910 = vadd.f32 %v3837, %v3909
  %v3911 = vpop.f32.mrf.mxu0
  %v3912 = vadd.f32 %v3839, %v3911
  %3913 = vmatprep.mubr.bf16.mxu0 %v3717
  %3914 = vmatmul.mubr.bf16.gmra.mxu0 %v2841
  %v3915 = vpop.f32.mrf.mxu0
  %v3916 = vadd.f32 %v3843, %v3915
  %v3917 = vpop.f32.mrf.mxu0
  %v3918 = vadd.f32 %v3845, %v3917
  %v3919 = vpop.f32.mrf.mxu0
  %v3920 = vadd.f32 %v3847, %v3919
  %v3921 = vpop.f32.mrf.mxu0
  %v3922 = vadd.f32 %v3849, %v3921
  %3923 = vmatprep.mubr.bf16.mxu0 %v3720
  %3924 = vmatmul.mubr.bf16.gmra.mxu0 %v2847
  %v3925 = vpop.f32.mrf.mxu0
  %v3926 = vadd.f32 %v3853, %v3925
  %v3927 = vpop.f32.mrf.mxu0
  %v3928 = vadd.f32 %v3855, %v3927
  %v3929 = vpop.f32.mrf.mxu0
  %v3930 = vadd.f32 %v3857, %v3929
  %v3931 = vpop.f32.mrf.mxu0
  %v3932 = vadd.f32 %v3859, %v3931
  %3933 = vmatprep.mubr.bf16.mxu0 %v3723
  %3934 = vmatmul.mubr.bf16.gmra.mxu0 %v2853
  %v3935 = vpop.f32.mrf.mxu0
  %v3936 = vadd.f32 %v3863, %v3935
  %v3937 = vpop.f32.mrf.mxu0
  %v3938 = vadd.f32 %v3865, %v3937
  %v3939 = vpop.f32.mrf.mxu0
  %v3940 = vadd.f32 %v3867, %v3939
  %v3941 = vpop.f32.mrf.mxu0
  %v3942 = vadd.f32 %v3869, %v3941
  %3943 = vdwg.mxu0
  %3944 = vmatprep.subr.bf16.mxu0 0
  %3945 = vmatpush1.bf16.msra.mxu0 %v3483
  %3946 = vmatprep.subr.bf16.mxu0 0
  %3947 = vmatpush1.bf16.msra.mxu0 %v3480
  %3948 = vmatprep.subr.bf16.mxu0 0
  %3949 = vmatpush1.bf16.msra.mxu0 %v3477
  %3950 = vmatprep.subr.bf16.mxu0 0
  %3951 = vmatpush1.bf16.msra.mxu0 %v3474
  %3952 = vmatprep.subr.bf16.mxu0 0
  %3953 = vmatpush1.bf16.msra.mxu0 %v3471
  %3954 = vmatprep.subr.bf16.mxu0 0
  %3955 = vmatpush1.bf16.msra.mxu0 %v3468
  %3956 = vmatprep.subr.bf16.mxu0 0
  %3957 = vmatpush1.bf16.msra.mxu0 %v3465
  %3958 = vmatprep.subr.bf16.mxu0 0
  %3959 = vmatpush1.bf16.msra.mxu0 %v3462
  %3960 = vmatprep.subr.bf16.mxu0 0
  %3961 = vmatpush2.bf16.msra.mxu0 %v3507
  %3962 = vmatprep.subr.bf16.mxu0 0
  %3963 = vmatpush2.bf16.msra.mxu0 %v3504
  %3964 = vmatprep.subr.bf16.mxu0 0
  %3965 = vmatpush2.bf16.msra.mxu0 %v3501
  %3966 = vmatprep.subr.bf16.mxu0 0
  %3967 = vmatpush2.bf16.msra.mxu0 %v3498
  %3968 = vmatprep.subr.bf16.mxu0 0
  %3969 = vmatpush2.bf16.msra.mxu0 %v3495
  %3970 = vmatprep.subr.bf16.mxu0 0
  %3971 = vmatpush2.bf16.msra.mxu0 %v3492
  %3972 = vmatprep.subr.bf16.mxu0 0
  %3973 = vmatpush2.bf16.msra.mxu0 %v3489
  %3974 = vmatprep.subr.bf16.mxu0 0
  %3975 = vmatpush2.bf16.msra.mxu0 %v3486
  %3976 = vmatprep.mubr.bf16.mxu0 %v2832
  %3977 = vmatmul.mubr.bf16.gmra.mxu0 %v2831
  %v3978 = vpop.f32.mrf.mxu0
  %v3979 = vadd.f32 %v3036, %v3978
  %v3980 = vpop.f32.mrf.mxu0
  %v3981 = vpop.f32.mrf.mxu0
  %v3982 = vadd.f32 %v3036, %v3981
  %v3983 = vpop.f32.mrf.mxu0
  %3984 = vmatprep.mubr.bf16.mxu0 %v2838
  %3985 = vmatmul.mubr.bf16.gmra.mxu0 %v2837
  %v3986 = vpop.f32.mrf.mxu0
  %v3987 = vadd.f32 %v3036, %v3986
  %v3988 = vpop.f32.mrf.mxu0
  %v3989 = vpop.f32.mrf.mxu0
  %v3990 = vadd.f32 %v3036, %v3989
  %v3991 = vpop.f32.mrf.mxu0
  %3992 = vmatprep.mubr.bf16.mxu0 %v2844
  %3993 = vmatmul.mubr.bf16.gmra.mxu0 %v2843
  %v3994 = vpop.f32.mrf.mxu0
  %v3995 = vadd.f32 %v3036, %v3994
  %v3996 = vpop.f32.mrf.mxu0
  %v3997 = vpop.f32.mrf.mxu0
  %v3998 = vadd.f32 %v3036, %v3997
  %v3999 = vpop.f32.mrf.mxu0
  %4000 = vmatprep.mubr.bf16.mxu0 %v2850
  %4001 = vmatmul.mubr.bf16.gmra.mxu0 %v2849
  %v4002 = vpop.f32.mrf.mxu0
  %v4003 = vadd.f32 %v3036, %v4002
  %v4004 = vpop.f32.mrf.mxu0
  %v4005 = vpop.f32.mrf.mxu0
  %v4006 = vadd.f32 %v3036, %v4005
  %v4007 = vpop.f32.mrf.mxu0
  %4008 = vdwg.mxu0
  %4009 = vmatprep.subr.bf16.mxu0 0
  %4010 = vmatpush1.bf16.msra.mxu0 %v3531
  %4011 = vmatprep.subr.bf16.mxu0 0
  %4012 = vmatpush1.bf16.msra.mxu0 %v3528
  %4013 = vmatprep.subr.bf16.mxu0 0
  %4014 = vmatpush1.bf16.msra.mxu0 %v3525
  %4015 = vmatprep.subr.bf16.mxu0 0
  %4016 = vmatpush1.bf16.msra.mxu0 %v3522
  %4017 = vmatprep.subr.bf16.mxu0 0
  %4018 = vmatpush1.bf16.msra.mxu0 %v3519
  %4019 = vmatprep.subr.bf16.mxu0 0
  %4020 = vmatpush1.bf16.msra.mxu0 %v3516
  %4021 = vmatprep.subr.bf16.mxu0 0
  %4022 = vmatpush1.bf16.msra.mxu0 %v3513
  %4023 = vmatprep.subr.bf16.mxu0 0
  %4024 = vmatpush1.bf16.msra.mxu0 %v3510
  %4025 = vmatprep.subr.bf16.mxu0 0
  %4026 = vmatpush2.bf16.msra.mxu0 %v3555
  %4027 = vmatprep.subr.bf16.mxu0 0
  %4028 = vmatpush2.bf16.msra.mxu0 %v3552
  %4029 = vmatprep.subr.bf16.mxu0 0
  %4030 = vmatpush2.bf16.msra.mxu0 %v3549
  %4031 = vmatprep.subr.bf16.mxu0 0
  %4032 = vmatpush2.bf16.msra.mxu0 %v3546
  %4033 = vmatprep.subr.bf16.mxu0 0
  %4034 = vmatpush2.bf16.msra.mxu0 %v3543
  %4035 = vmatprep.subr.bf16.mxu0 0
  %4036 = vmatpush2.bf16.msra.mxu0 %v3540
  %4037 = vmatprep.subr.bf16.mxu0 0
  %4038 = vmatpush2.bf16.msra.mxu0 %v3537
  %4039 = vmatprep.subr.bf16.mxu0 0
  %4040 = vmatpush2.bf16.msra.mxu0 %v3534
  %4041 = vmatprep.mubr.bf16.mxu0 %v2834
  %4042 = vmatmul.mubr.bf16.gmra.mxu0 %v2833
  %v4043 = vpop.f32.mrf.mxu0
  %v4044 = vadd.f32 %v3979, %v4043
  %v4045 = vpop.f32.mrf.mxu0
  %v4046 = vpop.f32.mrf.mxu0
  %v4047 = vadd.f32 %v3982, %v4046
  %v4048 = vpop.f32.mrf.mxu0
  %4049 = vmatprep.mubr.bf16.mxu0 %v2840
  %4050 = vmatmul.mubr.bf16.gmra.mxu0 %v2839
  %v4051 = vpop.f32.mrf.mxu0
  %v4052 = vadd.f32 %v3987, %v4051
  %v4053 = vpop.f32.mrf.mxu0
  %v4054 = vpop.f32.mrf.mxu0
  %v4055 = vadd.f32 %v3990, %v4054
  %v4056 = vpop.f32.mrf.mxu0
  %4057 = vmatprep.mubr.bf16.mxu0 %v2846
  %4058 = vmatmul.mubr.bf16.gmra.mxu0 %v2845
  %v4059 = vpop.f32.mrf.mxu0
  %v4060 = vadd.f32 %v3995, %v4059
  %v4061 = vpop.f32.mrf.mxu0
  %v4062 = vpop.f32.mrf.mxu0
  %v4063 = vadd.f32 %v3998, %v4062
  %v4064 = vpop.f32.mrf.mxu0
  %4065 = vmatprep.mubr.bf16.mxu0 %v2852
  %4066 = vmatmul.mubr.bf16.gmra.mxu0 %v2851
  %v4067 = vpop.f32.mrf.mxu0
  %v4068 = vadd.f32 %v4003, %v4067
  %v4069 = vpop.f32.mrf.mxu0
  %v4070 = vpop.f32.mrf.mxu0
  %v4071 = vadd.f32 %v4006, %v4070
  %v4072 = vpop.f32.mrf.mxu0
  %4073 = vdwg.mxu0
  %4074 = vmatprep.subr.bf16.mxu0 0
  %4075 = vmatpush1.bf16.msra.mxu0 %v3579
  %4076 = vmatprep.subr.bf16.mxu0 0
  %4077 = vmatpush1.bf16.msra.mxu0 %v3576
  %4078 = vmatprep.subr.bf16.mxu0 0
  %4079 = vmatpush1.bf16.msra.mxu0 %v3573
  %4080 = vmatprep.subr.bf16.mxu0 0
  %4081 = vmatpush1.bf16.msra.mxu0 %v3570
  %4082 = vmatprep.subr.bf16.mxu0 0
  %4083 = vmatpush1.bf16.msra.mxu0 %v3567
  %4084 = vmatprep.subr.bf16.mxu0 0
  %4085 = vmatpush1.bf16.msra.mxu0 %v3564
  %4086 = vmatprep.subr.bf16.mxu0 0
  %4087 = vmatpush1.bf16.msra.mxu0 %v3561
  %4088 = vmatprep.subr.bf16.mxu0 0
  %4089 = vmatpush1.bf16.msra.mxu0 %v3558
  %4090 = vmatprep.subr.bf16.mxu0 0
  %4091 = vmatpush2.bf16.msra.mxu0 0
  %4092 = vmatprep.subr.bf16.mxu0 0
  %4093 = vmatpush2.bf16.msra.mxu0 0
  %4094 = vmatprep.subr.bf16.mxu0 0
  %4095 = vmatpush2.bf16.msra.mxu0 0
  %4096 = vmatprep.subr.bf16.mxu0 0
  %4097 = vmatpush2.bf16.msra.mxu0 0
  %4098 = vmatprep.subr.bf16.mxu0 0
  %4099 = vmatpush2.bf16.msra.mxu0 0
  %4100 = vmatprep.subr.bf16.mxu0 0
  %4101 = vmatpush2.bf16.msra.mxu0 0
  %4102 = vmatprep.subr.bf16.mxu0 0
  %4103 = vmatpush2.bf16.msra.mxu0 %v3585
  %4104 = vmatprep.subr.bf16.mxu0 0
  %4105 = vmatpush2.bf16.msra.mxu0 %v3582
  %4106 = vmatprep.mubr.bf16.mxu0 %v3714
  %4107 = vmatmul.mubr.bf16.gmra.mxu0 %v2835
  %v4108 = vpop.f32.mrf.mxu0
  %v4109 = vadd.f32 %v4044, %v4108
  %v4110 = vpop.f32.mrf.mxu0
  %v4111 = vpop.f32.mrf.mxu0
  %v4112 = vadd.f32 %v4047, %v4111
  %v4113 = vpop.f32.mrf.mxu0
  %4114 = vmatprep.mubr.bf16.mxu0 %v3717
  %4115 = vmatmul.mubr.bf16.gmra.mxu0 %v2841
  %v4116 = vpop.f32.mrf.mxu0
  %v4117 = vadd.f32 %v4052, %v4116
  %v4118 = vpop.f32.mrf.mxu0
  %v4119 = vpop.f32.mrf.mxu0
  %v4120 = vadd.f32 %v4055, %v4119
  %v4121 = vpop.f32.mrf.mxu0
  %4122 = vmatprep.mubr.bf16.mxu0 %v3720
  %4123 = vmatmul.mubr.bf16.gmra.mxu0 %v2847
  %v4124 = vpop.f32.mrf.mxu0
  %v4125 = vadd.f32 %v4060, %v4124
  %v4126 = vpop.f32.mrf.mxu0
  %v4127 = vpop.f32.mrf.mxu0
  %v4128 = vadd.f32 %v4063, %v4127
  %v4129 = vpop.f32.mrf.mxu0
  %4130 = vmatprep.mubr.bf16.mxu0 %v3723
  %4131 = vmatmul.mubr.bf16.gmra.mxu0 %v2853
  %v4132 = vpop.f32.mrf.mxu0
  %v4133 = vadd.f32 %v4068, %v4132
  %v4134 = vpop.f32.mrf.mxu0
  %v4135 = vpop.f32.mrf.mxu0
  %v4136 = vadd.f32 %v4071, %v4135
  %v4137 = vpop.f32.mrf.mxu0
  %4138 = vdwg.mxu0
  %v4139 = vmax.f32 %v3906, 0.0
  %v4140 = vmax.f32 %v3908, 0.0
  %v4141 = vmax.f32 %v4109, 0.0
  %v4142 = vmax.f32 %v3910, 0.0
  %v4143 = vmax.f32 %v3912, 0.0
  %v4144 = vmax.f32 %v4112, 0.0
  %v4145 = vmax.f32 %v3916, 0.0
  %v4146 = vmax.f32 %v3918, 0.0
  %v4147 = vmax.f32 %v4117, 0.0
  %v4148 = vmax.f32 %v3920, 0.0
  %v4149 = vmax.f32 %v3922, 0.0
  %v4150 = vmax.f32 %v4120, 0.0
  %v4151 = vmax.f32 %v3926, 0.0
  %v4152 = vmax.f32 %v3928, 0.0
  %v4153 = vmax.f32 %v4125, 0.0
  %v4154 = vmax.f32 %v3930, 0.0
  %v4155 = vmax.f32 %v3932, 0.0
  %v4156 = vmax.f32 %v4128, 0.0
  %v4157 = vmax.f32 %v3936, 0.0
  %v4158 = vmax.f32 %v3938, 0.0
  %v4159 = vmax.f32 %v4133, 0.0
  %v4160 = vmax.f32 %v3940, 0.0
  %v4161 = vmax.f32 %v3942, 0.0
  %v4162 = vmax.f32 %v4136, 0.0
  %v4163 = vpack.c.bf16 %v4142, %v4139
  %v4164 = vpack.c.bf16 %v4143, %v4140
  %v4165 = vpack.c.bf16 %v4144, %v4141
  %v4166 = vpack.c.bf16 %v4148, %v4145
  %v4167 = vpack.c.bf16 %v4149, %v4146
  %v4168 = vpack.c.bf16 %v4150, %v4147
  %v4169 = vpack.c.bf16 %v4154, %v4151
  %v4170 = vpack.c.bf16 %v4155, %v4152
  %v4171 = vpack.c.bf16 %v4156, %v4153
  %v4172 = vpack.c.bf16 %v4160, %v4157
  %v4173 = vpack.c.bf16 %v4161, %v4158
  %v4174 = vpack.c.bf16 %v4162, %v4159
  %v4187 = vunpack.c.l.b16 %v4163
  %v4188 = vunpack.c.l.b16 %v4164
  %v4189 = vunpack.c.l.b16 %v4165
  %v4190 = vunpack.c.h.b16 %v4163
  %v4191 = vunpack.c.h.b16 %v4164
  %v4192 = vunpack.c.h.b16 %v4165
  %v4193 = vunpack.c.l.b16 %v4166
  %v4194 = vunpack.c.l.b16 %v4167
  %v4195 = vunpack.c.l.b16 %v4168
  %v4196 = vunpack.c.h.b16 %v4166
  %v4197 = vunpack.c.h.b16 %v4167
  %v4198 = vunpack.c.h.b16 %v4168
  %v4199 = vunpack.c.l.b16 %v4169
  %v4200 = vunpack.c.l.b16 %v4170
  %v4201 = vunpack.c.l.b16 %v4171
  %v4202 = vunpack.c.h.b16 %v4169
  %v4203 = vunpack.c.h.b16 %v4170
  %v4204 = vunpack.c.h.b16 %v4171
  %v4205 = vunpack.c.l.b16 %v4172
  %v4206 = vunpack.c.l.b16 %v4173
  %v4207 = vunpack.c.l.b16 %v4174
  %v4208 = vunpack.c.h.b16 %v4172
  %v4209 = vunpack.c.h.b16 %v4173
  %v4210 = vunpack.c.h.b16 %v4174
  %v4211 = vpack.c.b16 %v4188, %v4187
  %v4212 = vpack.c.b16 %v4189, %v4189
  %v4213 = vpack.c.b16 %v4191, %v4190
  %v4214 = vpack.c.b16 %v4192, %v4192
  %v4215 = vpack.c.b16 %v4194, %v4193
  %v4216 = vpack.c.b16 %v4195, %v4195
  %v4217 = vpack.c.b16 %v4197, %v4196
  %v4218 = vpack.c.b16 %v4198, %v4198
  %v4219 = vpack.c.b16 %v4200, %v4199
  %v4220 = vpack.c.b16 %v4201, %v4201
  %v4221 = vpack.c.b16 %v4203, %v4202
  %v4222 = vpack.c.b16 %v4204, %v4204
  %v4223 = vpack.c.b16 %v4206, %v4205
  %v4224 = vpack.c.b16 %v4207, %v4207
  %v4225 = vpack.c.b16 %v4209, %v4208
  %v4226 = vpack.c.b16 %v4210, %v4210
  %4243 = vst [vmem:[#allocation2] sm:$0xff] %v4211
  %4244 = vst [vmem:[#allocation2 + $0x8] sm:$0xf] %v4212
  %4245 = vst [vmem:[#allocation2 + $0xc] sm:$0xff] %v4213
  %4246 = vst [vmem:[#allocation2 + $0x14] sm:$0xf] %v4214
  %4247 = vst [vmem:[#allocation2 + $0x18] sm:$0xff] %v4215
  %4248 = vst [vmem:[#allocation2 + $0x20] sm:$0xf] %v4216
  %4249 = vst [vmem:[#allocation2 + $0x24] sm:$0xff] %v4217
  %4250 = vst [vmem:[#allocation2 + $0x2c] sm:$0xf] %v4218
  %4251 = vst [vmem:[#allocation2 + $0x30] sm:$0xff] %v4219
  %4252 = vst [vmem:[#allocation2 + $0x38] sm:$0xf] %v4220
  %4253 = vst [vmem:[#allocation2 + $0x3c] sm:$0xff] %v4221
  %4254 = vst [vmem:[#allocation2 + $0x44] sm:$0xf] %v4222
  %4255 = vst [vmem:[#allocation2 + $0x48] sm:$0xff] %v4223
  %4256 = vst [vmem:[#allocation2 + $0x50] sm:$0xf] %v4224
  %4257 = vst [vmem:[#allocation2 + $0x54] sm:$0xff] %v4225
  %4258 = vst [vmem:[#allocation2 + $0x5c] sm:$0xf] %v4226
  %v4259 = vld [vmem:[#allocation2] sm:$0xff]
  %v4260 = vld [vmem:[#allocation2 + $0x8] sm:$0xf]
  %v4261 = vld [vmem:[#allocation2 + $0xc] sm:$0xff]
  %v4262 = vld [vmem:[#allocation2 + $0x14] sm:$0xf]
  %v4263 = vld [vmem:[#allocation2 + $0x18] sm:$0xff]
  %v4264 = vld [vmem:[#allocation2 + $0x20] sm:$0xf]
  %v4265 = vld [vmem:[#allocation2 + $0x24] sm:$0xff]
  %v4266 = vld [vmem:[#allocation2 + $0x2c] sm:$0xf]
  %v4267 = vld [vmem:[#allocation2 + $0x30] sm:$0xff]
  %v4268 = vld [vmem:[#allocation2 + $0x38] sm:$0xf]
  %v4269 = vld [vmem:[#allocation2 + $0x3c] sm:$0xff]
  %v4270 = vld [vmem:[#allocation2 + $0x44] sm:$0xf]
  %v4271 = vld [vmem:[#allocation2 + $0x48] sm:$0xff]
  %v4272 = vld [vmem:[#allocation2 + $0x50] sm:$0xf]
  %v4273 = vld [vmem:[#allocation2 + $0x54] sm:$0xff]
  %v4274 = vld [vmem:[#allocation2 + $0x5c] sm:$0xf]
  %v4287 = vunpack.c.l.b16 %v4259
  %v4288 = vunpack.c.h.b16 %v4259
  %v4289 = vunpack.c.l.b16 %v4260
  %v4290 = vunpack.c.l.b16 %v4261
  %v4291 = vunpack.c.h.b16 %v4261
  %v4292 = vunpack.c.l.b16 %v4262
  %v4293 = vunpack.c.l.b16 %v4263
  %v4294 = vunpack.c.h.b16 %v4263
  %v4295 = vunpack.c.l.b16 %v4264
  %v4296 = vunpack.c.l.b16 %v4267
  %v4297 = vunpack.c.h.b16 %v4267
  %v4298 = vunpack.c.l.b16 %v4268
  %v4299 = vunpack.c.l.b16 %v4269
  %v4300 = vunpack.c.h.b16 %v4269
  %v4301 = vunpack.c.l.b16 %v4270
  %v4302 = vunpack.c.l.b16 %v4271
  %v4303 = vunpack.c.h.b16 %v4271
  %v4304 = vunpack.c.l.b16 %v4272
  %v4309 = vunpack.c.l.b16 %v4265
  %v4310 = vunpack.c.h.b16 %v4265
  %v4311 = vunpack.c.l.b16 %v4266
  %v4312 = vunpack.c.l.b16 %v4273
  %v4313 = vunpack.c.h.b16 %v4273
  %v4314 = vunpack.c.l.b16 %v4274
  %v4315 = vpack.c.b16 %v4290, %v4287
  %v4316 = vpack.c.b16 %v4291, %v4288
  %v4317 = vpack.c.b16 %v4292, %v4289
  %v4318 = vpack.c.b16 %v4309, %v4293
  %v4319 = vpack.c.b16 %v4310, %v4294
  %v4320 = vpack.c.b16 %v4311, %v4295
  %v4321 = vpack.c.b16 %v4299, %v4296
  %v4322 = vpack.c.b16 %v4300, %v4297
  %v4323 = vpack.c.b16 %v4301, %v4298
  %v4324 = vpack.c.b16 %v4312, %v4302
  %v4325 = vpack.c.b16 %v4313, %v4303
  %v4326 = vpack.c.b16 %v4314, %v4304
  %v4327 = vrot.slane %v4315, 1
  %v4328 = vrot.slane %v4318, 1
  %v4329 = vsel %vm112, %v4327, %v4328
  %v4330 = vrot.slane %v4316, 1
  %v4331 = vrot.slane %v4319, 1
  %v4332 = vsel %vm112, %v4330, %v4331
  %v4333 = vrot.slane %v4317, 1
  %v4334 = vrot.slane %v4320, 1
  %v4335 = vsel %vm112, %v4333, %v4334
  %v4336 = vrot.slane %v4321, 1
  %v4337 = vrot.slane %v4324, 1
  %v4338 = vsel %vm112, %v4336, %v4337
  %v4339 = vrot.slane %v4322, 1
  %v4340 = vrot.slane %v4325, 1
  %v4341 = vsel %vm112, %v4339, %v4340
  %v4342 = vrot.slane %v4323, 1
  %v4343 = vrot.slane %v4326, 1
  %v4344 = vsel %vm112, %v4342, %v4343
  %v4345 = vrot.slane %v4315, 2
  %v4346 = vrot.slane %v4318, 2
  %v4347 = vsel %vm158, %v4345, %v4346
  %v4348 = vrot.slane %v4316, 2
  %v4349 = vrot.slane %v4319, 2
  %v4350 = vsel %vm158, %v4348, %v4349
  %v4351 = vrot.slane %v4317, 2
  %v4352 = vrot.slane %v4320, 2
  %v4353 = vsel %vm158, %v4351, %v4352
  %v4354 = vrot.slane %v4321, 2
  %v4355 = vrot.slane %v4324, 2
  %v4356 = vsel %vm158, %v4354, %v4355
  %v4357 = vrot.slane %v4322, 2
  %v4358 = vrot.slane %v4325, 2
  %v4359 = vsel %vm158, %v4357, %v4358
  %v4360 = vrot.slane %v4323, 2
  %v4361 = vrot.slane %v4326, 2
  %v4362 = vsel %vm158, %v4360, %v4361
  %vm4363 = vcmask 1044480
  %v4364 = vrot.slane %v4315, 3
  %v4365 = vrot.slane %v4318, 3
  %v4366 = vsel %vm4363, %v4364, %v4365
  %v4367 = vrot.slane %v4316, 3
  %v4368 = vrot.slane %v4319, 3
  %v4369 = vsel %vm4363, %v4367, %v4368
  %v4370 = vrot.slane %v4317, 3
  %v4371 = vrot.slane %v4320, 3
  %v4372 = vsel %vm4363, %v4370, %v4371
  %v4373 = vrot.slane %v4321, 3
  %v4374 = vrot.slane %v4324, 3
  %v4375 = vsel %vm4363, %v4373, %v4374
  %v4376 = vrot.slane %v4322, 3
  %v4377 = vrot.slane %v4325, 3
  %v4378 = vsel %vm4363, %v4376, %v4377
  %v4379 = vrot.slane %v4323, 3
  %v4380 = vrot.slane %v4326, 3
  %v4381 = vsel %vm4363, %v4379, %v4380
  %v4382 = vunpack.c.l.b16 %v4329
  %v4383 = vunpack.c.l.b16 %v4332
  %v4384 = vunpack.c.l.b16 %v4335
  %v4385 = vunpack.c.l.b16 %v4347
  %v4386 = vunpack.c.l.b16 %v4350
  %v4387 = vunpack.c.l.b16 %v4353
  %v4388 = vunpack.c.l.b16 %v4366
  %v4389 = vunpack.c.l.b16 %v4369
  %v4390 = vunpack.c.l.b16 %v4372
  %v4391 = vunpack.c.h.b16 %v4329
  %v4392 = vunpack.c.h.b16 %v4332
  %v4393 = vunpack.c.h.b16 %v4335
  %v4394 = vunpack.c.h.b16 %v4347
  %v4395 = vunpack.c.h.b16 %v4350
  %v4396 = vunpack.c.h.b16 %v4353
  %v4397 = vunpack.c.h.b16 %v4366
  %v4398 = vunpack.c.h.b16 %v4369
  %v4399 = vunpack.c.h.b16 %v4372
  %v4400 = vunpack.c.l.b16 %v4328
  %v4401 = vunpack.c.l.b16 %v4331
  %v4402 = vunpack.c.l.b16 %v4334
  %v4403 = vunpack.c.l.b16 %v4346
  %v4404 = vunpack.c.l.b16 %v4349
  %v4405 = vunpack.c.l.b16 %v4352
  %v4406 = vunpack.c.l.b16 %v4365
  %v4407 = vunpack.c.l.b16 %v4368
  %v4408 = vunpack.c.l.b16 %v4371
  %v4409 = vunpack.c.l.b16 %v4338
  %v4410 = vunpack.c.l.b16 %v4341
  %v4411 = vunpack.c.l.b16 %v4344
  %v4412 = vunpack.c.l.b16 %v4356
  %v4413 = vunpack.c.l.b16 %v4359
  %v4414 = vunpack.c.l.b16 %v4362
  %v4415 = vunpack.c.l.b16 %v4375
  %v4416 = vunpack.c.l.b16 %v4378
  %v4417 = vunpack.c.l.b16 %v4381
  %v4418 = vunpack.c.h.b16 %v4338
  %v4419 = vunpack.c.h.b16 %v4341
  %v4420 = vunpack.c.h.b16 %v4344
  %v4421 = vunpack.c.h.b16 %v4356
  %v4422 = vunpack.c.h.b16 %v4359
  %v4423 = vunpack.c.h.b16 %v4362
  %v4424 = vunpack.c.h.b16 %v4375
  %v4425 = vunpack.c.h.b16 %v4378
  %v4426 = vunpack.c.h.b16 %v4381
  %v4427 = vunpack.c.l.b16 %v4337
  %v4428 = vunpack.c.l.b16 %v4340
  %v4429 = vunpack.c.l.b16 %v4343
  %v4430 = vunpack.c.l.b16 %v4355
  %v4431 = vunpack.c.l.b16 %v4358
  %v4432 = vunpack.c.l.b16 %v4361
  %v4433 = vunpack.c.l.b16 %v4374
  %v4434 = vunpack.c.l.b16 %v4377
  %v4435 = vunpack.c.l.b16 %v4380
  %v4436 = vld [vmem:[%s4] sm:$0xff]
  %v4437 = vld [vmem:[%s4 + $0x8] sm:$0xff]
  %v4438 = vld [vmem:[%s4 + $0x10] sm:$0xff]
  %v4439 = vld [vmem:[%s4 + $0x18] sm:$0xff]
  %v4440 = vld [vmem:[%s4 + $0x20] sm:$0xff]
  %v4441 = vld [vmem:[%s4 + $0x28] sm:$0xff]
  %v4442 = vld [vmem:[%s4 + $0x30] sm:$0xff]
  %v4443 = vld [vmem:[%s4 + $0x38] sm:$0xff]
  %v4444 = vld [vmem:[%s4 + $0x40] sm:$0xff]
  %v4445 = vld [vmem:[%s4 + $0x48] sm:$0xff]
  %v4446 = vld [vmem:[%s4 + $0x50] sm:$0xff]
  %v4447 = vld [vmem:[%s4 + $0x58] sm:$0xff]
  %v4448 = vld [vmem:[%s4 + $0x60] sm:$0xff]
  %v4449 = vld [vmem:[%s4 + $0x68] sm:$0xff]
  %v4450 = vld [vmem:[%s4 + $0x70] sm:$0xff]
  %v4451 = vld [vmem:[%s4 + $0x78] sm:$0xff]
  %v4452 = vld [vmem:[%s4 + $0x80] sm:$0xff]
  %v4453 = vld [vmem:[%s4 + $0x88] sm:$0xff]
  %v4454 = vld [vmem:[%s4 + $0x90] sm:$0xff]
  %v4455 = vld [vmem:[%s4 + $0x98] sm:$0xff]
  %v4456 = vld [vmem:[%s4 + $0xa0] sm:$0xff]
  %v4457 = vld [vmem:[%s4 + $0xa8] sm:$0xff]
  %v4458 = vld [vmem:[%s4 + $0xb0] sm:$0xff]
  %v4459 = vld [vmem:[%s4 + $0xb8] sm:$0xff]
  %v4460 = vld [vmem:[%s4 + $0xc0] sm:$0xff]
  %v4461 = vld [vmem:[%s4 + $0xc8] sm:$0xff]
  %v4462 = vld [vmem:[%s4 + $0xd0] sm:$0xff]
  %v4463 = vld [vmem:[%s4 + $0xd8] sm:$0xff]
  %v4464 = vld [vmem:[%s4 + $0xe0] sm:$0xff]
  %v4465 = vld [vmem:[%s4 + $0xe8] sm:$0xff]
  %v4466 = vld [vmem:[%s4 + $0xf0] sm:$0xff]
  %v4467 = vld [vmem:[%s4 + $0xf8] sm:$0xff]
  %v4468 = vld [vmem:[%s4 + $0x100] sm:$0xff]
  %v4469 = vld [vmem:[%s4 + $0x108] sm:$0xff]
  %v4470 = vld [vmem:[%s4 + $0x110] sm:$0xff]
  %v4471 = vld [vmem:[%s4 + $0x118] sm:$0xff]
  %v4472 = vld [vmem:[%s4 + $0x120] sm:$0xff]
  %v4473 = vld [vmem:[%s4 + $0x128] sm:$0xff]
  %v4474 = vld [vmem:[%s4 + $0x130] sm:$0xff]
  %v4475 = vld [vmem:[%s4 + $0x138] sm:$0xff]
  %v4476 = vld [vmem:[%s4 + $0x140] sm:$0xff]
  %v4477 = vld [vmem:[%s4 + $0x148] sm:$0xff]
  %v4478 = vld [vmem:[%s4 + $0x150] sm:$0xff]
  %v4479 = vld [vmem:[%s4 + $0x158] sm:$0xff]
  %v4480 = vld [vmem:[%s4 + $0x160] sm:$0xff]
  %v4481 = vld [vmem:[%s4 + $0x168] sm:$0xff]
  %v4482 = vld [vmem:[%s4 + $0x170] sm:$0xff]
  %v4483 = vld [vmem:[%s4 + $0x178] sm:$0xff]
  %v4484 = vld [vmem:[%s4 + $0x180] sm:$0xff]
  %v4485 = vld [vmem:[%s4 + $0x188] sm:$0xff]
  %v4486 = vld [vmem:[%s4 + $0x190] sm:$0xff]
  %v4487 = vld [vmem:[%s4 + $0x198] sm:$0xff]
  %v4488 = vld [vmem:[%s4 + $0x1a0] sm:$0xff]
  %v4489 = vld [vmem:[%s4 + $0x1a8] sm:$0xff]
  %v4490 = vld [vmem:[%s4 + $0x1b0] sm:$0xff]
  %v4491 = vld [vmem:[%s4 + $0x1b8] sm:$0xff]
  %v4492 = vld [vmem:[%s4 + $0x1c0] sm:$0xff]
  %v4493 = vld [vmem:[%s4 + $0x1c8] sm:$0xff]
  %v4494 = vld [vmem:[%s4 + $0x1d0] sm:$0xff]
  %v4495 = vld [vmem:[%s4 + $0x1d8] sm:$0xff]
  %v4496 = vld [vmem:[%s4 + $0x1e0] sm:$0xff]
  %v4497 = vld [vmem:[%s4 + $0x1e8] sm:$0xff]
  %v4498 = vld [vmem:[%s4 + $0x1f0] sm:$0xff]
  %v4499 = vld [vmem:[%s4 + $0x1f8] sm:$0xff]
  %v4500 = vld [vmem:[%s4 + $0x200] sm:$0xff]
  %v4501 = vld [vmem:[%s4 + $0x208] sm:$0xff]
  %v4502 = vld [vmem:[%s4 + $0x210] sm:$0xff]
  %v4503 = vld [vmem:[%s4 + $0x218] sm:$0xff]
  %v4504 = vld [vmem:[%s4 + $0x220] sm:$0xff]
  %v4505 = vld [vmem:[%s4 + $0x228] sm:$0xff]
  %v4506 = vld [vmem:[%s4 + $0x230] sm:$0xff]
  %v4507 = vld [vmem:[%s4 + $0x238] sm:$0xff]
  %v4508 = vld [vmem:[%s4 + $0x240] sm:$0xff]
  %v4509 = vld [vmem:[%s4 + $0x248] sm:$0xff]
  %v4510 = vld [vmem:[%s4 + $0x250] sm:$0xff]
  %v4511 = vld [vmem:[%s4 + $0x258] sm:$0xff]
  %v4512 = vld [vmem:[%s4 + $0x260] sm:$0xff]
  %v4513 = vld [vmem:[%s4 + $0x268] sm:$0xff]
  %v4514 = vld [vmem:[%s4 + $0x270] sm:$0xff]
  %v4515 = vld [vmem:[%s4 + $0x278] sm:$0xff]
  %v4516 = vld [vmem:[%s4 + $0x280] sm:$0xff]
  %v4517 = vld [vmem:[%s4 + $0x288] sm:$0xff]
  %v4518 = vld [vmem:[%s4 + $0x290] sm:$0xff]
  %v4519 = vld [vmem:[%s4 + $0x298] sm:$0xff]
  %v4520 = vld [vmem:[%s4 + $0x2a0] sm:$0xff]
  %v4521 = vld [vmem:[%s4 + $0x2a8] sm:$0xff]
  %v4522 = vld [vmem:[%s4 + $0x2b0] sm:$0xff]
  %v4523 = vld [vmem:[%s4 + $0x2b8] sm:$0xff]
  %v4524 = vld [vmem:[%s4 + $0x2c0] sm:$0xff]
  %v4525 = vld [vmem:[%s4 + $0x2c8] sm:$0xff]
  %v4526 = vld [vmem:[%s4 + $0x2d0] sm:$0xff]
  %v4527 = vld [vmem:[%s4 + $0x2d8] sm:$0xff]
  %v4528 = vld [vmem:[%s4 + $0x2e0] sm:$0xff]
  %v4529 = vld [vmem:[%s4 + $0x2e8] sm:$0xff]
  %v4530 = vld [vmem:[%s4 + $0x2f0] sm:$0xff]
  %v4531 = vld [vmem:[%s4 + $0x2f8] sm:$0xff]
  %v4532 = vld [vmem:[%s4 + $0x300] sm:$0xff]
  %v4533 = vld [vmem:[%s4 + $0x308] sm:$0xff]
  %v4534 = vld [vmem:[%s4 + $0x310] sm:$0xff]
  %v4535 = vld [vmem:[%s4 + $0x318] sm:$0xff]
  %v4536 = vld [vmem:[%s4 + $0x320] sm:$0xff]
  %v4537 = vld [vmem:[%s4 + $0x328] sm:$0xff]
  %v4538 = vld [vmem:[%s4 + $0x330] sm:$0xff]
  %v4539 = vld [vmem:[%s4 + $0x338] sm:$0xff]
  %v4540 = vld [vmem:[%s4 + $0x340] sm:$0xff]
  %v4541 = vld [vmem:[%s4 + $0x348] sm:$0xff]
  %v4542 = vld [vmem:[%s4 + $0x350] sm:$0xff]
  %v4543 = vld [vmem:[%s4 + $0x358] sm:$0xff]
  %v4544 = vld [vmem:[%s4 + $0x360] sm:$0xff]
  %v4545 = vld [vmem:[%s4 + $0x368] sm:$0xff]
  %v4546 = vld [vmem:[%s4 + $0x370] sm:$0xff]
  %v4547 = vld [vmem:[%s4 + $0x378] sm:$0xff]
  %v4548 = vld [vmem:[%s4 + $0x380] sm:$0xff]
  %v4549 = vld [vmem:[%s4 + $0x388] sm:$0xff]
  %v4550 = vld [vmem:[%s4 + $0x390] sm:$0xff]
  %v4551 = vld [vmem:[%s4 + $0x398] sm:$0xff]
  %v4552 = vld [vmem:[%s4 + $0x3a0] sm:$0xff]
  %v4553 = vld [vmem:[%s4 + $0x3a8] sm:$0xff]
  %v4554 = vld [vmem:[%s4 + $0x3b0] sm:$0xff]
  %v4555 = vld [vmem:[%s4 + $0x3b8] sm:$0xff]
  %v4556 = vld [vmem:[%s4 + $0x3c0] sm:$0xff]
  %v4557 = vld [vmem:[%s4 + $0x3c8] sm:$0xff]
  %v4558 = vld [vmem:[%s4 + $0x3d0] sm:$0xff]
  %v4559 = vld [vmem:[%s4 + $0x3d8] sm:$0xff]
  %v4560 = vld [vmem:[%s4 + $0x3e0] sm:$0xff]
  %v4561 = vld [vmem:[%s4 + $0x3e8] sm:$0xff]
  %v4562 = vld [vmem:[%s4 + $0x3f0] sm:$0xff]
  %v4563 = vld [vmem:[%s4 + $0x3f8] sm:$0xff]
  %v4564 = vld [vmem:[%s4 + $0x400] sm:$0xff]
  %v4565 = vld [vmem:[%s4 + $0x408] sm:$0xff]
  %v4566 = vld [vmem:[%s4 + $0x410] sm:$0xff]
  %v4567 = vld [vmem:[%s4 + $0x418] sm:$0xff]
  %v4568 = vld [vmem:[%s4 + $0x420] sm:$0xff]
  %v4569 = vld [vmem:[%s4 + $0x428] sm:$0xff]
  %v4570 = vld [vmem:[%s4 + $0x430] sm:$0xff]
  %v4571 = vld [vmem:[%s4 + $0x438] sm:$0xff]
  %v4572 = vld [vmem:[%s4 + $0x440] sm:$0xff]
  %v4573 = vld [vmem:[%s4 + $0x448] sm:$0xff]
  %v4574 = vld [vmem:[%s4 + $0x450] sm:$0xff]
  %v4575 = vld [vmem:[%s4 + $0x458] sm:$0xff]
  %v4576 = vld [vmem:[%s4 + $0x460] sm:$0xff]
  %v4577 = vld [vmem:[%s4 + $0x468] sm:$0xff]
  %v4578 = vld [vmem:[%s4 + $0x470] sm:$0xff]
  %v4579 = vld [vmem:[%s4 + $0x478] sm:$0xff]
  %v4580 = vld [vmem:[%s4 + $0x480] sm:$0xff]
  %v4581 = vld [vmem:[%s4 + $0x488] sm:$0xff]
  %v4582 = vld [vmem:[%s4 + $0x490] sm:$0xff]
  %v4583 = vld [vmem:[%s4 + $0x498] sm:$0xff]
  %v4584 = vld [vmem:[%s4 + $0x4a0] sm:$0xff]
  %v4585 = vld [vmem:[%s4 + $0x4a8] sm:$0xff]
  %v4586 = vld [vmem:[%s4 + $0x4b0] sm:$0xff]
  %v4587 = vld [vmem:[%s4 + $0x4b8] sm:$0xff]
  %v4588 = vld [vmem:[%s4 + $0x4c0] sm:$0xff]
  %v4589 = vld [vmem:[%s4 + $0x4c8] sm:$0xff]
  %v4590 = vld [vmem:[%s4 + $0x4d0] sm:$0xff]
  %v4591 = vld [vmem:[%s4 + $0x4d8] sm:$0xff]
  %v4592 = vld [vmem:[%s4 + $0x4e0] sm:$0xff]
  %v4593 = vld [vmem:[%s4 + $0x4e8] sm:$0xff]
  %v4594 = vld [vmem:[%s4 + $0x4f0] sm:$0xff]
  %v4595 = vld [vmem:[%s4 + $0x4f8] sm:$0xff]
  %v4596 = vld [vmem:[%s4 + $0x500] sm:$0xff]
  %v4597 = vld [vmem:[%s4 + $0x508] sm:$0xff]
  %v4598 = vld [vmem:[%s4 + $0x510] sm:$0xff]
  %v4599 = vld [vmem:[%s4 + $0x518] sm:$0xff]
  %v4600 = vld [vmem:[%s4 + $0x520] sm:$0xff]
  %v4601 = vld [vmem:[%s4 + $0x528] sm:$0xff]
  %v4602 = vld [vmem:[%s4 + $0x530] sm:$0xff]
  %v4603 = vld [vmem:[%s4 + $0x538] sm:$0xff]
  %v4604 = vld [vmem:[%s4 + $0x540] sm:$0xff]
  %v4605 = vld [vmem:[%s4 + $0x548] sm:$0xff]
  %v4606 = vld [vmem:[%s4 + $0x550] sm:$0xff]
  %v4607 = vld [vmem:[%s4 + $0x558] sm:$0xff]
  %v4608 = vld [vmem:[%s4 + $0x560] sm:$0xff]
  %v4609 = vld [vmem:[%s4 + $0x568] sm:$0xff]
  %v4610 = vld [vmem:[%s4 + $0x570] sm:$0xff]
  %v4611 = vld [vmem:[%s4 + $0x578] sm:$0xff]
  %v4612 = vld [vmem:[%s4 + $0x580] sm:$0xff]
  %v4613 = vld [vmem:[%s4 + $0x588] sm:$0xff]
  %v4614 = vld [vmem:[%s4 + $0x590] sm:$0xff]
  %v4615 = vld [vmem:[%s4 + $0x598] sm:$0xff]
  %v4616 = vld [vmem:[%s4 + $0x5a0] sm:$0xff]
  %v4617 = vld [vmem:[%s4 + $0x5a8] sm:$0xff]
  %v4618 = vld [vmem:[%s4 + $0x5b0] sm:$0xff]
  %v4619 = vld [vmem:[%s4 + $0x5b8] sm:$0xff]
  %v4620 = vld [vmem:[%s4 + $0x5c0] sm:$0xff]
  %v4621 = vld [vmem:[%s4 + $0x5c8] sm:$0xff]
  %v4622 = vld [vmem:[%s4 + $0x5d0] sm:$0xff]
  %v4623 = vld [vmem:[%s4 + $0x5d8] sm:$0xff]
  %v4624 = vld [vmem:[%s4 + $0x5e0] sm:$0xff]
  %v4625 = vld [vmem:[%s4 + $0x5e8] sm:$0xff]
  %v4626 = vld [vmem:[%s4 + $0x5f0] sm:$0xff]
  %v4627 = vld [vmem:[%s4 + $0x5f8] sm:$0xff]
  %v4628 = vld [vmem:[%s4 + $0x600] sm:$0xff]
  %v4629 = vld [vmem:[%s4 + $0x608] sm:$0xff]
  %v4630 = vld [vmem:[%s4 + $0x610] sm:$0xff]
  %v4631 = vld [vmem:[%s4 + $0x618] sm:$0xff]
  %v4632 = vld [vmem:[%s4 + $0x620] sm:$0xff]
  %v4633 = vld [vmem:[%s4 + $0x628] sm:$0xff]
  %v4634 = vld [vmem:[%s4 + $0x630] sm:$0xff]
  %v4635 = vld [vmem:[%s4 + $0x638] sm:$0xff]
  %v4636 = vld [vmem:[%s4 + $0x640] sm:$0xff]
  %v4637 = vld [vmem:[%s4 + $0x648] sm:$0xff]
  %v4638 = vld [vmem:[%s4 + $0x650] sm:$0xff]
  %v4639 = vld [vmem:[%s4 + $0x658] sm:$0xff]
  %v4640 = vld [vmem:[%s4 + $0x660] sm:$0xff]
  %v4641 = vld [vmem:[%s4 + $0x668] sm:$0xff]
  %v4642 = vld [vmem:[%s4 + $0x670] sm:$0xff]
  %v4643 = vld [vmem:[%s4 + $0x678] sm:$0xff]
  %v4644 = vld [vmem:[%s4 + $0x680] sm:$0xff]
  %v4645 = vld [vmem:[%s4 + $0x688] sm:$0xff]
  %v4646 = vld [vmem:[%s4 + $0x690] sm:$0xff]
  %v4647 = vld [vmem:[%s4 + $0x698] sm:$0xff]
  %v4648 = vld [vmem:[%s4 + $0x6a0] sm:$0xff]
  %v4649 = vld [vmem:[%s4 + $0x6a8] sm:$0xff]
  %v4650 = vld [vmem:[%s4 + $0x6b0] sm:$0xff]
  %v4651 = vld [vmem:[%s4 + $0x6b8] sm:$0xff]
  %v4652 = vld [vmem:[%s4 + $0x6c0] sm:$0xff]
  %v4653 = vld [vmem:[%s4 + $0x6c8] sm:$0xff]
  %v4654 = vld [vmem:[%s4 + $0x6d0] sm:$0xff]
  %v4655 = vld [vmem:[%s4 + $0x6d8] sm:$0xff]
  %v4656 = vld [vmem:[%s4 + $0x6e0] sm:$0xff]
  %v4657 = vld [vmem:[%s4 + $0x6e8] sm:$0xff]
  %v4658 = vld [vmem:[%s4 + $0x6f0] sm:$0xff]
  %v4659 = vld [vmem:[%s4 + $0x6f8] sm:$0xff]
  %v4660 = vld [vmem:[%s4 + $0x700] sm:$0xff]
  %v4661 = vld [vmem:[%s4 + $0x708] sm:$0xff]
  %v4662 = vld [vmem:[%s4 + $0x710] sm:$0xff]
  %v4663 = vld [vmem:[%s4 + $0x718] sm:$0xff]
  %v4664 = vld [vmem:[%s4 + $0x720] sm:$0xff]
  %v4665 = vld [vmem:[%s4 + $0x728] sm:$0xff]
  %v4666 = vld [vmem:[%s4 + $0x730] sm:$0xff]
  %v4667 = vld [vmem:[%s4 + $0x738] sm:$0xff]
  %v4668 = vld [vmem:[%s4 + $0x740] sm:$0xff]
  %v4669 = vld [vmem:[%s4 + $0x748] sm:$0xff]
  %v4670 = vld [vmem:[%s4 + $0x750] sm:$0xff]
  %v4671 = vld [vmem:[%s4 + $0x758] sm:$0xff]
  %v4672 = vld [vmem:[%s4 + $0x760] sm:$0xff]
  %v4673 = vld [vmem:[%s4 + $0x768] sm:$0xff]
  %v4674 = vld [vmem:[%s4 + $0x770] sm:$0xff]
  %v4675 = vld [vmem:[%s4 + $0x778] sm:$0xff]
  %v4676 = vld [vmem:[%s4 + $0x780] sm:$0xff]
  %v4677 = vld [vmem:[%s4 + $0x788] sm:$0xff]
  %v4678 = vld [vmem:[%s4 + $0x790] sm:$0xff]
  %v4679 = vld [vmem:[%s4 + $0x798] sm:$0xff]
  %v4680 = vld [vmem:[%s4 + $0x7a0] sm:$0xff]
  %v4681 = vld [vmem:[%s4 + $0x7a8] sm:$0xff]
  %v4682 = vld [vmem:[%s4 + $0x7b0] sm:$0xff]
  %v4683 = vld [vmem:[%s4 + $0x7b8] sm:$0xff]
  %v4684 = vld [vmem:[%s4 + $0x7c0] sm:$0xff]
  %v4685 = vld [vmem:[%s4 + $0x7c8] sm:$0xff]
  %v4686 = vld [vmem:[%s4 + $0x7d0] sm:$0xff]
  %v4687 = vld [vmem:[%s4 + $0x7d8] sm:$0xff]
  %v4688 = vld [vmem:[%s4 + $0x7e0] sm:$0xff]
  %v4689 = vld [vmem:[%s4 + $0x7e8] sm:$0xff]
  %v4690 = vld [vmem:[%s4 + $0x7f0] sm:$0xff]
  %v4691 = vld [vmem:[%s4 + $0x7f8] sm:$0xff]
  %v4692 = vld [vmem:[%s4 + $0x800] sm:$0xff]
  %v4693 = vld [vmem:[%s4 + $0x808] sm:$0xff]
  %v4694 = vld [vmem:[%s4 + $0x810] sm:$0xff]
  %v4695 = vld [vmem:[%s4 + $0x818] sm:$0xff]
  %v4696 = vld [vmem:[%s4 + $0x820] sm:$0xff]
  %v4697 = vld [vmem:[%s4 + $0x828] sm:$0xff]
  %v4698 = vld [vmem:[%s4 + $0x830] sm:$0xff]
  %v4699 = vld [vmem:[%s4 + $0x838] sm:$0xff]
  %v4700 = vld [vmem:[%s4 + $0x840] sm:$0xff]
  %v4701 = vld [vmem:[%s4 + $0x848] sm:$0xff]
  %v4702 = vld [vmem:[%s4 + $0x850] sm:$0xff]
  %v4703 = vld [vmem:[%s4 + $0x858] sm:$0xff]
  %v4704 = vld [vmem:[%s4 + $0x860] sm:$0xff]
  %v4705 = vld [vmem:[%s4 + $0x868] sm:$0xff]
  %v4706 = vld [vmem:[%s4 + $0x870] sm:$0xff]
  %v4707 = vld [vmem:[%s4 + $0x878] sm:$0xff]
  %v4708 = vld [vmem:[%s4 + $0x880] sm:$0xff]
  %v4709 = vld [vmem:[%s4 + $0x888] sm:$0xff]
  %v4710 = vld [vmem:[%s4 + $0x890] sm:$0xff]
  %v4711 = vld [vmem:[%s4 + $0x898] sm:$0xff]
  %v4712 = vld [vmem:[%s4 + $0x8a0] sm:$0xff]
  %v4713 = vld [vmem:[%s4 + $0x8a8] sm:$0xff]
  %v4714 = vld [vmem:[%s4 + $0x8b0] sm:$0xff]
  %v4715 = vld [vmem:[%s4 + $0x8b8] sm:$0xff]
  %v4716 = vld [vmem:[%s4 + $0x8c0] sm:$0xff]
  %v4717 = vld [vmem:[%s4 + $0x8c8] sm:$0xff]
  %v4718 = vld [vmem:[%s4 + $0x8d0] sm:$0xff]
  %v4719 = vld [vmem:[%s4 + $0x8d8] sm:$0xff]
  %v4720 = vld [vmem:[%s4 + $0x8e0] sm:$0xff]
  %v4721 = vld [vmem:[%s4 + $0x8e8] sm:$0xff]
  %v4722 = vld [vmem:[%s4 + $0x8f0] sm:$0xff]
  %v4723 = vld [vmem:[%s4 + $0x8f8] sm:$0xff]
  %v4724 = vld [vmem:[%s4 + $0x900] sm:$0xff]
  %v4725 = vld [vmem:[%s4 + $0x908] sm:$0xff]
  %v4726 = vld [vmem:[%s4 + $0x910] sm:$0xff]
  %v4727 = vld [vmem:[%s4 + $0x918] sm:$0xff]
  %v4728 = vld [vmem:[%s4 + $0x920] sm:$0xff]
  %v4729 = vld [vmem:[%s4 + $0x928] sm:$0xff]
  %v4730 = vld [vmem:[%s4 + $0x930] sm:$0xff]
  %v4731 = vld [vmem:[%s4 + $0x938] sm:$0xff]
  %v4732 = vld [vmem:[%s4 + $0x940] sm:$0xff]
  %v4733 = vld [vmem:[%s4 + $0x948] sm:$0xff]
  %v4734 = vld [vmem:[%s4 + $0x950] sm:$0xff]
  %v4735 = vld [vmem:[%s4 + $0x958] sm:$0xff]
  %v4736 = vld [vmem:[%s4 + $0x960] sm:$0xff]
  %v4737 = vld [vmem:[%s4 + $0x968] sm:$0xff]
  %v4738 = vld [vmem:[%s4 + $0x970] sm:$0xff]
  %v4739 = vld [vmem:[%s4 + $0x978] sm:$0xff]
  %v4740 = vld [vmem:[%s4 + $0x980] sm:$0xff]
  %v4741 = vld [vmem:[%s4 + $0x988] sm:$0xff]
  %v4742 = vld [vmem:[%s4 + $0x990] sm:$0xff]
  %v4743 = vld [vmem:[%s4 + $0x998] sm:$0xff]
  %v4744 = vld [vmem:[%s4 + $0x9a0] sm:$0xff]
  %v4745 = vld [vmem:[%s4 + $0x9a8] sm:$0xff]
  %v4746 = vld [vmem:[%s4 + $0x9b0] sm:$0xff]
  %v4747 = vld [vmem:[%s4 + $0x9b8] sm:$0xff]
  %v4748 = vld [vmem:[%s4 + $0x9c0] sm:$0xff]
  %v4749 = vld [vmem:[%s4 + $0x9c8] sm:$0xff]
  %v4750 = vld [vmem:[%s4 + $0x9d0] sm:$0xff]
  %v4751 = vld [vmem:[%s4 + $0x9d8] sm:$0xff]
  %v4752 = vld [vmem:[%s4 + $0x9e0] sm:$0xff]
  %v4753 = vld [vmem:[%s4 + $0x9e8] sm:$0xff]
  %v4754 = vld [vmem:[%s4 + $0x9f0] sm:$0xff]
  %v4755 = vld [vmem:[%s4 + $0x9f8] sm:$0xff]
  %v4756 = vld [vmem:[%s4 + $0xa00] sm:$0xff]
  %v4757 = vld [vmem:[%s4 + $0xa08] sm:$0xff]
  %v4758 = vld [vmem:[%s4 + $0xa10] sm:$0xff]
  %v4759 = vld [vmem:[%s4 + $0xa18] sm:$0xff]
  %v4760 = vld [vmem:[%s4 + $0xa20] sm:$0xff]
  %v4761 = vld [vmem:[%s4 + $0xa28] sm:$0xff]
  %v4762 = vld [vmem:[%s4 + $0xa30] sm:$0xff]
  %v4763 = vld [vmem:[%s4 + $0xa38] sm:$0xff]
  %v4764 = vld [vmem:[%s4 + $0xa40] sm:$0xff]
  %v4765 = vld [vmem:[%s4 + $0xa48] sm:$0xff]
  %v4766 = vld [vmem:[%s4 + $0xa50] sm:$0xff]
  %v4767 = vld [vmem:[%s4 + $0xa58] sm:$0xff]
  %v4768 = vld [vmem:[%s4 + $0xa60] sm:$0xff]
  %v4769 = vld [vmem:[%s4 + $0xa68] sm:$0xff]
  %v4770 = vld [vmem:[%s4 + $0xa70] sm:$0xff]
  %v4771 = vld [vmem:[%s4 + $0xa78] sm:$0xff]
  %v4772 = vld [vmem:[%s4 + $0xa80] sm:$0xff]
  %v4773 = vld [vmem:[%s4 + $0xa88] sm:$0xff]
  %v4774 = vld [vmem:[%s4 + $0xa90] sm:$0xff]
  %v4775 = vld [vmem:[%s4 + $0xa98] sm:$0xff]
  %v4776 = vld [vmem:[%s4 + $0xaa0] sm:$0xff]
  %v4777 = vld [vmem:[%s4 + $0xaa8] sm:$0xff]
  %v4778 = vld [vmem:[%s4 + $0xab0] sm:$0xff]
  %v4779 = vld [vmem:[%s4 + $0xab8] sm:$0xff]
  %v4780 = vld [vmem:[%s4 + $0xac0] sm:$0xff]
  %v4781 = vld [vmem:[%s4 + $0xac8] sm:$0xff]
  %v4782 = vld [vmem:[%s4 + $0xad0] sm:$0xff]
  %v4783 = vld [vmem:[%s4 + $0xad8] sm:$0xff]
  %v4784 = vld [vmem:[%s4 + $0xae0] sm:$0xff]
  %v4785 = vld [vmem:[%s4 + $0xae8] sm:$0xff]
  %v4786 = vld [vmem:[%s4 + $0xaf0] sm:$0xff]
  %v4787 = vld [vmem:[%s4 + $0xaf8] sm:$0xff]
  %v4788 = vld [vmem:[%s4 + $0xb00] sm:$0xff]
  %v4789 = vld [vmem:[%s4 + $0xb08] sm:$0xff]
  %v4790 = vld [vmem:[%s4 + $0xb10] sm:$0xff]
  %v4791 = vld [vmem:[%s4 + $0xb18] sm:$0xff]
  %v4792 = vld [vmem:[%s4 + $0xb20] sm:$0xff]
  %v4793 = vld [vmem:[%s4 + $0xb28] sm:$0xff]
  %v4794 = vld [vmem:[%s4 + $0xb30] sm:$0xff]
  %v4795 = vld [vmem:[%s4 + $0xb38] sm:$0xff]
  %v4796 = vld [vmem:[%s4 + $0xb40] sm:$0xff]
  %v4797 = vld [vmem:[%s4 + $0xb48] sm:$0xff]
  %v4798 = vld [vmem:[%s4 + $0xb50] sm:$0xff]
  %v4799 = vld [vmem:[%s4 + $0xb58] sm:$0xff]
  %v4800 = vld [vmem:[%s4 + $0xb60] sm:$0xff]
  %v4801 = vld [vmem:[%s4 + $0xb68] sm:$0xff]
  %v4802 = vld [vmem:[%s4 + $0xb70] sm:$0xff]
  %v4803 = vld [vmem:[%s4 + $0xb78] sm:$0xff]
  %v4804 = vld [vmem:[%s4 + $0xb80] sm:$0xff]
  %v4805 = vld [vmem:[%s4 + $0xb88] sm:$0xff]
  %v4806 = vld [vmem:[%s4 + $0xb90] sm:$0xff]
  %v4807 = vld [vmem:[%s4 + $0xb98] sm:$0xff]
  %v4808 = vld [vmem:[%s4 + $0xba0] sm:$0xff]
  %v4809 = vld [vmem:[%s4 + $0xba8] sm:$0xff]
  %v4810 = vld [vmem:[%s4 + $0xbb0] sm:$0xff]
  %v4811 = vld [vmem:[%s4 + $0xbb8] sm:$0xff]
  %v4812 = vld [vmem:[%s4 + $0xbc0] sm:$0xff]
  %v4813 = vld [vmem:[%s4 + $0xbc8] sm:$0xff]
  %v4814 = vld [vmem:[%s4 + $0xbd0] sm:$0xff]
  %v4815 = vld [vmem:[%s4 + $0xbd8] sm:$0xff]
  %v4816 = vld [vmem:[%s4 + $0xbe0] sm:$0xff]
  %v4817 = vld [vmem:[%s4 + $0xbe8] sm:$0xff]
  %v4818 = vld [vmem:[%s4 + $0xbf0] sm:$0xff]
  %v4819 = vld [vmem:[%s4 + $0xbf8] sm:$0xff]
  %v4820 = vld [vmem:[%s4 + $0xc00] sm:$0xff]
  %v4821 = vld [vmem:[%s4 + $0xc08] sm:$0xff]
  %v4822 = vld [vmem:[%s4 + $0xc10] sm:$0xff]
  %v4823 = vld [vmem:[%s4 + $0xc18] sm:$0xff]
  %v4824 = vld [vmem:[%s4 + $0xc20] sm:$0xff]
  %v4825 = vld [vmem:[%s4 + $0xc28] sm:$0xff]
  %v4826 = vld [vmem:[%s4 + $0xc30] sm:$0xff]
  %v4827 = vld [vmem:[%s4 + $0xc38] sm:$0xff]
  %v4828 = vld [vmem:[%s4 + $0xc40] sm:$0xff]
  %v4829 = vld [vmem:[%s4 + $0xc48] sm:$0xff]
  %v4830 = vld [vmem:[%s4 + $0xc50] sm:$0xff]
  %v4831 = vld [vmem:[%s4 + $0xc58] sm:$0xff]
  %v4832 = vld [vmem:[%s4 + $0xc60] sm:$0xff]
  %v4833 = vld [vmem:[%s4 + $0xc68] sm:$0xff]
  %v4834 = vld [vmem:[%s4 + $0xc70] sm:$0xff]
  %v4835 = vld [vmem:[%s4 + $0xc78] sm:$0xff]
  %v4836 = vld [vmem:[%s4 + $0xc80] sm:$0xff]
  %v4837 = vld [vmem:[%s4 + $0xc88] sm:$0xff]
  %v4838 = vld [vmem:[%s4 + $0xc90] sm:$0xff]
  %v4839 = vld [vmem:[%s4 + $0xc98] sm:$0xff]
  %v4840 = vld [vmem:[%s4 + $0xca0] sm:$0xff]
  %v4841 = vld [vmem:[%s4 + $0xca8] sm:$0xff]
  %v4842 = vld [vmem:[%s4 + $0xcb0] sm:$0xff]
  %v4843 = vld [vmem:[%s4 + $0xcb8] sm:$0xff]
  %v4844 = vld [vmem:[%s4 + $0xcc0] sm:$0xff]
  %v4845 = vld [vmem:[%s4 + $0xcc8] sm:$0xff]
  %v4846 = vld [vmem:[%s4 + $0xcd0] sm:$0xff]
  %v4847 = vld [vmem:[%s4 + $0xcd8] sm:$0xff]
  %v4848 = vld [vmem:[%s4 + $0xce0] sm:$0xff]
  %v4849 = vld [vmem:[%s4 + $0xce8] sm:$0xff]
  %v4850 = vld [vmem:[%s4 + $0xcf0] sm:$0xff]
  %v4851 = vld [vmem:[%s4 + $0xcf8] sm:$0xff]
  %v4852 = vld [vmem:[%s4 + $0xd00] sm:$0xff]
  %v4853 = vld [vmem:[%s4 + $0xd08] sm:$0xff]
  %v4854 = vld [vmem:[%s4 + $0xd10] sm:$0xff]
  %v4855 = vld [vmem:[%s4 + $0xd18] sm:$0xff]
  %v4856 = vld [vmem:[%s4 + $0xd20] sm:$0xff]
  %v4857 = vld [vmem:[%s4 + $0xd28] sm:$0xff]
  %v4858 = vld [vmem:[%s4 + $0xd30] sm:$0xff]
  %v4859 = vld [vmem:[%s4 + $0xd38] sm:$0xff]
  %v4860 = vld [vmem:[%s4 + $0xd40] sm:$0xff]
  %v4861 = vld [vmem:[%s4 + $0xd48] sm:$0xff]
  %v4862 = vld [vmem:[%s4 + $0xd50] sm:$0xff]
  %v4863 = vld [vmem:[%s4 + $0xd58] sm:$0xff]
  %v4864 = vld [vmem:[%s4 + $0xd60] sm:$0xff]
  %v4865 = vld [vmem:[%s4 + $0xd68] sm:$0xff]
  %v4866 = vld [vmem:[%s4 + $0xd70] sm:$0xff]
  %v4867 = vld [vmem:[%s4 + $0xd78] sm:$0xff]
  %v4868 = vld [vmem:[%s4 + $0xd80] sm:$0xff]
  %v4869 = vld [vmem:[%s4 + $0xd88] sm:$0xff]
  %v4870 = vld [vmem:[%s4 + $0xd90] sm:$0xff]
  %v4871 = vld [vmem:[%s4 + $0xd98] sm:$0xff]
  %v4872 = vld [vmem:[%s4 + $0xda0] sm:$0xff]
  %v4873 = vld [vmem:[%s4 + $0xda8] sm:$0xff]
  %v4874 = vld [vmem:[%s4 + $0xdb0] sm:$0xff]
  %v4875 = vld [vmem:[%s4 + $0xdb8] sm:$0xff]
  %v4876 = vld [vmem:[%s4 + $0xdc0] sm:$0xff]
  %v4877 = vld [vmem:[%s4 + $0xdc8] sm:$0xff]
  %v4878 = vld [vmem:[%s4 + $0xdd0] sm:$0xff]
  %v4879 = vld [vmem:[%s4 + $0xdd8] sm:$0xff]
  %v4880 = vld [vmem:[%s4 + $0xde0] sm:$0xff]
  %v4881 = vld [vmem:[%s4 + $0xde8] sm:$0xff]
  %v4882 = vld [vmem:[%s4 + $0xdf0] sm:$0xff]
  %v4883 = vld [vmem:[%s4 + $0xdf8] sm:$0xff]
  %v4884 = vld [vmem:[%s4 + $0xe00] sm:$0xff]
  %v4885 = vld [vmem:[%s4 + $0xe08] sm:$0xff]
  %v4886 = vld [vmem:[%s4 + $0xe10] sm:$0xff]
  %v4887 = vld [vmem:[%s4 + $0xe18] sm:$0xff]
  %v4888 = vld [vmem:[%s4 + $0xe20] sm:$0xff]
  %v4889 = vld [vmem:[%s4 + $0xe28] sm:$0xff]
  %v4890 = vld [vmem:[%s4 + $0xe30] sm:$0xff]
  %v4891 = vld [vmem:[%s4 + $0xe38] sm:$0xff]
  %v4892 = vld [vmem:[%s4 + $0xe40] sm:$0xff]
  %v4893 = vld [vmem:[%s4 + $0xe48] sm:$0xff]
  %v4894 = vld [vmem:[%s4 + $0xe50] sm:$0xff]
  %v4895 = vld [vmem:[%s4 + $0xe58] sm:$0xff]
  %v4896 = vld [vmem:[%s4 + $0xe60] sm:$0xff]
  %v4897 = vld [vmem:[%s4 + $0xe68] sm:$0xff]
  %v4898 = vld [vmem:[%s4 + $0xe70] sm:$0xff]
  %v4899 = vld [vmem:[%s4 + $0xe78] sm:$0xff]
  %v4900 = vld [vmem:[%s4 + $0xe80] sm:$0xff]
  %v4901 = vld [vmem:[%s4 + $0xe88] sm:$0xff]
  %v4902 = vld [vmem:[%s4 + $0xe90] sm:$0xff]
  %v4903 = vld [vmem:[%s4 + $0xe98] sm:$0xff]
  %v4904 = vld [vmem:[%s4 + $0xea0] sm:$0xff]
  %v4905 = vld [vmem:[%s4 + $0xea8] sm:$0xff]
  %v4906 = vld [vmem:[%s4 + $0xeb0] sm:$0xff]
  %v4907 = vld [vmem:[%s4 + $0xeb8] sm:$0xff]
  %v4908 = vld [vmem:[%s4 + $0xec0] sm:$0xff]
  %v4909 = vld [vmem:[%s4 + $0xec8] sm:$0xff]
  %v4910 = vld [vmem:[%s4 + $0xed0] sm:$0xff]
  %v4911 = vld [vmem:[%s4 + $0xed8] sm:$0xff]
  %v4912 = vld [vmem:[%s4 + $0xee0] sm:$0xff]
  %v4913 = vld [vmem:[%s4 + $0xee8] sm:$0xff]
  %v4914 = vld [vmem:[%s4 + $0xef0] sm:$0xff]
  %v4915 = vld [vmem:[%s4 + $0xef8] sm:$0xff]
  %v4916 = vld [vmem:[%s4 + $0xf00] sm:$0xff]
  %v4917 = vld [vmem:[%s4 + $0xf08] sm:$0xff]
  %v4918 = vld [vmem:[%s4 + $0xf10] sm:$0xff]
  %v4919 = vld [vmem:[%s4 + $0xf18] sm:$0xff]
  %v4920 = vld [vmem:[%s4 + $0xf20] sm:$0xff]
  %v4921 = vld [vmem:[%s4 + $0xf28] sm:$0xff]
  %v4922 = vld [vmem:[%s4 + $0xf30] sm:$0xff]
  %v4923 = vld [vmem:[%s4 + $0xf38] sm:$0xff]
  %v4924 = vld [vmem:[%s4 + $0xf40] sm:$0xff]
  %v4925 = vld [vmem:[%s4 + $0xf48] sm:$0xff]
  %v4926 = vld [vmem:[%s4 + $0xf50] sm:$0xff]
  %v4927 = vld [vmem:[%s4 + $0xf58] sm:$0xff]
  %v4928 = vld [vmem:[%s4 + $0xf60] sm:$0xff]
  %v4929 = vld [vmem:[%s4 + $0xf68] sm:$0xff]
  %v4930 = vld [vmem:[%s4 + $0xf70] sm:$0xff]
  %v4931 = vld [vmem:[%s4 + $0xf78] sm:$0xff]
  %v4932 = vld [vmem:[%s4 + $0xf80] sm:$0xff]
  %v4933 = vld [vmem:[%s4 + $0xf88] sm:$0xff]
  %v4934 = vld [vmem:[%s4 + $0xf90] sm:$0xff]
  %v4935 = vld [vmem:[%s4 + $0xf98] sm:$0xff]
  %v4936 = vld [vmem:[%s4 + $0xfa0] sm:$0xff]
  %v4937 = vld [vmem:[%s4 + $0xfa8] sm:$0xff]
  %v4938 = vld [vmem:[%s4 + $0xfb0] sm:$0xff]
  %v4939 = vld [vmem:[%s4 + $0xfb8] sm:$0xff]
  %v4940 = vld [vmem:[%s4 + $0xfc0] sm:$0xff]
  %v4941 = vld [vmem:[%s4 + $0xfc8] sm:$0xff]
  %v4942 = vld [vmem:[%s4 + $0xfd0] sm:$0xff]
  %v4943 = vld [vmem:[%s4 + $0xfd8] sm:$0xff]
  %v4944 = vld [vmem:[%s4 + $0xfe0] sm:$0xff]
  %v4945 = vld [vmem:[%s4 + $0xfe8] sm:$0xff]
  %v4946 = vld [vmem:[%s4 + $0xff0] sm:$0xff]
  %v4947 = vld [vmem:[%s4 + $0xff8] sm:$0xff]
  %v4948 = vld [vmem:[%s4 + $0x1000] sm:$0xff]
  %v4949 = vld [vmem:[%s4 + $0x1008] sm:$0xff]
  %v4950 = vld [vmem:[%s4 + $0x1010] sm:$0xff]
  %v4951 = vld [vmem:[%s4 + $0x1018] sm:$0xff]
  %v4952 = vld [vmem:[%s4 + $0x1020] sm:$0xff]
  %v4953 = vld [vmem:[%s4 + $0x1028] sm:$0xff]
  %v4954 = vld [vmem:[%s4 + $0x1030] sm:$0xff]
  %v4955 = vld [vmem:[%s4 + $0x1038] sm:$0xff]
  %v4956 = vld [vmem:[%s4 + $0x1040] sm:$0xff]
  %v4957 = vld [vmem:[%s4 + $0x1048] sm:$0xff]
  %v4958 = vld [vmem:[%s4 + $0x1050] sm:$0xff]
  %v4959 = vld [vmem:[%s4 + $0x1058] sm:$0xff]
  %v4960 = vld [vmem:[%s4 + $0x1060] sm:$0xff]
  %v4961 = vld [vmem:[%s4 + $0x1068] sm:$0xff]
  %v4962 = vld [vmem:[%s4 + $0x1070] sm:$0xff]
  %v4963 = vld [vmem:[%s4 + $0x1078] sm:$0xff]
  %v4964 = vld [vmem:[%s4 + $0x1080] sm:$0xff]
  %v4965 = vld [vmem:[%s4 + $0x1088] sm:$0xff]
  %v4966 = vld [vmem:[%s4 + $0x1090] sm:$0xff]
  %v4967 = vld [vmem:[%s4 + $0x1098] sm:$0xff]
  %v4968 = vld [vmem:[%s4 + $0x10a0] sm:$0xff]
  %v4969 = vld [vmem:[%s4 + $0x10a8] sm:$0xff]
  %v4970 = vld [vmem:[%s4 + $0x10b0] sm:$0xff]
  %v4971 = vld [vmem:[%s4 + $0x10b8] sm:$0xff]
  %v4972 = vld [vmem:[%s4 + $0x10c0] sm:$0xff]
  %v4973 = vld [vmem:[%s4 + $0x10c8] sm:$0xff]
  %v4974 = vld [vmem:[%s4 + $0x10d0] sm:$0xff]
  %v4975 = vld [vmem:[%s4 + $0x10d8] sm:$0xff]
  %v4976 = vld [vmem:[%s4 + $0x10e0] sm:$0xff]
  %v4977 = vld [vmem:[%s4 + $0x10e8] sm:$0xff]
  %v4978 = vld [vmem:[%s4 + $0x10f0] sm:$0xff]
  %v4979 = vld [vmem:[%s4 + $0x10f8] sm:$0xff]
  %v4980 = vld [vmem:[%s4 + $0x1100] sm:$0xff]
  %v4981 = vld [vmem:[%s4 + $0x1108] sm:$0xff]
  %v4982 = vld [vmem:[%s4 + $0x1110] sm:$0xff]
  %v4983 = vld [vmem:[%s4 + $0x1118] sm:$0xff]
  %v4984 = vld [vmem:[%s4 + $0x1120] sm:$0xff]
  %v4985 = vld [vmem:[%s4 + $0x1128] sm:$0xff]
  %v4986 = vld [vmem:[%s4 + $0x1130] sm:$0xff]
  %v4987 = vld [vmem:[%s4 + $0x1138] sm:$0xff]
  %v4988 = vld [vmem:[%s4 + $0x1140] sm:$0xff]
  %v4989 = vld [vmem:[%s4 + $0x1148] sm:$0xff]
  %v4990 = vld [vmem:[%s4 + $0x1150] sm:$0xff]
  %v4991 = vld [vmem:[%s4 + $0x1158] sm:$0xff]
  %v4992 = vld [vmem:[%s4 + $0x1160] sm:$0xff]
  %v4993 = vld [vmem:[%s4 + $0x1168] sm:$0xff]
  %v4994 = vld [vmem:[%s4 + $0x1170] sm:$0xff]
  %v4995 = vld [vmem:[%s4 + $0x1178] sm:$0xff]
  %v4996 = vld [vmem:[%s4 + $0x1180] sm:$0xff]
  %v4997 = vld [vmem:[%s4 + $0x1188] sm:$0xff]
  %v4998 = vld [vmem:[%s4 + $0x1190] sm:$0xff]
  %v4999 = vld [vmem:[%s4 + $0x1198] sm:$0xff]
  %v5000 = vld [vmem:[%s4 + $0x11a0] sm:$0xff]
  %v5001 = vld [vmem:[%s4 + $0x11a8] sm:$0xff]
  %v5002 = vld [vmem:[%s4 + $0x11b0] sm:$0xff]
  %v5003 = vld [vmem:[%s4 + $0x11b8] sm:$0xff]
  %v5004 = vld [vmem:[%s4 + $0x11c0] sm:$0xff]
  %v5005 = vld [vmem:[%s4 + $0x11c8] sm:$0xff]
  %v5006 = vld [vmem:[%s4 + $0x11d0] sm:$0xff]
  %v5007 = vld [vmem:[%s4 + $0x11d8] sm:$0xff]
  %v5008 = vld [vmem:[%s4 + $0x11e0] sm:$0xff]
  %v5009 = vld [vmem:[%s4 + $0x11e8] sm:$0xff]
  %v5010 = vld [vmem:[%s4 + $0x11f0] sm:$0xff]
  %v5011 = vld [vmem:[%s4 + $0x11f8] sm:$0xff]
  %v5012 = vld [vmem:[%s4 + $0x1200] sm:$0xff]
  %v5013 = vld [vmem:[%s4 + $0x1208] sm:$0xff]
  %v5014 = vld [vmem:[%s4 + $0x1210] sm:$0xff]
  %v5015 = vld [vmem:[%s4 + $0x1218] sm:$0xff]
  %v5016 = vld [vmem:[%s4 + $0x1220] sm:$0xff]
  %v5017 = vld [vmem:[%s4 + $0x1228] sm:$0xff]
  %v5018 = vld [vmem:[%s4 + $0x1230] sm:$0xff]
  %v5019 = vld [vmem:[%s4 + $0x1238] sm:$0xff]
  %v5020 = vld [vmem:[%s4 + $0x1240] sm:$0xff]
  %v5021 = vld [vmem:[%s4 + $0x1248] sm:$0xff]
  %v5022 = vld [vmem:[%s4 + $0x1250] sm:$0xff]
  %v5023 = vld [vmem:[%s4 + $0x1258] sm:$0xff]
  %v5024 = vld [vmem:[%s4 + $0x1260] sm:$0xff]
  %v5025 = vld [vmem:[%s4 + $0x1268] sm:$0xff]
  %v5026 = vld [vmem:[%s4 + $0x1270] sm:$0xff]
  %v5027 = vld [vmem:[%s4 + $0x1278] sm:$0xff]
  %v5028 = vld [vmem:[%s4 + $0x1280] sm:$0xff]
  %v5029 = vld [vmem:[%s4 + $0x1288] sm:$0xff]
  %v5030 = vld [vmem:[%s4 + $0x1290] sm:$0xff]
  %v5031 = vld [vmem:[%s4 + $0x1298] sm:$0xff]
  %v5032 = vld [vmem:[%s4 + $0x12a0] sm:$0xff]
  %v5033 = vld [vmem:[%s4 + $0x12a8] sm:$0xff]
  %v5034 = vld [vmem:[%s4 + $0x12b0] sm:$0xff]
  %v5035 = vld [vmem:[%s4 + $0x12b8] sm:$0xff]
  %v5036 = vld [vmem:[%s4 + $0x12c0] sm:$0xff]
  %v5037 = vld [vmem:[%s4 + $0x12c8] sm:$0xff]
  %v5038 = vld [vmem:[%s4 + $0x12d0] sm:$0xff]
  %v5039 = vld [vmem:[%s4 + $0x12d8] sm:$0xff]
  %v5040 = vld [vmem:[%s4 + $0x12e0] sm:$0xff]
  %v5041 = vld [vmem:[%s4 + $0x12e8] sm:$0xff]
  %v5042 = vld [vmem:[%s4 + $0x12f0] sm:$0xff]
  %v5043 = vld [vmem:[%s4 + $0x12f8] sm:$0xff]
  %v5044 = vld [vmem:[%s4 + $0x1300] sm:$0xff]
  %v5045 = vld [vmem:[%s4 + $0x1308] sm:$0xff]
  %v5046 = vld [vmem:[%s4 + $0x1310] sm:$0xff]
  %v5047 = vld [vmem:[%s4 + $0x1318] sm:$0xff]
  %v5048 = vld [vmem:[%s4 + $0x1320] sm:$0xff]
  %v5049 = vld [vmem:[%s4 + $0x1328] sm:$0xff]
  %v5050 = vld [vmem:[%s4 + $0x1330] sm:$0xff]
  %v5051 = vld [vmem:[%s4 + $0x1338] sm:$0xff]
  %v5052 = vld [vmem:[%s4 + $0x1340] sm:$0xff]
  %v5053 = vld [vmem:[%s4 + $0x1348] sm:$0xff]
  %v5054 = vld [vmem:[%s4 + $0x1350] sm:$0xff]
  %v5055 = vld [vmem:[%s4 + $0x1358] sm:$0xff]
  %v5056 = vld [vmem:[%s4 + $0x1360] sm:$0xff]
  %v5057 = vld [vmem:[%s4 + $0x1368] sm:$0xff]
  %v5058 = vld [vmem:[%s4 + $0x1370] sm:$0xff]
  %v5059 = vld [vmem:[%s4 + $0x1378] sm:$0xff]
  %v5060 = vld [vmem:[%s4 + $0x1380] sm:$0xff]
  %v5061 = vld [vmem:[%s4 + $0x1388] sm:$0xff]
  %v5062 = vld [vmem:[%s4 + $0x1390] sm:$0xff]
  %v5063 = vld [vmem:[%s4 + $0x1398] sm:$0xff]
  %v5064 = vld [vmem:[%s4 + $0x13a0] sm:$0xff]
  %v5065 = vld [vmem:[%s4 + $0x13a8] sm:$0xff]
  %v5066 = vld [vmem:[%s4 + $0x13b0] sm:$0xff]
  %v5067 = vld [vmem:[%s4 + $0x13b8] sm:$0xff]
  %v5068 = vld [vmem:[%s4 + $0x13c0] sm:$0xff]
  %v5069 = vld [vmem:[%s4 + $0x13c8] sm:$0xff]
  %v5070 = vld [vmem:[%s4 + $0x13d0] sm:$0xff]
  %v5071 = vld [vmem:[%s4 + $0x13d8] sm:$0xff]
  %v5072 = vld [vmem:[%s4 + $0x13e0] sm:$0xff]
  %v5073 = vld [vmem:[%s4 + $0x13e8] sm:$0xff]
  %v5074 = vld [vmem:[%s4 + $0x13f0] sm:$0xff]
  %v5075 = vld [vmem:[%s4 + $0x13f8] sm:$0xff]
  %v5076 = vld [vmem:[%s4 + $0x1400] sm:$0xff]
  %v5077 = vld [vmem:[%s4 + $0x1408] sm:$0xff]
  %v5078 = vld [vmem:[%s4 + $0x1410] sm:$0xff]
  %v5079 = vld [vmem:[%s4 + $0x1418] sm:$0xff]
  %v5080 = vld [vmem:[%s4 + $0x1420] sm:$0xff]
  %v5081 = vld [vmem:[%s4 + $0x1428] sm:$0xff]
  %v5082 = vld [vmem:[%s4 + $0x1430] sm:$0xff]
  %v5083 = vld [vmem:[%s4 + $0x1438] sm:$0xff]
  %v5084 = vld [vmem:[%s4 + $0x1440] sm:$0xff]
  %v5085 = vld [vmem:[%s4 + $0x1448] sm:$0xff]
  %v5086 = vld [vmem:[%s4 + $0x1450] sm:$0xff]
  %v5087 = vld [vmem:[%s4 + $0x1458] sm:$0xff]
  %v5088 = vld [vmem:[%s4 + $0x1460] sm:$0xff]
  %v5089 = vld [vmem:[%s4 + $0x1468] sm:$0xff]
  %v5090 = vld [vmem:[%s4 + $0x1470] sm:$0xff]
  %v5091 = vld [vmem:[%s4 + $0x1478] sm:$0xff]
  %v5092 = vld [vmem:[%s4 + $0x1480] sm:$0xff]
  %v5093 = vld [vmem:[%s4 + $0x1488] sm:$0xff]
  %v5094 = vld [vmem:[%s4 + $0x1490] sm:$0xff]
  %v5095 = vld [vmem:[%s4 + $0x1498] sm:$0xff]
  %v5096 = vld [vmem:[%s4 + $0x14a0] sm:$0xff]
  %v5097 = vld [vmem:[%s4 + $0x14a8] sm:$0xff]
  %v5098 = vld [vmem:[%s4 + $0x14b0] sm:$0xff]
  %v5099 = vld [vmem:[%s4 + $0x14b8] sm:$0xff]
  %v5100 = vld [vmem:[%s4 + $0x14c0] sm:$0xff]
  %v5101 = vld [vmem:[%s4 + $0x14c8] sm:$0xff]
  %v5102 = vld [vmem:[%s4 + $0x14d0] sm:$0xff]
  %v5103 = vld [vmem:[%s4 + $0x14d8] sm:$0xff]
  %v5104 = vld [vmem:[%s4 + $0x14e0] sm:$0xff]
  %v5105 = vld [vmem:[%s4 + $0x14e8] sm:$0xff]
  %v5106 = vld [vmem:[%s4 + $0x14f0] sm:$0xff]
  %v5107 = vld [vmem:[%s4 + $0x14f8] sm:$0xff]
  %v5108 = vld [vmem:[%s4 + $0x1500] sm:$0xff]
  %v5109 = vld [vmem:[%s4 + $0x1508] sm:$0xff]
  %v5110 = vld [vmem:[%s4 + $0x1510] sm:$0xff]
  %v5111 = vld [vmem:[%s4 + $0x1518] sm:$0xff]
  %v5112 = vld [vmem:[%s4 + $0x1520] sm:$0xff]
  %v5113 = vld [vmem:[%s4 + $0x1528] sm:$0xff]
  %v5114 = vld [vmem:[%s4 + $0x1530] sm:$0xff]
  %v5115 = vld [vmem:[%s4 + $0x1538] sm:$0xff]
  %v5116 = vld [vmem:[%s4 + $0x1540] sm:$0xff]
  %v5117 = vld [vmem:[%s4 + $0x1548] sm:$0xff]
  %v5118 = vld [vmem:[%s4 + $0x1550] sm:$0xff]
  %v5119 = vld [vmem:[%s4 + $0x1558] sm:$0xff]
  %v5120 = vld [vmem:[%s4 + $0x1560] sm:$0xff]
  %v5121 = vld [vmem:[%s4 + $0x1568] sm:$0xff]
  %v5122 = vld [vmem:[%s4 + $0x1570] sm:$0xff]
  %v5123 = vld [vmem:[%s4 + $0x1578] sm:$0xff]
  %v5124 = vld [vmem:[%s4 + $0x1580] sm:$0xff]
  %v5125 = vld [vmem:[%s4 + $0x1588] sm:$0xff]
  %v5126 = vld [vmem:[%s4 + $0x1590] sm:$0xff]
  %v5127 = vld [vmem:[%s4 + $0x1598] sm:$0xff]
  %v5128 = vld [vmem:[%s4 + $0x15a0] sm:$0xff]
  %v5129 = vld [vmem:[%s4 + $0x15a8] sm:$0xff]
  %v5130 = vld [vmem:[%s4 + $0x15b0] sm:$0xff]
  %v5131 = vld [vmem:[%s4 + $0x15b8] sm:$0xff]
  %v5132 = vld [vmem:[%s4 + $0x15c0] sm:$0xff]
  %v5133 = vld [vmem:[%s4 + $0x15c8] sm:$0xff]
  %v5134 = vld [vmem:[%s4 + $0x15d0] sm:$0xff]
  %v5135 = vld [vmem:[%s4 + $0x15d8] sm:$0xff]
  %v5136 = vld [vmem:[%s4 + $0x15e0] sm:$0xff]
  %v5137 = vld [vmem:[%s4 + $0x15e8] sm:$0xff]
  %v5138 = vld [vmem:[%s4 + $0x15f0] sm:$0xff]
  %v5139 = vld [vmem:[%s4 + $0x15f8] sm:$0xff]
  %v5140 = vld [vmem:[%s4 + $0x1600] sm:$0xff]
  %v5141 = vld [vmem:[%s4 + $0x1608] sm:$0xff]
  %v5142 = vld [vmem:[%s4 + $0x1610] sm:$0xff]
  %v5143 = vld [vmem:[%s4 + $0x1618] sm:$0xff]
  %v5144 = vld [vmem:[%s4 + $0x1620] sm:$0xff]
  %v5145 = vld [vmem:[%s4 + $0x1628] sm:$0xff]
  %v5146 = vld [vmem:[%s4 + $0x1630] sm:$0xff]
  %v5147 = vld [vmem:[%s4 + $0x1638] sm:$0xff]
  %v5148 = vld [vmem:[%s4 + $0x1640] sm:$0xff]
  %v5149 = vld [vmem:[%s4 + $0x1648] sm:$0xff]
  %v5150 = vld [vmem:[%s4 + $0x1650] sm:$0xff]
  %v5151 = vld [vmem:[%s4 + $0x1658] sm:$0xff]
  %v5152 = vld [vmem:[%s4 + $0x1660] sm:$0xff]
  %v5153 = vld [vmem:[%s4 + $0x1668] sm:$0xff]
  %v5154 = vld [vmem:[%s4 + $0x1670] sm:$0xff]
  %v5155 = vld [vmem:[%s4 + $0x1678] sm:$0xff]
  %v5156 = vpack.c.b16 %v4391, %v4382
  %v5157 = vpack.c.b16 %v4392, %v4383
  %v5158 = vpack.c.b16 %v4393, %v4384
  %v5159 = vpack.c.b16 %v4394, %v4385
  %v5160 = vpack.c.b16 %v4395, %v4386
  %v5161 = vpack.c.b16 %v4396, %v4387
  %v5162 = vpack.c.b16 %v4397, %v4388
  %v5163 = vpack.c.b16 %v4398, %v4389
  %v5164 = vpack.c.b16 %v4399, %v4390
  %v5165 = vpack.c.b16 %v4293, %v4290
  %v5166 = vpack.c.b16 %v4294, %v4291
  %v5167 = vpack.c.b16 %v4295, %v4292
  %v5168 = vpack.c.b16 %v4296, %v4293
  %v5169 = vpack.c.b16 %v4297, %v4294
  %v5170 = vpack.c.b16 %v4298, %v4295
  %v5171 = vpack.c.b16 %v4409, %v4400
  %v5172 = vpack.c.b16 %v4410, %v4401
  %v5173 = vpack.c.b16 %v4411, %v4402
  %v5174 = vpack.c.b16 %v4412, %v4403
  %v5175 = vpack.c.b16 %v4413, %v4404
  %v5176 = vpack.c.b16 %v4414, %v4405
  %v5177 = vpack.c.b16 %v4415, %v4406
  %v5178 = vpack.c.b16 %v4416, %v4407
  %v5179 = vpack.c.b16 %v4417, %v4408
  %v5180 = vpack.c.b16 %v4299, %v4309
  %v5181 = vpack.c.b16 %v4300, %v4310
  %v5182 = vpack.c.b16 %v4301, %v4311
  %v5183 = vpack.c.b16 %v4302, %v4299
  %v5184 = vpack.c.b16 %v4303, %v4300
  %v5185 = vpack.c.b16 %v4304, %v4301
  %v5186 = vpack.c.b16 %v4427, %v4418
  %v5187 = vpack.c.b16 %v4428, %v4419
  %v5188 = vpack.c.b16 %v4429, %v4420
  %v5189 = vpack.c.b16 %v4430, %v4421
  %v5190 = vpack.c.b16 %v4431, %v4422
  %v5191 = vpack.c.b16 %v4432, %v4423
  %v5192 = vpack.c.b16 %v4433, %v4424
  %v5193 = vpack.c.b16 %v4434, %v4425
  %v5194 = vpack.c.b16 %v4435, %v4426
  %v5960 = vunpack.c.l.b16 %v4436
  %v5961 = vunpack.c.h.b16 %v4436
  %v5962 = vunpack.c.l.b16 %v4437
  %v5963 = vunpack.c.h.b16 %v4437
  %v5964 = vunpack.c.l.b16 %v4438
  %v5965 = vunpack.c.h.b16 %v4438
  %v5966 = vunpack.c.l.b16 %v4439
  %v5967 = vunpack.c.h.b16 %v4439
  %v5968 = vunpack.c.l.b16 %v4440
  %v5969 = vunpack.c.h.b16 %v4440
  %v5970 = vunpack.c.l.b16 %v4441
  %v5971 = vunpack.c.h.b16 %v4441
  %v5972 = vunpack.c.l.b16 %v4442
  %v5973 = vunpack.c.h.b16 %v4442
  %v5974 = vunpack.c.l.b16 %v4443
  %v5975 = vunpack.c.h.b16 %v4443
  %v5976 = vunpack.c.l.b16 %v4444
  %v5977 = vunpack.c.h.b16 %v4444
  %v5978 = vunpack.c.l.b16 %v4445
  %v5979 = vunpack.c.h.b16 %v4445
  %v5980 = vunpack.c.l.b16 %v4446
  %v5981 = vunpack.c.h.b16 %v4446
  %v5982 = vunpack.c.l.b16 %v4447
  %v5983 = vunpack.c.h.b16 %v4447
  %v5984 = vunpack.c.l.b16 %v4448
  %v5985 = vunpack.c.h.b16 %v4448
  %v5986 = vunpack.c.l.b16 %v4449
  %v5987 = vunpack.c.h.b16 %v4449
  %v5988 = vunpack.c.l.b16 %v4450
  %v5989 = vunpack.c.h.b16 %v4450
  %v5990 = vunpack.c.l.b16 %v4451
  %v5991 = vunpack.c.h.b16 %v4451
  %v5992 = vunpack.c.l.b16 %v4452
  %v5993 = vunpack.c.h.b16 %v4452
  %v5994 = vunpack.c.l.b16 %v4453
  %v5995 = vunpack.c.h.b16 %v4453
  %v5996 = vunpack.c.l.b16 %v4454
  %v5997 = vunpack.c.h.b16 %v4454
  %v5998 = vunpack.c.l.b16 %v4455
  %v5999 = vunpack.c.h.b16 %v4455
  %v6000 = vunpack.c.l.b16 %v4456
  %v6001 = vunpack.c.h.b16 %v4456
  %v6002 = vunpack.c.l.b16 %v4457
  %v6003 = vunpack.c.h.b16 %v4457
  %v6004 = vunpack.c.l.b16 %v4458
  %v6005 = vunpack.c.h.b16 %v4458
  %v6006 = vunpack.c.l.b16 %v4459
  %v6007 = vunpack.c.h.b16 %v4459
  %v6008 = vunpack.c.l.b16 %v4460
  %v6009 = vunpack.c.h.b16 %v4460
  %v6010 = vunpack.c.l.b16 %v4461
  %v6011 = vunpack.c.h.b16 %v4461
  %v6012 = vunpack.c.l.b16 %v4462
  %v6013 = vunpack.c.h.b16 %v4462
  %v6014 = vunpack.c.l.b16 %v4463
  %v6015 = vunpack.c.h.b16 %v4463
  %v6016 = vunpack.c.l.b16 %v4464
  %v6017 = vunpack.c.h.b16 %v4464
  %v6018 = vunpack.c.l.b16 %v4465
  %v6019 = vunpack.c.h.b16 %v4465
  %v6020 = vunpack.c.l.b16 %v4466
  %v6021 = vunpack.c.h.b16 %v4466
  %v6022 = vunpack.c.l.b16 %v4467
  %v6023 = vunpack.c.h.b16 %v4467
  %v6024 = vunpack.c.l.b16 %v4468
  %v6025 = vunpack.c.h.b16 %v4468
  %v6026 = vunpack.c.l.b16 %v4469
  %v6027 = vunpack.c.h.b16 %v4469
  %v6028 = vunpack.c.l.b16 %v4470
  %v6029 = vunpack.c.h.b16 %v4470
  %v6030 = vunpack.c.l.b16 %v4471
  %v6031 = vunpack.c.h.b16 %v4471
  %v6032 = vunpack.c.l.b16 %v4472
  %v6033 = vunpack.c.h.b16 %v4472
  %v6034 = vunpack.c.l.b16 %v4473
  %v6035 = vunpack.c.h.b16 %v4473
  %v6036 = vunpack.c.l.b16 %v4474
  %v6037 = vunpack.c.h.b16 %v4474
  %v6038 = vunpack.c.l.b16 %v4475
  %v6039 = vunpack.c.h.b16 %v4475
  %v6040 = vunpack.c.l.b16 %v4476
  %v6041 = vunpack.c.h.b16 %v4476
  %v6042 = vunpack.c.l.b16 %v4477
  %v6043 = vunpack.c.h.b16 %v4477
  %v6044 = vunpack.c.l.b16 %v4478
  %v6045 = vunpack.c.h.b16 %v4478
  %v6046 = vunpack.c.l.b16 %v4479
  %v6047 = vunpack.c.h.b16 %v4479
  %v6048 = vunpack.c.l.b16 %v4480
  %v6049 = vunpack.c.h.b16 %v4480
  %v6050 = vunpack.c.l.b16 %v4481
  %v6051 = vunpack.c.h.b16 %v4481
  %v6052 = vunpack.c.l.b16 %v4482
  %v6053 = vunpack.c.h.b16 %v4482
  %v6054 = vunpack.c.l.b16 %v4483
  %v6055 = vunpack.c.h.b16 %v4483
  %v6056 = vunpack.c.l.b16 %v4484
  %v6057 = vunpack.c.h.b16 %v4484
  %v6058 = vunpack.c.l.b16 %v4485
  %v6059 = vunpack.c.h.b16 %v4485
  %v6060 = vunpack.c.l.b16 %v4486
  %v6061 = vunpack.c.h.b16 %v4486
  %v6062 = vunpack.c.l.b16 %v4487
  %v6063 = vunpack.c.h.b16 %v4487
  %v6064 = vunpack.c.l.b16 %v4488
  %v6065 = vunpack.c.h.b16 %v4488
  %v6066 = vunpack.c.l.b16 %v4489
  %v6067 = vunpack.c.h.b16 %v4489
  %v6068 = vunpack.c.l.b16 %v4490
  %v6069 = vunpack.c.h.b16 %v4490
  %v6070 = vunpack.c.l.b16 %v4491
  %v6071 = vunpack.c.h.b16 %v4491
  %v6072 = vunpack.c.l.b16 %v4492
  %v6073 = vunpack.c.h.b16 %v4492
  %v6074 = vunpack.c.l.b16 %v4493
  %v6075 = vunpack.c.h.b16 %v4493
  %v6076 = vunpack.c.l.b16 %v4494
  %v6077 = vunpack.c.h.b16 %v4494
  %v6078 = vunpack.c.l.b16 %v4495
  %v6079 = vunpack.c.h.b16 %v4495
  %v6080 = vunpack.c.l.b16 %v4496
  %v6081 = vunpack.c.h.b16 %v4496
  %v6082 = vunpack.c.l.b16 %v4497
  %v6083 = vunpack.c.h.b16 %v4497
  %v6084 = vunpack.c.l.b16 %v4498
  %v6085 = vunpack.c.h.b16 %v4498
  %v6086 = vunpack.c.l.b16 %v4499
  %v6087 = vunpack.c.h.b16 %v4499
  %v6088 = vunpack.c.l.b16 %v4500
  %v6089 = vunpack.c.h.b16 %v4500
  %v6090 = vunpack.c.l.b16 %v4501
  %v6091 = vunpack.c.h.b16 %v4501
  %v6092 = vunpack.c.l.b16 %v4502
  %v6093 = vunpack.c.h.b16 %v4502
  %v6094 = vunpack.c.l.b16 %v4503
  %v6095 = vunpack.c.h.b16 %v4503
  %v6096 = vunpack.c.l.b16 %v4504
  %v6097 = vunpack.c.h.b16 %v4504
  %v6098 = vunpack.c.l.b16 %v4505
  %v6099 = vunpack.c.h.b16 %v4505
  %v6100 = vunpack.c.l.b16 %v4506
  %v6101 = vunpack.c.h.b16 %v4506
  %v6102 = vunpack.c.l.b16 %v4507
  %v6103 = vunpack.c.h.b16 %v4507
  %v6104 = vunpack.c.l.b16 %v4508
  %v6105 = vunpack.c.h.b16 %v4508
  %v6106 = vunpack.c.l.b16 %v4509
  %v6107 = vunpack.c.h.b16 %v4509
  %v6108 = vunpack.c.l.b16 %v4510
  %v6109 = vunpack.c.h.b16 %v4510
  %v6110 = vunpack.c.l.b16 %v4511
  %v6111 = vunpack.c.h.b16 %v4511
  %v6112 = vunpack.c.l.b16 %v4512
  %v6113 = vunpack.c.h.b16 %v4512
  %v6114 = vunpack.c.l.b16 %v4513
  %v6115 = vunpack.c.h.b16 %v4513
  %v6116 = vunpack.c.l.b16 %v4514
  %v6117 = vunpack.c.h.b16 %v4514
  %v6118 = vunpack.c.l.b16 %v4515
  %v6119 = vunpack.c.h.b16 %v4515
  %v6120 = vunpack.c.l.b16 %v4516
  %v6121 = vunpack.c.h.b16 %v4516
  %v6122 = vunpack.c.l.b16 %v4517
  %v6123 = vunpack.c.h.b16 %v4517
  %v6124 = vunpack.c.l.b16 %v4518
  %v6125 = vunpack.c.h.b16 %v4518
  %v6126 = vunpack.c.l.b16 %v4519
  %v6127 = vunpack.c.h.b16 %v4519
  %v6128 = vunpack.c.l.b16 %v4520
  %v6129 = vunpack.c.h.b16 %v4520
  %v6130 = vunpack.c.l.b16 %v4521
  %v6131 = vunpack.c.h.b16 %v4521
  %v6132 = vunpack.c.l.b16 %v4522
  %v6133 = vunpack.c.h.b16 %v4522
  %v6134 = vunpack.c.l.b16 %v4523
  %v6135 = vunpack.c.h.b16 %v4523
  %v6136 = vunpack.c.l.b16 %v4524
  %v6137 = vunpack.c.h.b16 %v4524
  %v6138 = vunpack.c.l.b16 %v4525
  %v6139 = vunpack.c.h.b16 %v4525
  %v6140 = vunpack.c.l.b16 %v4526
  %v6141 = vunpack.c.h.b16 %v4526
  %v6142 = vunpack.c.l.b16 %v4527
  %v6143 = vunpack.c.h.b16 %v4527
  %v6144 = vunpack.c.l.b16 %v4528
  %v6145 = vunpack.c.h.b16 %v4528
  %v6146 = vunpack.c.l.b16 %v4529
  %v6147 = vunpack.c.h.b16 %v4529
  %v6148 = vunpack.c.l.b16 %v4530
  %v6149 = vunpack.c.h.b16 %v4530
  %v6150 = vunpack.c.l.b16 %v4531
  %v6151 = vunpack.c.h.b16 %v4531
  %v6152 = vunpack.c.l.b16 %v4532
  %v6153 = vunpack.c.h.b16 %v4532
  %v6154 = vunpack.c.l.b16 %v4533
  %v6155 = vunpack.c.h.b16 %v4533
  %v6156 = vunpack.c.l.b16 %v4534
  %v6157 = vunpack.c.h.b16 %v4534
  %v6158 = vunpack.c.l.b16 %v4535
  %v6159 = vunpack.c.h.b16 %v4535
  %v6160 = vunpack.c.l.b16 %v4536
  %v6161 = vunpack.c.h.b16 %v4536
  %v6162 = vunpack.c.l.b16 %v4537
  %v6163 = vunpack.c.h.b16 %v4537
  %v6164 = vunpack.c.l.b16 %v4538
  %v6165 = vunpack.c.h.b16 %v4538
  %v6166 = vunpack.c.l.b16 %v4539
  %v6167 = vunpack.c.h.b16 %v4539
  %v6168 = vunpack.c.l.b16 %v4540
  %v6169 = vunpack.c.h.b16 %v4540
  %v6170 = vunpack.c.l.b16 %v4541
  %v6171 = vunpack.c.h.b16 %v4541
  %v6172 = vunpack.c.l.b16 %v4542
  %v6173 = vunpack.c.h.b16 %v4542
  %v6174 = vunpack.c.l.b16 %v4543
  %v6175 = vunpack.c.h.b16 %v4543
  %v6176 = vunpack.c.l.b16 %v4544
  %v6177 = vunpack.c.h.b16 %v4544
  %v6178 = vunpack.c.l.b16 %v4545
  %v6179 = vunpack.c.h.b16 %v4545
  %v6180 = vunpack.c.l.b16 %v4546
  %v6181 = vunpack.c.h.b16 %v4546
  %v6182 = vunpack.c.l.b16 %v4547
  %v6183 = vunpack.c.h.b16 %v4547
  %v6184 = vunpack.c.l.b16 %v4548
  %v6185 = vunpack.c.h.b16 %v4548
  %v6186 = vunpack.c.l.b16 %v4549
  %v6187 = vunpack.c.h.b16 %v4549
  %v6188 = vunpack.c.l.b16 %v4550
  %v6189 = vunpack.c.h.b16 %v4550
  %v6190 = vunpack.c.l.b16 %v4551
  %v6191 = vunpack.c.h.b16 %v4551
  %v6192 = vunpack.c.l.b16 %v4552
  %v6193 = vunpack.c.h.b16 %v4552
  %v6194 = vunpack.c.l.b16 %v4553
  %v6195 = vunpack.c.h.b16 %v4553
  %v6196 = vunpack.c.l.b16 %v4554
  %v6197 = vunpack.c.h.b16 %v4554
  %v6198 = vunpack.c.l.b16 %v4555
  %v6199 = vunpack.c.h.b16 %v4555
  %v6200 = vunpack.c.l.b16 %v4556
  %v6201 = vunpack.c.h.b16 %v4556
  %v6202 = vunpack.c.l.b16 %v4557
  %v6203 = vunpack.c.h.b16 %v4557
  %v6204 = vunpack.c.l.b16 %v4558
  %v6205 = vunpack.c.h.b16 %v4558
  %v6206 = vunpack.c.l.b16 %v4559
  %v6207 = vunpack.c.h.b16 %v4559
  %v6208 = vunpack.c.l.b16 %v4560
  %v6209 = vunpack.c.h.b16 %v4560
  %v6210 = vunpack.c.l.b16 %v4561
  %v6211 = vunpack.c.h.b16 %v4561
  %v6212 = vunpack.c.l.b16 %v4562
  %v6213 = vunpack.c.h.b16 %v4562
  %v6214 = vunpack.c.l.b16 %v4563
  %v6215 = vunpack.c.h.b16 %v4563
  %v6216 = vunpack.c.l.b16 %v4564
  %v6217 = vunpack.c.h.b16 %v4564
  %v6218 = vunpack.c.l.b16 %v4565
  %v6219 = vunpack.c.h.b16 %v4565
  %v6220 = vunpack.c.l.b16 %v4566
  %v6221 = vunpack.c.h.b16 %v4566
  %v6222 = vunpack.c.l.b16 %v4567
  %v6223 = vunpack.c.h.b16 %v4567
  %v6224 = vunpack.c.l.b16 %v4568
  %v6225 = vunpack.c.h.b16 %v4568
  %v6226 = vunpack.c.l.b16 %v4569
  %v6227 = vunpack.c.h.b16 %v4569
  %v6228 = vunpack.c.l.b16 %v4570
  %v6229 = vunpack.c.h.b16 %v4570
  %v6230 = vunpack.c.l.b16 %v4571
  %v6231 = vunpack.c.h.b16 %v4571
  %v6232 = vunpack.c.l.b16 %v4572
  %v6233 = vunpack.c.h.b16 %v4572
  %v6234 = vunpack.c.l.b16 %v4573
  %v6235 = vunpack.c.h.b16 %v4573
  %v6236 = vunpack.c.l.b16 %v4574
  %v6237 = vunpack.c.h.b16 %v4574
  %v6238 = vunpack.c.l.b16 %v4575
  %v6239 = vunpack.c.h.b16 %v4575
  %v6240 = vunpack.c.l.b16 %v4576
  %v6241 = vunpack.c.h.b16 %v4576
  %v6242 = vunpack.c.l.b16 %v4577
  %v6243 = vunpack.c.h.b16 %v4577
  %v6244 = vunpack.c.l.b16 %v4578
  %v6245 = vunpack.c.h.b16 %v4578
  %v6246 = vunpack.c.l.b16 %v4579
  %v6247 = vunpack.c.h.b16 %v4579
  %v6248 = vunpack.c.l.b16 %v4580
  %v6249 = vunpack.c.h.b16 %v4580
  %v6250 = vunpack.c.l.b16 %v4581
  %v6251 = vunpack.c.h.b16 %v4581
  %v6252 = vunpack.c.l.b16 %v4582
  %v6253 = vunpack.c.h.b16 %v4582
  %v6254 = vunpack.c.l.b16 %v4583
  %v6255 = vunpack.c.h.b16 %v4583
  %v6256 = vunpack.c.l.b16 %v4584
  %v6257 = vunpack.c.h.b16 %v4584
  %v6258 = vunpack.c.l.b16 %v4585
  %v6259 = vunpack.c.h.b16 %v4585
  %v6260 = vunpack.c.l.b16 %v4586
  %v6261 = vunpack.c.h.b16 %v4586
  %v6262 = vunpack.c.l.b16 %v4587
  %v6263 = vunpack.c.h.b16 %v4587
  %v6264 = vunpack.c.l.b16 %v4588
  %v6265 = vunpack.c.h.b16 %v4588
  %v6266 = vunpack.c.l.b16 %v4589
  %v6267 = vunpack.c.h.b16 %v4589
  %v6268 = vunpack.c.l.b16 %v4590
  %v6269 = vunpack.c.h.b16 %v4590
  %v6270 = vunpack.c.l.b16 %v4591
  %v6271 = vunpack.c.h.b16 %v4591
  %v6272 = vunpack.c.l.b16 %v4592
  %v6273 = vunpack.c.h.b16 %v4592
  %v6274 = vunpack.c.l.b16 %v4593
  %v6275 = vunpack.c.h.b16 %v4593
  %v6276 = vunpack.c.l.b16 %v4594
  %v6277 = vunpack.c.h.b16 %v4594
  %v6278 = vunpack.c.l.b16 %v4595
  %v6279 = vunpack.c.h.b16 %v4595
  %v6280 = vunpack.c.l.b16 %v4596
  %v6281 = vunpack.c.h.b16 %v4596
  %v6282 = vunpack.c.l.b16 %v4597
  %v6283 = vunpack.c.h.b16 %v4597
  %v6284 = vunpack.c.l.b16 %v4598
  %v6285 = vunpack.c.h.b16 %v4598
  %v6286 = vunpack.c.l.b16 %v4599
  %v6287 = vunpack.c.h.b16 %v4599
  %v6288 = vunpack.c.l.b16 %v4600
  %v6289 = vunpack.c.h.b16 %v4600
  %v6290 = vunpack.c.l.b16 %v4601
  %v6291 = vunpack.c.h.b16 %v4601
  %v6292 = vunpack.c.l.b16 %v4602
  %v6293 = vunpack.c.h.b16 %v4602
  %v6294 = vunpack.c.l.b16 %v4603
  %v6295 = vunpack.c.h.b16 %v4603
  %v6296 = vunpack.c.l.b16 %v4604
  %v6297 = vunpack.c.h.b16 %v4604
  %v6298 = vunpack.c.l.b16 %v4605
  %v6299 = vunpack.c.h.b16 %v4605
  %v6300 = vunpack.c.l.b16 %v4606
  %v6301 = vunpack.c.h.b16 %v4606
  %v6302 = vunpack.c.l.b16 %v4607
  %v6303 = vunpack.c.h.b16 %v4607
  %v6304 = vunpack.c.l.b16 %v4608
  %v6305 = vunpack.c.h.b16 %v4608
  %v6306 = vunpack.c.l.b16 %v4609
  %v6307 = vunpack.c.h.b16 %v4609
  %v6308 = vunpack.c.l.b16 %v4610
  %v6309 = vunpack.c.h.b16 %v4610
  %v6310 = vunpack.c.l.b16 %v4611
  %v6311 = vunpack.c.h.b16 %v4611
  %v6312 = vunpack.c.l.b16 %v4612
  %v6313 = vunpack.c.h.b16 %v4612
  %v6314 = vunpack.c.l.b16 %v4613
  %v6315 = vunpack.c.h.b16 %v4613
  %v6316 = vunpack.c.l.b16 %v4614
  %v6317 = vunpack.c.h.b16 %v4614
  %v6318 = vunpack.c.l.b16 %v4615
  %v6319 = vunpack.c.h.b16 %v4615
  %v6320 = vunpack.c.l.b16 %v4616
  %v6321 = vunpack.c.h.b16 %v4616
  %v6322 = vunpack.c.l.b16 %v4617
  %v6323 = vunpack.c.h.b16 %v4617
  %v6324 = vunpack.c.l.b16 %v4618
  %v6325 = vunpack.c.h.b16 %v4618
  %v6326 = vunpack.c.l.b16 %v4619
  %v6327 = vunpack.c.h.b16 %v4619
  %v6328 = vunpack.c.l.b16 %v4620
  %v6329 = vunpack.c.h.b16 %v4620
  %v6330 = vunpack.c.l.b16 %v4621
  %v6331 = vunpack.c.h.b16 %v4621
  %v6332 = vunpack.c.l.b16 %v4622
  %v6333 = vunpack.c.h.b16 %v4622
  %v6334 = vunpack.c.l.b16 %v4623
  %v6335 = vunpack.c.h.b16 %v4623
  %v6336 = vunpack.c.l.b16 %v4624
  %v6337 = vunpack.c.h.b16 %v4624
  %v6338 = vunpack.c.l.b16 %v4625
  %v6339 = vunpack.c.h.b16 %v4625
  %v6340 = vunpack.c.l.b16 %v4626
  %v6341 = vunpack.c.h.b16 %v4626
  %v6342 = vunpack.c.l.b16 %v4627
  %v6343 = vunpack.c.h.b16 %v4627
  %v6344 = vunpack.c.l.b16 %v4628
  %v6345 = vunpack.c.h.b16 %v4628
  %v6346 = vunpack.c.l.b16 %v4629
  %v6347 = vunpack.c.h.b16 %v4629
  %v6348 = vunpack.c.l.b16 %v4630
  %v6349 = vunpack.c.h.b16 %v4630
  %v6350 = vunpack.c.l.b16 %v4631
  %v6351 = vunpack.c.h.b16 %v4631
  %v6352 = vunpack.c.l.b16 %v4632
  %v6353 = vunpack.c.h.b16 %v4632
  %v6354 = vunpack.c.l.b16 %v4633
  %v6355 = vunpack.c.h.b16 %v4633
  %v6356 = vunpack.c.l.b16 %v4634
  %v6357 = vunpack.c.h.b16 %v4634
  %v6358 = vunpack.c.l.b16 %v4635
  %v6359 = vunpack.c.h.b16 %v4635
  %v6360 = vunpack.c.l.b16 %v4636
  %v6361 = vunpack.c.h.b16 %v4636
  %v6362 = vunpack.c.l.b16 %v4637
  %v6363 = vunpack.c.h.b16 %v4637
  %v6364 = vunpack.c.l.b16 %v4638
  %v6365 = vunpack.c.h.b16 %v4638
  %v6366 = vunpack.c.l.b16 %v4639
  %v6367 = vunpack.c.h.b16 %v4639
  %v6368 = vunpack.c.l.b16 %v4640
  %v6369 = vunpack.c.h.b16 %v4640
  %v6370 = vunpack.c.l.b16 %v4641
  %v6371 = vunpack.c.h.b16 %v4641
  %v6372 = vunpack.c.l.b16 %v4642
  %v6373 = vunpack.c.h.b16 %v4642
  %v6374 = vunpack.c.l.b16 %v4643
  %v6375 = vunpack.c.h.b16 %v4643
  %v6376 = vunpack.c.l.b16 %v4644
  %v6377 = vunpack.c.h.b16 %v4644
  %v6378 = vunpack.c.l.b16 %v4645
  %v6379 = vunpack.c.h.b16 %v4645
  %v6380 = vunpack.c.l.b16 %v4646
  %v6381 = vunpack.c.h.b16 %v4646
  %v6382 = vunpack.c.l.b16 %v4647
  %v6383 = vunpack.c.h.b16 %v4647
  %v6384 = vunpack.c.l.b16 %v4648
  %v6385 = vunpack.c.h.b16 %v4648
  %v6386 = vunpack.c.l.b16 %v4649
  %v6387 = vunpack.c.h.b16 %v4649
  %v6388 = vunpack.c.l.b16 %v4650
  %v6389 = vunpack.c.h.b16 %v4650
  %v6390 = vunpack.c.l.b16 %v4651
  %v6391 = vunpack.c.h.b16 %v4651
  %v6392 = vunpack.c.l.b16 %v4652
  %v6393 = vunpack.c.h.b16 %v4652
  %v6394 = vunpack.c.l.b16 %v4653
  %v6395 = vunpack.c.h.b16 %v4653
  %v6396 = vunpack.c.l.b16 %v4654
  %v6397 = vunpack.c.h.b16 %v4654
  %v6398 = vunpack.c.l.b16 %v4655
  %v6399 = vunpack.c.h.b16 %v4655
  %v6400 = vunpack.c.l.b16 %v4656
  %v6401 = vunpack.c.h.b16 %v4656
  %v6402 = vunpack.c.l.b16 %v4657
  %v6403 = vunpack.c.h.b16 %v4657
  %v6404 = vunpack.c.l.b16 %v4658
  %v6405 = vunpack.c.h.b16 %v4658
  %v6406 = vunpack.c.l.b16 %v4659
  %v6407 = vunpack.c.h.b16 %v4659
  %v6408 = vunpack.c.l.b16 %v4660
  %v6409 = vunpack.c.h.b16 %v4660
  %v6410 = vunpack.c.l.b16 %v4661
  %v6411 = vunpack.c.h.b16 %v4661
  %v6412 = vunpack.c.l.b16 %v4662
  %v6413 = vunpack.c.h.b16 %v4662
  %v6414 = vunpack.c.l.b16 %v4663
  %v6415 = vunpack.c.h.b16 %v4663
  %v6416 = vunpack.c.l.b16 %v4664
  %v6417 = vunpack.c.h.b16 %v4664
  %v6418 = vunpack.c.l.b16 %v4665
  %v6419 = vunpack.c.h.b16 %v4665
  %v6420 = vunpack.c.l.b16 %v4666
  %v6421 = vunpack.c.h.b16 %v4666
  %v6422 = vunpack.c.l.b16 %v4667
  %v6423 = vunpack.c.h.b16 %v4667
  %v6424 = vunpack.c.l.b16 %v4668
  %v6425 = vunpack.c.h.b16 %v4668
  %v6426 = vunpack.c.l.b16 %v4669
  %v6427 = vunpack.c.h.b16 %v4669
  %v6428 = vunpack.c.l.b16 %v4670
  %v6429 = vunpack.c.h.b16 %v4670
  %v6430 = vunpack.c.l.b16 %v4671
  %v6431 = vunpack.c.h.b16 %v4671
  %v6432 = vunpack.c.l.b16 %v4672
  %v6433 = vunpack.c.h.b16 %v4672
  %v6434 = vunpack.c.l.b16 %v4673
  %v6435 = vunpack.c.h.b16 %v4673
  %v6436 = vunpack.c.l.b16 %v4674
  %v6437 = vunpack.c.h.b16 %v4674
  %v6438 = vunpack.c.l.b16 %v4675
  %v6439 = vunpack.c.h.b16 %v4675
  %v6440 = vunpack.c.l.b16 %v4676
  %v6441 = vunpack.c.h.b16 %v4676
  %v6442 = vunpack.c.l.b16 %v4677
  %v6443 = vunpack.c.h.b16 %v4677
  %v6444 = vunpack.c.l.b16 %v4678
  %v6445 = vunpack.c.h.b16 %v4678
  %v6446 = vunpack.c.l.b16 %v4679
  %v6447 = vunpack.c.h.b16 %v4679
  %v6448 = vunpack.c.l.b16 %v4680
  %v6449 = vunpack.c.h.b16 %v4680
  %v6450 = vunpack.c.l.b16 %v4681
  %v6451 = vunpack.c.h.b16 %v4681
  %v6452 = vunpack.c.l.b16 %v4682
  %v6453 = vunpack.c.h.b16 %v4682
  %v6454 = vunpack.c.l.b16 %v4683
  %v6455 = vunpack.c.h.b16 %v4683
  %v6456 = vunpack.c.l.b16 %v4684
  %v6457 = vunpack.c.h.b16 %v4684
  %v6458 = vunpack.c.l.b16 %v4685
  %v6459 = vunpack.c.h.b16 %v4685
  %v6460 = vunpack.c.l.b16 %v4686
  %v6461 = vunpack.c.h.b16 %v4686
  %v6462 = vunpack.c.l.b16 %v4687
  %v6463 = vunpack.c.h.b16 %v4687
  %v6464 = vunpack.c.l.b16 %v4688
  %v6465 = vunpack.c.h.b16 %v4688
  %v6466 = vunpack.c.l.b16 %v4689
  %v6467 = vunpack.c.h.b16 %v4689
  %v6468 = vunpack.c.l.b16 %v4690
  %v6469 = vunpack.c.h.b16 %v4690
  %v6470 = vunpack.c.l.b16 %v4691
  %v6471 = vunpack.c.h.b16 %v4691
  %v6472 = vunpack.c.l.b16 %v4692
  %v6473 = vunpack.c.h.b16 %v4692
  %v6474 = vunpack.c.l.b16 %v4693
  %v6475 = vunpack.c.h.b16 %v4693
  %v6476 = vunpack.c.l.b16 %v4694
  %v6477 = vunpack.c.h.b16 %v4694
  %v6478 = vunpack.c.l.b16 %v4695
  %v6479 = vunpack.c.h.b16 %v4695
  %v6480 = vunpack.c.l.b16 %v4696
  %v6481 = vunpack.c.h.b16 %v4696
  %v6482 = vunpack.c.l.b16 %v4697
  %v6483 = vunpack.c.h.b16 %v4697
  %v6484 = vunpack.c.l.b16 %v4698
  %v6485 = vunpack.c.h.b16 %v4698
  %v6486 = vunpack.c.l.b16 %v4699
  %v6487 = vunpack.c.h.b16 %v4699
  %v6488 = vunpack.c.l.b16 %v4700
  %v6489 = vunpack.c.h.b16 %v4700
  %v6490 = vunpack.c.l.b16 %v4701
  %v6491 = vunpack.c.h.b16 %v4701
  %v6492 = vunpack.c.l.b16 %v4702
  %v6493 = vunpack.c.h.b16 %v4702
  %v6494 = vunpack.c.l.b16 %v4703
  %v6495 = vunpack.c.h.b16 %v4703
  %v6496 = vunpack.c.l.b16 %v4704
  %v6497 = vunpack.c.h.b16 %v4704
  %v6498 = vunpack.c.l.b16 %v4705
  %v6499 = vunpack.c.h.b16 %v4705
  %v6500 = vunpack.c.l.b16 %v4706
  %v6501 = vunpack.c.h.b16 %v4706
  %v6502 = vunpack.c.l.b16 %v4707
  %v6503 = vunpack.c.h.b16 %v4707
  %v6504 = vunpack.c.l.b16 %v4708
  %v6505 = vunpack.c.h.b16 %v4708
  %v6506 = vunpack.c.l.b16 %v4709
  %v6507 = vunpack.c.h.b16 %v4709
  %v6508 = vunpack.c.l.b16 %v4710
  %v6509 = vunpack.c.h.b16 %v4710
  %v6510 = vunpack.c.l.b16 %v4711
  %v6511 = vunpack.c.h.b16 %v4711
  %v6512 = vunpack.c.l.b16 %v4712
  %v6513 = vunpack.c.h.b16 %v4712
  %v6514 = vunpack.c.l.b16 %v4713
  %v6515 = vunpack.c.h.b16 %v4713
  %v6516 = vunpack.c.l.b16 %v4714
  %v6517 = vunpack.c.h.b16 %v4714
  %v6518 = vunpack.c.l.b16 %v4715
  %v6519 = vunpack.c.h.b16 %v4715
  %v6520 = vunpack.c.l.b16 %v4716
  %v6521 = vunpack.c.h.b16 %v4716
  %v6522 = vunpack.c.l.b16 %v4717
  %v6523 = vunpack.c.h.b16 %v4717
  %v6524 = vunpack.c.l.b16 %v4718
  %v6525 = vunpack.c.h.b16 %v4718
  %v6526 = vunpack.c.l.b16 %v4719
  %v6527 = vunpack.c.h.b16 %v4719
  %v6528 = vunpack.c.l.b16 %v4720
  %v6529 = vunpack.c.h.b16 %v4720
  %v6530 = vunpack.c.l.b16 %v4721
  %v6531 = vunpack.c.h.b16 %v4721
  %v6532 = vunpack.c.l.b16 %v4722
  %v6533 = vunpack.c.h.b16 %v4722
  %v6534 = vunpack.c.l.b16 %v4723
  %v6535 = vunpack.c.h.b16 %v4723
  %v6536 = vunpack.c.l.b16 %v4724
  %v6537 = vunpack.c.h.b16 %v4724
  %v6538 = vunpack.c.l.b16 %v4725
  %v6539 = vunpack.c.h.b16 %v4725
  %v6540 = vunpack.c.l.b16 %v4726
  %v6541 = vunpack.c.h.b16 %v4726
  %v6542 = vunpack.c.l.b16 %v4727
  %v6543 = vunpack.c.h.b16 %v4727
  %v6544 = vunpack.c.l.b16 %v4728
  %v6545 = vunpack.c.h.b16 %v4728
  %v6546 = vunpack.c.l.b16 %v4729
  %v6547 = vunpack.c.h.b16 %v4729
  %v6548 = vunpack.c.l.b16 %v4730
  %v6549 = vunpack.c.h.b16 %v4730
  %v6550 = vunpack.c.l.b16 %v4731
  %v6551 = vunpack.c.h.b16 %v4731
  %v6552 = vunpack.c.l.b16 %v4732
  %v6553 = vunpack.c.h.b16 %v4732
  %v6554 = vunpack.c.l.b16 %v4733
  %v6555 = vunpack.c.h.b16 %v4733
  %v6556 = vunpack.c.l.b16 %v4734
  %v6557 = vunpack.c.h.b16 %v4734
  %v6558 = vunpack.c.l.b16 %v4735
  %v6559 = vunpack.c.h.b16 %v4735
  %v6560 = vunpack.c.l.b16 %v4736
  %v6561 = vunpack.c.h.b16 %v4736
  %v6562 = vunpack.c.l.b16 %v4737
  %v6563 = vunpack.c.h.b16 %v4737
  %v6564 = vunpack.c.l.b16 %v4738
  %v6565 = vunpack.c.h.b16 %v4738
  %v6566 = vunpack.c.l.b16 %v4739
  %v6567 = vunpack.c.h.b16 %v4739
  %v6568 = vunpack.c.l.b16 %v4740
  %v6569 = vunpack.c.h.b16 %v4740
  %v6570 = vunpack.c.l.b16 %v4741
  %v6571 = vunpack.c.h.b16 %v4741
  %v6572 = vunpack.c.l.b16 %v4742
  %v6573 = vunpack.c.h.b16 %v4742
  %v6574 = vunpack.c.l.b16 %v4743
  %v6575 = vunpack.c.h.b16 %v4743
  %v6576 = vunpack.c.l.b16 %v4744
  %v6577 = vunpack.c.h.b16 %v4744
  %v6578 = vunpack.c.l.b16 %v4745
  %v6579 = vunpack.c.h.b16 %v4745
  %v6580 = vunpack.c.l.b16 %v4746
  %v6581 = vunpack.c.h.b16 %v4746
  %v6582 = vunpack.c.l.b16 %v4747
  %v6583 = vunpack.c.h.b16 %v4747
  %v6584 = vunpack.c.l.b16 %v4748
  %v6585 = vunpack.c.h.b16 %v4748
  %v6586 = vunpack.c.l.b16 %v4749
  %v6587 = vunpack.c.h.b16 %v4749
  %v6588 = vunpack.c.l.b16 %v4750
  %v6589 = vunpack.c.h.b16 %v4750
  %v6590 = vunpack.c.l.b16 %v4751
  %v6591 = vunpack.c.h.b16 %v4751
  %v6592 = vunpack.c.l.b16 %v4752
  %v6593 = vunpack.c.h.b16 %v4752
  %v6594 = vunpack.c.l.b16 %v4753
  %v6595 = vunpack.c.h.b16 %v4753
  %v6596 = vunpack.c.l.b16 %v4754
  %v6597 = vunpack.c.h.b16 %v4754
  %v6598 = vunpack.c.l.b16 %v4755
  %v6599 = vunpack.c.h.b16 %v4755
  %v6600 = vunpack.c.l.b16 %v4756
  %v6601 = vunpack.c.h.b16 %v4756
  %v6602 = vunpack.c.l.b16 %v4757
  %v6603 = vunpack.c.h.b16 %v4757
  %v6604 = vunpack.c.l.b16 %v4758
  %v6605 = vunpack.c.h.b16 %v4758
  %v6606 = vunpack.c.l.b16 %v4759
  %v6607 = vunpack.c.h.b16 %v4759
  %v6608 = vunpack.c.l.b16 %v4760
  %v6609 = vunpack.c.h.b16 %v4760
  %v6610 = vunpack.c.l.b16 %v4761
  %v6611 = vunpack.c.h.b16 %v4761
  %v6612 = vunpack.c.l.b16 %v4762
  %v6613 = vunpack.c.h.b16 %v4762
  %v6614 = vunpack.c.l.b16 %v4763
  %v6615 = vunpack.c.h.b16 %v4763
  %v6616 = vunpack.c.l.b16 %v4764
  %v6617 = vunpack.c.h.b16 %v4764
  %v6618 = vunpack.c.l.b16 %v4765
  %v6619 = vunpack.c.h.b16 %v4765
  %v6620 = vunpack.c.l.b16 %v4766
  %v6621 = vunpack.c.h.b16 %v4766
  %v6622 = vunpack.c.l.b16 %v4767
  %v6623 = vunpack.c.h.b16 %v4767
  %v6624 = vunpack.c.l.b16 %v4768
  %v6625 = vunpack.c.h.b16 %v4768
  %v6626 = vunpack.c.l.b16 %v4769
  %v6627 = vunpack.c.h.b16 %v4769
  %v6628 = vunpack.c.l.b16 %v4770
  %v6629 = vunpack.c.h.b16 %v4770
  %v6630 = vunpack.c.l.b16 %v4771
  %v6631 = vunpack.c.h.b16 %v4771
  %v6632 = vunpack.c.l.b16 %v4772
  %v6633 = vunpack.c.h.b16 %v4772
  %v6634 = vunpack.c.l.b16 %v4773
  %v6635 = vunpack.c.h.b16 %v4773
  %v6636 = vunpack.c.l.b16 %v4774
  %v6637 = vunpack.c.h.b16 %v4774
  %v6638 = vunpack.c.l.b16 %v4775
  %v6639 = vunpack.c.h.b16 %v4775
  %v6640 = vunpack.c.l.b16 %v4776
  %v6641 = vunpack.c.h.b16 %v4776
  %v6642 = vunpack.c.l.b16 %v4777
  %v6643 = vunpack.c.h.b16 %v4777
  %v6644 = vunpack.c.l.b16 %v4778
  %v6645 = vunpack.c.h.b16 %v4778
  %v6646 = vunpack.c.l.b16 %v4779
  %v6647 = vunpack.c.h.b16 %v4779
  %v6648 = vunpack.c.l.b16 %v4780
  %v6649 = vunpack.c.h.b16 %v4780
  %v6650 = vunpack.c.l.b16 %v4781
  %v6651 = vunpack.c.h.b16 %v4781
  %v6652 = vunpack.c.l.b16 %v4782
  %v6653 = vunpack.c.h.b16 %v4782
  %v6654 = vunpack.c.l.b16 %v4783
  %v6655 = vunpack.c.h.b16 %v4783
  %v6656 = vunpack.c.l.b16 %v4784
  %v6657 = vunpack.c.h.b16 %v4784
  %v6658 = vunpack.c.l.b16 %v4785
  %v6659 = vunpack.c.h.b16 %v4785
  %v6660 = vunpack.c.l.b16 %v4786
  %v6661 = vunpack.c.h.b16 %v4786
  %v6662 = vunpack.c.l.b16 %v4787
  %v6663 = vunpack.c.h.b16 %v4787
  %v6664 = vunpack.c.l.b16 %v4788
  %v6665 = vunpack.c.h.b16 %v4788
  %v6666 = vunpack.c.l.b16 %v4789
  %v6667 = vunpack.c.h.b16 %v4789
  %v6668 = vunpack.c.l.b16 %v4790
  %v6669 = vunpack.c.h.b16 %v4790
  %v6670 = vunpack.c.l.b16 %v4791
  %v6671 = vunpack.c.h.b16 %v4791
  %v6672 = vunpack.c.l.b16 %v4792
  %v6673 = vunpack.c.h.b16 %v4792
  %v6674 = vunpack.c.l.b16 %v4793
  %v6675 = vunpack.c.h.b16 %v4793
  %v6676 = vunpack.c.l.b16 %v4794
  %v6677 = vunpack.c.h.b16 %v4794
  %v6678 = vunpack.c.l.b16 %v4795
  %v6679 = vunpack.c.h.b16 %v4795
  %v6680 = vunpack.c.l.b16 %v4796
  %v6681 = vunpack.c.h.b16 %v4796
  %v6682 = vunpack.c.l.b16 %v4797
  %v6683 = vunpack.c.h.b16 %v4797
  %v6684 = vunpack.c.l.b16 %v4798
  %v6685 = vunpack.c.h.b16 %v4798
  %v6686 = vunpack.c.l.b16 %v4799
  %v6687 = vunpack.c.h.b16 %v4799
  %v6688 = vunpack.c.l.b16 %v4800
  %v6689 = vunpack.c.h.b16 %v4800
  %v6690 = vunpack.c.l.b16 %v4801
  %v6691 = vunpack.c.h.b16 %v4801
  %v6692 = vunpack.c.l.b16 %v4802
  %v6693 = vunpack.c.h.b16 %v4802
  %v6694 = vunpack.c.l.b16 %v4803
  %v6695 = vunpack.c.h.b16 %v4803
  %v6696 = vunpack.c.l.b16 %v4804
  %v6697 = vunpack.c.h.b16 %v4804
  %v6698 = vunpack.c.l.b16 %v4805
  %v6699 = vunpack.c.h.b16 %v4805
  %v6700 = vunpack.c.l.b16 %v4806
  %v6701 = vunpack.c.h.b16 %v4806
  %v6702 = vunpack.c.l.b16 %v4807
  %v6703 = vunpack.c.h.b16 %v4807
  %v6704 = vunpack.c.l.b16 %v4808
  %v6705 = vunpack.c.h.b16 %v4808
  %v6706 = vunpack.c.l.b16 %v4809
  %v6707 = vunpack.c.h.b16 %v4809
  %v6708 = vunpack.c.l.b16 %v4810
  %v6709 = vunpack.c.h.b16 %v4810
  %v6710 = vunpack.c.l.b16 %v4811
  %v6711 = vunpack.c.h.b16 %v4811
  %v6712 = vunpack.c.l.b16 %v4812
  %v6713 = vunpack.c.h.b16 %v4812
  %v6714 = vunpack.c.l.b16 %v4813
  %v6715 = vunpack.c.h.b16 %v4813
  %v6716 = vunpack.c.l.b16 %v4814
  %v6717 = vunpack.c.h.b16 %v4814
  %v6718 = vunpack.c.l.b16 %v4815
  %v6719 = vunpack.c.h.b16 %v4815
  %v6720 = vunpack.c.l.b16 %v4816
  %v6721 = vunpack.c.h.b16 %v4816
  %v6722 = vunpack.c.l.b16 %v4817
  %v6723 = vunpack.c.h.b16 %v4817
  %v6724 = vunpack.c.l.b16 %v4818
  %v6725 = vunpack.c.h.b16 %v4818
  %v6726 = vunpack.c.l.b16 %v4819
  %v6727 = vunpack.c.h.b16 %v4819
  %v6728 = vunpack.c.l.b16 %v4820
  %v6729 = vunpack.c.h.b16 %v4820
  %v6730 = vunpack.c.l.b16 %v4821
  %v6731 = vunpack.c.h.b16 %v4821
  %v6732 = vunpack.c.l.b16 %v4822
  %v6733 = vunpack.c.h.b16 %v4822
  %v6734 = vunpack.c.l.b16 %v4823
  %v6735 = vunpack.c.h.b16 %v4823
  %v6736 = vunpack.c.l.b16 %v4824
  %v6737 = vunpack.c.h.b16 %v4824
  %v6738 = vunpack.c.l.b16 %v4825
  %v6739 = vunpack.c.h.b16 %v4825
  %v6740 = vunpack.c.l.b16 %v4826
  %v6741 = vunpack.c.h.b16 %v4826
  %v6742 = vunpack.c.l.b16 %v4827
  %v6743 = vunpack.c.h.b16 %v4827
  %v6744 = vunpack.c.l.b16 %v4828
  %v6745 = vunpack.c.h.b16 %v4828
  %v6746 = vunpack.c.l.b16 %v4829
  %v6747 = vunpack.c.h.b16 %v4829
  %v6748 = vunpack.c.l.b16 %v4830
  %v6749 = vunpack.c.h.b16 %v4830
  %v6750 = vunpack.c.l.b16 %v4831
  %v6751 = vunpack.c.h.b16 %v4831
  %v6752 = vunpack.c.l.b16 %v4832
  %v6753 = vunpack.c.h.b16 %v4832
  %v6754 = vunpack.c.l.b16 %v4833
  %v6755 = vunpack.c.h.b16 %v4833
  %v6756 = vunpack.c.l.b16 %v4834
  %v6757 = vunpack.c.h.b16 %v4834
  %v6758 = vunpack.c.l.b16 %v4835
  %v6759 = vunpack.c.h.b16 %v4835
  %v6760 = vunpack.c.l.b16 %v4836
  %v6761 = vunpack.c.h.b16 %v4836
  %v6762 = vunpack.c.l.b16 %v4837
  %v6763 = vunpack.c.h.b16 %v4837
  %v6764 = vunpack.c.l.b16 %v4838
  %v6765 = vunpack.c.h.b16 %v4838
  %v6766 = vunpack.c.l.b16 %v4839
  %v6767 = vunpack.c.h.b16 %v4839
  %v6768 = vunpack.c.l.b16 %v4840
  %v6769 = vunpack.c.h.b16 %v4840
  %v6770 = vunpack.c.l.b16 %v4841
  %v6771 = vunpack.c.h.b16 %v4841
  %v6772 = vunpack.c.l.b16 %v4842
  %v6773 = vunpack.c.h.b16 %v4842
  %v6774 = vunpack.c.l.b16 %v4843
  %v6775 = vunpack.c.h.b16 %v4843
  %v6776 = vunpack.c.l.b16 %v4844
  %v6777 = vunpack.c.h.b16 %v4844
  %v6778 = vunpack.c.l.b16 %v4845
  %v6779 = vunpack.c.h.b16 %v4845
  %v6780 = vunpack.c.l.b16 %v4846
  %v6781 = vunpack.c.h.b16 %v4846
  %v6782 = vunpack.c.l.b16 %v4847
  %v6783 = vunpack.c.h.b16 %v4847
  %v6784 = vunpack.c.l.b16 %v4848
  %v6785 = vunpack.c.h.b16 %v4848
  %v6786 = vunpack.c.l.b16 %v4849
  %v6787 = vunpack.c.h.b16 %v4849
  %v6788 = vunpack.c.l.b16 %v4850
  %v6789 = vunpack.c.h.b16 %v4850
  %v6790 = vunpack.c.l.b16 %v4851
  %v6791 = vunpack.c.h.b16 %v4851
  %v6792 = vunpack.c.l.b16 %v4852
  %v6793 = vunpack.c.h.b16 %v4852
  %v6794 = vunpack.c.l.b16 %v4853
  %v6795 = vunpack.c.h.b16 %v4853
  %v6796 = vunpack.c.l.b16 %v4854
  %v6797 = vunpack.c.h.b16 %v4854
  %v6798 = vunpack.c.l.b16 %v4855
  %v6799 = vunpack.c.h.b16 %v4855
  %v6800 = vunpack.c.l.b16 %v4856
  %v6801 = vunpack.c.h.b16 %v4856
  %v6802 = vunpack.c.l.b16 %v4857
  %v6803 = vunpack.c.h.b16 %v4857
  %v6804 = vunpack.c.l.b16 %v4858
  %v6805 = vunpack.c.h.b16 %v4858
  %v6806 = vunpack.c.l.b16 %v4859
  %v6807 = vunpack.c.h.b16 %v4859
  %v6808 = vunpack.c.l.b16 %v4860
  %v6809 = vunpack.c.h.b16 %v4860
  %v6810 = vunpack.c.l.b16 %v4861
  %v6811 = vunpack.c.h.b16 %v4861
  %v6812 = vunpack.c.l.b16 %v4862
  %v6813 = vunpack.c.h.b16 %v4862
  %v6814 = vunpack.c.l.b16 %v4863
  %v6815 = vunpack.c.h.b16 %v4863
  %v6816 = vunpack.c.l.b16 %v4864
  %v6817 = vunpack.c.h.b16 %v4864
  %v6818 = vunpack.c.l.b16 %v4865
  %v6819 = vunpack.c.h.b16 %v4865
  %v6820 = vunpack.c.l.b16 %v4866
  %v6821 = vunpack.c.h.b16 %v4866
  %v6822 = vunpack.c.l.b16 %v4867
  %v6823 = vunpack.c.h.b16 %v4867
  %v6824 = vunpack.c.l.b16 %v4868
  %v6825 = vunpack.c.h.b16 %v4868
  %v6826 = vunpack.c.l.b16 %v4869
  %v6827 = vunpack.c.h.b16 %v4869
  %v6828 = vunpack.c.l.b16 %v4870
  %v6829 = vunpack.c.h.b16 %v4870
  %v6830 = vunpack.c.l.b16 %v4871
  %v6831 = vunpack.c.h.b16 %v4871
  %v6832 = vunpack.c.l.b16 %v4872
  %v6833 = vunpack.c.h.b16 %v4872
  %v6834 = vunpack.c.l.b16 %v4873
  %v6835 = vunpack.c.h.b16 %v4873
  %v6836 = vunpack.c.l.b16 %v4874
  %v6837 = vunpack.c.h.b16 %v4874
  %v6838 = vunpack.c.l.b16 %v4875
  %v6839 = vunpack.c.h.b16 %v4875
  %v6840 = vunpack.c.l.b16 %v4876
  %v6841 = vunpack.c.h.b16 %v4876
  %v6842 = vunpack.c.l.b16 %v4877
  %v6843 = vunpack.c.h.b16 %v4877
  %v6844 = vunpack.c.l.b16 %v4878
  %v6845 = vunpack.c.h.b16 %v4878
  %v6846 = vunpack.c.l.b16 %v4879
  %v6847 = vunpack.c.h.b16 %v4879
  %v6848 = vunpack.c.l.b16 %v4880
  %v6849 = vunpack.c.h.b16 %v4880
  %v6850 = vunpack.c.l.b16 %v4881
  %v6851 = vunpack.c.h.b16 %v4881
  %v6852 = vunpack.c.l.b16 %v4882
  %v6853 = vunpack.c.h.b16 %v4882
  %v6854 = vunpack.c.l.b16 %v4883
  %v6855 = vunpack.c.h.b16 %v4883
  %v6856 = vunpack.c.l.b16 %v4884
  %v6857 = vunpack.c.h.b16 %v4884
  %v6858 = vunpack.c.l.b16 %v4885
  %v6859 = vunpack.c.h.b16 %v4885
  %v6860 = vunpack.c.l.b16 %v4886
  %v6861 = vunpack.c.h.b16 %v4886
  %v6862 = vunpack.c.l.b16 %v4887
  %v6863 = vunpack.c.h.b16 %v4887
  %v6864 = vunpack.c.l.b16 %v4888
  %v6865 = vunpack.c.h.b16 %v4888
  %v6866 = vunpack.c.l.b16 %v4889
  %v6867 = vunpack.c.h.b16 %v4889
  %v6868 = vunpack.c.l.b16 %v4890
  %v6869 = vunpack.c.h.b16 %v4890
  %v6870 = vunpack.c.l.b16 %v4891
  %v6871 = vunpack.c.h.b16 %v4891
  %v6872 = vunpack.c.l.b16 %v4892
  %v6873 = vunpack.c.h.b16 %v4892
  %v6874 = vunpack.c.l.b16 %v4893
  %v6875 = vunpack.c.h.b16 %v4893
  %v6876 = vunpack.c.l.b16 %v4894
  %v6877 = vunpack.c.h.b16 %v4894
  %v6878 = vunpack.c.l.b16 %v4895
  %v6879 = vunpack.c.h.b16 %v4895
  %v6880 = vunpack.c.l.b16 %v4896
  %v6881 = vunpack.c.h.b16 %v4896
  %v6882 = vunpack.c.l.b16 %v4897
  %v6883 = vunpack.c.h.b16 %v4897
  %v6884 = vunpack.c.l.b16 %v4898
  %v6885 = vunpack.c.h.b16 %v4898
  %v6886 = vunpack.c.l.b16 %v4899
  %v6887 = vunpack.c.h.b16 %v4899
  %v6888 = vunpack.c.l.b16 %v4900
  %v6889 = vunpack.c.h.b16 %v4900
  %v6890 = vunpack.c.l.b16 %v4901
  %v6891 = vunpack.c.h.b16 %v4901
  %v6892 = vunpack.c.l.b16 %v4902
  %v6893 = vunpack.c.h.b16 %v4902
  %v6894 = vunpack.c.l.b16 %v4903
  %v6895 = vunpack.c.h.b16 %v4903
  %v6896 = vunpack.c.l.b16 %v4904
  %v6897 = vunpack.c.h.b16 %v4904
  %v6898 = vunpack.c.l.b16 %v4905
  %v6899 = vunpack.c.h.b16 %v4905
  %v6900 = vunpack.c.l.b16 %v4906
  %v6901 = vunpack.c.h.b16 %v4906
  %v6902 = vunpack.c.l.b16 %v4907
  %v6903 = vunpack.c.h.b16 %v4907
  %v6904 = vunpack.c.l.b16 %v4908
  %v6905 = vunpack.c.h.b16 %v4908
  %v6906 = vunpack.c.l.b16 %v4909
  %v6907 = vunpack.c.h.b16 %v4909
  %v6908 = vunpack.c.l.b16 %v4910
  %v6909 = vunpack.c.h.b16 %v4910
  %v6910 = vunpack.c.l.b16 %v4911
  %v6911 = vunpack.c.h.b16 %v4911
  %v6912 = vunpack.c.l.b16 %v4912
  %v6913 = vunpack.c.h.b16 %v4912
  %v6914 = vunpack.c.l.b16 %v4913
  %v6915 = vunpack.c.h.b16 %v4913
  %v6916 = vunpack.c.l.b16 %v4914
  %v6917 = vunpack.c.h.b16 %v4914
  %v6918 = vunpack.c.l.b16 %v4915
  %v6919 = vunpack.c.h.b16 %v4915
  %v6920 = vunpack.c.l.b16 %v4916
  %v6921 = vunpack.c.h.b16 %v4916
  %v6922 = vunpack.c.l.b16 %v4917
  %v6923 = vunpack.c.h.b16 %v4917
  %v6924 = vunpack.c.l.b16 %v4918
  %v6925 = vunpack.c.h.b16 %v4918
  %v6926 = vunpack.c.l.b16 %v4919
  %v6927 = vunpack.c.h.b16 %v4919
  %v6928 = vunpack.c.l.b16 %v4920
  %v6929 = vunpack.c.h.b16 %v4920
  %v6930 = vunpack.c.l.b16 %v4921
  %v6931 = vunpack.c.h.b16 %v4921
  %v6932 = vunpack.c.l.b16 %v4922
  %v6933 = vunpack.c.h.b16 %v4922
  %v6934 = vunpack.c.l.b16 %v4923
  %v6935 = vunpack.c.h.b16 %v4923
  %v6936 = vunpack.c.l.b16 %v4924
  %v6937 = vunpack.c.h.b16 %v4924
  %v6938 = vunpack.c.l.b16 %v4925
  %v6939 = vunpack.c.h.b16 %v4925
  %v6940 = vunpack.c.l.b16 %v4926
  %v6941 = vunpack.c.h.b16 %v4926
  %v6942 = vunpack.c.l.b16 %v4927
  %v6943 = vunpack.c.h.b16 %v4927
  %v6944 = vunpack.c.l.b16 %v4928
  %v6945 = vunpack.c.h.b16 %v4928
  %v6946 = vunpack.c.l.b16 %v4929
  %v6947 = vunpack.c.h.b16 %v4929
  %v6948 = vunpack.c.l.b16 %v4930
  %v6949 = vunpack.c.h.b16 %v4930
  %v6950 = vunpack.c.l.b16 %v4931
  %v6951 = vunpack.c.h.b16 %v4931
  %v6952 = vunpack.c.l.b16 %v4932
  %v6953 = vunpack.c.h.b16 %v4932
  %v6954 = vunpack.c.l.b16 %v4933
  %v6955 = vunpack.c.h.b16 %v4933
  %v6956 = vunpack.c.l.b16 %v4934
  %v6957 = vunpack.c.h.b16 %v4934
  %v6958 = vunpack.c.l.b16 %v4935
  %v6959 = vunpack.c.h.b16 %v4935
  %v6960 = vunpack.c.l.b16 %v4936
  %v6961 = vunpack.c.h.b16 %v4936
  %v6962 = vunpack.c.l.b16 %v4937
  %v6963 = vunpack.c.h.b16 %v4937
  %v6964 = vunpack.c.l.b16 %v4938
  %v6965 = vunpack.c.h.b16 %v4938
  %v6966 = vunpack.c.l.b16 %v4939
  %v6967 = vunpack.c.h.b16 %v4939
  %v6968 = vunpack.c.l.b16 %v4940
  %v6969 = vunpack.c.h.b16 %v4940
  %v6970 = vunpack.c.l.b16 %v4941
  %v6971 = vunpack.c.h.b16 %v4941
  %v6972 = vunpack.c.l.b16 %v4942
  %v6973 = vunpack.c.h.b16 %v4942
  %v6974 = vunpack.c.l.b16 %v4943
  %v6975 = vunpack.c.h.b16 %v4943
  %v6976 = vunpack.c.l.b16 %v4944
  %v6977 = vunpack.c.h.b16 %v4944
  %v6978 = vunpack.c.l.b16 %v4945
  %v6979 = vunpack.c.h.b16 %v4945
  %v6980 = vunpack.c.l.b16 %v4946
  %v6981 = vunpack.c.h.b16 %v4946
  %v6982 = vunpack.c.l.b16 %v4947
  %v6983 = vunpack.c.h.b16 %v4947
  %v6984 = vunpack.c.l.b16 %v4948
  %v6985 = vunpack.c.h.b16 %v4948
  %v6986 = vunpack.c.l.b16 %v4949
  %v6987 = vunpack.c.h.b16 %v4949
  %v6988 = vunpack.c.l.b16 %v4950
  %v6989 = vunpack.c.h.b16 %v4950
  %v6990 = vunpack.c.l.b16 %v4951
  %v6991 = vunpack.c.h.b16 %v4951
  %v6992 = vunpack.c.l.b16 %v4952
  %v6993 = vunpack.c.h.b16 %v4952
  %v6994 = vunpack.c.l.b16 %v4953
  %v6995 = vunpack.c.h.b16 %v4953
  %v6996 = vunpack.c.l.b16 %v4954
  %v6997 = vunpack.c.h.b16 %v4954
  %v6998 = vunpack.c.l.b16 %v4955
  %v6999 = vunpack.c.h.b16 %v4955
  %v7000 = vunpack.c.l.b16 %v4956
  %v7001 = vunpack.c.h.b16 %v4956
  %v7002 = vunpack.c.l.b16 %v4957
  %v7003 = vunpack.c.h.b16 %v4957
  %v7004 = vunpack.c.l.b16 %v4958
  %v7005 = vunpack.c.h.b16 %v4958
  %v7006 = vunpack.c.l.b16 %v4959
  %v7007 = vunpack.c.h.b16 %v4959
  %v7008 = vunpack.c.l.b16 %v4960
  %v7009 = vunpack.c.h.b16 %v4960
  %v7010 = vunpack.c.l.b16 %v4961
  %v7011 = vunpack.c.h.b16 %v4961
  %v7012 = vunpack.c.l.b16 %v4962
  %v7013 = vunpack.c.h.b16 %v4962
  %v7014 = vunpack.c.l.b16 %v4963
  %v7015 = vunpack.c.h.b16 %v4963
  %v7016 = vunpack.c.l.b16 %v4964
  %v7017 = vunpack.c.h.b16 %v4964
  %v7018 = vunpack.c.l.b16 %v4965
  %v7019 = vunpack.c.h.b16 %v4965
  %v7020 = vunpack.c.l.b16 %v4966
  %v7021 = vunpack.c.h.b16 %v4966
  %v7022 = vunpack.c.l.b16 %v4967
  %v7023 = vunpack.c.h.b16 %v4967
  %v7024 = vunpack.c.l.b16 %v4968
  %v7025 = vunpack.c.h.b16 %v4968
  %v7026 = vunpack.c.l.b16 %v4969
  %v7027 = vunpack.c.h.b16 %v4969
  %v7028 = vunpack.c.l.b16 %v4970
  %v7029 = vunpack.c.h.b16 %v4970
  %v7030 = vunpack.c.l.b16 %v4971
  %v7031 = vunpack.c.h.b16 %v4971
  %v7032 = vunpack.c.l.b16 %v4972
  %v7033 = vunpack.c.h.b16 %v4972
  %v7034 = vunpack.c.l.b16 %v4973
  %v7035 = vunpack.c.h.b16 %v4973
  %v7036 = vunpack.c.l.b16 %v4974
  %v7037 = vunpack.c.h.b16 %v4974
  %v7038 = vunpack.c.l.b16 %v4975
  %v7039 = vunpack.c.h.b16 %v4975
  %v7040 = vunpack.c.l.b16 %v4976
  %v7041 = vunpack.c.h.b16 %v4976
  %v7042 = vunpack.c.l.b16 %v4977
  %v7043 = vunpack.c.h.b16 %v4977
  %v7044 = vunpack.c.l.b16 %v4978
  %v7045 = vunpack.c.h.b16 %v4978
  %v7046 = vunpack.c.l.b16 %v4979
  %v7047 = vunpack.c.h.b16 %v4979
  %v7048 = vunpack.c.l.b16 %v4980
  %v7049 = vunpack.c.h.b16 %v4980
  %v7050 = vunpack.c.l.b16 %v4981
  %v7051 = vunpack.c.h.b16 %v4981
  %v7052 = vunpack.c.l.b16 %v4982
  %v7053 = vunpack.c.h.b16 %v4982
  %v7054 = vunpack.c.l.b16 %v4983
  %v7055 = vunpack.c.h.b16 %v4983
  %v7056 = vunpack.c.l.b16 %v4984
  %v7057 = vunpack.c.h.b16 %v4984
  %v7058 = vunpack.c.l.b16 %v4985
  %v7059 = vunpack.c.h.b16 %v4985
  %v7060 = vunpack.c.l.b16 %v4986
  %v7061 = vunpack.c.h.b16 %v4986
  %v7062 = vunpack.c.l.b16 %v4987
  %v7063 = vunpack.c.h.b16 %v4987
  %v7064 = vunpack.c.l.b16 %v4988
  %v7065 = vunpack.c.h.b16 %v4988
  %v7066 = vunpack.c.l.b16 %v4989
  %v7067 = vunpack.c.h.b16 %v4989
  %v7068 = vunpack.c.l.b16 %v4990
  %v7069 = vunpack.c.h.b16 %v4990
  %v7070 = vunpack.c.l.b16 %v4991
  %v7071 = vunpack.c.h.b16 %v4991
  %v7072 = vunpack.c.l.b16 %v4992
  %v7073 = vunpack.c.h.b16 %v4992
  %v7074 = vunpack.c.l.b16 %v4993
  %v7075 = vunpack.c.h.b16 %v4993
  %v7076 = vunpack.c.l.b16 %v4994
  %v7077 = vunpack.c.h.b16 %v4994
  %v7078 = vunpack.c.l.b16 %v4995
  %v7079 = vunpack.c.h.b16 %v4995
  %v7080 = vunpack.c.l.b16 %v4996
  %v7081 = vunpack.c.h.b16 %v4996
  %v7082 = vunpack.c.l.b16 %v4997
  %v7083 = vunpack.c.h.b16 %v4997
  %v7084 = vunpack.c.l.b16 %v4998
  %v7085 = vunpack.c.h.b16 %v4998
  %v7086 = vunpack.c.l.b16 %v4999
  %v7087 = vunpack.c.h.b16 %v4999
  %v7088 = vunpack.c.l.b16 %v5000
  %v7089 = vunpack.c.h.b16 %v5000
  %v7090 = vunpack.c.l.b16 %v5001
  %v7091 = vunpack.c.h.b16 %v5001
  %v7092 = vunpack.c.l.b16 %v5002
  %v7093 = vunpack.c.h.b16 %v5002
  %v7094 = vunpack.c.l.b16 %v5003
  %v7095 = vunpack.c.h.b16 %v5003
  %v7096 = vunpack.c.l.b16 %v5004
  %v7097 = vunpack.c.h.b16 %v5004
  %v7098 = vunpack.c.l.b16 %v5005
  %v7099 = vunpack.c.h.b16 %v5005
  %v7100 = vunpack.c.l.b16 %v5006
  %v7101 = vunpack.c.h.b16 %v5006
  %v7102 = vunpack.c.l.b16 %v5007
  %v7103 = vunpack.c.h.b16 %v5007
  %v7104 = vunpack.c.l.b16 %v5008
  %v7105 = vunpack.c.h.b16 %v5008
  %v7106 = vunpack.c.l.b16 %v5009
  %v7107 = vunpack.c.h.b16 %v5009
  %v7108 = vunpack.c.l.b16 %v5010
  %v7109 = vunpack.c.h.b16 %v5010
  %v7110 = vunpack.c.l.b16 %v5011
  %v7111 = vunpack.c.h.b16 %v5011
  %v7112 = vunpack.c.l.b16 %v5012
  %v7113 = vunpack.c.h.b16 %v5012
  %v7114 = vunpack.c.l.b16 %v5013
  %v7115 = vunpack.c.h.b16 %v5013
  %v7116 = vunpack.c.l.b16 %v5014
  %v7117 = vunpack.c.h.b16 %v5014
  %v7118 = vunpack.c.l.b16 %v5015
  %v7119 = vunpack.c.h.b16 %v5015
  %v7120 = vunpack.c.l.b16 %v5016
  %v7121 = vunpack.c.h.b16 %v5016
  %v7122 = vunpack.c.l.b16 %v5017
  %v7123 = vunpack.c.h.b16 %v5017
  %v7124 = vunpack.c.l.b16 %v5018
  %v7125 = vunpack.c.h.b16 %v5018
  %v7126 = vunpack.c.l.b16 %v5019
  %v7127 = vunpack.c.h.b16 %v5019
  %v7128 = vunpack.c.l.b16 %v5020
  %v7129 = vunpack.c.h.b16 %v5020
  %v7130 = vunpack.c.l.b16 %v5021
  %v7131 = vunpack.c.h.b16 %v5021
  %v7132 = vunpack.c.l.b16 %v5022
  %v7133 = vunpack.c.h.b16 %v5022
  %v7134 = vunpack.c.l.b16 %v5023
  %v7135 = vunpack.c.h.b16 %v5023
  %v7136 = vunpack.c.l.b16 %v5024
  %v7137 = vunpack.c.h.b16 %v5024
  %v7138 = vunpack.c.l.b16 %v5025
  %v7139 = vunpack.c.h.b16 %v5025
  %v7140 = vunpack.c.l.b16 %v5026
  %v7141 = vunpack.c.h.b16 %v5026
  %v7142 = vunpack.c.l.b16 %v5027
  %v7143 = vunpack.c.h.b16 %v5027
  %v7144 = vunpack.c.l.b16 %v5028
  %v7145 = vunpack.c.h.b16 %v5028
  %v7146 = vunpack.c.l.b16 %v5029
  %v7147 = vunpack.c.h.b16 %v5029
  %v7148 = vunpack.c.l.b16 %v5030
  %v7149 = vunpack.c.h.b16 %v5030
  %v7150 = vunpack.c.l.b16 %v5031
  %v7151 = vunpack.c.h.b16 %v5031
  %v7152 = vunpack.c.l.b16 %v5032
  %v7153 = vunpack.c.h.b16 %v5032
  %v7154 = vunpack.c.l.b16 %v5033
  %v7155 = vunpack.c.h.b16 %v5033
  %v7156 = vunpack.c.l.b16 %v5034
  %v7157 = vunpack.c.h.b16 %v5034
  %v7158 = vunpack.c.l.b16 %v5035
  %v7159 = vunpack.c.h.b16 %v5035
  %v7160 = vunpack.c.l.b16 %v5036
  %v7161 = vunpack.c.h.b16 %v5036
  %v7162 = vunpack.c.l.b16 %v5037
  %v7163 = vunpack.c.h.b16 %v5037
  %v7164 = vunpack.c.l.b16 %v5038
  %v7165 = vunpack.c.h.b16 %v5038
  %v7166 = vunpack.c.l.b16 %v5039
  %v7167 = vunpack.c.h.b16 %v5039
  %v7168 = vunpack.c.l.b16 %v5040
  %v7169 = vunpack.c.h.b16 %v5040
  %v7170 = vunpack.c.l.b16 %v5041
  %v7171 = vunpack.c.h.b16 %v5041
  %v7172 = vunpack.c.l.b16 %v5042
  %v7173 = vunpack.c.h.b16 %v5042
  %v7174 = vunpack.c.l.b16 %v5043
  %v7175 = vunpack.c.h.b16 %v5043
  %v7176 = vunpack.c.l.b16 %v5044
  %v7177 = vunpack.c.h.b16 %v5044
  %v7178 = vunpack.c.l.b16 %v5045
  %v7179 = vunpack.c.h.b16 %v5045
  %v7180 = vunpack.c.l.b16 %v5046
  %v7181 = vunpack.c.h.b16 %v5046
  %v7182 = vunpack.c.l.b16 %v5047
  %v7183 = vunpack.c.h.b16 %v5047
  %v7184 = vunpack.c.l.b16 %v5048
  %v7185 = vunpack.c.h.b16 %v5048
  %v7186 = vunpack.c.l.b16 %v5049
  %v7187 = vunpack.c.h.b16 %v5049
  %v7188 = vunpack.c.l.b16 %v5050
  %v7189 = vunpack.c.h.b16 %v5050
  %v7190 = vunpack.c.l.b16 %v5051
  %v7191 = vunpack.c.h.b16 %v5051
  %v7192 = vunpack.c.l.b16 %v5052
  %v7193 = vunpack.c.h.b16 %v5052
  %v7194 = vunpack.c.l.b16 %v5053
  %v7195 = vunpack.c.h.b16 %v5053
  %v7196 = vunpack.c.l.b16 %v5054
  %v7197 = vunpack.c.h.b16 %v5054
  %v7198 = vunpack.c.l.b16 %v5055
  %v7199 = vunpack.c.h.b16 %v5055
  %v7200 = vunpack.c.l.b16 %v5056
  %v7201 = vunpack.c.h.b16 %v5056
  %v7202 = vunpack.c.l.b16 %v5057
  %v7203 = vunpack.c.h.b16 %v5057
  %v7204 = vunpack.c.l.b16 %v5058
  %v7205 = vunpack.c.h.b16 %v5058
  %v7206 = vunpack.c.l.b16 %v5059
  %v7207 = vunpack.c.h.b16 %v5059
  %v7208 = vunpack.c.l.b16 %v5060
  %v7209 = vunpack.c.h.b16 %v5060
  %v7210 = vunpack.c.l.b16 %v5061
  %v7211 = vunpack.c.h.b16 %v5061
  %v7212 = vunpack.c.l.b16 %v5062
  %v7213 = vunpack.c.h.b16 %v5062
  %v7214 = vunpack.c.l.b16 %v5063
  %v7215 = vunpack.c.h.b16 %v5063
  %v7216 = vunpack.c.l.b16 %v5064
  %v7217 = vunpack.c.h.b16 %v5064
  %v7218 = vunpack.c.l.b16 %v5065
  %v7219 = vunpack.c.h.b16 %v5065
  %v7220 = vunpack.c.l.b16 %v5066
  %v7221 = vunpack.c.h.b16 %v5066
  %v7222 = vunpack.c.l.b16 %v5067
  %v7223 = vunpack.c.h.b16 %v5067
  %v7224 = vunpack.c.l.b16 %v5068
  %v7225 = vunpack.c.h.b16 %v5068
  %v7226 = vunpack.c.l.b16 %v5069
  %v7227 = vunpack.c.h.b16 %v5069
  %v7228 = vunpack.c.l.b16 %v5070
  %v7229 = vunpack.c.h.b16 %v5070
  %v7230 = vunpack.c.l.b16 %v5071
  %v7231 = vunpack.c.h.b16 %v5071
  %v7232 = vunpack.c.l.b16 %v5072
  %v7233 = vunpack.c.h.b16 %v5072
  %v7234 = vunpack.c.l.b16 %v5073
  %v7235 = vunpack.c.h.b16 %v5073
  %v7236 = vunpack.c.l.b16 %v5074
  %v7237 = vunpack.c.h.b16 %v5074
  %v7238 = vunpack.c.l.b16 %v5075
  %v7239 = vunpack.c.h.b16 %v5075
  %v7240 = vunpack.c.l.b16 %v5076
  %v7241 = vunpack.c.h.b16 %v5076
  %v7242 = vunpack.c.l.b16 %v5077
  %v7243 = vunpack.c.h.b16 %v5077
  %v7244 = vunpack.c.l.b16 %v5078
  %v7245 = vunpack.c.h.b16 %v5078
  %v7246 = vunpack.c.l.b16 %v5079
  %v7247 = vunpack.c.h.b16 %v5079
  %v7248 = vunpack.c.l.b16 %v5080
  %v7249 = vunpack.c.h.b16 %v5080
  %v7250 = vunpack.c.l.b16 %v5081
  %v7251 = vunpack.c.h.b16 %v5081
  %v7252 = vunpack.c.l.b16 %v5082
  %v7253 = vunpack.c.h.b16 %v5082
  %v7254 = vunpack.c.l.b16 %v5083
  %v7255 = vunpack.c.h.b16 %v5083
  %v7256 = vunpack.c.l.b16 %v5084
  %v7257 = vunpack.c.h.b16 %v5084
  %v7258 = vunpack.c.l.b16 %v5085
  %v7259 = vunpack.c.h.b16 %v5085
  %v7260 = vunpack.c.l.b16 %v5086
  %v7261 = vunpack.c.h.b16 %v5086
  %v7262 = vunpack.c.l.b16 %v5087
  %v7263 = vunpack.c.h.b16 %v5087
  %v7264 = vunpack.c.l.b16 %v5088
  %v7265 = vunpack.c.h.b16 %v5088
  %v7266 = vunpack.c.l.b16 %v5089
  %v7267 = vunpack.c.h.b16 %v5089
  %v7268 = vunpack.c.l.b16 %v5090
  %v7269 = vunpack.c.h.b16 %v5090
  %v7270 = vunpack.c.l.b16 %v5091
  %v7271 = vunpack.c.h.b16 %v5091
  %v7272 = vunpack.c.l.b16 %v5092
  %v7273 = vunpack.c.h.b16 %v5092
  %v7274 = vunpack.c.l.b16 %v5093
  %v7275 = vunpack.c.h.b16 %v5093
  %v7276 = vunpack.c.l.b16 %v5094
  %v7277 = vunpack.c.h.b16 %v5094
  %v7278 = vunpack.c.l.b16 %v5095
  %v7279 = vunpack.c.h.b16 %v5095
  %v7280 = vunpack.c.l.b16 %v5096
  %v7281 = vunpack.c.h.b16 %v5096
  %v7282 = vunpack.c.l.b16 %v5097
  %v7283 = vunpack.c.h.b16 %v5097
  %v7284 = vunpack.c.l.b16 %v5098
  %v7285 = vunpack.c.h.b16 %v5098
  %v7286 = vunpack.c.l.b16 %v5099
  %v7287 = vunpack.c.h.b16 %v5099
  %v7288 = vunpack.c.l.b16 %v5100
  %v7289 = vunpack.c.h.b16 %v5100
  %v7290 = vunpack.c.l.b16 %v5101
  %v7291 = vunpack.c.h.b16 %v5101
  %v7292 = vunpack.c.l.b16 %v5102
  %v7293 = vunpack.c.h.b16 %v5102
  %v7294 = vunpack.c.l.b16 %v5103
  %v7295 = vunpack.c.h.b16 %v5103
  %v7296 = vunpack.c.l.b16 %v5104
  %v7297 = vunpack.c.h.b16 %v5104
  %v7298 = vunpack.c.l.b16 %v5105
  %v7299 = vunpack.c.h.b16 %v5105
  %v7300 = vunpack.c.l.b16 %v5106
  %v7301 = vunpack.c.h.b16 %v5106
  %v7302 = vunpack.c.l.b16 %v5107
  %v7303 = vunpack.c.h.b16 %v5107
  %v7304 = vunpack.c.l.b16 %v5108
  %v7305 = vunpack.c.h.b16 %v5108
  %v7306 = vunpack.c.l.b16 %v5109
  %v7307 = vunpack.c.h.b16 %v5109
  %v7308 = vunpack.c.l.b16 %v5110
  %v7309 = vunpack.c.h.b16 %v5110
  %v7310 = vunpack.c.l.b16 %v5111
  %v7311 = vunpack.c.h.b16 %v5111
  %v7312 = vunpack.c.l.b16 %v5112
  %v7313 = vunpack.c.h.b16 %v5112
  %v7314 = vunpack.c.l.b16 %v5113
  %v7315 = vunpack.c.h.b16 %v5113
  %v7316 = vunpack.c.l.b16 %v5114
  %v7317 = vunpack.c.h.b16 %v5114
  %v7318 = vunpack.c.l.b16 %v5115
  %v7319 = vunpack.c.h.b16 %v5115
  %v7320 = vunpack.c.l.b16 %v5116
  %v7321 = vunpack.c.h.b16 %v5116
  %v7322 = vunpack.c.l.b16 %v5117
  %v7323 = vunpack.c.h.b16 %v5117
  %v7324 = vunpack.c.l.b16 %v5118
  %v7325 = vunpack.c.h.b16 %v5118
  %v7326 = vunpack.c.l.b16 %v5119
  %v7327 = vunpack.c.h.b16 %v5119
  %v7328 = vunpack.c.l.b16 %v5120
  %v7329 = vunpack.c.h.b16 %v5120
  %v7330 = vunpack.c.l.b16 %v5121
  %v7331 = vunpack.c.h.b16 %v5121
  %v7332 = vunpack.c.l.b16 %v5122
  %v7333 = vunpack.c.h.b16 %v5122
  %v7334 = vunpack.c.l.b16 %v5123
  %v7335 = vunpack.c.h.b16 %v5123
  %v7336 = vunpack.c.l.b16 %v5124
  %v7337 = vunpack.c.h.b16 %v5124
  %v7338 = vunpack.c.l.b16 %v5125
  %v7339 = vunpack.c.h.b16 %v5125
  %v7340 = vunpack.c.l.b16 %v5126
  %v7341 = vunpack.c.h.b16 %v5126
  %v7342 = vunpack.c.l.b16 %v5127
  %v7343 = vunpack.c.h.b16 %v5127
  %v7344 = vunpack.c.l.b16 %v5128
  %v7345 = vunpack.c.h.b16 %v5128
  %v7346 = vunpack.c.l.b16 %v5129
  %v7347 = vunpack.c.h.b16 %v5129
  %v7348 = vunpack.c.l.b16 %v5130
  %v7349 = vunpack.c.h.b16 %v5130
  %v7350 = vunpack.c.l.b16 %v5131
  %v7351 = vunpack.c.h.b16 %v5131
  %v7352 = vunpack.c.l.b16 %v5132
  %v7353 = vunpack.c.h.b16 %v5132
  %v7354 = vunpack.c.l.b16 %v5133
  %v7355 = vunpack.c.h.b16 %v5133
  %v7356 = vunpack.c.l.b16 %v5134
  %v7357 = vunpack.c.h.b16 %v5134
  %v7358 = vunpack.c.l.b16 %v5135
  %v7359 = vunpack.c.h.b16 %v5135
  %v7360 = vunpack.c.l.b16 %v5136
  %v7361 = vunpack.c.h.b16 %v5136
  %v7362 = vunpack.c.l.b16 %v5137
  %v7363 = vunpack.c.h.b16 %v5137
  %v7364 = vunpack.c.l.b16 %v5138
  %v7365 = vunpack.c.h.b16 %v5138
  %v7366 = vunpack.c.l.b16 %v5139
  %v7367 = vunpack.c.h.b16 %v5139
  %v7368 = vunpack.c.l.b16 %v5140
  %v7369 = vunpack.c.h.b16 %v5140
  %v7370 = vunpack.c.l.b16 %v5141
  %v7371 = vunpack.c.h.b16 %v5141
  %v7372 = vunpack.c.l.b16 %v5142
  %v7373 = vunpack.c.h.b16 %v5142
  %v7374 = vunpack.c.l.b16 %v5143
  %v7375 = vunpack.c.h.b16 %v5143
  %v7376 = vunpack.c.l.b16 %v5144
  %v7377 = vunpack.c.h.b16 %v5144
  %v7378 = vunpack.c.l.b16 %v5145
  %v7379 = vunpack.c.h.b16 %v5145
  %v7380 = vunpack.c.l.b16 %v5146
  %v7381 = vunpack.c.h.b16 %v5146
  %v7382 = vunpack.c.l.b16 %v5147
  %v7383 = vunpack.c.h.b16 %v5147
  %v7384 = vunpack.c.l.b16 %v5148
  %v7385 = vunpack.c.h.b16 %v5148
  %v7386 = vunpack.c.l.b16 %v5149
  %v7387 = vunpack.c.h.b16 %v5149
  %v7388 = vunpack.c.l.b16 %v5150
  %v7389 = vunpack.c.h.b16 %v5150
  %v7390 = vunpack.c.l.b16 %v5151
  %v7391 = vunpack.c.h.b16 %v5151
  %v7392 = vunpack.c.l.b16 %v5152
  %v7393 = vunpack.c.h.b16 %v5152
  %v7394 = vunpack.c.l.b16 %v5153
  %v7395 = vunpack.c.h.b16 %v5153
  %v7396 = vunpack.c.l.b16 %v5154
  %v7397 = vunpack.c.h.b16 %v5154
  %v7398 = vunpack.c.l.b16 %v5155
  %v7399 = vunpack.c.h.b16 %v5155
  %v7400 = vpack.c.b16 %v5966, %v5960
  %v7401 = vpack.c.b16 %v5967, %v5961
  %v7402 = vpack.c.b16 %v5968, %v5962
  %v7403 = vpack.c.b16 %v5969, %v5963
  %v7404 = vpack.c.b16 %v5970, %v5964
  %v7405 = vpack.c.b16 %v5971, %v5965
  %v7406 = vpack.c.b16 %v5978, %v5972
  %v7407 = vpack.c.b16 %v5979, %v5973
  %v7408 = vpack.c.b16 %v5980, %v5974
  %v7409 = vpack.c.b16 %v5981, %v5975
  %v7410 = vpack.c.b16 %v5982, %v5976
  %v7411 = vpack.c.b16 %v5983, %v5977
  %v7412 = vpack.c.b16 %v5990, %v5984
  %v7413 = vpack.c.b16 %v5991, %v5985
  %v7414 = vpack.c.b16 %v5992, %v5986
  %v7415 = vpack.c.b16 %v5993, %v5987
  %v7416 = vpack.c.b16 %v5994, %v5988
  %v7417 = vpack.c.b16 %v5995, %v5989
  %v7418 = vpack.c.b16 %v6002, %v5996
  %v7419 = vpack.c.b16 %v6003, %v5997
  %v7420 = vpack.c.b16 %v6004, %v5998
  %v7421 = vpack.c.b16 %v6005, %v5999
  %v7422 = vpack.c.b16 %v6006, %v6000
  %v7423 = vpack.c.b16 %v6007, %v6001
  %v7424 = vpack.c.b16 %v6014, %v6008
  %v7425 = vpack.c.b16 %v6015, %v6009
  %v7426 = vpack.c.b16 %v6016, %v6010
  %v7427 = vpack.c.b16 %v6017, %v6011
  %v7428 = vpack.c.b16 %v6018, %v6012
  %v7429 = vpack.c.b16 %v6019, %v6013
  %v7430 = vpack.c.b16 %v6026, %v6020
  %v7431 = vpack.c.b16 %v6027, %v6021
  %v7432 = vpack.c.b16 %v6028, %v6022
  %v7433 = vpack.c.b16 %v6029, %v6023
  %v7434 = vpack.c.b16 %v6030, %v6024
  %v7435 = vpack.c.b16 %v6031, %v6025
  %v7436 = vpack.c.b16 %v6038, %v6032
  %v7437 = vpack.c.b16 %v6039, %v6033
  %v7438 = vpack.c.b16 %v6040, %v6034
  %v7439 = vpack.c.b16 %v6041, %v6035
  %v7440 = vpack.c.b16 %v6042, %v6036
  %v7441 = vpack.c.b16 %v6043, %v6037
  %v7442 = vpack.c.b16 %v6050, %v6044
  %v7443 = vpack.c.b16 %v6051, %v6045
  %v7444 = vpack.c.b16 %v6052, %v6046
  %v7445 = vpack.c.b16 %v6053, %v6047
  %v7446 = vpack.c.b16 %v6054, %v6048
  %v7447 = vpack.c.b16 %v6055, %v6049
  %v7448 = vpack.c.b16 %v6062, %v6056
  %v7449 = vpack.c.b16 %v6063, %v6057
  %v7450 = vpack.c.b16 %v6064, %v6058
  %v7451 = vpack.c.b16 %v6065, %v6059
  %v7452 = vpack.c.b16 %v6066, %v6060
  %v7453 = vpack.c.b16 %v6067, %v6061
  %v7454 = vpack.c.b16 %v6074, %v6068
  %v7455 = vpack.c.b16 %v6075, %v6069
  %v7456 = vpack.c.b16 %v6076, %v6070
  %v7457 = vpack.c.b16 %v6077, %v6071
  %v7458 = vpack.c.b16 %v6078, %v6072
  %v7459 = vpack.c.b16 %v6079, %v6073
  %v7460 = vpack.c.b16 %v6086, %v6080
  %v7461 = vpack.c.b16 %v6087, %v6081
  %v7462 = vpack.c.b16 %v6088, %v6082
  %v7463 = vpack.c.b16 %v6089, %v6083
  %v7464 = vpack.c.b16 %v6090, %v6084
  %v7465 = vpack.c.b16 %v6091, %v6085
  %v7466 = vpack.c.b16 %v6098, %v6092
  %v7467 = vpack.c.b16 %v6099, %v6093
  %v7468 = vpack.c.b16 %v6100, %v6094
  %v7469 = vpack.c.b16 %v6101, %v6095
  %v7470 = vpack.c.b16 %v6102, %v6096
  %v7471 = vpack.c.b16 %v6103, %v6097
  %v7472 = vpack.c.b16 %v6110, %v6104
  %v7473 = vpack.c.b16 %v6111, %v6105
  %v7474 = vpack.c.b16 %v6112, %v6106
  %v7475 = vpack.c.b16 %v6113, %v6107
  %v7476 = vpack.c.b16 %v6114, %v6108
  %v7477 = vpack.c.b16 %v6115, %v6109
  %v7478 = vpack.c.b16 %v6122, %v6116
  %v7479 = vpack.c.b16 %v6123, %v6117
  %v7480 = vpack.c.b16 %v6124, %v6118
  %v7481 = vpack.c.b16 %v6125, %v6119
  %v7482 = vpack.c.b16 %v6126, %v6120
  %v7483 = vpack.c.b16 %v6127, %v6121
  %v7484 = vpack.c.b16 %v6134, %v6128
  %v7485 = vpack.c.b16 %v6135, %v6129
  %v7486 = vpack.c.b16 %v6136, %v6130
  %v7487 = vpack.c.b16 %v6137, %v6131
  %v7488 = vpack.c.b16 %v6138, %v6132
  %v7489 = vpack.c.b16 %v6139, %v6133
  %v7490 = vpack.c.b16 %v6146, %v6140
  %v7491 = vpack.c.b16 %v6147, %v6141
  %v7492 = vpack.c.b16 %v6148, %v6142
  %v7493 = vpack.c.b16 %v6149, %v6143
  %v7494 = vpack.c.b16 %v6150, %v6144
  %v7495 = vpack.c.b16 %v6151, %v6145
  %v7496 = vpack.c.b16 %v6158, %v6152
  %v7497 = vpack.c.b16 %v6159, %v6153
  %v7498 = vpack.c.b16 %v6160, %v6154
  %v7499 = vpack.c.b16 %v6161, %v6155
  %v7500 = vpack.c.b16 %v6162, %v6156
  %v7501 = vpack.c.b16 %v6163, %v6157
  %v7502 = vpack.c.b16 %v6170, %v6164
  %v7503 = vpack.c.b16 %v6171, %v6165
  %v7504 = vpack.c.b16 %v6172, %v6166
  %v7505 = vpack.c.b16 %v6173, %v6167
  %v7506 = vpack.c.b16 %v6174, %v6168
  %v7507 = vpack.c.b16 %v6175, %v6169
  %v7508 = vpack.c.b16 %v6182, %v6176
  %v7509 = vpack.c.b16 %v6183, %v6177
  %v7510 = vpack.c.b16 %v6184, %v6178
  %v7511 = vpack.c.b16 %v6185, %v6179
  %v7512 = vpack.c.b16 %v6186, %v6180
  %v7513 = vpack.c.b16 %v6187, %v6181
  %v7514 = vpack.c.b16 %v6194, %v6188
  %v7515 = vpack.c.b16 %v6195, %v6189
  %v7516 = vpack.c.b16 %v6196, %v6190
  %v7517 = vpack.c.b16 %v6197, %v6191
  %v7518 = vpack.c.b16 %v6198, %v6192
  %v7519 = vpack.c.b16 %v6199, %v6193
  %v7520 = vpack.c.b16 %v6206, %v6200
  %v7521 = vpack.c.b16 %v6207, %v6201
  %v7522 = vpack.c.b16 %v6208, %v6202
  %v7523 = vpack.c.b16 %v6209, %v6203
  %v7524 = vpack.c.b16 %v6210, %v6204
  %v7525 = vpack.c.b16 %v6211, %v6205
  %v7526 = vpack.c.b16 %v6218, %v6212
  %v7527 = vpack.c.b16 %v6219, %v6213
  %v7528 = vpack.c.b16 %v6220, %v6214
  %v7529 = vpack.c.b16 %v6221, %v6215
  %v7530 = vpack.c.b16 %v6222, %v6216
  %v7531 = vpack.c.b16 %v6223, %v6217
  %v7532 = vpack.c.b16 %v6230, %v6224
  %v7533 = vpack.c.b16 %v6231, %v6225
  %v7534 = vpack.c.b16 %v6232, %v6226
  %v7535 = vpack.c.b16 %v6233, %v6227
  %v7536 = vpack.c.b16 %v6234, %v6228
  %v7537 = vpack.c.b16 %v6235, %v6229
  %v7538 = vpack.c.b16 %v6242, %v6236
  %v7539 = vpack.c.b16 %v6243, %v6237
  %v7540 = vpack.c.b16 %v6244, %v6238
  %v7541 = vpack.c.b16 %v6245, %v6239
  %v7542 = vpack.c.b16 %v6246, %v6240
  %v7543 = vpack.c.b16 %v6247, %v6241
  %v7544 = vpack.c.b16 %v6254, %v6248
  %v7545 = vpack.c.b16 %v6255, %v6249
  %v7546 = vpack.c.b16 %v6256, %v6250
  %v7547 = vpack.c.b16 %v6257, %v6251
  %v7548 = vpack.c.b16 %v6258, %v6252
  %v7549 = vpack.c.b16 %v6259, %v6253
  %v7550 = vpack.c.b16 %v6266, %v6260
  %v7551 = vpack.c.b16 %v6267, %v6261
  %v7552 = vpack.c.b16 %v6268, %v6262
  %v7553 = vpack.c.b16 %v6269, %v6263
  %v7554 = vpack.c.b16 %v6270, %v6264
  %v7555 = vpack.c.b16 %v6271, %v6265
  %v7556 = vpack.c.b16 %v6278, %v6272
  %v7557 = vpack.c.b16 %v6279, %v6273
  %v7558 = vpack.c.b16 %v6280, %v6274
  %v7559 = vpack.c.b16 %v6281, %v6275
  %v7560 = vpack.c.b16 %v6282, %v6276
  %v7561 = vpack.c.b16 %v6283, %v6277
  %v7562 = vpack.c.b16 %v6290, %v6284
  %v7563 = vpack.c.b16 %v6291, %v6285
  %v7564 = vpack.c.b16 %v6292, %v6286
  %v7565 = vpack.c.b16 %v6293, %v6287
  %v7566 = vpack.c.b16 %v6294, %v6288
  %v7567 = vpack.c.b16 %v6295, %v6289
  %v7568 = vpack.c.b16 %v6302, %v6296
  %v7569 = vpack.c.b16 %v6303, %v6297
  %v7570 = vpack.c.b16 %v6304, %v6298
  %v7571 = vpack.c.b16 %v6305, %v6299
  %v7572 = vpack.c.b16 %v6306, %v6300
  %v7573 = vpack.c.b16 %v6307, %v6301
  %v7574 = vpack.c.b16 %v6314, %v6308
  %v7575 = vpack.c.b16 %v6315, %v6309
  %v7576 = vpack.c.b16 %v6316, %v6310
  %v7577 = vpack.c.b16 %v6317, %v6311
  %v7578 = vpack.c.b16 %v6318, %v6312
  %v7579 = vpack.c.b16 %v6319, %v6313
  %v7580 = vpack.c.b16 %v6326, %v6320
  %v7581 = vpack.c.b16 %v6327, %v6321
  %v7582 = vpack.c.b16 %v6328, %v6322
  %v7583 = vpack.c.b16 %v6329, %v6323
  %v7584 = vpack.c.b16 %v6330, %v6324
  %v7585 = vpack.c.b16 %v6331, %v6325
  %v7586 = vpack.c.b16 %v6338, %v6332
  %v7587 = vpack.c.b16 %v6339, %v6333
  %v7588 = vpack.c.b16 %v6340, %v6334
  %v7589 = vpack.c.b16 %v6341, %v6335
  %v7590 = vpack.c.b16 %v6342, %v6336
  %v7591 = vpack.c.b16 %v6343, %v6337
  %v7592 = vpack.c.b16 %v6350, %v6344
  %v7593 = vpack.c.b16 %v6351, %v6345
  %v7594 = vpack.c.b16 %v6352, %v6346
  %v7595 = vpack.c.b16 %v6353, %v6347
  %v7596 = vpack.c.b16 %v6354, %v6348
  %v7597 = vpack.c.b16 %v6355, %v6349
  %v7598 = vpack.c.b16 %v6362, %v6356
  %v7599 = vpack.c.b16 %v6363, %v6357
  %v7600 = vpack.c.b16 %v6364, %v6358
  %v7601 = vpack.c.b16 %v6365, %v6359
  %v7602 = vpack.c.b16 %v6366, %v6360
  %v7603 = vpack.c.b16 %v6367, %v6361
  %v7604 = vpack.c.b16 %v6374, %v6368
  %v7605 = vpack.c.b16 %v6375, %v6369
  %v7606 = vpack.c.b16 %v6376, %v6370
  %v7607 = vpack.c.b16 %v6377, %v6371
  %v7608 = vpack.c.b16 %v6378, %v6372
  %v7609 = vpack.c.b16 %v6379, %v6373
  %v7610 = vpack.c.b16 %v6386, %v6380
  %v7611 = vpack.c.b16 %v6387, %v6381
  %v7612 = vpack.c.b16 %v6388, %v6382
  %v7613 = vpack.c.b16 %v6389, %v6383
  %v7614 = vpack.c.b16 %v6390, %v6384
  %v7615 = vpack.c.b16 %v6391, %v6385
  %v7616 = vpack.c.b16 %v6398, %v6392
  %v7617 = vpack.c.b16 %v6399, %v6393
  %v7618 = vpack.c.b16 %v6400, %v6394
  %v7619 = vpack.c.b16 %v6401, %v6395
  %v7620 = vpack.c.b16 %v6402, %v6396
  %v7621 = vpack.c.b16 %v6403, %v6397
  %v7622 = vpack.c.b16 %v6410, %v6404
  %v7623 = vpack.c.b16 %v6411, %v6405
  %v7624 = vpack.c.b16 %v6412, %v6406
  %v7625 = vpack.c.b16 %v6413, %v6407
  %v7626 = vpack.c.b16 %v6414, %v6408
  %v7627 = vpack.c.b16 %v6415, %v6409
  %v7628 = vpack.c.b16 %v6422, %v6416
  %v7629 = vpack.c.b16 %v6423, %v6417
  %v7630 = vpack.c.b16 %v6424, %v6418
  %v7631 = vpack.c.b16 %v6425, %v6419
  %v7632 = vpack.c.b16 %v6426, %v6420
  %v7633 = vpack.c.b16 %v6427, %v6421
  %v7634 = vpack.c.b16 %v6434, %v6428
  %v7635 = vpack.c.b16 %v6435, %v6429
  %v7636 = vpack.c.b16 %v6436, %v6430
  %v7637 = vpack.c.b16 %v6437, %v6431
  %v7638 = vpack.c.b16 %v6438, %v6432
  %v7639 = vpack.c.b16 %v6439, %v6433
  %v7640 = vpack.c.b16 %v6446, %v6440
  %v7641 = vpack.c.b16 %v6447, %v6441
  %v7642 = vpack.c.b16 %v6448, %v6442
  %v7643 = vpack.c.b16 %v6449, %v6443
  %v7644 = vpack.c.b16 %v6450, %v6444
  %v7645 = vpack.c.b16 %v6451, %v6445
  %v7646 = vpack.c.b16 %v6458, %v6452
  %v7647 = vpack.c.b16 %v6459, %v6453
  %v7648 = vpack.c.b16 %v6460, %v6454
  %v7649 = vpack.c.b16 %v6461, %v6455
  %v7650 = vpack.c.b16 %v6462, %v6456
  %v7651 = vpack.c.b16 %v6463, %v6457
  %v7652 = vpack.c.b16 %v6470, %v6464
  %v7653 = vpack.c.b16 %v6471, %v6465
  %v7654 = vpack.c.b16 %v6472, %v6466
  %v7655 = vpack.c.b16 %v6473, %v6467
  %v7656 = vpack.c.b16 %v6474, %v6468
  %v7657 = vpack.c.b16 %v6475, %v6469
  %v7658 = vpack.c.b16 %v6482, %v6476
  %v7659 = vpack.c.b16 %v6483, %v6477
  %v7660 = vpack.c.b16 %v6484, %v6478
  %v7661 = vpack.c.b16 %v6485, %v6479
  %v7662 = vpack.c.b16 %v6486, %v6480
  %v7663 = vpack.c.b16 %v6487, %v6481
  %v7664 = vpack.c.b16 %v6494, %v6488
  %v7665 = vpack.c.b16 %v6495, %v6489
  %v7666 = vpack.c.b16 %v6496, %v6490
  %v7667 = vpack.c.b16 %v6497, %v6491
  %v7668 = vpack.c.b16 %v6498, %v6492
  %v7669 = vpack.c.b16 %v6499, %v6493
  %v7670 = vpack.c.b16 %v6506, %v6500
  %v7671 = vpack.c.b16 %v6507, %v6501
  %v7672 = vpack.c.b16 %v6508, %v6502
  %v7673 = vpack.c.b16 %v6509, %v6503
  %v7674 = vpack.c.b16 %v6510, %v6504
  %v7675 = vpack.c.b16 %v6511, %v6505
  %v7676 = vpack.c.b16 %v6518, %v6512
  %v7677 = vpack.c.b16 %v6519, %v6513
  %v7678 = vpack.c.b16 %v6520, %v6514
  %v7679 = vpack.c.b16 %v6521, %v6515
  %v7680 = vpack.c.b16 %v6522, %v6516
  %v7681 = vpack.c.b16 %v6523, %v6517
  %v7682 = vpack.c.b16 %v6530, %v6524
  %v7683 = vpack.c.b16 %v6531, %v6525
  %v7684 = vpack.c.b16 %v6532, %v6526
  %v7685 = vpack.c.b16 %v6533, %v6527
  %v7686 = vpack.c.b16 %v6534, %v6528
  %v7687 = vpack.c.b16 %v6535, %v6529
  %v7688 = vpack.c.b16 %v6542, %v6536
  %v7689 = vpack.c.b16 %v6543, %v6537
  %v7690 = vpack.c.b16 %v6544, %v6538
  %v7691 = vpack.c.b16 %v6545, %v6539
  %v7692 = vpack.c.b16 %v6546, %v6540
  %v7693 = vpack.c.b16 %v6547, %v6541
  %v7694 = vpack.c.b16 %v6554, %v6548
  %v7695 = vpack.c.b16 %v6555, %v6549
  %v7696 = vpack.c.b16 %v6556, %v6550
  %v7697 = vpack.c.b16 %v6557, %v6551
  %v7698 = vpack.c.b16 %v6558, %v6552
  %v7699 = vpack.c.b16 %v6559, %v6553
  %v7700 = vpack.c.b16 %v6566, %v6560
  %v7701 = vpack.c.b16 %v6567, %v6561
  %v7702 = vpack.c.b16 %v6568, %v6562
  %v7703 = vpack.c.b16 %v6569, %v6563
  %v7704 = vpack.c.b16 %v6570, %v6564
  %v7705 = vpack.c.b16 %v6571, %v6565
  %v7706 = vpack.c.b16 %v6578, %v6572
  %v7707 = vpack.c.b16 %v6579, %v6573
  %v7708 = vpack.c.b16 %v6580, %v6574
  %v7709 = vpack.c.b16 %v6581, %v6575
  %v7710 = vpack.c.b16 %v6582, %v6576
  %v7711 = vpack.c.b16 %v6583, %v6577
  %v7712 = vpack.c.b16 %v6590, %v6584
  %v7713 = vpack.c.b16 %v6591, %v6585
  %v7714 = vpack.c.b16 %v6592, %v6586
  %v7715 = vpack.c.b16 %v6593, %v6587
  %v7716 = vpack.c.b16 %v6594, %v6588
  %v7717 = vpack.c.b16 %v6595, %v6589
  %v7718 = vpack.c.b16 %v6602, %v6596
  %v7719 = vpack.c.b16 %v6603, %v6597
  %v7720 = vpack.c.b16 %v6604, %v6598
  %v7721 = vpack.c.b16 %v6605, %v6599
  %v7722 = vpack.c.b16 %v6606, %v6600
  %v7723 = vpack.c.b16 %v6607, %v6601
  %v7724 = vpack.c.b16 %v6614, %v6608
  %v7725 = vpack.c.b16 %v6615, %v6609
  %v7726 = vpack.c.b16 %v6616, %v6610
  %v7727 = vpack.c.b16 %v6617, %v6611
  %v7728 = vpack.c.b16 %v6618, %v6612
  %v7729 = vpack.c.b16 %v6619, %v6613
  %v7730 = vpack.c.b16 %v6626, %v6620
  %v7731 = vpack.c.b16 %v6627, %v6621
  %v7732 = vpack.c.b16 %v6628, %v6622
  %v7733 = vpack.c.b16 %v6629, %v6623
  %v7734 = vpack.c.b16 %v6630, %v6624
  %v7735 = vpack.c.b16 %v6631, %v6625
  %v7736 = vpack.c.b16 %v6638, %v6632
  %v7737 = vpack.c.b16 %v6639, %v6633
  %v7738 = vpack.c.b16 %v6640, %v6634
  %v7739 = vpack.c.b16 %v6641, %v6635
  %v7740 = vpack.c.b16 %v6642, %v6636
  %v7741 = vpack.c.b16 %v6643, %v6637
  %v7742 = vpack.c.b16 %v6650, %v6644
  %v7743 = vpack.c.b16 %v6651, %v6645
  %v7744 = vpack.c.b16 %v6652, %v6646
  %v7745 = vpack.c.b16 %v6653, %v6647
  %v7746 = vpack.c.b16 %v6654, %v6648
  %v7747 = vpack.c.b16 %v6655, %v6649
  %v7748 = vpack.c.b16 %v6662, %v6656
  %v7749 = vpack.c.b16 %v6663, %v6657
  %v7750 = vpack.c.b16 %v6664, %v6658
  %v7751 = vpack.c.b16 %v6665, %v6659
  %v7752 = vpack.c.b16 %v6666, %v6660
  %v7753 = vpack.c.b16 %v6667, %v6661
  %v7754 = vpack.c.b16 %v6674, %v6668
  %v7755 = vpack.c.b16 %v6675, %v6669
  %v7756 = vpack.c.b16 %v6676, %v6670
  %v7757 = vpack.c.b16 %v6677, %v6671
  %v7758 = vpack.c.b16 %v6678, %v6672
  %v7759 = vpack.c.b16 %v6679, %v6673
  %v7760 = vpack.c.b16 %v6686, %v6680
  %v7761 = vpack.c.b16 %v6687, %v6681
  %v7762 = vpack.c.b16 %v6688, %v6682
  %v7763 = vpack.c.b16 %v6689, %v6683
  %v7764 = vpack.c.b16 %v6690, %v6684
  %v7765 = vpack.c.b16 %v6691, %v6685
  %v7766 = vpack.c.b16 %v6698, %v6692
  %v7767 = vpack.c.b16 %v6699, %v6693
  %v7768 = vpack.c.b16 %v6700, %v6694
  %v7769 = vpack.c.b16 %v6701, %v6695
  %v7770 = vpack.c.b16 %v6702, %v6696
  %v7771 = vpack.c.b16 %v6703, %v6697
  %v7772 = vpack.c.b16 %v6710, %v6704
  %v7773 = vpack.c.b16 %v6711, %v6705
  %v7774 = vpack.c.b16 %v6712, %v6706
  %v7775 = vpack.c.b16 %v6713, %v6707
  %v7776 = vpack.c.b16 %v6714, %v6708
  %v7777 = vpack.c.b16 %v6715, %v6709
  %v7778 = vpack.c.b16 %v6722, %v6716
  %v7779 = vpack.c.b16 %v6723, %v6717
  %v7780 = vpack.c.b16 %v6724, %v6718
  %v7781 = vpack.c.b16 %v6725, %v6719
  %v7782 = vpack.c.b16 %v6726, %v6720
  %v7783 = vpack.c.b16 %v6727, %v6721
  %v7784 = vpack.c.b16 %v6734, %v6728
  %v7785 = vpack.c.b16 %v6735, %v6729
  %v7786 = vpack.c.b16 %v6736, %v6730
  %v7787 = vpack.c.b16 %v6737, %v6731
  %v7788 = vpack.c.b16 %v6738, %v6732
  %v7789 = vpack.c.b16 %v6739, %v6733
  %v7790 = vpack.c.b16 %v6746, %v6740
  %v7791 = vpack.c.b16 %v6747, %v6741
  %v7792 = vpack.c.b16 %v6748, %v6742
  %v7793 = vpack.c.b16 %v6749, %v6743
  %v7794 = vpack.c.b16 %v6750, %v6744
  %v7795 = vpack.c.b16 %v6751, %v6745
  %v7796 = vpack.c.b16 %v6758, %v6752
  %v7797 = vpack.c.b16 %v6759, %v6753
  %v7798 = vpack.c.b16 %v6760, %v6754
  %v7799 = vpack.c.b16 %v6761, %v6755
  %v7800 = vpack.c.b16 %v6762, %v6756
  %v7801 = vpack.c.b16 %v6763, %v6757
  %v7802 = vpack.c.b16 %v6770, %v6764
  %v7803 = vpack.c.b16 %v6771, %v6765
  %v7804 = vpack.c.b16 %v6772, %v6766
  %v7805 = vpack.c.b16 %v6773, %v6767
  %v7806 = vpack.c.b16 %v6774, %v6768
  %v7807 = vpack.c.b16 %v6775, %v6769
  %v7808 = vpack.c.b16 %v6782, %v6776
  %v7809 = vpack.c.b16 %v6783, %v6777
  %v7810 = vpack.c.b16 %v6784, %v6778
  %v7811 = vpack.c.b16 %v6785, %v6779
  %v7812 = vpack.c.b16 %v6786, %v6780
  %v7813 = vpack.c.b16 %v6787, %v6781
  %v7814 = vpack.c.b16 %v6794, %v6788
  %v7815 = vpack.c.b16 %v6795, %v6789
  %v7816 = vpack.c.b16 %v6796, %v6790
  %v7817 = vpack.c.b16 %v6797, %v6791
  %v7818 = vpack.c.b16 %v6798, %v6792
  %v7819 = vpack.c.b16 %v6799, %v6793
  %v7820 = vpack.c.b16 %v6806, %v6800
  %v7821 = vpack.c.b16 %v6807, %v6801
  %v7822 = vpack.c.b16 %v6808, %v6802
  %v7823 = vpack.c.b16 %v6809, %v6803
  %v7824 = vpack.c.b16 %v6810, %v6804
  %v7825 = vpack.c.b16 %v6811, %v6805
  %v7826 = vpack.c.b16 %v6818, %v6812
  %v7827 = vpack.c.b16 %v6819, %v6813
  %v7828 = vpack.c.b16 %v6820, %v6814
  %v7829 = vpack.c.b16 %v6821, %v6815
  %v7830 = vpack.c.b16 %v6822, %v6816
  %v7831 = vpack.c.b16 %v6823, %v6817
  %v7832 = vpack.c.b16 %v6830, %v6824
  %v7833 = vpack.c.b16 %v6831, %v6825
  %v7834 = vpack.c.b16 %v6832, %v6826
  %v7835 = vpack.c.b16 %v6833, %v6827
  %v7836 = vpack.c.b16 %v6834, %v6828
  %v7837 = vpack.c.b16 %v6835, %v6829
  %v7838 = vpack.c.b16 %v6842, %v6836
  %v7839 = vpack.c.b16 %v6843, %v6837
  %v7840 = vpack.c.b16 %v6844, %v6838
  %v7841 = vpack.c.b16 %v6845, %v6839
  %v7842 = vpack.c.b16 %v6846, %v6840
  %v7843 = vpack.c.b16 %v6847, %v6841
  %v7844 = vpack.c.b16 %v6854, %v6848
  %v7845 = vpack.c.b16 %v6855, %v6849
  %v7846 = vpack.c.b16 %v6856, %v6850
  %v7847 = vpack.c.b16 %v6857, %v6851
  %v7848 = vpack.c.b16 %v6858, %v6852
  %v7849 = vpack.c.b16 %v6859, %v6853
  %v7850 = vpack.c.b16 %v6866, %v6860
  %v7851 = vpack.c.b16 %v6867, %v6861
  %v7852 = vpack.c.b16 %v6868, %v6862
  %v7853 = vpack.c.b16 %v6869, %v6863
  %v7854 = vpack.c.b16 %v6870, %v6864
  %v7855 = vpack.c.b16 %v6871, %v6865
  %v7856 = vpack.c.b16 %v6878, %v6872
  %v7857 = vpack.c.b16 %v6879, %v6873
  %v7858 = vpack.c.b16 %v6880, %v6874
  %v7859 = vpack.c.b16 %v6881, %v6875
  %v7860 = vpack.c.b16 %v6882, %v6876
  %v7861 = vpack.c.b16 %v6883, %v6877
  %v7862 = vpack.c.b16 %v6890, %v6884
  %v7863 = vpack.c.b16 %v6891, %v6885
  %v7864 = vpack.c.b16 %v6892, %v6886
  %v7865 = vpack.c.b16 %v6893, %v6887
  %v7866 = vpack.c.b16 %v6894, %v6888
  %v7867 = vpack.c.b16 %v6895, %v6889
  %v7868 = vpack.c.b16 %v6902, %v6896
  %v7869 = vpack.c.b16 %v6903, %v6897
  %v7870 = vpack.c.b16 %v6904, %v6898
  %v7871 = vpack.c.b16 %v6905, %v6899
  %v7872 = vpack.c.b16 %v6906, %v6900
  %v7873 = vpack.c.b16 %v6907, %v6901
  %v7874 = vpack.c.b16 %v6914, %v6908
  %v7875 = vpack.c.b16 %v6915, %v6909
  %v7876 = vpack.c.b16 %v6916, %v6910
  %v7877 = vpack.c.b16 %v6917, %v6911
  %v7878 = vpack.c.b16 %v6918, %v6912
  %v7879 = vpack.c.b16 %v6919, %v6913
  %v7880 = vpack.c.b16 %v6926, %v6920
  %v7881 = vpack.c.b16 %v6927, %v6921
  %v7882 = vpack.c.b16 %v6928, %v6922
  %v7883 = vpack.c.b16 %v6929, %v6923
  %v7884 = vpack.c.b16 %v6930, %v6924
  %v7885 = vpack.c.b16 %v6931, %v6925
  %v7886 = vpack.c.b16 %v6938, %v6932
  %v7887 = vpack.c.b16 %v6939, %v6933
  %v7888 = vpack.c.b16 %v6940, %v6934
  %v7889 = vpack.c.b16 %v6941, %v6935
  %v7890 = vpack.c.b16 %v6942, %v6936
  %v7891 = vpack.c.b16 %v6943, %v6937
  %v7892 = vpack.c.b16 %v6950, %v6944
  %v7893 = vpack.c.b16 %v6951, %v6945
  %v7894 = vpack.c.b16 %v6952, %v6946
  %v7895 = vpack.c.b16 %v6953, %v6947
  %v7896 = vpack.c.b16 %v6954, %v6948
  %v7897 = vpack.c.b16 %v6955, %v6949
  %v7898 = vpack.c.b16 %v6962, %v6956
  %v7899 = vpack.c.b16 %v6963, %v6957
  %v7900 = vpack.c.b16 %v6964, %v6958
  %v7901 = vpack.c.b16 %v6965, %v6959
  %v7902 = vpack.c.b16 %v6966, %v6960
  %v7903 = vpack.c.b16 %v6967, %v6961
  %v7904 = vpack.c.b16 %v6974, %v6968
  %v7905 = vpack.c.b16 %v6975, %v6969
  %v7906 = vpack.c.b16 %v6976, %v6970
  %v7907 = vpack.c.b16 %v6977, %v6971
  %v7908 = vpack.c.b16 %v6978, %v6972
  %v7909 = vpack.c.b16 %v6979, %v6973
  %v7910 = vpack.c.b16 %v6986, %v6980
  %v7911 = vpack.c.b16 %v6987, %v6981
  %v7912 = vpack.c.b16 %v6988, %v6982
  %v7913 = vpack.c.b16 %v6989, %v6983
  %v7914 = vpack.c.b16 %v6990, %v6984
  %v7915 = vpack.c.b16 %v6991, %v6985
  %v7916 = vpack.c.b16 %v6998, %v6992
  %v7917 = vpack.c.b16 %v6999, %v6993
  %v7918 = vpack.c.b16 %v7000, %v6994
  %v7919 = vpack.c.b16 %v7001, %v6995
  %v7920 = vpack.c.b16 %v7002, %v6996
  %v7921 = vpack.c.b16 %v7003, %v6997
  %v7922 = vpack.c.b16 %v7010, %v7004
  %v7923 = vpack.c.b16 %v7011, %v7005
  %v7924 = vpack.c.b16 %v7012, %v7006
  %v7925 = vpack.c.b16 %v7013, %v7007
  %v7926 = vpack.c.b16 %v7014, %v7008
  %v7927 = vpack.c.b16 %v7015, %v7009
  %v7928 = vpack.c.b16 %v7022, %v7016
  %v7929 = vpack.c.b16 %v7023, %v7017
  %v7930 = vpack.c.b16 %v7024, %v7018
  %v7931 = vpack.c.b16 %v7025, %v7019
  %v7932 = vpack.c.b16 %v7026, %v7020
  %v7933 = vpack.c.b16 %v7027, %v7021
  %v7934 = vpack.c.b16 %v7034, %v7028
  %v7935 = vpack.c.b16 %v7035, %v7029
  %v7936 = vpack.c.b16 %v7036, %v7030
  %v7937 = vpack.c.b16 %v7037, %v7031
  %v7938 = vpack.c.b16 %v7038, %v7032
  %v7939 = vpack.c.b16 %v7039, %v7033
  %v7940 = vpack.c.b16 %v7046, %v7040
  %v7941 = vpack.c.b16 %v7047, %v7041
  %v7942 = vpack.c.b16 %v7048, %v7042
  %v7943 = vpack.c.b16 %v7049, %v7043
  %v7944 = vpack.c.b16 %v7050, %v7044
  %v7945 = vpack.c.b16 %v7051, %v7045
  %v7946 = vpack.c.b16 %v7058, %v7052
  %v7947 = vpack.c.b16 %v7059, %v7053
  %v7948 = vpack.c.b16 %v7060, %v7054
  %v7949 = vpack.c.b16 %v7061, %v7055
  %v7950 = vpack.c.b16 %v7062, %v7056
  %v7951 = vpack.c.b16 %v7063, %v7057
  %v7952 = vpack.c.b16 %v7070, %v7064
  %v7953 = vpack.c.b16 %v7071, %v7065
  %v7954 = vpack.c.b16 %v7072, %v7066
  %v7955 = vpack.c.b16 %v7073, %v7067
  %v7956 = vpack.c.b16 %v7074, %v7068
  %v7957 = vpack.c.b16 %v7075, %v7069
  %v7958 = vpack.c.b16 %v7082, %v7076
  %v7959 = vpack.c.b16 %v7083, %v7077
  %v7960 = vpack.c.b16 %v7084, %v7078
  %v7961 = vpack.c.b16 %v7085, %v7079
  %v7962 = vpack.c.b16 %v7086, %v7080
  %v7963 = vpack.c.b16 %v7087, %v7081
  %v7964 = vpack.c.b16 %v7094, %v7088
  %v7965 = vpack.c.b16 %v7095, %v7089
  %v7966 = vpack.c.b16 %v7096, %v7090
  %v7967 = vpack.c.b16 %v7097, %v7091
  %v7968 = vpack.c.b16 %v7098, %v7092
  %v7969 = vpack.c.b16 %v7099, %v7093
  %v7970 = vpack.c.b16 %v7106, %v7100
  %v7971 = vpack.c.b16 %v7107, %v7101
  %v7972 = vpack.c.b16 %v7108, %v7102
  %v7973 = vpack.c.b16 %v7109, %v7103
  %v7974 = vpack.c.b16 %v7110, %v7104
  %v7975 = vpack.c.b16 %v7111, %v7105
  %v7976 = vpack.c.b16 %v7118, %v7112
  %v7977 = vpack.c.b16 %v7119, %v7113
  %v7978 = vpack.c.b16 %v7120, %v7114
  %v7979 = vpack.c.b16 %v7121, %v7115
  %v7980 = vpack.c.b16 %v7122, %v7116
  %v7981 = vpack.c.b16 %v7123, %v7117
  %v7982 = vpack.c.b16 %v7130, %v7124
  %v7983 = vpack.c.b16 %v7131, %v7125
  %v7984 = vpack.c.b16 %v7132, %v7126
  %v7985 = vpack.c.b16 %v7133, %v7127
  %v7986 = vpack.c.b16 %v7134, %v7128
  %v7987 = vpack.c.b16 %v7135, %v7129
  %v7988 = vpack.c.b16 %v7142, %v7136
  %v7989 = vpack.c.b16 %v7143, %v7137
  %v7990 = vpack.c.b16 %v7144, %v7138
  %v7991 = vpack.c.b16 %v7145, %v7139
  %v7992 = vpack.c.b16 %v7146, %v7140
  %v7993 = vpack.c.b16 %v7147, %v7141
  %v7994 = vpack.c.b16 %v7154, %v7148
  %v7995 = vpack.c.b16 %v7155, %v7149
  %v7996 = vpack.c.b16 %v7156, %v7150
  %v7997 = vpack.c.b16 %v7157, %v7151
  %v7998 = vpack.c.b16 %v7158, %v7152
  %v7999 = vpack.c.b16 %v7159, %v7153
  %v8000 = vpack.c.b16 %v7166, %v7160
  %v8001 = vpack.c.b16 %v7167, %v7161
  %v8002 = vpack.c.b16 %v7168, %v7162
  %v8003 = vpack.c.b16 %v7169, %v7163
  %v8004 = vpack.c.b16 %v7170, %v7164
  %v8005 = vpack.c.b16 %v7171, %v7165
  %v8006 = vpack.c.b16 %v7178, %v7172
  %v8007 = vpack.c.b16 %v7179, %v7173
  %v8008 = vpack.c.b16 %v7180, %v7174
  %v8009 = vpack.c.b16 %v7181, %v7175
  %v8010 = vpack.c.b16 %v7182, %v7176
  %v8011 = vpack.c.b16 %v7183, %v7177
  %v8012 = vpack.c.b16 %v7190, %v7184
  %v8013 = vpack.c.b16 %v7191, %v7185
  %v8014 = vpack.c.b16 %v7192, %v7186
  %v8015 = vpack.c.b16 %v7193, %v7187
  %v8016 = vpack.c.b16 %v7194, %v7188
  %v8017 = vpack.c.b16 %v7195, %v7189
  %v8018 = vpack.c.b16 %v7202, %v7196
  %v8019 = vpack.c.b16 %v7203, %v7197
  %v8020 = vpack.c.b16 %v7204, %v7198
  %v8021 = vpack.c.b16 %v7205, %v7199
  %v8022 = vpack.c.b16 %v7206, %v7200
  %v8023 = vpack.c.b16 %v7207, %v7201
  %v8024 = vpack.c.b16 %v7214, %v7208
  %v8025 = vpack.c.b16 %v7215, %v7209
  %v8026 = vpack.c.b16 %v7216, %v7210
  %v8027 = vpack.c.b16 %v7217, %v7211
  %v8028 = vpack.c.b16 %v7218, %v7212
  %v8029 = vpack.c.b16 %v7219, %v7213
  %v8030 = vpack.c.b16 %v7226, %v7220
  %v8031 = vpack.c.b16 %v7227, %v7221
  %v8032 = vpack.c.b16 %v7228, %v7222
  %v8033 = vpack.c.b16 %v7229, %v7223
  %v8034 = vpack.c.b16 %v7230, %v7224
  %v8035 = vpack.c.b16 %v7231, %v7225
  %v8036 = vpack.c.b16 %v7238, %v7232
  %v8037 = vpack.c.b16 %v7239, %v7233
  %v8038 = vpack.c.b16 %v7240, %v7234
  %v8039 = vpack.c.b16 %v7241, %v7235
  %v8040 = vpack.c.b16 %v7242, %v7236
  %v8041 = vpack.c.b16 %v7243, %v7237
  %v8042 = vpack.c.b16 %v7250, %v7244
  %v8043 = vpack.c.b16 %v7251, %v7245
  %v8044 = vpack.c.b16 %v7252, %v7246
  %v8045 = vpack.c.b16 %v7253, %v7247
  %v8046 = vpack.c.b16 %v7254, %v7248
  %v8047 = vpack.c.b16 %v7255, %v7249
  %v8048 = vpack.c.b16 %v7262, %v7256
  %v8049 = vpack.c.b16 %v7263, %v7257
  %v8050 = vpack.c.b16 %v7264, %v7258
  %v8051 = vpack.c.b16 %v7265, %v7259
  %v8052 = vpack.c.b16 %v7266, %v7260
  %v8053 = vpack.c.b16 %v7267, %v7261
  %v8054 = vpack.c.b16 %v7274, %v7268
  %v8055 = vpack.c.b16 %v7275, %v7269
  %v8056 = vpack.c.b16 %v7276, %v7270
  %v8057 = vpack.c.b16 %v7277, %v7271
  %v8058 = vpack.c.b16 %v7278, %v7272
  %v8059 = vpack.c.b16 %v7279, %v7273
  %v8060 = vpack.c.b16 %v7286, %v7280
  %v8061 = vpack.c.b16 %v7287, %v7281
  %v8062 = vpack.c.b16 %v7288, %v7282
  %v8063 = vpack.c.b16 %v7289, %v7283
  %v8064 = vpack.c.b16 %v7290, %v7284
  %v8065 = vpack.c.b16 %v7291, %v7285
  %v8066 = vpack.c.b16 %v7298, %v7292
  %v8067 = vpack.c.b16 %v7299, %v7293
  %v8068 = vpack.c.b16 %v7300, %v7294
  %v8069 = vpack.c.b16 %v7301, %v7295
  %v8070 = vpack.c.b16 %v7302, %v7296
  %v8071 = vpack.c.b16 %v7303, %v7297
  %v8072 = vpack.c.b16 %v7310, %v7304
  %v8073 = vpack.c.b16 %v7311, %v7305
  %v8074 = vpack.c.b16 %v7312, %v7306
  %v8075 = vpack.c.b16 %v7313, %v7307
  %v8076 = vpack.c.b16 %v7314, %v7308
  %v8077 = vpack.c.b16 %v7315, %v7309
  %v8078 = vpack.c.b16 %v7322, %v7316
  %v8079 = vpack.c.b16 %v7323, %v7317
  %v8080 = vpack.c.b16 %v7324, %v7318
  %v8081 = vpack.c.b16 %v7325, %v7319
  %v8082 = vpack.c.b16 %v7326, %v7320
  %v8083 = vpack.c.b16 %v7327, %v7321
  %v8084 = vpack.c.b16 %v7334, %v7328
  %v8085 = vpack.c.b16 %v7335, %v7329
  %v8086 = vpack.c.b16 %v7336, %v7330
  %v8087 = vpack.c.b16 %v7337, %v7331
  %v8088 = vpack.c.b16 %v7338, %v7332
  %v8089 = vpack.c.b16 %v7339, %v7333
  %v8090 = vpack.c.b16 %v7346, %v7340
  %v8091 = vpack.c.b16 %v7347, %v7341
  %v8092 = vpack.c.b16 %v7348, %v7342
  %v8093 = vpack.c.b16 %v7349, %v7343
  %v8094 = vpack.c.b16 %v7350, %v7344
  %v8095 = vpack.c.b16 %v7351, %v7345
  %v8096 = vpack.c.b16 %v7358, %v7352
  %v8097 = vpack.c.b16 %v7359, %v7353
  %v8098 = vpack.c.b16 %v7360, %v7354
  %v8099 = vpack.c.b16 %v7361, %v7355
  %v8100 = vpack.c.b16 %v7362, %v7356
  %v8101 = vpack.c.b16 %v7363, %v7357
  %v8102 = vpack.c.b16 %v7370, %v7364
  %v8103 = vpack.c.b16 %v7371, %v7365
  %v8104 = vpack.c.b16 %v7372, %v7366
  %v8105 = vpack.c.b16 %v7373, %v7367
  %v8106 = vpack.c.b16 %v7374, %v7368
  %v8107 = vpack.c.b16 %v7375, %v7369
  %v8108 = vpack.c.b16 %v7382, %v7376
  %v8109 = vpack.c.b16 %v7383, %v7377
  %v8110 = vpack.c.b16 %v7384, %v7378
  %v8111 = vpack.c.b16 %v7385, %v7379
  %v8112 = vpack.c.b16 %v7386, %v7380
  %v8113 = vpack.c.b16 %v7387, %v7381
  %v8114 = vpack.c.b16 %v7394, %v7388
  %v8115 = vpack.c.b16 %v7395, %v7389
  %v8116 = vpack.c.b16 %v7396, %v7390
  %v8117 = vpack.c.b16 %v7397, %v7391
  %v8118 = vpack.c.b16 %v7398, %v7392
  %v8119 = vpack.c.b16 %v7399, %v7393
  %8840 = vmatprep.subr.bf16.mxu0 %v7443
  %8841 = vmatpush1.bf16.msra.mxu0 %v7442
  %8842 = vmatprep.subr.bf16.mxu0 %v7437
  %8843 = vmatpush1.bf16.msra.mxu0 %v7436
  %8844 = vmatprep.subr.bf16.mxu0 %v7431
  %8845 = vmatpush1.bf16.msra.mxu0 %v7430
  %8846 = vmatprep.subr.bf16.mxu0 %v7425
  %8847 = vmatpush1.bf16.msra.mxu0 %v7424
  %8848 = vmatprep.subr.bf16.mxu0 %v7419
  %8849 = vmatpush1.bf16.msra.mxu0 %v7418
  %8850 = vmatprep.subr.bf16.mxu0 %v7413
  %8851 = vmatpush1.bf16.msra.mxu0 %v7412
  %8852 = vmatprep.subr.bf16.mxu0 %v7407
  %8853 = vmatpush1.bf16.msra.mxu0 %v7406
  %8854 = vmatprep.subr.bf16.mxu0 %v7401
  %8855 = vmatpush1.bf16.msra.mxu0 %v7400
  %8856 = vmatprep.subr.bf16.mxu0 %v7491
  %8857 = vmatpush2.bf16.msra.mxu0 %v7490
  %8858 = vmatprep.subr.bf16.mxu0 %v7485
  %8859 = vmatpush2.bf16.msra.mxu0 %v7484
  %8860 = vmatprep.subr.bf16.mxu0 %v7479
  %8861 = vmatpush2.bf16.msra.mxu0 %v7478
  %8862 = vmatprep.subr.bf16.mxu0 %v7473
  %8863 = vmatpush2.bf16.msra.mxu0 %v7472
  %8864 = vmatprep.subr.bf16.mxu0 %v7467
  %8865 = vmatpush2.bf16.msra.mxu0 %v7466
  %8866 = vmatprep.subr.bf16.mxu0 %v7461
  %8867 = vmatpush2.bf16.msra.mxu0 %v7460
  %8868 = vmatprep.subr.bf16.mxu0 %v7455
  %8869 = vmatpush2.bf16.msra.mxu0 %v7454
  %8870 = vmatprep.subr.bf16.mxu0 %v7449
  %8871 = vmatpush2.bf16.msra.mxu0 %v7448
  %8872 = vmatprep.mubr.bf16.mxu0 %v4316
  %8873 = vmatmul.mubr.bf16.gmra.mxu0 %v4315
  %v8874 = vpop.f32.mrf.mxu0
  %v8875 = vadd.f32 0.0, %v8874
  %v8876 = vpop.f32.mrf.mxu0
  %v8877 = vadd.f32 0.0, %v8876
  %v8878 = vpop.f32.mrf.mxu0
  %v8879 = vadd.f32 0.0, %v8878
  %v8880 = vpop.f32.mrf.mxu0
  %v8881 = vadd.f32 0.0, %v8880
  %8882 = vmatprep.mubr.bf16.mxu0 %v5169
  %8883 = vmatmul.mubr.bf16.gmra.mxu0 %v5168
  %v8884 = vpop.f32.mrf.mxu0
  %v8885 = vadd.f32 0.0, %v8884
  %v8886 = vpop.f32.mrf.mxu0
  %v8887 = vadd.f32 0.0, %v8886
  %v8888 = vpop.f32.mrf.mxu0
  %v8889 = vadd.f32 0.0, %v8888
  %v8890 = vpop.f32.mrf.mxu0
  %v8891 = vadd.f32 0.0, %v8890
  %8892 = vmatprep.mubr.bf16.mxu0 %v5184
  %8893 = vmatmul.mubr.bf16.gmra.mxu0 %v5183
  %v8894 = vpop.f32.mrf.mxu0
  %v8895 = vadd.f32 0.0, %v8894
  %v8896 = vpop.f32.mrf.mxu0
  %v8897 = vadd.f32 0.0, %v8896
  %v8898 = vpop.f32.mrf.mxu0
  %v8899 = vadd.f32 0.0, %v8898
  %v8900 = vpop.f32.mrf.mxu0
  %v8901 = vadd.f32 0.0, %v8900
  %8902 = vdwg.mxu0
  %8903 = vmatprep.subr.bf16.mxu0 %v7539
  %8904 = vmatpush1.bf16.msra.mxu0 %v7538
  %8905 = vmatprep.subr.bf16.mxu0 %v7533
  %8906 = vmatpush1.bf16.msra.mxu0 %v7532
  %8907 = vmatprep.subr.bf16.mxu0 %v7527
  %8908 = vmatpush1.bf16.msra.mxu0 %v7526
  %8909 = vmatprep.subr.bf16.mxu0 %v7521
  %8910 = vmatpush1.bf16.msra.mxu0 %v7520
  %8911 = vmatprep.subr.bf16.mxu0 %v7515
  %8912 = vmatpush1.bf16.msra.mxu0 %v7514
  %8913 = vmatprep.subr.bf16.mxu0 %v7509
  %8914 = vmatpush1.bf16.msra.mxu0 %v7508
  %8915 = vmatprep.subr.bf16.mxu0 %v7503
  %8916 = vmatpush1.bf16.msra.mxu0 %v7502
  %8917 = vmatprep.subr.bf16.mxu0 %v7497
  %8918 = vmatpush1.bf16.msra.mxu0 %v7496
  %8919 = vmatprep.subr.bf16.mxu0 %v7587
  %8920 = vmatpush2.bf16.msra.mxu0 %v7586
  %8921 = vmatprep.subr.bf16.mxu0 %v7581
  %8922 = vmatpush2.bf16.msra.mxu0 %v7580
  %8923 = vmatprep.subr.bf16.mxu0 %v7575
  %8924 = vmatpush2.bf16.msra.mxu0 %v7574
  %8925 = vmatprep.subr.bf16.mxu0 %v7569
  %8926 = vmatpush2.bf16.msra.mxu0 %v7568
  %8927 = vmatprep.subr.bf16.mxu0 %v7563
  %8928 = vmatpush2.bf16.msra.mxu0 %v7562
  %8929 = vmatprep.subr.bf16.mxu0 %v7557
  %8930 = vmatpush2.bf16.msra.mxu0 %v7556
  %8931 = vmatprep.subr.bf16.mxu0 %v7551
  %8932 = vmatpush2.bf16.msra.mxu0 %v7550
  %8933 = vmatprep.subr.bf16.mxu0 %v7545
  %8934 = vmatpush2.bf16.msra.mxu0 %v7544
  %8935 = vmatprep.mubr.bf16.mxu0 %v5156
  %8936 = vmatmul.mubr.bf16.gmra.mxu0 %v4317
  %v8937 = vpop.f32.mrf.mxu0
  %v8938 = vadd.f32 %v8875, %v8937
  %v8939 = vpop.f32.mrf.mxu0
  %v8940 = vadd.f32 %v8877, %v8939
  %v8941 = vpop.f32.mrf.mxu0
  %v8942 = vadd.f32 %v8879, %v8941
  %v8943 = vpop.f32.mrf.mxu0
  %v8944 = vadd.f32 %v8881, %v8943
  %8945 = vmatprep.mubr.bf16.mxu0 %v5171
  %8946 = vmatmul.mubr.bf16.gmra.mxu0 %v5170
  %v8947 = vpop.f32.mrf.mxu0
  %v8948 = vadd.f32 %v8885, %v8947
  %v8949 = vpop.f32.mrf.mxu0
  %v8950 = vadd.f32 %v8887, %v8949
  %v8951 = vpop.f32.mrf.mxu0
  %v8952 = vadd.f32 %v8889, %v8951
  %v8953 = vpop.f32.mrf.mxu0
  %v8954 = vadd.f32 %v8891, %v8953
  %8955 = vmatprep.mubr.bf16.mxu0 %v5186
  %8956 = vmatmul.mubr.bf16.gmra.mxu0 %v5185
  %v8957 = vpop.f32.mrf.mxu0
  %v8958 = vadd.f32 %v8895, %v8957
  %v8959 = vpop.f32.mrf.mxu0
  %v8960 = vadd.f32 %v8897, %v8959
  %v8961 = vpop.f32.mrf.mxu0
  %v8962 = vadd.f32 %v8899, %v8961
  %v8963 = vpop.f32.mrf.mxu0
  %v8964 = vadd.f32 %v8901, %v8963
  %8965 = vdwg.mxu0
  %8966 = vmatprep.subr.bf16.mxu0 %v7635
  %8967 = vmatpush1.bf16.msra.mxu0 %v7634
  %8968 = vmatprep.subr.bf16.mxu0 %v7629
  %8969 = vmatpush1.bf16.msra.mxu0 %v7628
  %8970 = vmatprep.subr.bf16.mxu0 %v7623
  %8971 = vmatpush1.bf16.msra.mxu0 %v7622
  %8972 = vmatprep.subr.bf16.mxu0 %v7617
  %8973 = vmatpush1.bf16.msra.mxu0 %v7616
  %8974 = vmatprep.subr.bf16.mxu0 %v7611
  %8975 = vmatpush1.bf16.msra.mxu0 %v7610
  %8976 = vmatprep.subr.bf16.mxu0 %v7605
  %8977 = vmatpush1.bf16.msra.mxu0 %v7604
  %8978 = vmatprep.subr.bf16.mxu0 %v7599
  %8979 = vmatpush1.bf16.msra.mxu0 %v7598
  %8980 = vmatprep.subr.bf16.mxu0 %v7593
  %8981 = vmatpush1.bf16.msra.mxu0 %v7592
  %8982 = vmatprep.subr.bf16.mxu0 %v7683
  %8983 = vmatpush2.bf16.msra.mxu0 %v7682
  %8984 = vmatprep.subr.bf16.mxu0 %v7677
  %8985 = vmatpush2.bf16.msra.mxu0 %v7676
  %8986 = vmatprep.subr.bf16.mxu0 %v7671
  %8987 = vmatpush2.bf16.msra.mxu0 %v7670
  %8988 = vmatprep.subr.bf16.mxu0 %v7665
  %8989 = vmatpush2.bf16.msra.mxu0 %v7664
  %8990 = vmatprep.subr.bf16.mxu0 %v7659
  %8991 = vmatpush2.bf16.msra.mxu0 %v7658
  %8992 = vmatprep.subr.bf16.mxu0 %v7653
  %8993 = vmatpush2.bf16.msra.mxu0 %v7652
  %8994 = vmatprep.subr.bf16.mxu0 %v7647
  %8995 = vmatpush2.bf16.msra.mxu0 %v7646
  %8996 = vmatprep.subr.bf16.mxu0 %v7641
  %8997 = vmatpush2.bf16.msra.mxu0 %v7640
  %8998 = vmatprep.mubr.bf16.mxu0 %v5158
  %8999 = vmatmul.mubr.bf16.gmra.mxu0 %v5157
  %v9000 = vpop.f32.mrf.mxu0
  %v9001 = vadd.f32 %v8938, %v9000
  %v9002 = vpop.f32.mrf.mxu0
  %v9003 = vadd.f32 %v8940, %v9002
  %v9004 = vpop.f32.mrf.mxu0
  %v9005 = vadd.f32 %v8942, %v9004
  %v9006 = vpop.f32.mrf.mxu0
  %v9007 = vadd.f32 %v8944, %v9006
  %9008 = vmatprep.mubr.bf16.mxu0 %v5173
  %9009 = vmatmul.mubr.bf16.gmra.mxu0 %v5172
  %v9010 = vpop.f32.mrf.mxu0
  %v9011 = vadd.f32 %v8948, %v9010
  %v9012 = vpop.f32.mrf.mxu0
  %v9013 = vadd.f32 %v8950, %v9012
  %v9014 = vpop.f32.mrf.mxu0
  %v9015 = vadd.f32 %v8952, %v9014
  %v9016 = vpop.f32.mrf.mxu0
  %v9017 = vadd.f32 %v8954, %v9016
  %9018 = vmatprep.mubr.bf16.mxu0 %v5188
  %9019 = vmatmul.mubr.bf16.gmra.mxu0 %v5187
  %v9020 = vpop.f32.mrf.mxu0
  %v9021 = vadd.f32 %v8958, %v9020
  %v9022 = vpop.f32.mrf.mxu0
  %v9023 = vadd.f32 %v8960, %v9022
  %v9024 = vpop.f32.mrf.mxu0
  %v9025 = vadd.f32 %v8962, %v9024
  %v9026 = vpop.f32.mrf.mxu0
  %v9027 = vadd.f32 %v8964, %v9026
  %9028 = vdwg.mxu0
  %9029 = vmatprep.subr.bf16.mxu0 %v7731
  %9030 = vmatpush1.bf16.msra.mxu0 %v7730
  %9031 = vmatprep.subr.bf16.mxu0 %v7725
  %9032 = vmatpush1.bf16.msra.mxu0 %v7724
  %9033 = vmatprep.subr.bf16.mxu0 %v7719
  %9034 = vmatpush1.bf16.msra.mxu0 %v7718
  %9035 = vmatprep.subr.bf16.mxu0 %v7713
  %9036 = vmatpush1.bf16.msra.mxu0 %v7712
  %9037 = vmatprep.subr.bf16.mxu0 %v7707
  %9038 = vmatpush1.bf16.msra.mxu0 %v7706
  %9039 = vmatprep.subr.bf16.mxu0 %v7701
  %9040 = vmatpush1.bf16.msra.mxu0 %v7700
  %9041 = vmatprep.subr.bf16.mxu0 %v7695
  %9042 = vmatpush1.bf16.msra.mxu0 %v7694
  %9043 = vmatprep.subr.bf16.mxu0 %v7689
  %9044 = vmatpush1.bf16.msra.mxu0 %v7688
  %9045 = vmatprep.subr.bf16.mxu0 %v7779
  %9046 = vmatpush2.bf16.msra.mxu0 %v7778
  %9047 = vmatprep.subr.bf16.mxu0 %v7773
  %9048 = vmatpush2.bf16.msra.mxu0 %v7772
  %9049 = vmatprep.subr.bf16.mxu0 %v7767
  %9050 = vmatpush2.bf16.msra.mxu0 %v7766
  %9051 = vmatprep.subr.bf16.mxu0 %v7761
  %9052 = vmatpush2.bf16.msra.mxu0 %v7760
  %9053 = vmatprep.subr.bf16.mxu0 %v7755
  %9054 = vmatpush2.bf16.msra.mxu0 %v7754
  %9055 = vmatprep.subr.bf16.mxu0 %v7749
  %9056 = vmatpush2.bf16.msra.mxu0 %v7748
  %9057 = vmatprep.subr.bf16.mxu0 %v7743
  %9058 = vmatpush2.bf16.msra.mxu0 %v7742
  %9059 = vmatprep.subr.bf16.mxu0 %v7737
  %9060 = vmatpush2.bf16.msra.mxu0 %v7736
  %9061 = vmatprep.mubr.bf16.mxu0 %v5160
  %9062 = vmatmul.mubr.bf16.gmra.mxu0 %v5159
  %v9063 = vpop.f32.mrf.mxu0
  %v9064 = vadd.f32 %v9001, %v9063
  %v9065 = vpop.f32.mrf.mxu0
  %v9066 = vadd.f32 %v9003, %v9065
  %v9067 = vpop.f32.mrf.mxu0
  %v9068 = vadd.f32 %v9005, %v9067
  %v9069 = vpop.f32.mrf.mxu0
  %v9070 = vadd.f32 %v9007, %v9069
  %9071 = vmatprep.mubr.bf16.mxu0 %v5175
  %9072 = vmatmul.mubr.bf16.gmra.mxu0 %v5174
  %v9073 = vpop.f32.mrf.mxu0
  %v9074 = vadd.f32 %v9011, %v9073
  %v9075 = vpop.f32.mrf.mxu0
  %v9076 = vadd.f32 %v9013, %v9075
  %v9077 = vpop.f32.mrf.mxu0
  %v9078 = vadd.f32 %v9015, %v9077
  %v9079 = vpop.f32.mrf.mxu0
  %v9080 = vadd.f32 %v9017, %v9079
  %9081 = vmatprep.mubr.bf16.mxu0 %v5190
  %9082 = vmatmul.mubr.bf16.gmra.mxu0 %v5189
  %v9083 = vpop.f32.mrf.mxu0
  %v9084 = vadd.f32 %v9021, %v9083
  %v9085 = vpop.f32.mrf.mxu0
  %v9086 = vadd.f32 %v9023, %v9085
  %v9087 = vpop.f32.mrf.mxu0
  %v9088 = vadd.f32 %v9025, %v9087
  %v9089 = vpop.f32.mrf.mxu0
  %v9090 = vadd.f32 %v9027, %v9089
  %9091 = vdwg.mxu0
  %9092 = vmatprep.subr.bf16.mxu0 %v7827
  %9093 = vmatpush1.bf16.msra.mxu0 %v7826
  %9094 = vmatprep.subr.bf16.mxu0 %v7821
  %9095 = vmatpush1.bf16.msra.mxu0 %v7820
  %9096 = vmatprep.subr.bf16.mxu0 %v7815
  %9097 = vmatpush1.bf16.msra.mxu0 %v7814
  %9098 = vmatprep.subr.bf16.mxu0 %v7809
  %9099 = vmatpush1.bf16.msra.mxu0 %v7808
  %9100 = vmatprep.subr.bf16.mxu0 %v7803
  %9101 = vmatpush1.bf16.msra.mxu0 %v7802
  %9102 = vmatprep.subr.bf16.mxu0 %v7797
  %9103 = vmatpush1.bf16.msra.mxu0 %v7796
  %9104 = vmatprep.subr.bf16.mxu0 %v7791
  %9105 = vmatpush1.bf16.msra.mxu0 %v7790
  %9106 = vmatprep.subr.bf16.mxu0 %v7785
  %9107 = vmatpush1.bf16.msra.mxu0 %v7784
  %9108 = vmatprep.subr.bf16.mxu0 %v7875
  %9109 = vmatpush2.bf16.msra.mxu0 %v7874
  %9110 = vmatprep.subr.bf16.mxu0 %v7869
  %9111 = vmatpush2.bf16.msra.mxu0 %v7868
  %9112 = vmatprep.subr.bf16.mxu0 %v7863
  %9113 = vmatpush2.bf16.msra.mxu0 %v7862
  %9114 = vmatprep.subr.bf16.mxu0 %v7857
  %9115 = vmatpush2.bf16.msra.mxu0 %v7856
  %9116 = vmatprep.subr.bf16.mxu0 %v7851
  %9117 = vmatpush2.bf16.msra.mxu0 %v7850
  %9118 = vmatprep.subr.bf16.mxu0 %v7845
  %9119 = vmatpush2.bf16.msra.mxu0 %v7844
  %9120 = vmatprep.subr.bf16.mxu0 %v7839
  %9121 = vmatpush2.bf16.msra.mxu0 %v7838
  %9122 = vmatprep.subr.bf16.mxu0 %v7833
  %9123 = vmatpush2.bf16.msra.mxu0 %v7832
  %9124 = vmatprep.mubr.bf16.mxu0 %v5162
  %9125 = vmatmul.mubr.bf16.gmra.mxu0 %v5161
  %v9126 = vpop.f32.mrf.mxu0
  %v9127 = vadd.f32 %v9064, %v9126
  %v9128 = vpop.f32.mrf.mxu0
  %v9129 = vadd.f32 %v9066, %v9128
  %v9130 = vpop.f32.mrf.mxu0
  %v9131 = vadd.f32 %v9068, %v9130
  %v9132 = vpop.f32.mrf.mxu0
  %v9133 = vadd.f32 %v9070, %v9132
  %9134 = vmatprep.mubr.bf16.mxu0 %v5177
  %9135 = vmatmul.mubr.bf16.gmra.mxu0 %v5176
  %v9136 = vpop.f32.mrf.mxu0
  %v9137 = vadd.f32 %v9074, %v9136
  %v9138 = vpop.f32.mrf.mxu0
  %v9139 = vadd.f32 %v9076, %v9138
  %v9140 = vpop.f32.mrf.mxu0
  %v9141 = vadd.f32 %v9078, %v9140
  %v9142 = vpop.f32.mrf.mxu0
  %v9143 = vadd.f32 %v9080, %v9142
  %9144 = vmatprep.mubr.bf16.mxu0 %v5192
  %9145 = vmatmul.mubr.bf16.gmra.mxu0 %v5191
  %v9146 = vpop.f32.mrf.mxu0
  %v9147 = vadd.f32 %v9084, %v9146
  %v9148 = vpop.f32.mrf.mxu0
  %v9149 = vadd.f32 %v9086, %v9148
  %v9150 = vpop.f32.mrf.mxu0
  %v9151 = vadd.f32 %v9088, %v9150
  %v9152 = vpop.f32.mrf.mxu0
  %v9153 = vadd.f32 %v9090, %v9152
  %9154 = vdwg.mxu0
  %9155 = vmatprep.subr.bf16.mxu0 %v7923
  %9156 = vmatpush1.bf16.msra.mxu0 %v7922
  %9157 = vmatprep.subr.bf16.mxu0 %v7917
  %9158 = vmatpush1.bf16.msra.mxu0 %v7916
  %9159 = vmatprep.subr.bf16.mxu0 %v7911
  %9160 = vmatpush1.bf16.msra.mxu0 %v7910
  %9161 = vmatprep.subr.bf16.mxu0 %v7905
  %9162 = vmatpush1.bf16.msra.mxu0 %v7904
  %9163 = vmatprep.subr.bf16.mxu0 %v7899
  %9164 = vmatpush1.bf16.msra.mxu0 %v7898
  %9165 = vmatprep.subr.bf16.mxu0 %v7893
  %9166 = vmatpush1.bf16.msra.mxu0 %v7892
  %9167 = vmatprep.subr.bf16.mxu0 %v7887
  %9168 = vmatpush1.bf16.msra.mxu0 %v7886
  %9169 = vmatprep.subr.bf16.mxu0 %v7881
  %9170 = vmatpush1.bf16.msra.mxu0 %v7880
  %9171 = vmatprep.subr.bf16.mxu0 %v7971
  %9172 = vmatpush2.bf16.msra.mxu0 %v7970
  %9173 = vmatprep.subr.bf16.mxu0 %v7965
  %9174 = vmatpush2.bf16.msra.mxu0 %v7964
  %9175 = vmatprep.subr.bf16.mxu0 %v7959
  %9176 = vmatpush2.bf16.msra.mxu0 %v7958
  %9177 = vmatprep.subr.bf16.mxu0 %v7953
  %9178 = vmatpush2.bf16.msra.mxu0 %v7952
  %9179 = vmatprep.subr.bf16.mxu0 %v7947
  %9180 = vmatpush2.bf16.msra.mxu0 %v7946
  %9181 = vmatprep.subr.bf16.mxu0 %v7941
  %9182 = vmatpush2.bf16.msra.mxu0 %v7940
  %9183 = vmatprep.subr.bf16.mxu0 %v7935
  %9184 = vmatpush2.bf16.msra.mxu0 %v7934
  %9185 = vmatprep.subr.bf16.mxu0 %v7929
  %9186 = vmatpush2.bf16.msra.mxu0 %v7928
  %9187 = vmatprep.mubr.bf16.mxu0 %v5164
  %9188 = vmatmul.mubr.bf16.gmra.mxu0 %v5163
  %v9189 = vpop.f32.mrf.mxu0
  %v9190 = vadd.f32 %v9127, %v9189
  %v9191 = vpop.f32.mrf.mxu0
  %v9192 = vadd.f32 %v9129, %v9191
  %v9193 = vpop.f32.mrf.mxu0
  %v9194 = vadd.f32 %v9131, %v9193
  %v9195 = vpop.f32.mrf.mxu0
  %v9196 = vadd.f32 %v9133, %v9195
  %9197 = vmatprep.mubr.bf16.mxu0 %v5179
  %9198 = vmatmul.mubr.bf16.gmra.mxu0 %v5178
  %v9199 = vpop.f32.mrf.mxu0
  %v9200 = vadd.f32 %v9137, %v9199
  %v9201 = vpop.f32.mrf.mxu0
  %v9202 = vadd.f32 %v9139, %v9201
  %v9203 = vpop.f32.mrf.mxu0
  %v9204 = vadd.f32 %v9141, %v9203
  %v9205 = vpop.f32.mrf.mxu0
  %v9206 = vadd.f32 %v9143, %v9205
  %9207 = vmatprep.mubr.bf16.mxu0 %v5194
  %9208 = vmatmul.mubr.bf16.gmra.mxu0 %v5193
  %v9209 = vpop.f32.mrf.mxu0
  %v9210 = vadd.f32 %v9147, %v9209
  %v9211 = vpop.f32.mrf.mxu0
  %v9212 = vadd.f32 %v9149, %v9211
  %v9213 = vpop.f32.mrf.mxu0
  %v9214 = vadd.f32 %v9151, %v9213
  %v9215 = vpop.f32.mrf.mxu0
  %v9216 = vadd.f32 %v9153, %v9215
  %9217 = vdwg.mxu0
  %9218 = vmatprep.subr.bf16.mxu0 %v8019
  %9219 = vmatpush1.bf16.msra.mxu0 %v8018
  %9220 = vmatprep.subr.bf16.mxu0 %v8013
  %9221 = vmatpush1.bf16.msra.mxu0 %v8012
  %9222 = vmatprep.subr.bf16.mxu0 %v8007
  %9223 = vmatpush1.bf16.msra.mxu0 %v8006
  %9224 = vmatprep.subr.bf16.mxu0 %v8001
  %9225 = vmatpush1.bf16.msra.mxu0 %v8000
  %9226 = vmatprep.subr.bf16.mxu0 %v7995
  %9227 = vmatpush1.bf16.msra.mxu0 %v7994
  %9228 = vmatprep.subr.bf16.mxu0 %v7989
  %9229 = vmatpush1.bf16.msra.mxu0 %v7988
  %9230 = vmatprep.subr.bf16.mxu0 %v7983
  %9231 = vmatpush1.bf16.msra.mxu0 %v7982
  %9232 = vmatprep.subr.bf16.mxu0 %v7977
  %9233 = vmatpush1.bf16.msra.mxu0 %v7976
  %9234 = vmatprep.subr.bf16.mxu0 %v8067
  %9235 = vmatpush2.bf16.msra.mxu0 %v8066
  %9236 = vmatprep.subr.bf16.mxu0 %v8061
  %9237 = vmatpush2.bf16.msra.mxu0 %v8060
  %9238 = vmatprep.subr.bf16.mxu0 %v8055
  %9239 = vmatpush2.bf16.msra.mxu0 %v8054
  %9240 = vmatprep.subr.bf16.mxu0 %v8049
  %9241 = vmatpush2.bf16.msra.mxu0 %v8048
  %9242 = vmatprep.subr.bf16.mxu0 %v8043
  %9243 = vmatpush2.bf16.msra.mxu0 %v8042
  %9244 = vmatprep.subr.bf16.mxu0 %v8037
  %9245 = vmatpush2.bf16.msra.mxu0 %v8036
  %9246 = vmatprep.subr.bf16.mxu0 %v8031
  %9247 = vmatpush2.bf16.msra.mxu0 %v8030
  %9248 = vmatprep.subr.bf16.mxu0 %v8025
  %9249 = vmatpush2.bf16.msra.mxu0 %v8024
  %9250 = vmatprep.mubr.bf16.mxu0 %v5166
  %9251 = vmatmul.mubr.bf16.gmra.mxu0 %v5165
  %v9252 = vpop.f32.mrf.mxu0
  %v9253 = vadd.f32 %v9190, %v9252
  %v9254 = vpop.f32.mrf.mxu0
  %v9255 = vadd.f32 %v9192, %v9254
  %v9256 = vpop.f32.mrf.mxu0
  %v9257 = vadd.f32 %v9194, %v9256
  %v9258 = vpop.f32.mrf.mxu0
  %v9259 = vadd.f32 %v9196, %v9258
  %9260 = vmatprep.mubr.bf16.mxu0 %v5181
  %9261 = vmatmul.mubr.bf16.gmra.mxu0 %v5180
  %v9262 = vpop.f32.mrf.mxu0
  %v9263 = vadd.f32 %v9200, %v9262
  %v9264 = vpop.f32.mrf.mxu0
  %v9265 = vadd.f32 %v9202, %v9264
  %v9266 = vpop.f32.mrf.mxu0
  %v9267 = vadd.f32 %v9204, %v9266
  %v9268 = vpop.f32.mrf.mxu0
  %v9269 = vadd.f32 %v9206, %v9268
  %9270 = vmatprep.mubr.bf16.mxu0 %v4325
  %9271 = vmatmul.mubr.bf16.gmra.mxu0 %v4324
  %v9272 = vpop.f32.mrf.mxu0
  %v9273 = vadd.f32 %v9210, %v9272
  %v9274 = vpop.f32.mrf.mxu0
  %v9275 = vadd.f32 %v9212, %v9274
  %v9276 = vpop.f32.mrf.mxu0
  %v9277 = vadd.f32 %v9214, %v9276
  %v9278 = vpop.f32.mrf.mxu0
  %v9279 = vadd.f32 %v9216, %v9278
  %9280 = vdwg.mxu0
  %9281 = vmatprep.subr.bf16.mxu0 %v8115
  %9282 = vmatpush1.bf16.msra.mxu0 %v8114
  %9283 = vmatprep.subr.bf16.mxu0 %v8109
  %9284 = vmatpush1.bf16.msra.mxu0 %v8108
  %9285 = vmatprep.subr.bf16.mxu0 %v8103
  %9286 = vmatpush1.bf16.msra.mxu0 %v8102
  %9287 = vmatprep.subr.bf16.mxu0 %v8097
  %9288 = vmatpush1.bf16.msra.mxu0 %v8096
  %9289 = vmatprep.subr.bf16.mxu0 %v8091
  %9290 = vmatpush1.bf16.msra.mxu0 %v8090
  %9291 = vmatprep.subr.bf16.mxu0 %v8085
  %9292 = vmatpush1.bf16.msra.mxu0 %v8084
  %9293 = vmatprep.subr.bf16.mxu0 %v8079
  %9294 = vmatpush1.bf16.msra.mxu0 %v8078
  %9295 = vmatprep.subr.bf16.mxu0 %v8073
  %9296 = vmatpush1.bf16.msra.mxu0 %v8072
  %9297 = vmatprep.subr.bf16.mxu0 0
  %9298 = vmatpush2.bf16.msra.mxu0 0
  %9299 = vmatprep.subr.bf16.mxu0 0
  %9300 = vmatpush2.bf16.msra.mxu0 0
  %9301 = vmatprep.subr.bf16.mxu0 0
  %9302 = vmatpush2.bf16.msra.mxu0 0
  %9303 = vmatprep.subr.bf16.mxu0 0
  %9304 = vmatpush2.bf16.msra.mxu0 0
  %9305 = vmatprep.subr.bf16.mxu0 0
  %9306 = vmatpush2.bf16.msra.mxu0 0
  %9307 = vmatprep.subr.bf16.mxu0 0
  %9308 = vmatpush2.bf16.msra.mxu0 0
  %9309 = vmatprep.subr.bf16.mxu0 0
  %9310 = vmatpush2.bf16.msra.mxu0 0
  %9311 = vmatprep.subr.bf16.mxu0 0
  %9312 = vmatpush2.bf16.msra.mxu0 0
  %9313 = vmatprep.mubr.bf16.mxu0 0
  %9314 = vmatmul.mubr.bf16.gmra.mxu0 %v5167
  %v9315 = vpop.f32.mrf.mxu0
  %v9316 = vadd.f32 %v9253, %v9315
  %v9317 = vpop.f32.mrf.mxu0
  %v9318 = vadd.f32 %v9255, %v9317
  %v9319 = vpop.f32.mrf.mxu0
  %v9320 = vadd.f32 %v9257, %v9319
  %v9321 = vpop.f32.mrf.mxu0
  %v9322 = vadd.f32 %v9259, %v9321
  %9323 = vmatprep.mubr.bf16.mxu0 0
  %9324 = vmatmul.mubr.bf16.gmra.mxu0 %v5182
  %v9325 = vpop.f32.mrf.mxu0
  %v9326 = vadd.f32 %v9263, %v9325
  %v9327 = vpop.f32.mrf.mxu0
  %v9328 = vadd.f32 %v9265, %v9327
  %v9329 = vpop.f32.mrf.mxu0
  %v9330 = vadd.f32 %v9267, %v9329
  %v9331 = vpop.f32.mrf.mxu0
  %v9332 = vadd.f32 %v9269, %v9331
  %9333 = vmatprep.mubr.bf16.mxu0 0
  %9334 = vmatmul.mubr.bf16.gmra.mxu0 %v4326
  %v9335 = vpop.f32.mrf.mxu0
  %v9336 = vadd.f32 %v9273, %v9335
  %v9337 = vpop.f32.mrf.mxu0
  %v9338 = vadd.f32 %v9275, %v9337
  %v9339 = vpop.f32.mrf.mxu0
  %v9340 = vadd.f32 %v9277, %v9339
  %v9341 = vpop.f32.mrf.mxu0
  %v9342 = vadd.f32 %v9279, %v9341
  %9343 = vdwg.mxu0
  %9344 = vmatprep.subr.bf16.mxu0 %v7445
  %9345 = vmatpush1.bf16.msra.mxu0 %v7444
  %9346 = vmatprep.subr.bf16.mxu0 %v7439
  %9347 = vmatpush1.bf16.msra.mxu0 %v7438
  %9348 = vmatprep.subr.bf16.mxu0 %v7433
  %9349 = vmatpush1.bf16.msra.mxu0 %v7432
  %9350 = vmatprep.subr.bf16.mxu0 %v7427
  %9351 = vmatpush1.bf16.msra.mxu0 %v7426
  %9352 = vmatprep.subr.bf16.mxu0 %v7421
  %9353 = vmatpush1.bf16.msra.mxu0 %v7420
  %9354 = vmatprep.subr.bf16.mxu0 %v7415
  %9355 = vmatpush1.bf16.msra.mxu0 %v7414
  %9356 = vmatprep.subr.bf16.mxu0 %v7409
  %9357 = vmatpush1.bf16.msra.mxu0 %v7408
  %9358 = vmatprep.subr.bf16.mxu0 %v7403
  %9359 = vmatpush1.bf16.msra.mxu0 %v7402
  %9360 = vmatprep.subr.bf16.mxu0 %v7493
  %9361 = vmatpush2.bf16.msra.mxu0 %v7492
  %9362 = vmatprep.subr.bf16.mxu0 %v7487
  %9363 = vmatpush2.bf16.msra.mxu0 %v7486
  %9364 = vmatprep.subr.bf16.mxu0 %v7481
  %9365 = vmatpush2.bf16.msra.mxu0 %v7480
  %9366 = vmatprep.subr.bf16.mxu0 %v7475
  %9367 = vmatpush2.bf16.msra.mxu0 %v7474
  %9368 = vmatprep.subr.bf16.mxu0 %v7469
  %9369 = vmatpush2.bf16.msra.mxu0 %v7468
  %9370 = vmatprep.subr.bf16.mxu0 %v7463
  %9371 = vmatpush2.bf16.msra.mxu0 %v7462
  %9372 = vmatprep.subr.bf16.mxu0 %v7457
  %9373 = vmatpush2.bf16.msra.mxu0 %v7456
  %9374 = vmatprep.subr.bf16.mxu0 %v7451
  %9375 = vmatpush2.bf16.msra.mxu0 %v7450
  %9376 = vmatprep.mubr.bf16.mxu0 %v4316
  %9377 = vmatmul.mubr.bf16.gmra.mxu0 %v4315
  %v9378 = vpop.f32.mrf.mxu0
  %v9379 = vadd.f32 0.0, %v9378
  %v9380 = vpop.f32.mrf.mxu0
  %v9381 = vadd.f32 0.0, %v9380
  %v9382 = vpop.f32.mrf.mxu0
  %v9383 = vadd.f32 0.0, %v9382
  %v9384 = vpop.f32.mrf.mxu0
  %v9385 = vadd.f32 0.0, %v9384
  %9386 = vmatprep.mubr.bf16.mxu0 %v5169
  %9387 = vmatmul.mubr.bf16.gmra.mxu0 %v5168
  %v9388 = vpop.f32.mrf.mxu0
  %v9389 = vadd.f32 0.0, %v9388
  %v9390 = vpop.f32.mrf.mxu0
  %v9391 = vadd.f32 0.0, %v9390
  %v9392 = vpop.f32.mrf.mxu0
  %v9393 = vadd.f32 0.0, %v9392
  %v9394 = vpop.f32.mrf.mxu0
  %v9395 = vadd.f32 0.0, %v9394
  %9396 = vmatprep.mubr.bf16.mxu0 %v5184
  %9397 = vmatmul.mubr.bf16.gmra.mxu0 %v5183
  %v9398 = vpop.f32.mrf.mxu0
  %v9399 = vadd.f32 0.0, %v9398
  %v9400 = vpop.f32.mrf.mxu0
  %v9401 = vadd.f32 0.0, %v9400
  %v9402 = vpop.f32.mrf.mxu0
  %v9403 = vadd.f32 0.0, %v9402
  %v9404 = vpop.f32.mrf.mxu0
  %v9405 = vadd.f32 0.0, %v9404
  %9406 = vdwg.mxu0
  %9407 = vmatprep.subr.bf16.mxu0 %v7541
  %9408 = vmatpush1.bf16.msra.mxu0 %v7540
  %9409 = vmatprep.subr.bf16.mxu0 %v7535
  %9410 = vmatpush1.bf16.msra.mxu0 %v7534
  %9411 = vmatprep.subr.bf16.mxu0 %v7529
  %9412 = vmatpush1.bf16.msra.mxu0 %v7528
  %9413 = vmatprep.subr.bf16.mxu0 %v7523
  %9414 = vmatpush1.bf16.msra.mxu0 %v7522
  %9415 = vmatprep.subr.bf16.mxu0 %v7517
  %9416 = vmatpush1.bf16.msra.mxu0 %v7516
  %9417 = vmatprep.subr.bf16.mxu0 %v7511
  %9418 = vmatpush1.bf16.msra.mxu0 %v7510
  %9419 = vmatprep.subr.bf16.mxu0 %v7505
  %9420 = vmatpush1.bf16.msra.mxu0 %v7504
  %9421 = vmatprep.subr.bf16.mxu0 %v7499
  %9422 = vmatpush1.bf16.msra.mxu0 %v7498
  %9423 = vmatprep.subr.bf16.mxu0 %v7589
  %9424 = vmatpush2.bf16.msra.mxu0 %v7588
  %9425 = vmatprep.subr.bf16.mxu0 %v7583
  %9426 = vmatpush2.bf16.msra.mxu0 %v7582
  %9427 = vmatprep.subr.bf16.mxu0 %v7577
  %9428 = vmatpush2.bf16.msra.mxu0 %v7576
  %9429 = vmatprep.subr.bf16.mxu0 %v7571
  %9430 = vmatpush2.bf16.msra.mxu0 %v7570
  %9431 = vmatprep.subr.bf16.mxu0 %v7565
  %9432 = vmatpush2.bf16.msra.mxu0 %v7564
  %9433 = vmatprep.subr.bf16.mxu0 %v7559
  %9434 = vmatpush2.bf16.msra.mxu0 %v7558
  %9435 = vmatprep.subr.bf16.mxu0 %v7553
  %9436 = vmatpush2.bf16.msra.mxu0 %v7552
  %9437 = vmatprep.subr.bf16.mxu0 %v7547
  %9438 = vmatpush2.bf16.msra.mxu0 %v7546
  %9439 = vmatprep.mubr.bf16.mxu0 %v5156
  %9440 = vmatmul.mubr.bf16.gmra.mxu0 %v4317
  %v9441 = vpop.f32.mrf.mxu0
  %v9442 = vadd.f32 %v9379, %v9441
  %v9443 = vpop.f32.mrf.mxu0
  %v9444 = vadd.f32 %v9381, %v9443
  %v9445 = vpop.f32.mrf.mxu0
  %v9446 = vadd.f32 %v9383, %v9445
  %v9447 = vpop.f32.mrf.mxu0
  %v9448 = vadd.f32 %v9385, %v9447
  %9449 = vmatprep.mubr.bf16.mxu0 %v5171
  %9450 = vmatmul.mubr.bf16.gmra.mxu0 %v5170
  %v9451 = vpop.f32.mrf.mxu0
  %v9452 = vadd.f32 %v9389, %v9451
  %v9453 = vpop.f32.mrf.mxu0
  %v9454 = vadd.f32 %v9391, %v9453
  %v9455 = vpop.f32.mrf.mxu0
  %v9456 = vadd.f32 %v9393, %v9455
  %v9457 = vpop.f32.mrf.mxu0
  %v9458 = vadd.f32 %v9395, %v9457
  %9459 = vmatprep.mubr.bf16.mxu0 %v5186
  %9460 = vmatmul.mubr.bf16.gmra.mxu0 %v5185
  %v9461 = vpop.f32.mrf.mxu0
  %v9462 = vadd.f32 %v9399, %v9461
  %v9463 = vpop.f32.mrf.mxu0
  %v9464 = vadd.f32 %v9401, %v9463
  %v9465 = vpop.f32.mrf.mxu0
  %v9466 = vadd.f32 %v9403, %v9465
  %v9467 = vpop.f32.mrf.mxu0
  %v9468 = vadd.f32 %v9405, %v9467
  %9469 = vdwg.mxu0
  %9470 = vmatprep.subr.bf16.mxu0 %v7637
  %9471 = vmatpush1.bf16.msra.mxu0 %v7636
  %9472 = vmatprep.subr.bf16.mxu0 %v7631
  %9473 = vmatpush1.bf16.msra.mxu0 %v7630
  %9474 = vmatprep.subr.bf16.mxu0 %v7625
  %9475 = vmatpush1.bf16.msra.mxu0 %v7624
  %9476 = vmatprep.subr.bf16.mxu0 %v7619
  %9477 = vmatpush1.bf16.msra.mxu0 %v7618
  %9478 = vmatprep.subr.bf16.mxu0 %v7613
  %9479 = vmatpush1.bf16.msra.mxu0 %v7612
  %9480 = vmatprep.subr.bf16.mxu0 %v7607
  %9481 = vmatpush1.bf16.msra.mxu0 %v7606
  %9482 = vmatprep.subr.bf16.mxu0 %v7601
  %9483 = vmatpush1.bf16.msra.mxu0 %v7600
  %9484 = vmatprep.subr.bf16.mxu0 %v7595
  %9485 = vmatpush1.bf16.msra.mxu0 %v7594
  %9486 = vmatprep.subr.bf16.mxu0 %v7685
  %9487 = vmatpush2.bf16.msra.mxu0 %v7684
  %9488 = vmatprep.subr.bf16.mxu0 %v7679
  %9489 = vmatpush2.bf16.msra.mxu0 %v7678
  %9490 = vmatprep.subr.bf16.mxu0 %v7673
  %9491 = vmatpush2.bf16.msra.mxu0 %v7672
  %9492 = vmatprep.subr.bf16.mxu0 %v7667
  %9493 = vmatpush2.bf16.msra.mxu0 %v7666
  %9494 = vmatprep.subr.bf16.mxu0 %v7661
  %9495 = vmatpush2.bf16.msra.mxu0 %v7660
  %9496 = vmatprep.subr.bf16.mxu0 %v7655
  %9497 = vmatpush2.bf16.msra.mxu0 %v7654
  %9498 = vmatprep.subr.bf16.mxu0 %v7649
  %9499 = vmatpush2.bf16.msra.mxu0 %v7648
  %9500 = vmatprep.subr.bf16.mxu0 %v7643
  %9501 = vmatpush2.bf16.msra.mxu0 %v7642
  %9502 = vmatprep.mubr.bf16.mxu0 %v5158
  %9503 = vmatmul.mubr.bf16.gmra.mxu0 %v5157
  %v9504 = vpop.f32.mrf.mxu0
  %v9505 = vadd.f32 %v9442, %v9504
  %v9506 = vpop.f32.mrf.mxu0
  %v9507 = vadd.f32 %v9444, %v9506
  %v9508 = vpop.f32.mrf.mxu0
  %v9509 = vadd.f32 %v9446, %v9508
  %v9510 = vpop.f32.mrf.mxu0
  %v9511 = vadd.f32 %v9448, %v9510
  %9512 = vmatprep.mubr.bf16.mxu0 %v5173
  %9513 = vmatmul.mubr.bf16.gmra.mxu0 %v5172
  %v9514 = vpop.f32.mrf.mxu0
  %v9515 = vadd.f32 %v9452, %v9514
  %v9516 = vpop.f32.mrf.mxu0
  %v9517 = vadd.f32 %v9454, %v9516
  %v9518 = vpop.f32.mrf.mxu0
  %v9519 = vadd.f32 %v9456, %v9518
  %v9520 = vpop.f32.mrf.mxu0
  %v9521 = vadd.f32 %v9458, %v9520
  %9522 = vmatprep.mubr.bf16.mxu0 %v5188
  %9523 = vmatmul.mubr.bf16.gmra.mxu0 %v5187
  %v9524 = vpop.f32.mrf.mxu0
  %v9525 = vadd.f32 %v9462, %v9524
  %v9526 = vpop.f32.mrf.mxu0
  %v9527 = vadd.f32 %v9464, %v9526
  %v9528 = vpop.f32.mrf.mxu0
  %v9529 = vadd.f32 %v9466, %v9528
  %v9530 = vpop.f32.mrf.mxu0
  %v9531 = vadd.f32 %v9468, %v9530
  %9532 = vdwg.mxu0
  %9533 = vmatprep.subr.bf16.mxu0 %v7733
  %9534 = vmatpush1.bf16.msra.mxu0 %v7732
  %9535 = vmatprep.subr.bf16.mxu0 %v7727
  %9536 = vmatpush1.bf16.msra.mxu0 %v7726
  %9537 = vmatprep.subr.bf16.mxu0 %v7721
  %9538 = vmatpush1.bf16.msra.mxu0 %v7720
  %9539 = vmatprep.subr.bf16.mxu0 %v7715
  %9540 = vmatpush1.bf16.msra.mxu0 %v7714
  %9541 = vmatprep.subr.bf16.mxu0 %v7709
  %9542 = vmatpush1.bf16.msra.mxu0 %v7708
  %9543 = vmatprep.subr.bf16.mxu0 %v7703
  %9544 = vmatpush1.bf16.msra.mxu0 %v7702
  %9545 = vmatprep.subr.bf16.mxu0 %v7697
  %9546 = vmatpush1.bf16.msra.mxu0 %v7696
  %9547 = vmatprep.subr.bf16.mxu0 %v7691
  %9548 = vmatpush1.bf16.msra.mxu0 %v7690
  %9549 = vmatprep.subr.bf16.mxu0 %v7781
  %9550 = vmatpush2.bf16.msra.mxu0 %v7780
  %9551 = vmatprep.subr.bf16.mxu0 %v7775
  %9552 = vmatpush2.bf16.msra.mxu0 %v7774
  %9553 = vmatprep.subr.bf16.mxu0 %v7769
  %9554 = vmatpush2.bf16.msra.mxu0 %v7768
  %9555 = vmatprep.subr.bf16.mxu0 %v7763
  %9556 = vmatpush2.bf16.msra.mxu0 %v7762
  %9557 = vmatprep.subr.bf16.mxu0 %v7757
  %9558 = vmatpush2.bf16.msra.mxu0 %v7756
  %9559 = vmatprep.subr.bf16.mxu0 %v7751
  %9560 = vmatpush2.bf16.msra.mxu0 %v7750
  %9561 = vmatprep.subr.bf16.mxu0 %v7745
  %9562 = vmatpush2.bf16.msra.mxu0 %v7744
  %9563 = vmatprep.subr.bf16.mxu0 %v7739
  %9564 = vmatpush2.bf16.msra.mxu0 %v7738
  %9565 = vmatprep.mubr.bf16.mxu0 %v5160
  %9566 = vmatmul.mubr.bf16.gmra.mxu0 %v5159
  %v9567 = vpop.f32.mrf.mxu0
  %v9568 = vadd.f32 %v9505, %v9567
  %v9569 = vpop.f32.mrf.mxu0
  %v9570 = vadd.f32 %v9507, %v9569
  %v9571 = vpop.f32.mrf.mxu0
  %v9572 = vadd.f32 %v9509, %v9571
  %v9573 = vpop.f32.mrf.mxu0
  %v9574 = vadd.f32 %v9511, %v9573
  %9575 = vmatprep.mubr.bf16.mxu0 %v5175
  %9576 = vmatmul.mubr.bf16.gmra.mxu0 %v5174
  %v9577 = vpop.f32.mrf.mxu0
  %v9578 = vadd.f32 %v9515, %v9577
  %v9579 = vpop.f32.mrf.mxu0
  %v9580 = vadd.f32 %v9517, %v9579
  %v9581 = vpop.f32.mrf.mxu0
  %v9582 = vadd.f32 %v9519, %v9581
  %v9583 = vpop.f32.mrf.mxu0
  %v9584 = vadd.f32 %v9521, %v9583
  %9585 = vmatprep.mubr.bf16.mxu0 %v5190
  %9586 = vmatmul.mubr.bf16.gmra.mxu0 %v5189
  %v9587 = vpop.f32.mrf.mxu0
  %v9588 = vadd.f32 %v9525, %v9587
  %v9589 = vpop.f32.mrf.mxu0
  %v9590 = vadd.f32 %v9527, %v9589
  %v9591 = vpop.f32.mrf.mxu0
  %v9592 = vadd.f32 %v9529, %v9591
  %v9593 = vpop.f32.mrf.mxu0
  %v9594 = vadd.f32 %v9531, %v9593
  %9595 = vdwg.mxu0
  %9596 = vmatprep.subr.bf16.mxu0 %v7829
  %9597 = vmatpush1.bf16.msra.mxu0 %v7828
  %9598 = vmatprep.subr.bf16.mxu0 %v7823
  %9599 = vmatpush1.bf16.msra.mxu0 %v7822
  %9600 = vmatprep.subr.bf16.mxu0 %v7817
  %9601 = vmatpush1.bf16.msra.mxu0 %v7816
  %9602 = vmatprep.subr.bf16.mxu0 %v7811
  %9603 = vmatpush1.bf16.msra.mxu0 %v7810
  %9604 = vmatprep.subr.bf16.mxu0 %v7805
  %9605 = vmatpush1.bf16.msra.mxu0 %v7804
  %9606 = vmatprep.subr.bf16.mxu0 %v7799
  %9607 = vmatpush1.bf16.msra.mxu0 %v7798
  %9608 = vmatprep.subr.bf16.mxu0 %v7793
  %9609 = vmatpush1.bf16.msra.mxu0 %v7792
  %9610 = vmatprep.subr.bf16.mxu0 %v7787
  %9611 = vmatpush1.bf16.msra.mxu0 %v7786
  %9612 = vmatprep.subr.bf16.mxu0 %v7877
  %9613 = vmatpush2.bf16.msra.mxu0 %v7876
  %9614 = vmatprep.subr.bf16.mxu0 %v7871
  %9615 = vmatpush2.bf16.msra.mxu0 %v7870
  %9616 = vmatprep.subr.bf16.mxu0 %v7865
  %9617 = vmatpush2.bf16.msra.mxu0 %v7864
  %9618 = vmatprep.subr.bf16.mxu0 %v7859
  %9619 = vmatpush2.bf16.msra.mxu0 %v7858
  %9620 = vmatprep.subr.bf16.mxu0 %v7853
  %9621 = vmatpush2.bf16.msra.mxu0 %v7852
  %9622 = vmatprep.subr.bf16.mxu0 %v7847
  %9623 = vmatpush2.bf16.msra.mxu0 %v7846
  %9624 = vmatprep.subr.bf16.mxu0 %v7841
  %9625 = vmatpush2.bf16.msra.mxu0 %v7840
  %9626 = vmatprep.subr.bf16.mxu0 %v7835
  %9627 = vmatpush2.bf16.msra.mxu0 %v7834
  %9628 = vmatprep.mubr.bf16.mxu0 %v5162
  %9629 = vmatmul.mubr.bf16.gmra.mxu0 %v5161
  %v9630 = vpop.f32.mrf.mxu0
  %v9631 = vadd.f32 %v9568, %v9630
  %v9632 = vpop.f32.mrf.mxu0
  %v9633 = vadd.f32 %v9570, %v9632
  %v9634 = vpop.f32.mrf.mxu0
  %v9635 = vadd.f32 %v9572, %v9634
  %v9636 = vpop.f32.mrf.mxu0
  %v9637 = vadd.f32 %v9574, %v9636
  %9638 = vmatprep.mubr.bf16.mxu0 %v5177
  %9639 = vmatmul.mubr.bf16.gmra.mxu0 %v5176
  %v9640 = vpop.f32.mrf.mxu0
  %v9641 = vadd.f32 %v9578, %v9640
  %v9642 = vpop.f32.mrf.mxu0
  %v9643 = vadd.f32 %v9580, %v9642
  %v9644 = vpop.f32.mrf.mxu0
  %v9645 = vadd.f32 %v9582, %v9644
  %v9646 = vpop.f32.mrf.mxu0
  %v9647 = vadd.f32 %v9584, %v9646
  %9648 = vmatprep.mubr.bf16.mxu0 %v5192
  %9649 = vmatmul.mubr.bf16.gmra.mxu0 %v5191
  %v9650 = vpop.f32.mrf.mxu0
  %v9651 = vadd.f32 %v9588, %v9650
  %v9652 = vpop.f32.mrf.mxu0
  %v9653 = vadd.f32 %v9590, %v9652
  %v9654 = vpop.f32.mrf.mxu0
  %v9655 = vadd.f32 %v9592, %v9654
  %v9656 = vpop.f32.mrf.mxu0
  %v9657 = vadd.f32 %v9594, %v9656
  %9658 = vdwg.mxu0
  %9659 = vmatprep.subr.bf16.mxu0 %v7925
  %9660 = vmatpush1.bf16.msra.mxu0 %v7924
  %9661 = vmatprep.subr.bf16.mxu0 %v7919
  %9662 = vmatpush1.bf16.msra.mxu0 %v7918
  %9663 = vmatprep.subr.bf16.mxu0 %v7913
  %9664 = vmatpush1.bf16.msra.mxu0 %v7912
  %9665 = vmatprep.subr.bf16.mxu0 %v7907
  %9666 = vmatpush1.bf16.msra.mxu0 %v7906
  %9667 = vmatprep.subr.bf16.mxu0 %v7901
  %9668 = vmatpush1.bf16.msra.mxu0 %v7900
  %9669 = vmatprep.subr.bf16.mxu0 %v7895
  %9670 = vmatpush1.bf16.msra.mxu0 %v7894
  %9671 = vmatprep.subr.bf16.mxu0 %v7889
  %9672 = vmatpush1.bf16.msra.mxu0 %v7888
  %9673 = vmatprep.subr.bf16.mxu0 %v7883
  %9674 = vmatpush1.bf16.msra.mxu0 %v7882
  %9675 = vmatprep.subr.bf16.mxu0 %v7973
  %9676 = vmatpush2.bf16.msra.mxu0 %v7972
  %9677 = vmatprep.subr.bf16.mxu0 %v7967
  %9678 = vmatpush2.bf16.msra.mxu0 %v7966
  %9679 = vmatprep.subr.bf16.mxu0 %v7961
  %9680 = vmatpush2.bf16.msra.mxu0 %v7960
  %9681 = vmatprep.subr.bf16.mxu0 %v7955
  %9682 = vmatpush2.bf16.msra.mxu0 %v7954
  %9683 = vmatprep.subr.bf16.mxu0 %v7949
  %9684 = vmatpush2.bf16.msra.mxu0 %v7948
  %9685 = vmatprep.subr.bf16.mxu0 %v7943
  %9686 = vmatpush2.bf16.msra.mxu0 %v7942
  %9687 = vmatprep.subr.bf16.mxu0 %v7937
  %9688 = vmatpush2.bf16.msra.mxu0 %v7936
  %9689 = vmatprep.subr.bf16.mxu0 %v7931
  %9690 = vmatpush2.bf16.msra.mxu0 %v7930
  %9691 = vmatprep.mubr.bf16.mxu0 %v5164
  %9692 = vmatmul.mubr.bf16.gmra.mxu0 %v5163
  %v9693 = vpop.f32.mrf.mxu0
  %v9694 = vadd.f32 %v9631, %v9693
  %v9695 = vpop.f32.mrf.mxu0
  %v9696 = vadd.f32 %v9633, %v9695
  %v9697 = vpop.f32.mrf.mxu0
  %v9698 = vadd.f32 %v9635, %v9697
  %v9699 = vpop.f32.mrf.mxu0
  %v9700 = vadd.f32 %v9637, %v9699
  %9701 = vmatprep.mubr.bf16.mxu0 %v5179
  %9702 = vmatmul.mubr.bf16.gmra.mxu0 %v5178
  %v9703 = vpop.f32.mrf.mxu0
  %v9704 = vadd.f32 %v9641, %v9703
  %v9705 = vpop.f32.mrf.mxu0
  %v9706 = vadd.f32 %v9643, %v9705
  %v9707 = vpop.f32.mrf.mxu0
  %v9708 = vadd.f32 %v9645, %v9707
  %v9709 = vpop.f32.mrf.mxu0
  %v9710 = vadd.f32 %v9647, %v9709
  %9711 = vmatprep.mubr.bf16.mxu0 %v5194
  %9712 = vmatmul.mubr.bf16.gmra.mxu0 %v5193
  %v9713 = vpop.f32.mrf.mxu0
  %v9714 = vadd.f32 %v9651, %v9713
  %v9715 = vpop.f32.mrf.mxu0
  %v9716 = vadd.f32 %v9653, %v9715
  %v9717 = vpop.f32.mrf.mxu0
  %v9718 = vadd.f32 %v9655, %v9717
  %v9719 = vpop.f32.mrf.mxu0
  %v9720 = vadd.f32 %v9657, %v9719
  %9721 = vdwg.mxu0
  %9722 = vmatprep.subr.bf16.mxu0 %v8021
  %9723 = vmatpush1.bf16.msra.mxu0 %v8020
  %9724 = vmatprep.subr.bf16.mxu0 %v8015
  %9725 = vmatpush1.bf16.msra.mxu0 %v8014
  %9726 = vmatprep.subr.bf16.mxu0 %v8009
  %9727 = vmatpush1.bf16.msra.mxu0 %v8008
  %9728 = vmatprep.subr.bf16.mxu0 %v8003
  %9729 = vmatpush1.bf16.msra.mxu0 %v8002
  %9730 = vmatprep.subr.bf16.mxu0 %v7997
  %9731 = vmatpush1.bf16.msra.mxu0 %v7996
  %9732 = vmatprep.subr.bf16.mxu0 %v7991
  %9733 = vmatpush1.bf16.msra.mxu0 %v7990
  %9734 = vmatprep.subr.bf16.mxu0 %v7985
  %9735 = vmatpush1.bf16.msra.mxu0 %v7984
  %9736 = vmatprep.subr.bf16.mxu0 %v7979
  %9737 = vmatpush1.bf16.msra.mxu0 %v7978
  %9738 = vmatprep.subr.bf16.mxu0 %v8069
  %9739 = vmatpush2.bf16.msra.mxu0 %v8068
  %9740 = vmatprep.subr.bf16.mxu0 %v8063
  %9741 = vmatpush2.bf16.msra.mxu0 %v8062
  %9742 = vmatprep.subr.bf16.mxu0 %v8057
  %9743 = vmatpush2.bf16.msra.mxu0 %v8056
  %9744 = vmatprep.subr.bf16.mxu0 %v8051
  %9745 = vmatpush2.bf16.msra.mxu0 %v8050
  %9746 = vmatprep.subr.bf16.mxu0 %v8045
  %9747 = vmatpush2.bf16.msra.mxu0 %v8044
  %9748 = vmatprep.subr.bf16.mxu0 %v8039
  %9749 = vmatpush2.bf16.msra.mxu0 %v8038
  %9750 = vmatprep.subr.bf16.mxu0 %v8033
  %9751 = vmatpush2.bf16.msra.mxu0 %v8032
  %9752 = vmatprep.subr.bf16.mxu0 %v8027
  %9753 = vmatpush2.bf16.msra.mxu0 %v8026
  %9754 = vmatprep.mubr.bf16.mxu0 %v5166
  %9755 = vmatmul.mubr.bf16.gmra.mxu0 %v5165
  %v9756 = vpop.f32.mrf.mxu0
  %v9757 = vadd.f32 %v9694, %v9756
  %v9758 = vpop.f32.mrf.mxu0
  %v9759 = vadd.f32 %v9696, %v9758
  %v9760 = vpop.f32.mrf.mxu0
  %v9761 = vadd.f32 %v9698, %v9760
  %v9762 = vpop.f32.mrf.mxu0
  %v9763 = vadd.f32 %v9700, %v9762
  %9764 = vmatprep.mubr.bf16.mxu0 %v5181
  %9765 = vmatmul.mubr.bf16.gmra.mxu0 %v5180
  %v9766 = vpop.f32.mrf.mxu0
  %v9767 = vadd.f32 %v9704, %v9766
  %v9768 = vpop.f32.mrf.mxu0
  %v9769 = vadd.f32 %v9706, %v9768
  %v9770 = vpop.f32.mrf.mxu0
  %v9771 = vadd.f32 %v9708, %v9770
  %v9772 = vpop.f32.mrf.mxu0
  %v9773 = vadd.f32 %v9710, %v9772
  %9774 = vmatprep.mubr.bf16.mxu0 %v4325
  %9775 = vmatmul.mubr.bf16.gmra.mxu0 %v4324
  %v9776 = vpop.f32.mrf.mxu0
  %v9777 = vadd.f32 %v9714, %v9776
  %v9778 = vpop.f32.mrf.mxu0
  %v9779 = vadd.f32 %v9716, %v9778
  %v9780 = vpop.f32.mrf.mxu0
  %v9781 = vadd.f32 %v9718, %v9780
  %v9782 = vpop.f32.mrf.mxu0
  %v9783 = vadd.f32 %v9720, %v9782
  %9784 = vdwg.mxu0
  %9785 = vmatprep.subr.bf16.mxu0 %v8117
  %9786 = vmatpush1.bf16.msra.mxu0 %v8116
  %9787 = vmatprep.subr.bf16.mxu0 %v8111
  %9788 = vmatpush1.bf16.msra.mxu0 %v8110
  %9789 = vmatprep.subr.bf16.mxu0 %v8105
  %9790 = vmatpush1.bf16.msra.mxu0 %v8104
  %9791 = vmatprep.subr.bf16.mxu0 %v8099
  %9792 = vmatpush1.bf16.msra.mxu0 %v8098
  %9793 = vmatprep.subr.bf16.mxu0 %v8093
  %9794 = vmatpush1.bf16.msra.mxu0 %v8092
  %9795 = vmatprep.subr.bf16.mxu0 %v8087
  %9796 = vmatpush1.bf16.msra.mxu0 %v8086
  %9797 = vmatprep.subr.bf16.mxu0 %v8081
  %9798 = vmatpush1.bf16.msra.mxu0 %v8080
  %9799 = vmatprep.subr.bf16.mxu0 %v8075
  %9800 = vmatpush1.bf16.msra.mxu0 %v8074
  %9801 = vmatprep.subr.bf16.mxu0 0
  %9802 = vmatpush2.bf16.msra.mxu0 0
  %9803 = vmatprep.subr.bf16.mxu0 0
  %9804 = vmatpush2.bf16.msra.mxu0 0
  %9805 = vmatprep.subr.bf16.mxu0 0
  %9806 = vmatpush2.bf16.msra.mxu0 0
  %9807 = vmatprep.subr.bf16.mxu0 0
  %9808 = vmatpush2.bf16.msra.mxu0 0
  %9809 = vmatprep.subr.bf16.mxu0 0
  %9810 = vmatpush2.bf16.msra.mxu0 0
  %9811 = vmatprep.subr.bf16.mxu0 0
  %9812 = vmatpush2.bf16.msra.mxu0 0
  %9813 = vmatprep.subr.bf16.mxu0 0
  %9814 = vmatpush2.bf16.msra.mxu0 0
  %9815 = vmatprep.subr.bf16.mxu0 0
  %9816 = vmatpush2.bf16.msra.mxu0 0
  %9817 = vmatprep.mubr.bf16.mxu0 0
  %9818 = vmatmul.mubr.bf16.gmra.mxu0 %v5167
  %v9819 = vpop.f32.mrf.mxu0
  %v9820 = vadd.f32 %v9757, %v9819
  %v9821 = vpop.f32.mrf.mxu0
  %v9822 = vadd.f32 %v9759, %v9821
  %v9823 = vpop.f32.mrf.mxu0
  %v9824 = vadd.f32 %v9761, %v9823
  %v9825 = vpop.f32.mrf.mxu0
  %v9826 = vadd.f32 %v9763, %v9825
  %9827 = vmatprep.mubr.bf16.mxu0 0
  %9828 = vmatmul.mubr.bf16.gmra.mxu0 %v5182
  %v9829 = vpop.f32.mrf.mxu0
  %v9830 = vadd.f32 %v9767, %v9829
  %v9831 = vpop.f32.mrf.mxu0
  %v9832 = vadd.f32 %v9769, %v9831
  %v9833 = vpop.f32.mrf.mxu0
  %v9834 = vadd.f32 %v9771, %v9833
  %v9835 = vpop.f32.mrf.mxu0
  %v9836 = vadd.f32 %v9773, %v9835
  %9837 = vmatprep.mubr.bf16.mxu0 0
  %9838 = vmatmul.mubr.bf16.gmra.mxu0 %v4326
  %v9839 = vpop.f32.mrf.mxu0
  %v9840 = vadd.f32 %v9777, %v9839
  %v9841 = vpop.f32.mrf.mxu0
  %v9842 = vadd.f32 %v9779, %v9841
  %v9843 = vpop.f32.mrf.mxu0
  %v9844 = vadd.f32 %v9781, %v9843
  %v9845 = vpop.f32.mrf.mxu0
  %v9846 = vadd.f32 %v9783, %v9845
  %9847 = vdwg.mxu0
  %9848 = vmatprep.subr.bf16.mxu0 %v7447
  %9849 = vmatpush1.bf16.msra.mxu0 %v7446
  %9850 = vmatprep.subr.bf16.mxu0 %v7441
  %9851 = vmatpush1.bf16.msra.mxu0 %v7440
  %9852 = vmatprep.subr.bf16.mxu0 %v7435
  %9853 = vmatpush1.bf16.msra.mxu0 %v7434
  %9854 = vmatprep.subr.bf16.mxu0 %v7429
  %9855 = vmatpush1.bf16.msra.mxu0 %v7428
  %9856 = vmatprep.subr.bf16.mxu0 %v7423
  %9857 = vmatpush1.bf16.msra.mxu0 %v7422
  %9858 = vmatprep.subr.bf16.mxu0 %v7417
  %9859 = vmatpush1.bf16.msra.mxu0 %v7416
  %9860 = vmatprep.subr.bf16.mxu0 %v7411
  %9861 = vmatpush1.bf16.msra.mxu0 %v7410
  %9862 = vmatprep.subr.bf16.mxu0 %v7405
  %9863 = vmatpush1.bf16.msra.mxu0 %v7404
  %9864 = vmatprep.subr.bf16.mxu0 %v7495
  %9865 = vmatpush2.bf16.msra.mxu0 %v7494
  %9866 = vmatprep.subr.bf16.mxu0 %v7489
  %9867 = vmatpush2.bf16.msra.mxu0 %v7488
  %9868 = vmatprep.subr.bf16.mxu0 %v7483
  %9869 = vmatpush2.bf16.msra.mxu0 %v7482
  %9870 = vmatprep.subr.bf16.mxu0 %v7477
  %9871 = vmatpush2.bf16.msra.mxu0 %v7476
  %9872 = vmatprep.subr.bf16.mxu0 %v7471
  %9873 = vmatpush2.bf16.msra.mxu0 %v7470
  %9874 = vmatprep.subr.bf16.mxu0 %v7465
  %9875 = vmatpush2.bf16.msra.mxu0 %v7464
  %9876 = vmatprep.subr.bf16.mxu0 %v7459
  %9877 = vmatpush2.bf16.msra.mxu0 %v7458
  %9878 = vmatprep.subr.bf16.mxu0 %v7453
  %9879 = vmatpush2.bf16.msra.mxu0 %v7452
  %9880 = vmatprep.mubr.bf16.mxu0 %v4316
  %9881 = vmatmul.mubr.bf16.gmra.mxu0 %v4315
  %v9882 = vpop.f32.mrf.mxu0
  %v9883 = vadd.f32 0.0, %v9882
  %v9884 = vpop.f32.mrf.mxu0
  %v9885 = vadd.f32 0.0, %v9884
  %v9886 = vpop.f32.mrf.mxu0
  %v9887 = vadd.f32 0.0, %v9886
  %v9888 = vpop.f32.mrf.mxu0
  %v9889 = vadd.f32 0.0, %v9888
  %9890 = vmatprep.mubr.bf16.mxu0 %v5169
  %9891 = vmatmul.mubr.bf16.gmra.mxu0 %v5168
  %v9892 = vpop.f32.mrf.mxu0
  %v9893 = vadd.f32 0.0, %v9892
  %v9894 = vpop.f32.mrf.mxu0
  %v9895 = vadd.f32 0.0, %v9894
  %v9896 = vpop.f32.mrf.mxu0
  %v9897 = vadd.f32 0.0, %v9896
  %v9898 = vpop.f32.mrf.mxu0
  %v9899 = vadd.f32 0.0, %v9898
  %9900 = vmatprep.mubr.bf16.mxu0 %v5184
  %9901 = vmatmul.mubr.bf16.gmra.mxu0 %v5183
  %v9902 = vpop.f32.mrf.mxu0
  %v9903 = vadd.f32 0.0, %v9902
  %v9904 = vpop.f32.mrf.mxu0
  %v9905 = vadd.f32 0.0, %v9904
  %v9906 = vpop.f32.mrf.mxu0
  %v9907 = vadd.f32 0.0, %v9906
  %v9908 = vpop.f32.mrf.mxu0
  %v9909 = vadd.f32 0.0, %v9908
  %9910 = vdwg.mxu0
  %9911 = vmatprep.subr.bf16.mxu0 %v7543
  %9912 = vmatpush1.bf16.msra.mxu0 %v7542
  %9913 = vmatprep.subr.bf16.mxu0 %v7537
  %9914 = vmatpush1.bf16.msra.mxu0 %v7536
  %9915 = vmatprep.subr.bf16.mxu0 %v7531
  %9916 = vmatpush1.bf16.msra.mxu0 %v7530
  %9917 = vmatprep.subr.bf16.mxu0 %v7525
  %9918 = vmatpush1.bf16.msra.mxu0 %v7524
  %9919 = vmatprep.subr.bf16.mxu0 %v7519
  %9920 = vmatpush1.bf16.msra.mxu0 %v7518
  %9921 = vmatprep.subr.bf16.mxu0 %v7513
  %9922 = vmatpush1.bf16.msra.mxu0 %v7512
  %9923 = vmatprep.subr.bf16.mxu0 %v7507
  %9924 = vmatpush1.bf16.msra.mxu0 %v7506
  %9925 = vmatprep.subr.bf16.mxu0 %v7501
  %9926 = vmatpush1.bf16.msra.mxu0 %v7500
  %9927 = vmatprep.subr.bf16.mxu0 %v7591
  %9928 = vmatpush2.bf16.msra.mxu0 %v7590
  %9929 = vmatprep.subr.bf16.mxu0 %v7585
  %9930 = vmatpush2.bf16.msra.mxu0 %v7584
  %9931 = vmatprep.subr.bf16.mxu0 %v7579
  %9932 = vmatpush2.bf16.msra.mxu0 %v7578
  %9933 = vmatprep.subr.bf16.mxu0 %v7573
  %9934 = vmatpush2.bf16.msra.mxu0 %v7572
  %9935 = vmatprep.subr.bf16.mxu0 %v7567
  %9936 = vmatpush2.bf16.msra.mxu0 %v7566
  %9937 = vmatprep.subr.bf16.mxu0 %v7561
  %9938 = vmatpush2.bf16.msra.mxu0 %v7560
  %9939 = vmatprep.subr.bf16.mxu0 %v7555
  %9940 = vmatpush2.bf16.msra.mxu0 %v7554
  %9941 = vmatprep.subr.bf16.mxu0 %v7549
  %9942 = vmatpush2.bf16.msra.mxu0 %v7548
  %9943 = vmatprep.mubr.bf16.mxu0 %v5156
  %9944 = vmatmul.mubr.bf16.gmra.mxu0 %v4317
  %v9945 = vpop.f32.mrf.mxu0
  %v9946 = vadd.f32 %v9883, %v9945
  %v9947 = vpop.f32.mrf.mxu0
  %v9948 = vadd.f32 %v9885, %v9947
  %v9949 = vpop.f32.mrf.mxu0
  %v9950 = vadd.f32 %v9887, %v9949
  %v9951 = vpop.f32.mrf.mxu0
  %v9952 = vadd.f32 %v9889, %v9951
  %9953 = vmatprep.mubr.bf16.mxu0 %v5171
  %9954 = vmatmul.mubr.bf16.gmra.mxu0 %v5170
  %v9955 = vpop.f32.mrf.mxu0
  %v9956 = vadd.f32 %v9893, %v9955
  %v9957 = vpop.f32.mrf.mxu0
  %v9958 = vadd.f32 %v9895, %v9957
  %v9959 = vpop.f32.mrf.mxu0
  %v9960 = vadd.f32 %v9897, %v9959
  %v9961 = vpop.f32.mrf.mxu0
  %v9962 = vadd.f32 %v9899, %v9961
  %9963 = vmatprep.mubr.bf16.mxu0 %v5186
  %9964 = vmatmul.mubr.bf16.gmra.mxu0 %v5185
  %v9965 = vpop.f32.mrf.mxu0
  %v9966 = vadd.f32 %v9903, %v9965
  %v9967 = vpop.f32.mrf.mxu0
  %v9968 = vadd.f32 %v9905, %v9967
  %v9969 = vpop.f32.mrf.mxu0
  %v9970 = vadd.f32 %v9907, %v9969
  %v9971 = vpop.f32.mrf.mxu0
  %v9972 = vadd.f32 %v9909, %v9971
  %9973 = vdwg.mxu0
  %9974 = vmatprep.subr.bf16.mxu0 %v7639
  %9975 = vmatpush1.bf16.msra.mxu0 %v7638
  %9976 = vmatprep.subr.bf16.mxu0 %v7633
  %9977 = vmatpush1.bf16.msra.mxu0 %v7632
  %9978 = vmatprep.subr.bf16.mxu0 %v7627
  %9979 = vmatpush1.bf16.msra.mxu0 %v7626
  %9980 = vmatprep.subr.bf16.mxu0 %v7621
  %9981 = vmatpush1.bf16.msra.mxu0 %v7620
  %9982 = vmatprep.subr.bf16.mxu0 %v7615
  %9983 = vmatpush1.bf16.msra.mxu0 %v7614
  %9984 = vmatprep.subr.bf16.mxu0 %v7609
  %9985 = vmatpush1.bf16.msra.mxu0 %v7608
  %9986 = vmatprep.subr.bf16.mxu0 %v7603
  %9987 = vmatpush1.bf16.msra.mxu0 %v7602
  %9988 = vmatprep.subr.bf16.mxu0 %v7597
  %9989 = vmatpush1.bf16.msra.mxu0 %v7596
  %9990 = vmatprep.subr.bf16.mxu0 %v7687
  %9991 = vmatpush2.bf16.msra.mxu0 %v7686
  %9992 = vmatprep.subr.bf16.mxu0 %v7681
  %9993 = vmatpush2.bf16.msra.mxu0 %v7680
  %9994 = vmatprep.subr.bf16.mxu0 %v7675
  %9995 = vmatpush2.bf16.msra.mxu0 %v7674
  %9996 = vmatprep.subr.bf16.mxu0 %v7669
  %9997 = vmatpush2.bf16.msra.mxu0 %v7668
  %9998 = vmatprep.subr.bf16.mxu0 %v7663
  %9999 = vmatpush2.bf16.msra.mxu0 %v7662
  %10000 = vmatprep.subr.bf16.mxu0 %v7657
  %10001 = vmatpush2.bf16.msra.mxu0 %v7656
  %10002 = vmatprep.subr.bf16.mxu0 %v7651
  %10003 = vmatpush2.bf16.msra.mxu0 %v7650
  %10004 = vmatprep.subr.bf16.mxu0 %v7645
  %10005 = vmatpush2.bf16.msra.mxu0 %v7644
  %10006 = vmatprep.mubr.bf16.mxu0 %v5158
  %10007 = vmatmul.mubr.bf16.gmra.mxu0 %v5157
  %v10008 = vpop.f32.mrf.mxu0
  %v10009 = vadd.f32 %v9946, %v10008
  %v10010 = vpop.f32.mrf.mxu0
  %v10011 = vadd.f32 %v9948, %v10010
  %v10012 = vpop.f32.mrf.mxu0
  %v10013 = vadd.f32 %v9950, %v10012
  %v10014 = vpop.f32.mrf.mxu0
  %v10015 = vadd.f32 %v9952, %v10014
  %10016 = vmatprep.mubr.bf16.mxu0 %v5173
  %10017 = vmatmul.mubr.bf16.gmra.mxu0 %v5172
  %v10018 = vpop.f32.mrf.mxu0
  %v10019 = vadd.f32 %v9956, %v10018
  %v10020 = vpop.f32.mrf.mxu0
  %v10021 = vadd.f32 %v9958, %v10020
  %v10022 = vpop.f32.mrf.mxu0
  %v10023 = vadd.f32 %v9960, %v10022
  %v10024 = vpop.f32.mrf.mxu0
  %v10025 = vadd.f32 %v9962, %v10024
  %10026 = vmatprep.mubr.bf16.mxu0 %v5188
  %10027 = vmatmul.mubr.bf16.gmra.mxu0 %v5187
  %v10028 = vpop.f32.mrf.mxu0
  %v10029 = vadd.f32 %v9966, %v10028
  %v10030 = vpop.f32.mrf.mxu0
  %v10031 = vadd.f32 %v9968, %v10030
  %v10032 = vpop.f32.mrf.mxu0
  %v10033 = vadd.f32 %v9970, %v10032
  %v10034 = vpop.f32.mrf.mxu0
  %v10035 = vadd.f32 %v9972, %v10034
  %10036 = vdwg.mxu0
  %10037 = vmatprep.subr.bf16.mxu0 %v7735
  %10038 = vmatpush1.bf16.msra.mxu0 %v7734
  %10039 = vmatprep.subr.bf16.mxu0 %v7729
  %10040 = vmatpush1.bf16.msra.mxu0 %v7728
  %10041 = vmatprep.subr.bf16.mxu0 %v7723
  %10042 = vmatpush1.bf16.msra.mxu0 %v7722
  %10043 = vmatprep.subr.bf16.mxu0 %v7717
  %10044 = vmatpush1.bf16.msra.mxu0 %v7716
  %10045 = vmatprep.subr.bf16.mxu0 %v7711
  %10046 = vmatpush1.bf16.msra.mxu0 %v7710
  %10047 = vmatprep.subr.bf16.mxu0 %v7705
  %10048 = vmatpush1.bf16.msra.mxu0 %v7704
  %10049 = vmatprep.subr.bf16.mxu0 %v7699
  %10050 = vmatpush1.bf16.msra.mxu0 %v7698
  %10051 = vmatprep.subr.bf16.mxu0 %v7693
  %10052 = vmatpush1.bf16.msra.mxu0 %v7692
  %10053 = vmatprep.subr.bf16.mxu0 %v7783
  %10054 = vmatpush2.bf16.msra.mxu0 %v7782
  %10055 = vmatprep.subr.bf16.mxu0 %v7777
  %10056 = vmatpush2.bf16.msra.mxu0 %v7776
  %10057 = vmatprep.subr.bf16.mxu0 %v7771
  %10058 = vmatpush2.bf16.msra.mxu0 %v7770
  %10059 = vmatprep.subr.bf16.mxu0 %v7765
  %10060 = vmatpush2.bf16.msra.mxu0 %v7764
  %10061 = vmatprep.subr.bf16.mxu0 %v7759
  %10062 = vmatpush2.bf16.msra.mxu0 %v7758
  %10063 = vmatprep.subr.bf16.mxu0 %v7753
  %10064 = vmatpush2.bf16.msra.mxu0 %v7752
  %10065 = vmatprep.subr.bf16.mxu0 %v7747
  %10066 = vmatpush2.bf16.msra.mxu0 %v7746
  %10067 = vmatprep.subr.bf16.mxu0 %v7741
  %10068 = vmatpush2.bf16.msra.mxu0 %v7740
  %10069 = vmatprep.mubr.bf16.mxu0 %v5160
  %10070 = vmatmul.mubr.bf16.gmra.mxu0 %v5159
  %v10071 = vpop.f32.mrf.mxu0
  %v10072 = vadd.f32 %v10009, %v10071
  %v10073 = vpop.f32.mrf.mxu0
  %v10074 = vadd.f32 %v10011, %v10073
  %v10075 = vpop.f32.mrf.mxu0
  %v10076 = vadd.f32 %v10013, %v10075
  %v10077 = vpop.f32.mrf.mxu0
  %v10078 = vadd.f32 %v10015, %v10077
  %10079 = vmatprep.mubr.bf16.mxu0 %v5175
  %10080 = vmatmul.mubr.bf16.gmra.mxu0 %v5174
  %v10081 = vpop.f32.mrf.mxu0
  %v10082 = vadd.f32 %v10019, %v10081
  %v10083 = vpop.f32.mrf.mxu0
  %v10084 = vadd.f32 %v10021, %v10083
  %v10085 = vpop.f32.mrf.mxu0
  %v10086 = vadd.f32 %v10023, %v10085
  %v10087 = vpop.f32.mrf.mxu0
  %v10088 = vadd.f32 %v10025, %v10087
  %10089 = vmatprep.mubr.bf16.mxu0 %v5190
  %10090 = vmatmul.mubr.bf16.gmra.mxu0 %v5189
  %v10091 = vpop.f32.mrf.mxu0
  %v10092 = vadd.f32 %v10029, %v10091
  %v10093 = vpop.f32.mrf.mxu0
  %v10094 = vadd.f32 %v10031, %v10093
  %v10095 = vpop.f32.mrf.mxu0
  %v10096 = vadd.f32 %v10033, %v10095
  %v10097 = vpop.f32.mrf.mxu0
  %v10098 = vadd.f32 %v10035, %v10097
  %10099 = vdwg.mxu0
  %10100 = vmatprep.subr.bf16.mxu0 %v7831
  %10101 = vmatpush1.bf16.msra.mxu0 %v7830
  %10102 = vmatprep.subr.bf16.mxu0 %v7825
  %10103 = vmatpush1.bf16.msra.mxu0 %v7824
  %10104 = vmatprep.subr.bf16.mxu0 %v7819
  %10105 = vmatpush1.bf16.msra.mxu0 %v7818
  %10106 = vmatprep.subr.bf16.mxu0 %v7813
  %10107 = vmatpush1.bf16.msra.mxu0 %v7812
  %10108 = vmatprep.subr.bf16.mxu0 %v7807
  %10109 = vmatpush1.bf16.msra.mxu0 %v7806
  %10110 = vmatprep.subr.bf16.mxu0 %v7801
  %10111 = vmatpush1.bf16.msra.mxu0 %v7800
  %10112 = vmatprep.subr.bf16.mxu0 %v7795
  %10113 = vmatpush1.bf16.msra.mxu0 %v7794
  %10114 = vmatprep.subr.bf16.mxu0 %v7789
  %10115 = vmatpush1.bf16.msra.mxu0 %v7788
  %10116 = vmatprep.subr.bf16.mxu0 %v7879
  %10117 = vmatpush2.bf16.msra.mxu0 %v7878
  %10118 = vmatprep.subr.bf16.mxu0 %v7873
  %10119 = vmatpush2.bf16.msra.mxu0 %v7872
  %10120 = vmatprep.subr.bf16.mxu0 %v7867
  %10121 = vmatpush2.bf16.msra.mxu0 %v7866
  %10122 = vmatprep.subr.bf16.mxu0 %v7861
  %10123 = vmatpush2.bf16.msra.mxu0 %v7860
  %10124 = vmatprep.subr.bf16.mxu0 %v7855
  %10125 = vmatpush2.bf16.msra.mxu0 %v7854
  %10126 = vmatprep.subr.bf16.mxu0 %v7849
  %10127 = vmatpush2.bf16.msra.mxu0 %v7848
  %10128 = vmatprep.subr.bf16.mxu0 %v7843
  %10129 = vmatpush2.bf16.msra.mxu0 %v7842
  %10130 = vmatprep.subr.bf16.mxu0 %v7837
  %10131 = vmatpush2.bf16.msra.mxu0 %v7836
  %10132 = vmatprep.mubr.bf16.mxu0 %v5162
  %10133 = vmatmul.mubr.bf16.gmra.mxu0 %v5161
  %v10134 = vpop.f32.mrf.mxu0
  %v10135 = vadd.f32 %v10072, %v10134
  %v10136 = vpop.f32.mrf.mxu0
  %v10137 = vadd.f32 %v10074, %v10136
  %v10138 = vpop.f32.mrf.mxu0
  %v10139 = vadd.f32 %v10076, %v10138
  %v10140 = vpop.f32.mrf.mxu0
  %v10141 = vadd.f32 %v10078, %v10140
  %10142 = vmatprep.mubr.bf16.mxu0 %v5177
  %10143 = vmatmul.mubr.bf16.gmra.mxu0 %v5176
  %v10144 = vpop.f32.mrf.mxu0
  %v10145 = vadd.f32 %v10082, %v10144
  %v10146 = vpop.f32.mrf.mxu0
  %v10147 = vadd.f32 %v10084, %v10146
  %v10148 = vpop.f32.mrf.mxu0
  %v10149 = vadd.f32 %v10086, %v10148
  %v10150 = vpop.f32.mrf.mxu0
  %v10151 = vadd.f32 %v10088, %v10150
  %10152 = vmatprep.mubr.bf16.mxu0 %v5192
  %10153 = vmatmul.mubr.bf16.gmra.mxu0 %v5191
  %v10154 = vpop.f32.mrf.mxu0
  %v10155 = vadd.f32 %v10092, %v10154
  %v10156 = vpop.f32.mrf.mxu0
  %v10157 = vadd.f32 %v10094, %v10156
  %v10158 = vpop.f32.mrf.mxu0
  %v10159 = vadd.f32 %v10096, %v10158
  %v10160 = vpop.f32.mrf.mxu0
  %v10161 = vadd.f32 %v10098, %v10160
  %10162 = vdwg.mxu0
  %10163 = vmatprep.subr.bf16.mxu0 %v7927
  %10164 = vmatpush1.bf16.msra.mxu0 %v7926
  %10165 = vmatprep.subr.bf16.mxu0 %v7921
  %10166 = vmatpush1.bf16.msra.mxu0 %v7920
  %10167 = vmatprep.subr.bf16.mxu0 %v7915
  %10168 = vmatpush1.bf16.msra.mxu0 %v7914
  %10169 = vmatprep.subr.bf16.mxu0 %v7909
  %10170 = vmatpush1.bf16.msra.mxu0 %v7908
  %10171 = vmatprep.subr.bf16.mxu0 %v7903
  %10172 = vmatpush1.bf16.msra.mxu0 %v7902
  %10173 = vmatprep.subr.bf16.mxu0 %v7897
  %10174 = vmatpush1.bf16.msra.mxu0 %v7896
  %10175 = vmatprep.subr.bf16.mxu0 %v7891
  %10176 = vmatpush1.bf16.msra.mxu0 %v7890
  %10177 = vmatprep.subr.bf16.mxu0 %v7885
  %10178 = vmatpush1.bf16.msra.mxu0 %v7884
  %10179 = vmatprep.subr.bf16.mxu0 %v7975
  %10180 = vmatpush2.bf16.msra.mxu0 %v7974
  %10181 = vmatprep.subr.bf16.mxu0 %v7969
  %10182 = vmatpush2.bf16.msra.mxu0 %v7968
  %10183 = vmatprep.subr.bf16.mxu0 %v7963
  %10184 = vmatpush2.bf16.msra.mxu0 %v7962
  %10185 = vmatprep.subr.bf16.mxu0 %v7957
  %10186 = vmatpush2.bf16.msra.mxu0 %v7956
  %10187 = vmatprep.subr.bf16.mxu0 %v7951
  %10188 = vmatpush2.bf16.msra.mxu0 %v7950
  %10189 = vmatprep.subr.bf16.mxu0 %v7945
  %10190 = vmatpush2.bf16.msra.mxu0 %v7944
  %10191 = vmatprep.subr.bf16.mxu0 %v7939
  %10192 = vmatpush2.bf16.msra.mxu0 %v7938
  %10193 = vmatprep.subr.bf16.mxu0 %v7933
  %10194 = vmatpush2.bf16.msra.mxu0 %v7932
  %10195 = vmatprep.mubr.bf16.mxu0 %v5164
  %10196 = vmatmul.mubr.bf16.gmra.mxu0 %v5163
  %v10197 = vpop.f32.mrf.mxu0
  %v10198 = vadd.f32 %v10135, %v10197
  %v10199 = vpop.f32.mrf.mxu0
  %v10200 = vadd.f32 %v10137, %v10199
  %v10201 = vpop.f32.mrf.mxu0
  %v10202 = vadd.f32 %v10139, %v10201
  %v10203 = vpop.f32.mrf.mxu0
  %v10204 = vadd.f32 %v10141, %v10203
  %10205 = vmatprep.mubr.bf16.mxu0 %v5179
  %10206 = vmatmul.mubr.bf16.gmra.mxu0 %v5178
  %v10207 = vpop.f32.mrf.mxu0
  %v10208 = vadd.f32 %v10145, %v10207
  %v10209 = vpop.f32.mrf.mxu0
  %v10210 = vadd.f32 %v10147, %v10209
  %v10211 = vpop.f32.mrf.mxu0
  %v10212 = vadd.f32 %v10149, %v10211
  %v10213 = vpop.f32.mrf.mxu0
  %v10214 = vadd.f32 %v10151, %v10213
  %10215 = vmatprep.mubr.bf16.mxu0 %v5194
  %10216 = vmatmul.mubr.bf16.gmra.mxu0 %v5193
  %v10217 = vpop.f32.mrf.mxu0
  %v10218 = vadd.f32 %v10155, %v10217
  %v10219 = vpop.f32.mrf.mxu0
  %v10220 = vadd.f32 %v10157, %v10219
  %v10221 = vpop.f32.mrf.mxu0
  %v10222 = vadd.f32 %v10159, %v10221
  %v10223 = vpop.f32.mrf.mxu0
  %v10224 = vadd.f32 %v10161, %v10223
  %10225 = vdwg.mxu0
  %10226 = vmatprep.subr.bf16.mxu0 %v8023
  %10227 = vmatpush1.bf16.msra.mxu0 %v8022
  %10228 = vmatprep.subr.bf16.mxu0 %v8017
  %10229 = vmatpush1.bf16.msra.mxu0 %v8016
  %10230 = vmatprep.subr.bf16.mxu0 %v8011
  %10231 = vmatpush1.bf16.msra.mxu0 %v8010
  %10232 = vmatprep.subr.bf16.mxu0 %v8005
  %10233 = vmatpush1.bf16.msra.mxu0 %v8004
  %10234 = vmatprep.subr.bf16.mxu0 %v7999
  %10235 = vmatpush1.bf16.msra.mxu0 %v7998
  %10236 = vmatprep.subr.bf16.mxu0 %v7993
  %10237 = vmatpush1.bf16.msra.mxu0 %v7992
  %10238 = vmatprep.subr.bf16.mxu0 %v7987
  %10239 = vmatpush1.bf16.msra.mxu0 %v7986
  %10240 = vmatprep.subr.bf16.mxu0 %v7981
  %10241 = vmatpush1.bf16.msra.mxu0 %v7980
  %10242 = vmatprep.subr.bf16.mxu0 %v8071
  %10243 = vmatpush2.bf16.msra.mxu0 %v8070
  %10244 = vmatprep.subr.bf16.mxu0 %v8065
  %10245 = vmatpush2.bf16.msra.mxu0 %v8064
  %10246 = vmatprep.subr.bf16.mxu0 %v8059
  %10247 = vmatpush2.bf16.msra.mxu0 %v8058
  %10248 = vmatprep.subr.bf16.mxu0 %v8053
  %10249 = vmatpush2.bf16.msra.mxu0 %v8052
  %10250 = vmatprep.subr.bf16.mxu0 %v8047
  %10251 = vmatpush2.bf16.msra.mxu0 %v8046
  %10252 = vmatprep.subr.bf16.mxu0 %v8041
  %10253 = vmatpush2.bf16.msra.mxu0 %v8040
  %10254 = vmatprep.subr.bf16.mxu0 %v8035
  %10255 = vmatpush2.bf16.msra.mxu0 %v8034
  %10256 = vmatprep.subr.bf16.mxu0 %v8029
  %10257 = vmatpush2.bf16.msra.mxu0 %v8028
  %10258 = vmatprep.mubr.bf16.mxu0 %v5166
  %10259 = vmatmul.mubr.bf16.gmra.mxu0 %v5165
  %v10260 = vpop.f32.mrf.mxu0
  %v10261 = vadd.f32 %v10198, %v10260
  %v10262 = vpop.f32.mrf.mxu0
  %v10263 = vadd.f32 %v10200, %v10262
  %v10264 = vpop.f32.mrf.mxu0
  %v10265 = vadd.f32 %v10202, %v10264
  %v10266 = vpop.f32.mrf.mxu0
  %v10267 = vadd.f32 %v10204, %v10266
  %10268 = vmatprep.mubr.bf16.mxu0 %v5181
  %10269 = vmatmul.mubr.bf16.gmra.mxu0 %v5180
  %v10270 = vpop.f32.mrf.mxu0
  %v10271 = vadd.f32 %v10208, %v10270
  %v10272 = vpop.f32.mrf.mxu0
  %v10273 = vadd.f32 %v10210, %v10272
  %v10274 = vpop.f32.mrf.mxu0
  %v10275 = vadd.f32 %v10212, %v10274
  %v10276 = vpop.f32.mrf.mxu0
  %v10277 = vadd.f32 %v10214, %v10276
  %10278 = vmatprep.mubr.bf16.mxu0 %v4325
  %10279 = vmatmul.mubr.bf16.gmra.mxu0 %v4324
  %v10280 = vpop.f32.mrf.mxu0
  %v10281 = vadd.f32 %v10218, %v10280
  %v10282 = vpop.f32.mrf.mxu0
  %v10283 = vadd.f32 %v10220, %v10282
  %v10284 = vpop.f32.mrf.mxu0
  %v10285 = vadd.f32 %v10222, %v10284
  %v10286 = vpop.f32.mrf.mxu0
  %v10287 = vadd.f32 %v10224, %v10286
  %10288 = vdwg.mxu0
  %10289 = vmatprep.subr.bf16.mxu0 %v8119
  %10290 = vmatpush1.bf16.msra.mxu0 %v8118
  %10291 = vmatprep.subr.bf16.mxu0 %v8113
  %10292 = vmatpush1.bf16.msra.mxu0 %v8112
  %10293 = vmatprep.subr.bf16.mxu0 %v8107
  %10294 = vmatpush1.bf16.msra.mxu0 %v8106
  %10295 = vmatprep.subr.bf16.mxu0 %v8101
  %10296 = vmatpush1.bf16.msra.mxu0 %v8100
  %10297 = vmatprep.subr.bf16.mxu0 %v8095
  %10298 = vmatpush1.bf16.msra.mxu0 %v8094
  %10299 = vmatprep.subr.bf16.mxu0 %v8089
  %10300 = vmatpush1.bf16.msra.mxu0 %v8088
  %10301 = vmatprep.subr.bf16.mxu0 %v8083
  %10302 = vmatpush1.bf16.msra.mxu0 %v8082
  %10303 = vmatprep.subr.bf16.mxu0 %v8077
  %10304 = vmatpush1.bf16.msra.mxu0 %v8076
  %10305 = vmatprep.subr.bf16.mxu0 0
  %10306 = vmatpush2.bf16.msra.mxu0 0
  %10307 = vmatprep.subr.bf16.mxu0 0
  %10308 = vmatpush2.bf16.msra.mxu0 0
  %10309 = vmatprep.subr.bf16.mxu0 0
  %10310 = vmatpush2.bf16.msra.mxu0 0
  %10311 = vmatprep.subr.bf16.mxu0 0
  %10312 = vmatpush2.bf16.msra.mxu0 0
  %10313 = vmatprep.subr.bf16.mxu0 0
  %10314 = vmatpush2.bf16.msra.mxu0 0
  %10315 = vmatprep.subr.bf16.mxu0 0
  %10316 = vmatpush2.bf16.msra.mxu0 0
  %10317 = vmatprep.subr.bf16.mxu0 0
  %10318 = vmatpush2.bf16.msra.mxu0 0
  %10319 = vmatprep.subr.bf16.mxu0 0
  %10320 = vmatpush2.bf16.msra.mxu0 0
  %10321 = vmatprep.mubr.bf16.mxu0 0
  %10322 = vmatmul.mubr.bf16.gmra.mxu0 %v5167
  %v10323 = vpop.f32.mrf.mxu0
  %v10324 = vadd.f32 %v10261, %v10323
  %v10325 = vpop.f32.mrf.mxu0
  %v10326 = vadd.f32 %v10263, %v10325
  %v10327 = vpop.f32.mrf.mxu0
  %v10328 = vadd.f32 %v10265, %v10327
  %v10329 = vpop.f32.mrf.mxu0
  %v10330 = vadd.f32 %v10267, %v10329
  %10331 = vmatprep.mubr.bf16.mxu0 0
  %10332 = vmatmul.mubr.bf16.gmra.mxu0 %v5182
  %v10333 = vpop.f32.mrf.mxu0
  %v10334 = vadd.f32 %v10271, %v10333
  %v10335 = vpop.f32.mrf.mxu0
  %v10336 = vadd.f32 %v10273, %v10335
  %v10337 = vpop.f32.mrf.mxu0
  %v10338 = vadd.f32 %v10275, %v10337
  %v10339 = vpop.f32.mrf.mxu0
  %v10340 = vadd.f32 %v10277, %v10339
  %10341 = vmatprep.mubr.bf16.mxu0 0
  %10342 = vmatmul.mubr.bf16.gmra.mxu0 %v4326
  %v10343 = vpop.f32.mrf.mxu0
  %v10344 = vadd.f32 %v10281, %v10343
  %v10345 = vpop.f32.mrf.mxu0
  %v10346 = vadd.f32 %v10283, %v10345
  %v10347 = vpop.f32.mrf.mxu0
  %v10348 = vadd.f32 %v10285, %v10347
  %v10349 = vpop.f32.mrf.mxu0
  %v10350 = vadd.f32 %v10287, %v10349
  %10351 = vdwg.mxu0
  %vm10388 = vcmask 1045504
  %v10389 = vrot.slane %v9316, 2
  %v10390 = vrot.slane %v9320, 2
  %v10391 = vsel %vm10388, %v10389, %v10390
  %v10392 = vrot.slane %v9318, 2
  %v10393 = vrot.slane %v9322, 2
  %v10394 = vsel %vm10388, %v10392, %v10393
  %v10395 = vrot.slane %v9820, 2
  %v10396 = vrot.slane %v9824, 2
  %v10397 = vsel %vm10388, %v10395, %v10396
  %v10398 = vrot.slane %v9822, 2
  %v10399 = vrot.slane %v9826, 2
  %v10400 = vsel %vm10388, %v10398, %v10399
  %v10401 = vrot.slane %v10324, 2
  %v10402 = vrot.slane %v10328, 2
  %v10403 = vsel %vm10388, %v10401, %v10402
  %v10404 = vrot.slane %v10326, 2
  %v10405 = vrot.slane %v10330, 2
  %v10406 = vsel %vm10388, %v10404, %v10405
  %v10407 = vrot.slane %v9326, 2
  %v10408 = vsel %vm10388, %v10390, %v10407
  %v10409 = vrot.slane %v9328, 2
  %v10410 = vsel %vm10388, %v10393, %v10409
  %v10411 = vrot.slane %v9830, 2
  %v10412 = vsel %vm10388, %v10396, %v10411
  %v10413 = vrot.slane %v9832, 2
  %v10414 = vsel %vm10388, %v10399, %v10413
  %v10415 = vrot.slane %v10334, 2
  %v10416 = vsel %vm10388, %v10402, %v10415
  %v10417 = vrot.slane %v10336, 2
  %v10418 = vsel %vm10388, %v10405, %v10417
  %v10419 = vrot.slane %v9330, 2
  %v10420 = vsel %vm10388, %v10407, %v10419
  %v10421 = vrot.slane %v9332, 2
  %v10422 = vsel %vm10388, %v10409, %v10421
  %v10423 = vrot.slane %v9834, 2
  %v10424 = vsel %vm10388, %v10411, %v10423
  %v10425 = vrot.slane %v9836, 2
  %v10426 = vsel %vm10388, %v10413, %v10425
  %v10427 = vrot.slane %v10338, 2
  %v10428 = vsel %vm10388, %v10415, %v10427
  %v10429 = vrot.slane %v10340, 2
  %v10430 = vsel %vm10388, %v10417, %v10429
  %v10431 = vrot.slane %v9336, 2
  %v10432 = vsel %vm10388, %v10419, %v10431
  %v10433 = vrot.slane %v9338, 2
  %v10434 = vsel %vm10388, %v10421, %v10433
  %v10435 = vrot.slane %v9840, 2
  %v10436 = vsel %vm10388, %v10423, %v10435
  %v10437 = vrot.slane %v9842, 2
  %v10438 = vsel %vm10388, %v10425, %v10437
  %v10439 = vrot.slane %v10344, 2
  %v10440 = vsel %vm10388, %v10427, %v10439
  %v10441 = vrot.slane %v10346, 2
  %v10442 = vsel %vm10388, %v10429, %v10441
  %v10443 = vrot.slane %v9340, 2
  %v10444 = vsel %vm10388, %v10431, %v10443
  %v10445 = vrot.slane %v9342, 2
  %v10446 = vsel %vm10388, %v10433, %v10445
  %v10447 = vrot.slane %v9844, 2
  %v10448 = vsel %vm10388, %v10435, %v10447
  %v10449 = vrot.slane %v9846, 2
  %v10450 = vsel %vm10388, %v10437, %v10449
  %v10451 = vrot.slane %v10348, 2
  %v10452 = vsel %vm10388, %v10439, %v10451
  %v10453 = vrot.slane %v10350, 2
  %v10454 = vsel %vm10388, %v10441, %v10453
  %v10497 = vsel %vm10388, %v10443, %v10389
  %v10498 = vsel %vm10388, %v10445, %v10392
  %v10499 = vsel %vm10388, %v10447, %v10395
  %v10500 = vsel %vm10388, %v10449, %v10398
  %v10501 = vsel %vm10388, %v10451, %v10401
  %v10502 = vsel %vm10388, %v10453, %v10404
  %v10503 = vmax.f32 %v9316, %v10391
  %v10504 = vmax.f32 %v9318, %v10394
  %v10505 = vmax.f32 %v9820, %v10397
  %v10506 = vmax.f32 %v9822, %v10400
  %v10507 = vmax.f32 %v10324, %v10403
  %v10508 = vmax.f32 %v10326, %v10406
  %v10509 = vmax.f32 %v9320, %v10408
  %v10510 = vmax.f32 %v9322, %v10410
  %v10511 = vmax.f32 %v9824, %v10412
  %v10512 = vmax.f32 %v9826, %v10414
  %v10513 = vmax.f32 %v10328, %v10416
  %v10514 = vmax.f32 %v10330, %v10418
  %v10515 = vmax.f32 %v9326, %v10420
  %v10516 = vmax.f32 %v9328, %v10422
  %v10517 = vmax.f32 %v9830, %v10424
  %v10518 = vmax.f32 %v9832, %v10426
  %v10519 = vmax.f32 %v10334, %v10428
  %v10520 = vmax.f32 %v10336, %v10430
  %v10521 = vmax.f32 %v9330, %v10432
  %v10522 = vmax.f32 %v9332, %v10434
  %v10523 = vmax.f32 %v9834, %v10436
  %v10524 = vmax.f32 %v9836, %v10438
  %v10525 = vmax.f32 %v10338, %v10440
  %v10526 = vmax.f32 %v10340, %v10442
  %v10527 = vmax.f32 %v9336, %v10444
  %v10528 = vmax.f32 %v9338, %v10446
  %v10529 = vmax.f32 %v9840, %v10448
  %v10530 = vmax.f32 %v9842, %v10450
  %v10531 = vmax.f32 %v10344, %v10452
  %v10532 = vmax.f32 %v10346, %v10454
  %v10533 = vmax.f32 %v9340, %v10497
  %v10534 = vmax.f32 %v9342, %v10498
  %v10535 = vmax.f32 %v9844, %v10499
  %v10536 = vmax.f32 %v9846, %v10500
  %v10537 = vmax.f32 %v10348, %v10501
  %v10538 = vmax.f32 %v10350, %v10502
  %10575 = vrot.lane.b32.xlu0 %v10503, 56
  %v10576 = vpop.permute.xlu0 %10575
  %10577 = vrot.lane.b32.xlu0 %v10504, 56
  %v10578 = vpop.permute.xlu0 %10577
  %10579 = vrot.lane.b32.xlu0 %v10505, 56
  %v10580 = vpop.permute.xlu0 %10579
  %10581 = vrot.lane.b32.xlu0 %v10506, 56
  %v10582 = vpop.permute.xlu0 %10581
  %10583 = vrot.lane.b32.xlu0 %v10507, 56
  %v10584 = vpop.permute.xlu0 %10583
  %10585 = vrot.lane.b32.xlu0 %v10508, 56
  %v10586 = vpop.permute.xlu0 %10585
  %10587 = vrot.lane.b32.xlu0 %v10509, 56
  %v10588 = vpop.permute.xlu0 %10587
  %10589 = vrot.lane.b32.xlu0 %v10510, 56
  %v10590 = vpop.permute.xlu0 %10589
  %10591 = vrot.lane.b32.xlu0 %v10511, 56
  %v10592 = vpop.permute.xlu0 %10591
  %10593 = vrot.lane.b32.xlu0 %v10512, 56
  %v10594 = vpop.permute.xlu0 %10593
  %10595 = vrot.lane.b32.xlu0 %v10513, 56
  %v10596 = vpop.permute.xlu0 %10595
  %10597 = vrot.lane.b32.xlu0 %v10514, 56
  %v10598 = vpop.permute.xlu0 %10597
  %10599 = vrot.lane.b32.xlu0 %v10515, 56
  %v10600 = vpop.permute.xlu0 %10599
  %10601 = vrot.lane.b32.xlu0 %v10516, 56
  %v10602 = vpop.permute.xlu0 %10601
  %10603 = vrot.lane.b32.xlu0 %v10517, 56
  %v10604 = vpop.permute.xlu0 %10603
  %10605 = vrot.lane.b32.xlu0 %v10518, 56
  %v10606 = vpop.permute.xlu0 %10605
  %10607 = vrot.lane.b32.xlu0 %v10519, 56
  %v10608 = vpop.permute.xlu0 %10607
  %10609 = vrot.lane.b32.xlu0 %v10520, 56
  %v10610 = vpop.permute.xlu0 %10609
  %10611 = vrot.lane.b32.xlu0 %v10521, 56
  %v10612 = vpop.permute.xlu0 %10611
  %10613 = vrot.lane.b32.xlu0 %v10522, 56
  %v10614 = vpop.permute.xlu0 %10613
  %10615 = vrot.lane.b32.xlu0 %v10523, 56
  %v10616 = vpop.permute.xlu0 %10615
  %10617 = vrot.lane.b32.xlu0 %v10524, 56
  %v10618 = vpop.permute.xlu0 %10617
  %10619 = vrot.lane.b32.xlu0 %v10525, 56
  %v10620 = vpop.permute.xlu0 %10619
  %10621 = vrot.lane.b32.xlu0 %v10526, 56
  %v10622 = vpop.permute.xlu0 %10621
  %10623 = vrot.lane.b32.xlu0 %v10527, 56
  %v10624 = vpop.permute.xlu0 %10623
  %10625 = vrot.lane.b32.xlu0 %v10528, 56
  %v10626 = vpop.permute.xlu0 %10625
  %10627 = vrot.lane.b32.xlu0 %v10529, 56
  %v10628 = vpop.permute.xlu0 %10627
  %10629 = vrot.lane.b32.xlu0 %v10530, 56
  %v10630 = vpop.permute.xlu0 %10629
  %10631 = vrot.lane.b32.xlu0 %v10531, 56
  %v10632 = vpop.permute.xlu0 %10631
  %10633 = vrot.lane.b32.xlu0 %v10532, 56
  %v10634 = vpop.permute.xlu0 %10633
  %10635 = vrot.lane.b32.xlu0 %v10533, 56
  %v10636 = vpop.permute.xlu0 %10635
  %10637 = vrot.lane.b32.xlu0 %v10534, 56
  %v10638 = vpop.permute.xlu0 %10637
  %10639 = vrot.lane.b32.xlu0 %v10535, 56
  %v10640 = vpop.permute.xlu0 %10639
  %10641 = vrot.lane.b32.xlu0 %v10536, 56
  %v10642 = vpop.permute.xlu0 %10641
  %10643 = vrot.lane.b32.xlu0 %v10537, 56
  %v10644 = vpop.permute.xlu0 %10643
  %10645 = vrot.lane.b32.xlu0 %v10538, 56
  %v10646 = vpop.permute.xlu0 %10645
  %vm10647 = vcmask 457728
  %v10648 = vsel %vm10647, %v10576, %v10578
  %v10649 = vsel %vm10647, %v10578, %v10580
  %v10650 = vsel %vm10647, %v10580, %v10582
  %v10651 = vsel %vm10647, %v10582, %v10584
  %v10652 = vsel %vm10647, %v10584, %v10586
  %v10653 = vsel %vm10647, %v10588, %v10590
  %v10654 = vsel %vm10647, %v10590, %v10592
  %v10655 = vsel %vm10647, %v10592, %v10594
  %v10656 = vsel %vm10647, %v10594, %v10596
  %v10657 = vsel %vm10647, %v10596, %v10598
  %v10658 = vsel %vm10647, %v10600, %v10602
  %v10659 = vsel %vm10647, %v10602, %v10604
  %v10660 = vsel %vm10647, %v10604, %v10606
  %v10661 = vsel %vm10647, %v10606, %v10608
  %v10662 = vsel %vm10647, %v10608, %v10610
  %v10663 = vsel %vm10647, %v10612, %v10614
  %v10664 = vsel %vm10647, %v10614, %v10616
  %v10665 = vsel %vm10647, %v10616, %v10618
  %v10666 = vsel %vm10647, %v10618, %v10620
  %v10667 = vsel %vm10647, %v10620, %v10622
  %v10668 = vsel %vm10647, %v10624, %v10626
  %v10669 = vsel %vm10647, %v10626, %v10628
  %v10670 = vsel %vm10647, %v10628, %v10630
  %v10671 = vsel %vm10647, %v10630, %v10632
  %v10672 = vsel %vm10647, %v10632, %v10634
  %v10673 = vsel %vm10647, %v10636, %v10638
  %v10674 = vsel %vm10647, %v10638, %v10640
  %v10675 = vsel %vm10647, %v10640, %v10642
  %v10676 = vsel %vm10647, %v10642, %v10644
  %v10677 = vsel %vm10647, %v10644, %v10646
  %10714 = vrot.lane.b32.xlu0 %v10503, 8
  %v10715 = vpop.permute.xlu0 %10714
  %10716 = vrot.lane.b32.xlu0 %v10509, 8
  %v10717 = vpop.permute.xlu0 %10716
  %10718 = vrot.lane.b32.xlu0 %v10515, 8
  %v10719 = vpop.permute.xlu0 %10718
  %10720 = vrot.lane.b32.xlu0 %v10521, 8
  %v10721 = vpop.permute.xlu0 %10720
  %10722 = vrot.lane.b32.xlu0 %v10527, 8
  %v10723 = vpop.permute.xlu0 %10722
  %10724 = vrot.lane.b32.xlu0 %v10533, 8
  %v10725 = vpop.permute.xlu0 %10724
  %v10732 = vsel %vm2774, %v10586, %v10715
  %v10733 = vsel %vm2774, %v10598, %v10717
  %v10734 = vsel %vm2774, %v10610, %v10719
  %v10735 = vsel %vm2774, %v10622, %v10721
  %v10736 = vsel %vm2774, %v10634, %v10723
  %v10737 = vsel %vm2774, %v10646, %v10725
  %v10738 = vmax.f32 %v10503, %v10648
  %v10739 = vmax.f32 %v10504, %v10649
  %v10740 = vmax.f32 %v10505, %v10650
  %v10741 = vmax.f32 %v10506, %v10651
  %v10742 = vmax.f32 %v10507, %v10652
  %v10743 = vmax.f32 %v10508, %v10732
  %v10744 = vmax.f32 %v10509, %v10653
  %v10745 = vmax.f32 %v10510, %v10654
  %v10746 = vmax.f32 %v10511, %v10655
  %v10747 = vmax.f32 %v10512, %v10656
  %v10748 = vmax.f32 %v10513, %v10657
  %v10749 = vmax.f32 %v10514, %v10733
  %v10750 = vmax.f32 %v10515, %v10658
  %v10751 = vmax.f32 %v10516, %v10659
  %v10752 = vmax.f32 %v10517, %v10660
  %v10753 = vmax.f32 %v10518, %v10661
  %v10754 = vmax.f32 %v10519, %v10662
  %v10755 = vmax.f32 %v10520, %v10734
  %v10756 = vmax.f32 %v10521, %v10663
  %v10757 = vmax.f32 %v10522, %v10664
  %v10758 = vmax.f32 %v10523, %v10665
  %v10759 = vmax.f32 %v10524, %v10666
  %v10760 = vmax.f32 %v10525, %v10667
  %v10761 = vmax.f32 %v10526, %v10735
  %v10762 = vmax.f32 %v10527, %v10668
  %v10763 = vmax.f32 %v10528, %v10669
  %v10764 = vmax.f32 %v10529, %v10670
  %v10765 = vmax.f32 %v10530, %v10671
  %v10766 = vmax.f32 %v10531, %v10672
  %v10767 = vmax.f32 %v10532, %v10736
  %v10768 = vmax.f32 %v10533, %v10673
  %v10769 = vmax.f32 %v10534, %v10674
  %v10770 = vmax.f32 %v10535, %v10675
  %v10771 = vmax.f32 %v10536, %v10676
  %v10772 = vmax.f32 %v10537, %v10677
  %v10773 = vmax.f32 %v10538, %v10737
  %v10774 = vpack.c.bf16 %v10744, %v10738
  %v10775 = vpack.c.bf16 %v10745, %v10739
  %v10776 = vpack.c.bf16 %v10746, %v10740
  %v10777 = vpack.c.bf16 %v10747, %v10741
  %v10778 = vpack.c.bf16 %v10748, %v10742
  %v10779 = vpack.c.bf16 %v10749, %v10743
  %v10780 = vpack.c.bf16 %v10756, %v10750
  %v10781 = vpack.c.bf16 %v10757, %v10751
  %v10782 = vpack.c.bf16 %v10758, %v10752
  %v10783 = vpack.c.bf16 %v10759, %v10753
  %v10784 = vpack.c.bf16 %v10760, %v10754
  %v10785 = vpack.c.bf16 %v10761, %v10755
  %v10786 = vpack.c.bf16 %v10768, %v10762
  %v10787 = vpack.c.bf16 %v10769, %v10763
  %v10788 = vpack.c.bf16 %v10770, %v10764
  %v10789 = vpack.c.bf16 %v10771, %v10765
  %v10790 = vpack.c.bf16 %v10772, %v10766
  %v10791 = vpack.c.bf16 %v10773, %v10767
  %v10792 = vld [vmem:[%s6] sm:$0xff]
  %v10793 = vld [vmem:[%s6 + $0x8] sm:$0xf]
  %v10794 = vld [vmem:[%s6 + $0xc] sm:$0xff]
  %v10795 = vld [vmem:[%s6 + $0x14] sm:$0xf]
  %v10796 = vld [vmem:[%s6 + $0x18] sm:$0xff]
  %v10797 = vld [vmem:[%s6 + $0x20] sm:$0xf]
  %v10798 = vld [vmem:[%s6 + $0x24] sm:$0xff]
  %v10799 = vld [vmem:[%s6 + $0x2c] sm:$0xf]
  %v10800 = vld [vmem:[%s6 + $0x30] sm:$0xff]
  %v10801 = vld [vmem:[%s6 + $0x38] sm:$0xf]
  %v10802 = vld [vmem:[%s6 + $0x3c] sm:$0xff]
  %v10803 = vld [vmem:[%s6 + $0x44] sm:$0xf]
  %v10804 = vld [vmem:[%s6 + $0x48] sm:$0xff]
  %v10805 = vld [vmem:[%s6 + $0x50] sm:$0xf]
  %v10806 = vld [vmem:[%s6 + $0x54] sm:$0xff]
  %v10807 = vld [vmem:[%s6 + $0x5c] sm:$0xf]
  %v10808 = vld [vmem:[%s6 + $0x60] sm:$0xff]
  %v10809 = vld [vmem:[%s6 + $0x68] sm:$0xf]
  %v10810 = vld [vmem:[%s6 + $0x6c] sm:$0xff]
  %v10811 = vld [vmem:[%s6 + $0x74] sm:$0xf]
  %v10812 = vld [vmem:[%s6 + $0x78] sm:$0xff]
  %v10813 = vld [vmem:[%s6 + $0x80] sm:$0xf]
  %v10814 = vld [vmem:[%s6 + $0x84] sm:$0xff]
  %v10815 = vld [vmem:[%s6 + $0x8c] sm:$0xf]
  %v10816 = vld [vmem:[%s6 + $0x90] sm:$0xff]
  %v10817 = vld [vmem:[%s6 + $0x98] sm:$0xf]
  %v10818 = vld [vmem:[%s6 + $0x9c] sm:$0xff]
  %v10819 = vld [vmem:[%s6 + $0xa4] sm:$0xf]
  %v10820 = vld [vmem:[%s6 + $0xa8] sm:$0xff]
  %v10821 = vld [vmem:[%s6 + $0xb0] sm:$0xf]
  %v10822 = vld [vmem:[%s6 + $0xb4] sm:$0xff]
  %v10823 = vld [vmem:[%s6 + $0xbc] sm:$0xf]
  %v10824 = vld [vmem:[%s6 + $0xc0] sm:$0xff]
  %v10825 = vld [vmem:[%s6 + $0xc8] sm:$0xf]
  %v10826 = vld [vmem:[%s6 + $0xcc] sm:$0xff]
  %v10827 = vld [vmem:[%s6 + $0xd4] sm:$0xf]
  %v10828 = vld [vmem:[%s6 + $0xd8] sm:$0xff]
  %v10829 = vld [vmem:[%s6 + $0xe0] sm:$0xf]
  %v10830 = vld [vmem:[%s6 + $0xe4] sm:$0xff]
  %v10831 = vld [vmem:[%s6 + $0xec] sm:$0xf]
  %v10832 = vld [vmem:[%s6 + $0xf0] sm:$0xff]
  %v10833 = vld [vmem:[%s6 + $0xf8] sm:$0xf]
  %v10834 = vld [vmem:[%s6 + $0xfc] sm:$0xff]
  %v10835 = vld [vmem:[%s6 + $0x104] sm:$0xf]
  %v10836 = vld [vmem:[%s6 + $0x108] sm:$0xff]
  %v10837 = vld [vmem:[%s6 + $0x110] sm:$0xf]
  %v10838 = vld [vmem:[%s6 + $0x114] sm:$0xff]
  %v10839 = vld [vmem:[%s6 + $0x11c] sm:$0xf]
  %v10840 = vld [vmem:[%s6 + $0x120] sm:$0xff]
  %v10841 = vld [vmem:[%s6 + $0x128] sm:$0xf]
  %v10842 = vld [vmem:[%s6 + $0x12c] sm:$0xff]
  %v10843 = vld [vmem:[%s6 + $0x134] sm:$0xf]
  %v10844 = vld [vmem:[%s6 + $0x138] sm:$0xff]
  %v10845 = vld [vmem:[%s6 + $0x140] sm:$0xf]
  %v10846 = vld [vmem:[%s6 + $0x144] sm:$0xff]
  %v10847 = vld [vmem:[%s6 + $0x14c] sm:$0xf]
  %v10848 = vld [vmem:[%s6 + $0x150] sm:$0xff]
  %v10849 = vld [vmem:[%s6 + $0x158] sm:$0xf]
  %v10850 = vld [vmem:[%s6 + $0x15c] sm:$0xff]
  %v10851 = vld [vmem:[%s6 + $0x164] sm:$0xf]
  %v10852 = vld [vmem:[%s6 + $0x168] sm:$0xff]
  %v10853 = vld [vmem:[%s6 + $0x170] sm:$0xf]
  %v10854 = vld [vmem:[%s6 + $0x174] sm:$0xff]
  %v10855 = vld [vmem:[%s6 + $0x17c] sm:$0xf]
  %v10856 = vld [vmem:[%s6 + $0x180] sm:$0xff]
  %v10857 = vld [vmem:[%s6 + $0x188] sm:$0xf]
  %v10858 = vld [vmem:[%s6 + $0x18c] sm:$0xff]
  %v10859 = vld [vmem:[%s6 + $0x194] sm:$0xf]
  %v10860 = vld [vmem:[%s6 + $0x198] sm:$0xff]
  %v10861 = vld [vmem:[%s6 + $0x1a0] sm:$0xf]
  %v10862 = vld [vmem:[%s6 + $0x1a4] sm:$0xff]
  %v10863 = vld [vmem:[%s6 + $0x1ac] sm:$0xf]
  %v10864 = vld [vmem:[%s6 + $0x1b0] sm:$0xff]
  %v10865 = vld [vmem:[%s6 + $0x1b8] sm:$0xf]
  %v10866 = vld [vmem:[%s6 + $0x1bc] sm:$0xff]
  %v10867 = vld [vmem:[%s6 + $0x1c4] sm:$0xf]
  %v10868 = vld [vmem:[%s6 + $0x1c8] sm:$0xff]
  %v10869 = vld [vmem:[%s6 + $0x1d0] sm:$0xf]
  %v10870 = vld [vmem:[%s6 + $0x1d4] sm:$0xff]
  %v10871 = vld [vmem:[%s6 + $0x1dc] sm:$0xf]
  %v10872 = vld [vmem:[%s6 + $0x1e0] sm:$0xff]
  %v10873 = vld [vmem:[%s6 + $0x1e8] sm:$0xf]
  %v10874 = vld [vmem:[%s6 + $0x1ec] sm:$0xff]
  %v10875 = vld [vmem:[%s6 + $0x1f4] sm:$0xf]
  %v10876 = vld [vmem:[%s6 + $0x1f8] sm:$0xff]
  %v10877 = vld [vmem:[%s6 + $0x200] sm:$0xf]
  %v10878 = vld [vmem:[%s6 + $0x204] sm:$0xff]
  %v10879 = vld [vmem:[%s6 + $0x20c] sm:$0xf]
  %v10880 = vld [vmem:[%s6 + $0x210] sm:$0xff]
  %v10881 = vld [vmem:[%s6 + $0x218] sm:$0xf]
  %v10882 = vld [vmem:[%s6 + $0x21c] sm:$0xff]
  %v10883 = vld [vmem:[%s6 + $0x224] sm:$0xf]
  %v10884 = vld [vmem:[%s6 + $0x228] sm:$0xff]
  %v10885 = vld [vmem:[%s6 + $0x230] sm:$0xf]
  %v10886 = vld [vmem:[%s6 + $0x234] sm:$0xff]
  %v10887 = vld [vmem:[%s6 + $0x23c] sm:$0xf]
  %v10888 = vld [vmem:[%s6 + $0x240] sm:$0xff]
  %v10889 = vld [vmem:[%s6 + $0x248] sm:$0xf]
  %v10890 = vld [vmem:[%s6 + $0x24c] sm:$0xff]
  %v10891 = vld [vmem:[%s6 + $0x254] sm:$0xf]
  %v10892 = vld [vmem:[%s6 + $0x258] sm:$0xff]
  %v10893 = vld [vmem:[%s6 + $0x260] sm:$0xf]
  %v10894 = vld [vmem:[%s6 + $0x264] sm:$0xff]
  %v10895 = vld [vmem:[%s6 + $0x26c] sm:$0xf]
  %v10896 = vld [vmem:[%s6 + $0x270] sm:$0xff]
  %v10897 = vld [vmem:[%s6 + $0x278] sm:$0xf]
  %v10898 = vld [vmem:[%s6 + $0x27c] sm:$0xff]
  %v10899 = vld [vmem:[%s6 + $0x284] sm:$0xf]
  %v10900 = vld [vmem:[%s6 + $0x288] sm:$0xff]
  %v10901 = vld [vmem:[%s6 + $0x290] sm:$0xf]
  %v10902 = vld [vmem:[%s6 + $0x294] sm:$0xff]
  %v10903 = vld [vmem:[%s6 + $0x29c] sm:$0xf]
  %v10904 = vld [vmem:[%s6 + $0x2a0] sm:$0xff]
  %v10905 = vld [vmem:[%s6 + $0x2a8] sm:$0xf]
  %v10906 = vld [vmem:[%s6 + $0x2ac] sm:$0xff]
  %v10907 = vld [vmem:[%s6 + $0x2b4] sm:$0xf]
  %v10908 = vld [vmem:[%s6 + $0x2b8] sm:$0xff]
  %v10909 = vld [vmem:[%s6 + $0x2c0] sm:$0xf]
  %v10910 = vld [vmem:[%s6 + $0x2c4] sm:$0xff]
  %v10911 = vld [vmem:[%s6 + $0x2cc] sm:$0xf]
  %v10912 = vld [vmem:[%s6 + $0x2d0] sm:$0xff]
  %v10913 = vld [vmem:[%s6 + $0x2d8] sm:$0xf]
  %v10914 = vld [vmem:[%s6 + $0x2dc] sm:$0xff]
  %v10915 = vld [vmem:[%s6 + $0x2e4] sm:$0xf]
  %v10916 = vld [vmem:[%s6 + $0x2e8] sm:$0xff]
  %v10917 = vld [vmem:[%s6 + $0x2f0] sm:$0xf]
  %v10918 = vld [vmem:[%s6 + $0x2f4] sm:$0xff]
  %v10919 = vld [vmem:[%s6 + $0x2fc] sm:$0xf]
  %v10920 = vld [vmem:[%s6 + $0x300] sm:$0xff]
  %v10921 = vld [vmem:[%s6 + $0x308] sm:$0xf]
  %v10922 = vld [vmem:[%s6 + $0x30c] sm:$0xff]
  %v10923 = vld [vmem:[%s6 + $0x314] sm:$0xf]
  %v10924 = vld [vmem:[%s6 + $0x318] sm:$0xff]
  %v10925 = vld [vmem:[%s6 + $0x320] sm:$0xf]
  %v10926 = vld [vmem:[%s6 + $0x324] sm:$0xff]
  %v10927 = vld [vmem:[%s6 + $0x32c] sm:$0xf]
  %v10928 = vld [vmem:[%s6 + $0x330] sm:$0xff]
  %v10929 = vld [vmem:[%s6 + $0x338] sm:$0xf]
  %v10930 = vld [vmem:[%s6 + $0x33c] sm:$0xff]
  %v10931 = vld [vmem:[%s6 + $0x344] sm:$0xf]
  %v10932 = vld [vmem:[%s6 + $0x348] sm:$0xff]
  %v10933 = vld [vmem:[%s6 + $0x350] sm:$0xf]
  %v10934 = vld [vmem:[%s6 + $0x354] sm:$0xff]
  %v10935 = vld [vmem:[%s6 + $0x35c] sm:$0xf]
  %v10936 = vld [vmem:[%s6 + $0x360] sm:$0xff]
  %v10937 = vld [vmem:[%s6 + $0x368] sm:$0xf]
  %v10938 = vld [vmem:[%s6 + $0x36c] sm:$0xff]
  %v10939 = vld [vmem:[%s6 + $0x374] sm:$0xf]
  %v10940 = vld [vmem:[%s6 + $0x378] sm:$0xff]
  %v10941 = vld [vmem:[%s6 + $0x380] sm:$0xf]
  %v10942 = vld [vmem:[%s6 + $0x384] sm:$0xff]
  %v10943 = vld [vmem:[%s6 + $0x38c] sm:$0xf]
  %v10944 = vld [vmem:[%s6 + $0x390] sm:$0xff]
  %v10945 = vld [vmem:[%s6 + $0x398] sm:$0xf]
  %v10946 = vld [vmem:[%s6 + $0x39c] sm:$0xff]
  %v10947 = vld [vmem:[%s6 + $0x3a4] sm:$0xf]
  %v10948 = vld [vmem:[%s6 + $0x3a8] sm:$0xff]
  %v10949 = vld [vmem:[%s6 + $0x3b0] sm:$0xf]
  %v10950 = vld [vmem:[%s6 + $0x3b4] sm:$0xff]
  %v10951 = vld [vmem:[%s6 + $0x3bc] sm:$0xf]
  %v10952 = vld [vmem:[%s6 + $0x3c0] sm:$0xff]
  %v10953 = vld [vmem:[%s6 + $0x3c8] sm:$0xf]
  %v10954 = vld [vmem:[%s6 + $0x3cc] sm:$0xff]
  %v10955 = vld [vmem:[%s6 + $0x3d4] sm:$0xf]
  %v10956 = vld [vmem:[%s6 + $0x3d8] sm:$0xff]
  %v10957 = vld [vmem:[%s6 + $0x3e0] sm:$0xf]
  %v10958 = vld [vmem:[%s6 + $0x3e4] sm:$0xff]
  %v10959 = vld [vmem:[%s6 + $0x3ec] sm:$0xf]
  %v10960 = vld [vmem:[%s6 + $0x3f0] sm:$0xff]
  %v10961 = vld [vmem:[%s6 + $0x3f8] sm:$0xf]
  %v10962 = vld [vmem:[%s6 + $0x3fc] sm:$0xff]
  %v10963 = vld [vmem:[%s6 + $0x404] sm:$0xf]
  %v10964 = vld [vmem:[%s6 + $0x408] sm:$0xff]
  %v10965 = vld [vmem:[%s6 + $0x410] sm:$0xf]
  %v10966 = vld [vmem:[%s6 + $0x414] sm:$0xff]
  %v10967 = vld [vmem:[%s6 + $0x41c] sm:$0xf]
  %v10968 = vld [vmem:[%s6 + $0x420] sm:$0xff]
  %v10969 = vld [vmem:[%s6 + $0x428] sm:$0xf]
  %v10970 = vld [vmem:[%s6 + $0x42c] sm:$0xff]
  %v10971 = vld [vmem:[%s6 + $0x434] sm:$0xf]
  %v10972 = vld [vmem:[%s5] sm:$0x7]
  %v10974 = vlaneseq
  %v10975 = vshrl.u32 %v10974, 7
  %v10976 = vsub.s32 0, %v10975
  %v10977 = vrot.slane %v10972, %v10976
  %v10978 = vlaneseq
  %v10979 = vshrl.u32 %v10978, 7
  %v10980 = vsub.s32 1, %v10979
  %v10981 = vrot.slane %v10972, %v10980
  %v10982 = vlaneseq
  %v10983 = vshrl.u32 %v10982, 7
  %v10984 = vsub.s32 2, %v10983
  %v10985 = vrot.slane %v10972, %v10984
  %v11169 = vunpack.c.l.b16 %v10792
  %v11170 = vunpack.c.h.b16 %v10792
  %v11171 = vunpack.c.l.b16 %v10793
  %v11172 = vunpack.c.l.b16 %v10794
  %v11173 = vunpack.c.h.b16 %v10794
  %v11174 = vunpack.c.l.b16 %v10795
  %v11175 = vunpack.c.l.b16 %v10796
  %v11176 = vunpack.c.h.b16 %v10796
  %v11177 = vunpack.c.l.b16 %v10797
  %v11178 = vunpack.c.l.b16 %v10798
  %v11179 = vunpack.c.h.b16 %v10798
  %v11180 = vunpack.c.l.b16 %v10799
  %v11181 = vunpack.c.l.b16 %v10800
  %v11182 = vunpack.c.h.b16 %v10800
  %v11183 = vunpack.c.l.b16 %v10801
  %v11184 = vunpack.c.l.b16 %v10802
  %v11185 = vunpack.c.h.b16 %v10802
  %v11186 = vunpack.c.l.b16 %v10803
  %v11187 = vunpack.c.l.b16 %v10804
  %v11188 = vunpack.c.h.b16 %v10804
  %v11189 = vunpack.c.l.b16 %v10805
  %v11190 = vunpack.c.l.b16 %v10806
  %v11191 = vunpack.c.h.b16 %v10806
  %v11192 = vunpack.c.l.b16 %v10807
  %v11193 = vunpack.c.l.b16 %v10808
  %v11194 = vunpack.c.h.b16 %v10808
  %v11195 = vunpack.c.l.b16 %v10809
  %v11196 = vunpack.c.l.b16 %v10810
  %v11197 = vunpack.c.h.b16 %v10810
  %v11198 = vunpack.c.l.b16 %v10811
  %v11199 = vunpack.c.l.b16 %v10812
  %v11200 = vunpack.c.h.b16 %v10812
  %v11201 = vunpack.c.l.b16 %v10813
  %v11202 = vunpack.c.l.b16 %v10814
  %v11203 = vunpack.c.h.b16 %v10814
  %v11204 = vunpack.c.l.b16 %v10815
  %v11205 = vunpack.c.l.b16 %v10816
  %v11206 = vunpack.c.h.b16 %v10816
  %v11207 = vunpack.c.l.b16 %v10817
  %v11208 = vunpack.c.l.b16 %v10818
  %v11209 = vunpack.c.h.b16 %v10818
  %v11210 = vunpack.c.l.b16 %v10819
  %v11211 = vunpack.c.l.b16 %v10820
  %v11212 = vunpack.c.h.b16 %v10820
  %v11213 = vunpack.c.l.b16 %v10821
  %v11214 = vunpack.c.l.b16 %v10822
  %v11215 = vunpack.c.h.b16 %v10822
  %v11216 = vunpack.c.l.b16 %v10823
  %v11217 = vunpack.c.l.b16 %v10824
  %v11218 = vunpack.c.h.b16 %v10824
  %v11219 = vunpack.c.l.b16 %v10825
  %v11220 = vunpack.c.l.b16 %v10826
  %v11221 = vunpack.c.h.b16 %v10826
  %v11222 = vunpack.c.l.b16 %v10827
  %v11223 = vunpack.c.l.b16 %v10828
  %v11224 = vunpack.c.h.b16 %v10828
  %v11225 = vunpack.c.l.b16 %v10829
  %v11226 = vunpack.c.l.b16 %v10830
  %v11227 = vunpack.c.h.b16 %v10830
  %v11228 = vunpack.c.l.b16 %v10831
  %v11229 = vunpack.c.l.b16 %v10832
  %v11230 = vunpack.c.h.b16 %v10832
  %v11231 = vunpack.c.l.b16 %v10833
  %v11232 = vunpack.c.l.b16 %v10834
  %v11233 = vunpack.c.h.b16 %v10834
  %v11234 = vunpack.c.l.b16 %v10835
  %v11235 = vunpack.c.l.b16 %v10836
  %v11236 = vunpack.c.h.b16 %v10836
  %v11237 = vunpack.c.l.b16 %v10837
  %v11238 = vunpack.c.l.b16 %v10838
  %v11239 = vunpack.c.h.b16 %v10838
  %v11240 = vunpack.c.l.b16 %v10839
  %v11241 = vunpack.c.l.b16 %v10840
  %v11242 = vunpack.c.h.b16 %v10840
  %v11243 = vunpack.c.l.b16 %v10841
  %v11244 = vunpack.c.l.b16 %v10842
  %v11245 = vunpack.c.h.b16 %v10842
  %v11246 = vunpack.c.l.b16 %v10843
  %v11247 = vunpack.c.l.b16 %v10844
  %v11248 = vunpack.c.h.b16 %v10844
  %v11249 = vunpack.c.l.b16 %v10845
  %v11250 = vunpack.c.l.b16 %v10846
  %v11251 = vunpack.c.h.b16 %v10846
  %v11252 = vunpack.c.l.b16 %v10847
  %v11253 = vunpack.c.l.b16 %v10848
  %v11254 = vunpack.c.h.b16 %v10848
  %v11255 = vunpack.c.l.b16 %v10849
  %v11256 = vunpack.c.l.b16 %v10850
  %v11257 = vunpack.c.h.b16 %v10850
  %v11258 = vunpack.c.l.b16 %v10851
  %v11259 = vunpack.c.l.b16 %v10852
  %v11260 = vunpack.c.h.b16 %v10852
  %v11261 = vunpack.c.l.b16 %v10853
  %v11262 = vunpack.c.l.b16 %v10854
  %v11263 = vunpack.c.h.b16 %v10854
  %v11264 = vunpack.c.l.b16 %v10855
  %v11265 = vunpack.c.l.b16 %v10856
  %v11266 = vunpack.c.h.b16 %v10856
  %v11267 = vunpack.c.l.b16 %v10857
  %v11268 = vunpack.c.l.b16 %v10858
  %v11269 = vunpack.c.h.b16 %v10858
  %v11270 = vunpack.c.l.b16 %v10859
  %v11271 = vunpack.c.l.b16 %v10860
  %v11272 = vunpack.c.h.b16 %v10860
  %v11273 = vunpack.c.l.b16 %v10861
  %v11274 = vunpack.c.l.b16 %v10862
  %v11275 = vunpack.c.h.b16 %v10862
  %v11276 = vunpack.c.l.b16 %v10863
  %v11277 = vunpack.c.l.b16 %v10864
  %v11278 = vunpack.c.h.b16 %v10864
  %v11279 = vunpack.c.l.b16 %v10865
  %v11280 = vunpack.c.l.b16 %v10866
  %v11281 = vunpack.c.h.b16 %v10866
  %v11282 = vunpack.c.l.b16 %v10867
  %v11283 = vunpack.c.l.b16 %v10868
  %v11284 = vunpack.c.h.b16 %v10868
  %v11285 = vunpack.c.l.b16 %v10869
  %v11286 = vunpack.c.l.b16 %v10870
  %v11287 = vunpack.c.h.b16 %v10870
  %v11288 = vunpack.c.l.b16 %v10871
  %v11289 = vunpack.c.l.b16 %v10872
  %v11290 = vunpack.c.h.b16 %v10872
  %v11291 = vunpack.c.l.b16 %v10873
  %v11292 = vunpack.c.l.b16 %v10874
  %v11293 = vunpack.c.h.b16 %v10874
  %v11294 = vunpack.c.l.b16 %v10875
  %v11295 = vunpack.c.l.b16 %v10876
  %v11296 = vunpack.c.h.b16 %v10876
  %v11297 = vunpack.c.l.b16 %v10877
  %v11298 = vunpack.c.l.b16 %v10878
  %v11299 = vunpack.c.h.b16 %v10878
  %v11300 = vunpack.c.l.b16 %v10879
  %v11301 = vunpack.c.l.b16 %v10880
  %v11302 = vunpack.c.h.b16 %v10880
  %v11303 = vunpack.c.l.b16 %v10881
  %v11304 = vunpack.c.l.b16 %v10882
  %v11305 = vunpack.c.h.b16 %v10882
  %v11306 = vunpack.c.l.b16 %v10883
  %v11307 = vunpack.c.l.b16 %v10884
  %v11308 = vunpack.c.h.b16 %v10884
  %v11309 = vunpack.c.l.b16 %v10885
  %v11310 = vunpack.c.l.b16 %v10886
  %v11311 = vunpack.c.h.b16 %v10886
  %v11312 = vunpack.c.l.b16 %v10887
  %v11313 = vunpack.c.l.b16 %v10888
  %v11314 = vunpack.c.h.b16 %v10888
  %v11315 = vunpack.c.l.b16 %v10889
  %v11316 = vunpack.c.l.b16 %v10890
  %v11317 = vunpack.c.h.b16 %v10890
  %v11318 = vunpack.c.l.b16 %v10891
  %v11319 = vunpack.c.l.b16 %v10892
  %v11320 = vunpack.c.h.b16 %v10892
  %v11321 = vunpack.c.l.b16 %v10893
  %v11322 = vunpack.c.l.b16 %v10894
  %v11323 = vunpack.c.h.b16 %v10894
  %v11324 = vunpack.c.l.b16 %v10895
  %v11325 = vunpack.c.l.b16 %v10896
  %v11326 = vunpack.c.h.b16 %v10896
  %v11327 = vunpack.c.l.b16 %v10897
  %v11328 = vunpack.c.l.b16 %v10898
  %v11329 = vunpack.c.h.b16 %v10898
  %v11330 = vunpack.c.l.b16 %v10899
  %v11331 = vunpack.c.l.b16 %v10900
  %v11332 = vunpack.c.h.b16 %v10900
  %v11333 = vunpack.c.l.b16 %v10901
  %v11334 = vunpack.c.l.b16 %v10902
  %v11335 = vunpack.c.h.b16 %v10902
  %v11336 = vunpack.c.l.b16 %v10903
  %v11337 = vunpack.c.l.b16 %v10904
  %v11338 = vunpack.c.h.b16 %v10904
  %v11339 = vunpack.c.l.b16 %v10905
  %v11340 = vunpack.c.l.b16 %v10906
  %v11341 = vunpack.c.h.b16 %v10906
  %v11342 = vunpack.c.l.b16 %v10907
  %v11343 = vunpack.c.l.b16 %v10908
  %v11344 = vunpack.c.h.b16 %v10908
  %v11345 = vunpack.c.l.b16 %v10909
  %v11346 = vunpack.c.l.b16 %v10910
  %v11347 = vunpack.c.h.b16 %v10910
  %v11348 = vunpack.c.l.b16 %v10911
  %v11349 = vunpack.c.l.b16 %v10912
  %v11350 = vunpack.c.h.b16 %v10912
  %v11351 = vunpack.c.l.b16 %v10913
  %v11352 = vunpack.c.l.b16 %v10914
  %v11353 = vunpack.c.h.b16 %v10914
  %v11354 = vunpack.c.l.b16 %v10915
  %v11355 = vunpack.c.l.b16 %v10916
  %v11356 = vunpack.c.h.b16 %v10916
  %v11357 = vunpack.c.l.b16 %v10917
  %v11358 = vunpack.c.l.b16 %v10918
  %v11359 = vunpack.c.h.b16 %v10918
  %v11360 = vunpack.c.l.b16 %v10919
  %v11361 = vunpack.c.l.b16 %v10920
  %v11362 = vunpack.c.h.b16 %v10920
  %v11363 = vunpack.c.l.b16 %v10921
  %v11364 = vunpack.c.l.b16 %v10922
  %v11365 = vunpack.c.h.b16 %v10922
  %v11366 = vunpack.c.l.b16 %v10923
  %v11367 = vunpack.c.l.b16 %v10924
  %v11368 = vunpack.c.h.b16 %v10924
  %v11369 = vunpack.c.l.b16 %v10925
  %v11370 = vunpack.c.l.b16 %v10926
  %v11371 = vunpack.c.h.b16 %v10926
  %v11372 = vunpack.c.l.b16 %v10927
  %v11373 = vunpack.c.l.b16 %v10928
  %v11374 = vunpack.c.h.b16 %v10928
  %v11375 = vunpack.c.l.b16 %v10929
  %v11376 = vunpack.c.l.b16 %v10930
  %v11377 = vunpack.c.h.b16 %v10930
  %v11378 = vunpack.c.l.b16 %v10931
  %v11379 = vunpack.c.l.b16 %v10932
  %v11380 = vunpack.c.h.b16 %v10932
  %v11381 = vunpack.c.l.b16 %v10933
  %v11382 = vunpack.c.l.b16 %v10934
  %v11383 = vunpack.c.h.b16 %v10934
  %v11384 = vunpack.c.l.b16 %v10935
  %v11385 = vunpack.c.l.b16 %v10936
  %v11386 = vunpack.c.h.b16 %v10936
  %v11387 = vunpack.c.l.b16 %v10937
  %v11388 = vunpack.c.l.b16 %v10938
  %v11389 = vunpack.c.h.b16 %v10938
  %v11390 = vunpack.c.l.b16 %v10939
  %v11391 = vunpack.c.l.b16 %v10940
  %v11392 = vunpack.c.h.b16 %v10940
  %v11393 = vunpack.c.l.b16 %v10941
  %v11394 = vunpack.c.l.b16 %v10942
  %v11395 = vunpack.c.h.b16 %v10942
  %v11396 = vunpack.c.l.b16 %v10943
  %v11397 = vunpack.c.l.b16 %v10944
  %v11398 = vunpack.c.h.b16 %v10944
  %v11399 = vunpack.c.l.b16 %v10945
  %v11400 = vunpack.c.l.b16 %v10946
  %v11401 = vunpack.c.h.b16 %v10946
  %v11402 = vunpack.c.l.b16 %v10947
  %v11403 = vunpack.c.l.b16 %v10948
  %v11404 = vunpack.c.h.b16 %v10948
  %v11405 = vunpack.c.l.b16 %v10949
  %v11406 = vunpack.c.l.b16 %v10950
  %v11407 = vunpack.c.h.b16 %v10950
  %v11408 = vunpack.c.l.b16 %v10951
  %v11409 = vunpack.c.l.b16 %v10952
  %v11410 = vunpack.c.h.b16 %v10952
  %v11411 = vunpack.c.l.b16 %v10953
  %v11412 = vunpack.c.l.b16 %v10954
  %v11413 = vunpack.c.h.b16 %v10954
  %v11414 = vunpack.c.l.b16 %v10955
  %v11415 = vunpack.c.l.b16 %v10956
  %v11416 = vunpack.c.h.b16 %v10956
  %v11417 = vunpack.c.l.b16 %v10957
  %v11418 = vunpack.c.l.b16 %v10958
  %v11419 = vunpack.c.h.b16 %v10958
  %v11420 = vunpack.c.l.b16 %v10959
  %v11421 = vunpack.c.l.b16 %v10960
  %v11422 = vunpack.c.h.b16 %v10960
  %v11423 = vunpack.c.l.b16 %v10961
  %v11424 = vunpack.c.l.b16 %v10962
  %v11425 = vunpack.c.h.b16 %v10962
  %v11426 = vunpack.c.l.b16 %v10963
  %v11427 = vunpack.c.l.b16 %v10964
  %v11428 = vunpack.c.h.b16 %v10964
  %v11429 = vunpack.c.l.b16 %v10965
  %v11430 = vunpack.c.l.b16 %v10966
  %v11431 = vunpack.c.h.b16 %v10966
  %v11432 = vunpack.c.l.b16 %v10967
  %v11433 = vunpack.c.l.b16 %v10968
  %v11434 = vunpack.c.h.b16 %v10968
  %v11435 = vunpack.c.l.b16 %v10969
  %v11436 = vunpack.c.l.b16 %v10970
  %v11437 = vunpack.c.h.b16 %v10970
  %v11438 = vunpack.c.l.b16 %v10971
  %v11439 = vpack.c.b16 %v11172, %v11169
  %v11440 = vpack.c.b16 %v11173, %v11170
  %v11441 = vpack.c.b16 %v11174, %v11171
  %v11442 = vpack.c.b16 %v11178, %v11175
  %v11443 = vpack.c.b16 %v11179, %v11176
  %v11444 = vpack.c.b16 %v11180, %v11177
  %v11445 = vpack.c.b16 %v11184, %v11181
  %v11446 = vpack.c.b16 %v11185, %v11182
  %v11447 = vpack.c.b16 %v11186, %v11183
  %v11448 = vpack.c.b16 %v11190, %v11187
  %v11449 = vpack.c.b16 %v11191, %v11188
  %v11450 = vpack.c.b16 %v11192, %v11189
  %v11451 = vpack.c.b16 %v11196, %v11193
  %v11452 = vpack.c.b16 %v11197, %v11194
  %v11453 = vpack.c.b16 %v11198, %v11195
  %v11454 = vpack.c.b16 %v11202, %v11199
  %v11455 = vpack.c.b16 %v11203, %v11200
  %v11456 = vpack.c.b16 %v11204, %v11201
  %v11457 = vpack.c.b16 %v11208, %v11205
  %v11458 = vpack.c.b16 %v11209, %v11206
  %v11459 = vpack.c.b16 %v11210, %v11207
  %v11460 = vpack.c.b16 %v11214, %v11211
  %v11461 = vpack.c.b16 %v11215, %v11212
  %v11462 = vpack.c.b16 %v11216, %v11213
  %v11463 = vpack.c.b16 %v11220, %v11217
  %v11464 = vpack.c.b16 %v11221, %v11218
  %v11465 = vpack.c.b16 %v11222, %v11219
  %v11466 = vpack.c.b16 %v11226, %v11223
  %v11467 = vpack.c.b16 %v11227, %v11224
  %v11468 = vpack.c.b16 %v11228, %v11225
  %v11469 = vpack.c.b16 %v11232, %v11229
  %v11470 = vpack.c.b16 %v11233, %v11230
  %v11471 = vpack.c.b16 %v11234, %v11231
  %v11472 = vpack.c.b16 %v11238, %v11235
  %v11473 = vpack.c.b16 %v11239, %v11236
  %v11474 = vpack.c.b16 %v11240, %v11237
  %v11475 = vpack.c.b16 %v11244, %v11241
  %v11476 = vpack.c.b16 %v11245, %v11242
  %v11477 = vpack.c.b16 %v11246, %v11243
  %v11478 = vpack.c.b16 %v11250, %v11247
  %v11479 = vpack.c.b16 %v11251, %v11248
  %v11480 = vpack.c.b16 %v11252, %v11249
  %v11481 = vpack.c.b16 %v11256, %v11253
  %v11482 = vpack.c.b16 %v11257, %v11254
  %v11483 = vpack.c.b16 %v11258, %v11255
  %v11484 = vpack.c.b16 %v11262, %v11259
  %v11485 = vpack.c.b16 %v11263, %v11260
  %v11486 = vpack.c.b16 %v11264, %v11261
  %v11487 = vpack.c.b16 %v11268, %v11265
  %v11488 = vpack.c.b16 %v11269, %v11266
  %v11489 = vpack.c.b16 %v11270, %v11267
  %v11490 = vpack.c.b16 %v11274, %v11271
  %v11491 = vpack.c.b16 %v11275, %v11272
  %v11492 = vpack.c.b16 %v11276, %v11273
  %v11493 = vpack.c.b16 %v11280, %v11277
  %v11494 = vpack.c.b16 %v11281, %v11278
  %v11495 = vpack.c.b16 %v11282, %v11279
  %v11496 = vpack.c.b16 %v11286, %v11283
  %v11497 = vpack.c.b16 %v11287, %v11284
  %v11498 = vpack.c.b16 %v11288, %v11285
  %v11499 = vpack.c.b16 %v11292, %v11289
  %v11500 = vpack.c.b16 %v11293, %v11290
  %v11501 = vpack.c.b16 %v11294, %v11291
  %v11502 = vpack.c.b16 %v11298, %v11295
  %v11503 = vpack.c.b16 %v11299, %v11296
  %v11504 = vpack.c.b16 %v11300, %v11297
  %v11505 = vpack.c.b16 %v11304, %v11301
  %v11506 = vpack.c.b16 %v11305, %v11302
  %v11507 = vpack.c.b16 %v11306, %v11303
  %v11508 = vpack.c.b16 %v11310, %v11307
  %v11509 = vpack.c.b16 %v11311, %v11308
  %v11510 = vpack.c.b16 %v11312, %v11309
  %v11511 = vpack.c.b16 %v11316, %v11313
  %v11512 = vpack.c.b16 %v11317, %v11314
  %v11513 = vpack.c.b16 %v11318, %v11315
  %v11514 = vpack.c.b16 %v11322, %v11319
  %v11515 = vpack.c.b16 %v11323, %v11320
  %v11516 = vpack.c.b16 %v11324, %v11321
  %v11517 = vpack.c.b16 %v11328, %v11325
  %v11518 = vpack.c.b16 %v11329, %v11326
  %v11519 = vpack.c.b16 %v11330, %v11327
  %v11520 = vpack.c.b16 %v11334, %v11331
  %v11521 = vpack.c.b16 %v11335, %v11332
  %v11522 = vpack.c.b16 %v11336, %v11333
  %v11523 = vpack.c.b16 %v11340, %v11337
  %v11524 = vpack.c.b16 %v11341, %v11338
  %v11525 = vpack.c.b16 %v11342, %v11339
  %v11526 = vpack.c.b16 %v11346, %v11343
  %v11527 = vpack.c.b16 %v11347, %v11344
  %v11528 = vpack.c.b16 %v11348, %v11345
  %v11529 = vpack.c.b16 %v11352, %v11349
  %v11530 = vpack.c.b16 %v11353, %v11350
  %v11531 = vpack.c.b16 %v11354, %v11351
  %v11532 = vpack.c.b16 %v11358, %v11355
  %v11533 = vpack.c.b16 %v11359, %v11356
  %v11534 = vpack.c.b16 %v11360, %v11357
  %v11535 = vpack.c.b16 %v11364, %v11361
  %v11536 = vpack.c.b16 %v11365, %v11362
  %v11537 = vpack.c.b16 %v11366, %v11363
  %v11538 = vpack.c.b16 %v11370, %v11367
  %v11539 = vpack.c.b16 %v11371, %v11368
  %v11540 = vpack.c.b16 %v11372, %v11369
  %v11541 = vpack.c.b16 %v11376, %v11373
  %v11542 = vpack.c.b16 %v11377, %v11374
  %v11543 = vpack.c.b16 %v11378, %v11375
  %v11544 = vpack.c.b16 %v11382, %v11379
  %v11545 = vpack.c.b16 %v11383, %v11380
  %v11546 = vpack.c.b16 %v11384, %v11381
  %v11547 = vpack.c.b16 %v11388, %v11385
  %v11548 = vpack.c.b16 %v11389, %v11386
  %v11549 = vpack.c.b16 %v11390, %v11387
  %v11550 = vpack.c.b16 %v11394, %v11391
  %v11551 = vpack.c.b16 %v11395, %v11392
  %v11552 = vpack.c.b16 %v11396, %v11393
  %v11553 = vpack.c.b16 %v11400, %v11397
  %v11554 = vpack.c.b16 %v11401, %v11398
  %v11555 = vpack.c.b16 %v11402, %v11399
  %v11556 = vpack.c.b16 %v11406, %v11403
  %v11557 = vpack.c.b16 %v11407, %v11404
  %v11558 = vpack.c.b16 %v11408, %v11405
  %v11559 = vpack.c.b16 %v11412, %v11409
  %v11560 = vpack.c.b16 %v11413, %v11410
  %v11561 = vpack.c.b16 %v11414, %v11411
  %v11562 = vpack.c.b16 %v11418, %v11415
  %v11563 = vpack.c.b16 %v11419, %v11416
  %v11564 = vpack.c.b16 %v11420, %v11417
  %v11565 = vpack.c.b16 %v11424, %v11421
  %v11566 = vpack.c.b16 %v11425, %v11422
  %v11567 = vpack.c.b16 %v11426, %v11423
  %v11568 = vpack.c.b16 %v11430, %v11427
  %v11569 = vpack.c.b16 %v11431, %v11428
  %v11570 = vpack.c.b16 %v11432, %v11429
  %v11571 = vpack.c.b16 %v11436, %v11433
  %v11572 = vpack.c.b16 %v11437, %v11434
  %v11573 = vpack.c.b16 %v11438, %v11435
  %vm11709 = vcmask 654336
  %v11711 = vsel %vm11709, %v10779, 0
  %v11714 = vsel %vm11709, %v10785, 0
  %v11717 = vsel %vm11709, %v10791, 0
  %11719 = vmatprep.subr.bf16.mxu0 %v11461
  %11720 = vmatpush1.bf16.msra.mxu0 %v11460
  %11721 = vmatprep.subr.bf16.mxu0 %v11458
  %11722 = vmatpush1.bf16.msra.mxu0 %v11457
  %11723 = vmatprep.subr.bf16.mxu0 %v11455
  %11724 = vmatpush1.bf16.msra.mxu0 %v11454
  %11725 = vmatprep.subr.bf16.mxu0 %v11452
  %11726 = vmatpush1.bf16.msra.mxu0 %v11451
  %11727 = vmatprep.subr.bf16.mxu0 %v11449
  %11728 = vmatpush1.bf16.msra.mxu0 %v11448
  %11729 = vmatprep.subr.bf16.mxu0 %v11446
  %11730 = vmatpush1.bf16.msra.mxu0 %v11445
  %11731 = vmatprep.subr.bf16.mxu0 %v11443
  %11732 = vmatpush1.bf16.msra.mxu0 %v11442
  %11733 = vmatprep.subr.bf16.mxu0 %v11440
  %11734 = vmatpush1.bf16.msra.mxu0 %v11439
  %11735 = vmatprep.subr.bf16.mxu0 %v11485
  %11736 = vmatpush2.bf16.msra.mxu0 %v11484
  %11737 = vmatprep.subr.bf16.mxu0 %v11482
  %11738 = vmatpush2.bf16.msra.mxu0 %v11481
  %11739 = vmatprep.subr.bf16.mxu0 %v11479
  %11740 = vmatpush2.bf16.msra.mxu0 %v11478
  %11741 = vmatprep.subr.bf16.mxu0 %v11476
  %11742 = vmatpush2.bf16.msra.mxu0 %v11475
  %11743 = vmatprep.subr.bf16.mxu0 %v11473
  %11744 = vmatpush2.bf16.msra.mxu0 %v11472
  %11745 = vmatprep.subr.bf16.mxu0 %v11470
  %11746 = vmatpush2.bf16.msra.mxu0 %v11469
  %11747 = vmatprep.subr.bf16.mxu0 %v11467
  %11748 = vmatpush2.bf16.msra.mxu0 %v11466
  %11749 = vmatprep.subr.bf16.mxu0 %v11464
  %11750 = vmatpush2.bf16.msra.mxu0 %v11463
  %11751 = vmatprep.mubr.bf16.mxu0 %v10775
  %11752 = vmatmul.mubr.bf16.gmra.mxu0 %v10774
  %v11753 = vpop.f32.mrf.mxu0
  %v11754 = vadd.f32 %v10977, %v11753
  %v11755 = vpop.f32.mrf.mxu0
  %v11756 = vadd.f32 %v10981, %v11755
  %v11757 = vpop.f32.mrf.mxu0
  %v11758 = vadd.f32 %v10977, %v11757
  %v11759 = vpop.f32.mrf.mxu0
  %v11760 = vadd.f32 %v10981, %v11759
  %11761 = vmatprep.mubr.bf16.mxu0 %v10781
  %11762 = vmatmul.mubr.bf16.gmra.mxu0 %v10780
  %v11763 = vpop.f32.mrf.mxu0
  %v11764 = vadd.f32 %v10977, %v11763
  %v11765 = vpop.f32.mrf.mxu0
  %v11766 = vadd.f32 %v10981, %v11765
  %v11767 = vpop.f32.mrf.mxu0
  %v11768 = vadd.f32 %v10977, %v11767
  %v11769 = vpop.f32.mrf.mxu0
  %v11770 = vadd.f32 %v10981, %v11769
  %11771 = vmatprep.mubr.bf16.mxu0 %v10787
  %11772 = vmatmul.mubr.bf16.gmra.mxu0 %v10786
  %v11773 = vpop.f32.mrf.mxu0
  %v11774 = vadd.f32 %v10977, %v11773
  %v11775 = vpop.f32.mrf.mxu0
  %v11776 = vadd.f32 %v10981, %v11775
  %v11777 = vpop.f32.mrf.mxu0
  %v11778 = vadd.f32 %v10977, %v11777
  %v11779 = vpop.f32.mrf.mxu0
  %v11780 = vadd.f32 %v10981, %v11779
  %11781 = vdwg.mxu0
  %11782 = vmatprep.subr.bf16.mxu0 %v11509
  %11783 = vmatpush1.bf16.msra.mxu0 %v11508
  %11784 = vmatprep.subr.bf16.mxu0 %v11506
  %11785 = vmatpush1.bf16.msra.mxu0 %v11505
  %11786 = vmatprep.subr.bf16.mxu0 %v11503
  %11787 = vmatpush1.bf16.msra.mxu0 %v11502
  %11788 = vmatprep.subr.bf16.mxu0 %v11500
  %11789 = vmatpush1.bf16.msra.mxu0 %v11499
  %11790 = vmatprep.subr.bf16.mxu0 %v11497
  %11791 = vmatpush1.bf16.msra.mxu0 %v11496
  %11792 = vmatprep.subr.bf16.mxu0 %v11494
  %11793 = vmatpush1.bf16.msra.mxu0 %v11493
  %11794 = vmatprep.subr.bf16.mxu0 %v11491
  %11795 = vmatpush1.bf16.msra.mxu0 %v11490
  %11796 = vmatprep.subr.bf16.mxu0 %v11488
  %11797 = vmatpush1.bf16.msra.mxu0 %v11487
  %11798 = vmatprep.subr.bf16.mxu0 %v11533
  %11799 = vmatpush2.bf16.msra.mxu0 %v11532
  %11800 = vmatprep.subr.bf16.mxu0 %v11530
  %11801 = vmatpush2.bf16.msra.mxu0 %v11529
  %11802 = vmatprep.subr.bf16.mxu0 %v11527
  %11803 = vmatpush2.bf16.msra.mxu0 %v11526
  %11804 = vmatprep.subr.bf16.mxu0 %v11524
  %11805 = vmatpush2.bf16.msra.mxu0 %v11523
  %11806 = vmatprep.subr.bf16.mxu0 %v11521
  %11807 = vmatpush2.bf16.msra.mxu0 %v11520
  %11808 = vmatprep.subr.bf16.mxu0 %v11518
  %11809 = vmatpush2.bf16.msra.mxu0 %v11517
  %11810 = vmatprep.subr.bf16.mxu0 %v11515
  %11811 = vmatpush2.bf16.msra.mxu0 %v11514
  %11812 = vmatprep.subr.bf16.mxu0 %v11512
  %11813 = vmatpush2.bf16.msra.mxu0 %v11511
  %11814 = vmatprep.mubr.bf16.mxu0 %v10777
  %11815 = vmatmul.mubr.bf16.gmra.mxu0 %v10776
  %v11816 = vpop.f32.mrf.mxu0
  %v11817 = vadd.f32 %v11754, %v11816
  %v11818 = vpop.f32.mrf.mxu0
  %v11819 = vadd.f32 %v11756, %v11818
  %v11820 = vpop.f32.mrf.mxu0
  %v11821 = vadd.f32 %v11758, %v11820
  %v11822 = vpop.f32.mrf.mxu0
  %v11823 = vadd.f32 %v11760, %v11822
  %11824 = vmatprep.mubr.bf16.mxu0 %v10783
  %11825 = vmatmul.mubr.bf16.gmra.mxu0 %v10782
  %v11826 = vpop.f32.mrf.mxu0
  %v11827 = vadd.f32 %v11764, %v11826
  %v11828 = vpop.f32.mrf.mxu0
  %v11829 = vadd.f32 %v11766, %v11828
  %v11830 = vpop.f32.mrf.mxu0
  %v11831 = vadd.f32 %v11768, %v11830
  %v11832 = vpop.f32.mrf.mxu0
  %v11833 = vadd.f32 %v11770, %v11832
  %11834 = vmatprep.mubr.bf16.mxu0 %v10789
  %11835 = vmatmul.mubr.bf16.gmra.mxu0 %v10788
  %v11836 = vpop.f32.mrf.mxu0
  %v11837 = vadd.f32 %v11774, %v11836
  %v11838 = vpop.f32.mrf.mxu0
  %v11839 = vadd.f32 %v11776, %v11838
  %v11840 = vpop.f32.mrf.mxu0
  %v11841 = vadd.f32 %v11778, %v11840
  %v11842 = vpop.f32.mrf.mxu0
  %v11843 = vadd.f32 %v11780, %v11842
  %11844 = vdwg.mxu0
  %11845 = vmatprep.subr.bf16.mxu0 %v11557
  %11846 = vmatpush1.bf16.msra.mxu0 %v11556
  %11847 = vmatprep.subr.bf16.mxu0 %v11554
  %11848 = vmatpush1.bf16.msra.mxu0 %v11553
  %11849 = vmatprep.subr.bf16.mxu0 %v11551
  %11850 = vmatpush1.bf16.msra.mxu0 %v11550
  %11851 = vmatprep.subr.bf16.mxu0 %v11548
  %11852 = vmatpush1.bf16.msra.mxu0 %v11547
  %11853 = vmatprep.subr.bf16.mxu0 %v11545
  %11854 = vmatpush1.bf16.msra.mxu0 %v11544
  %11855 = vmatprep.subr.bf16.mxu0 %v11542
  %11856 = vmatpush1.bf16.msra.mxu0 %v11541
  %11857 = vmatprep.subr.bf16.mxu0 %v11539
  %11858 = vmatpush1.bf16.msra.mxu0 %v11538
  %11859 = vmatprep.subr.bf16.mxu0 %v11536
  %11860 = vmatpush1.bf16.msra.mxu0 %v11535
  %11861 = vmatprep.subr.bf16.mxu0 0
  %11862 = vmatpush2.bf16.msra.mxu0 0
  %11863 = vmatprep.subr.bf16.mxu0 0
  %11864 = vmatpush2.bf16.msra.mxu0 0
  %11865 = vmatprep.subr.bf16.mxu0 0
  %11866 = vmatpush2.bf16.msra.mxu0 0
  %11867 = vmatprep.subr.bf16.mxu0 %v11572
  %11868 = vmatpush2.bf16.msra.mxu0 %v11571
  %11869 = vmatprep.subr.bf16.mxu0 %v11569
  %11870 = vmatpush2.bf16.msra.mxu0 %v11568
  %11871 = vmatprep.subr.bf16.mxu0 %v11566
  %11872 = vmatpush2.bf16.msra.mxu0 %v11565
  %11873 = vmatprep.subr.bf16.mxu0 %v11563
  %11874 = vmatpush2.bf16.msra.mxu0 %v11562
  %11875 = vmatprep.subr.bf16.mxu0 %v11560
  %11876 = vmatpush2.bf16.msra.mxu0 %v11559
  %11877 = vmatprep.mubr.bf16.mxu0 %v11711
  %11878 = vmatmul.mubr.bf16.gmra.mxu0 %v10778
  %v11879 = vpop.f32.mrf.mxu0
  %v11880 = vadd.f32 %v11817, %v11879
  %v11881 = vpop.f32.mrf.mxu0
  %v11882 = vadd.f32 %v11819, %v11881
  %v11883 = vpop.f32.mrf.mxu0
  %v11884 = vadd.f32 %v11821, %v11883
  %v11885 = vpop.f32.mrf.mxu0
  %v11886 = vadd.f32 %v11823, %v11885
  %11887 = vmatprep.mubr.bf16.mxu0 %v11714
  %11888 = vmatmul.mubr.bf16.gmra.mxu0 %v10784
  %v11889 = vpop.f32.mrf.mxu0
  %v11890 = vadd.f32 %v11827, %v11889
  %v11891 = vpop.f32.mrf.mxu0
  %v11892 = vadd.f32 %v11829, %v11891
  %v11893 = vpop.f32.mrf.mxu0
  %v11894 = vadd.f32 %v11831, %v11893
  %v11895 = vpop.f32.mrf.mxu0
  %v11896 = vadd.f32 %v11833, %v11895
  %11897 = vmatprep.mubr.bf16.mxu0 %v11717
  %11898 = vmatmul.mubr.bf16.gmra.mxu0 %v10790
  %v11899 = vpop.f32.mrf.mxu0
  %v11900 = vadd.f32 %v11837, %v11899
  %v11901 = vpop.f32.mrf.mxu0
  %v11902 = vadd.f32 %v11839, %v11901
  %v11903 = vpop.f32.mrf.mxu0
  %v11904 = vadd.f32 %v11841, %v11903
  %v11905 = vpop.f32.mrf.mxu0
  %v11906 = vadd.f32 %v11843, %v11905
  %11907 = vdwg.mxu0
  %11908 = vmatprep.subr.bf16.mxu0 0
  %11909 = vmatpush1.bf16.msra.mxu0 %v11462
  %11910 = vmatprep.subr.bf16.mxu0 0
  %11911 = vmatpush1.bf16.msra.mxu0 %v11459
  %11912 = vmatprep.subr.bf16.mxu0 0
  %11913 = vmatpush1.bf16.msra.mxu0 %v11456
  %11914 = vmatprep.subr.bf16.mxu0 0
  %11915 = vmatpush1.bf16.msra.mxu0 %v11453
  %11916 = vmatprep.subr.bf16.mxu0 0
  %11917 = vmatpush1.bf16.msra.mxu0 %v11450
  %11918 = vmatprep.subr.bf16.mxu0 0
  %11919 = vmatpush1.bf16.msra.mxu0 %v11447
  %11920 = vmatprep.subr.bf16.mxu0 0
  %11921 = vmatpush1.bf16.msra.mxu0 %v11444
  %11922 = vmatprep.subr.bf16.mxu0 0
  %11923 = vmatpush1.bf16.msra.mxu0 %v11441
  %11924 = vmatprep.subr.bf16.mxu0 0
  %11925 = vmatpush2.bf16.msra.mxu0 %v11486
  %11926 = vmatprep.subr.bf16.mxu0 0
  %11927 = vmatpush2.bf16.msra.mxu0 %v11483
  %11928 = vmatprep.subr.bf16.mxu0 0
  %11929 = vmatpush2.bf16.msra.mxu0 %v11480
  %11930 = vmatprep.subr.bf16.mxu0 0
  %11931 = vmatpush2.bf16.msra.mxu0 %v11477
  %11932 = vmatprep.subr.bf16.mxu0 0
  %11933 = vmatpush2.bf16.msra.mxu0 %v11474
  %11934 = vmatprep.subr.bf16.mxu0 0
  %11935 = vmatpush2.bf16.msra.mxu0 %v11471
  %11936 = vmatprep.subr.bf16.mxu0 0
  %11937 = vmatpush2.bf16.msra.mxu0 %v11468
  %11938 = vmatprep.subr.bf16.mxu0 0
  %11939 = vmatpush2.bf16.msra.mxu0 %v11465
  %11940 = vmatprep.mubr.bf16.mxu0 %v10775
  %11941 = vmatmul.mubr.bf16.gmra.mxu0 %v10774
  %v11942 = vpop.f32.mrf.mxu0
  %v11943 = vadd.f32 %v10985, %v11942
  %v11944 = vpop.f32.mrf.mxu0
  %v11945 = vpop.f32.mrf.mxu0
  %v11946 = vadd.f32 %v10985, %v11945
  %v11947 = vpop.f32.mrf.mxu0
  %11948 = vmatprep.mubr.bf16.mxu0 %v10781
  %11949 = vmatmul.mubr.bf16.gmra.mxu0 %v10780
  %v11950 = vpop.f32.mrf.mxu0
  %v11951 = vadd.f32 %v10985, %v11950
  %v11952 = vpop.f32.mrf.mxu0
  %v11953 = vpop.f32.mrf.mxu0
  %v11954 = vadd.f32 %v10985, %v11953
  %v11955 = vpop.f32.mrf.mxu0
  %11956 = vmatprep.mubr.bf16.mxu0 %v10787
  %11957 = vmatmul.mubr.bf16.gmra.mxu0 %v10786
  %v11958 = vpop.f32.mrf.mxu0
  %v11959 = vadd.f32 %v10985, %v11958
  %v11960 = vpop.f32.mrf.mxu0
  %v11961 = vpop.f32.mrf.mxu0
  %v11962 = vadd.f32 %v10985, %v11961
  %v11963 = vpop.f32.mrf.mxu0
  %11964 = vdwg.mxu0
  %11965 = vmatprep.subr.bf16.mxu0 0
  %11966 = vmatpush1.bf16.msra.mxu0 %v11510
  %11967 = vmatprep.subr.bf16.mxu0 0
  %11968 = vmatpush1.bf16.msra.mxu0 %v11507
  %11969 = vmatprep.subr.bf16.mxu0 0
  %11970 = vmatpush1.bf16.msra.mxu0 %v11504
  %11971 = vmatprep.subr.bf16.mxu0 0
  %11972 = vmatpush1.bf16.msra.mxu0 %v11501
  %11973 = vmatprep.subr.bf16.mxu0 0
  %11974 = vmatpush1.bf16.msra.mxu0 %v11498
  %11975 = vmatprep.subr.bf16.mxu0 0
  %11976 = vmatpush1.bf16.msra.mxu0 %v11495
  %11977 = vmatprep.subr.bf16.mxu0 0
  %11978 = vmatpush1.bf16.msra.mxu0 %v11492
  %11979 = vmatprep.subr.bf16.mxu0 0
  %11980 = vmatpush1.bf16.msra.mxu0 %v11489
  %11981 = vmatprep.subr.bf16.mxu0 0
  %11982 = vmatpush2.bf16.msra.mxu0 %v11534
  %11983 = vmatprep.subr.bf16.mxu0 0
  %11984 = vmatpush2.bf16.msra.mxu0 %v11531
  %11985 = vmatprep.subr.bf16.mxu0 0
  %11986 = vmatpush2.bf16.msra.mxu0 %v11528
  %11987 = vmatprep.subr.bf16.mxu0 0
  %11988 = vmatpush2.bf16.msra.mxu0 %v11525
  %11989 = vmatprep.subr.bf16.mxu0 0
  %11990 = vmatpush2.bf16.msra.mxu0 %v11522
  %11991 = vmatprep.subr.bf16.mxu0 0
  %11992 = vmatpush2.bf16.msra.mxu0 %v11519
  %11993 = vmatprep.subr.bf16.mxu0 0
  %11994 = vmatpush2.bf16.msra.mxu0 %v11516
  %11995 = vmatprep.subr.bf16.mxu0 0
  %11996 = vmatpush2.bf16.msra.mxu0 %v11513
  %11997 = vmatprep.mubr.bf16.mxu0 %v10777
  %11998 = vmatmul.mubr.bf16.gmra.mxu0 %v10776
  %v11999 = vpop.f32.mrf.mxu0
  %v12000 = vadd.f32 %v11943, %v11999
  %v12001 = vpop.f32.mrf.mxu0
  %v12002 = vpop.f32.mrf.mxu0
  %v12003 = vadd.f32 %v11946, %v12002
  %v12004 = vpop.f32.mrf.mxu0
  %12005 = vmatprep.mubr.bf16.mxu0 %v10783
  %12006 = vmatmul.mubr.bf16.gmra.mxu0 %v10782
  %v12007 = vpop.f32.mrf.mxu0
  %v12008 = vadd.f32 %v11951, %v12007
  %v12009 = vpop.f32.mrf.mxu0
  %v12010 = vpop.f32.mrf.mxu0
  %v12011 = vadd.f32 %v11954, %v12010
  %v12012 = vpop.f32.mrf.mxu0
  %12013 = vmatprep.mubr.bf16.mxu0 %v10789
  %12014 = vmatmul.mubr.bf16.gmra.mxu0 %v10788
  %v12015 = vpop.f32.mrf.mxu0
  %v12016 = vadd.f32 %v11959, %v12015
  %v12017 = vpop.f32.mrf.mxu0
  %v12018 = vpop.f32.mrf.mxu0
  %v12019 = vadd.f32 %v11962, %v12018
  %v12020 = vpop.f32.mrf.mxu0
  %12021 = vdwg.mxu0
  %12022 = vmatprep.subr.bf16.mxu0 0
  %12023 = vmatpush1.bf16.msra.mxu0 %v11558
  %12024 = vmatprep.subr.bf16.mxu0 0
  %12025 = vmatpush1.bf16.msra.mxu0 %v11555
  %12026 = vmatprep.subr.bf16.mxu0 0
  %12027 = vmatpush1.bf16.msra.mxu0 %v11552
  %12028 = vmatprep.subr.bf16.mxu0 0
  %12029 = vmatpush1.bf16.msra.mxu0 %v11549
  %12030 = vmatprep.subr.bf16.mxu0 0
  %12031 = vmatpush1.bf16.msra.mxu0 %v11546
  %12032 = vmatprep.subr.bf16.mxu0 0
  %12033 = vmatpush1.bf16.msra.mxu0 %v11543
  %12034 = vmatprep.subr.bf16.mxu0 0
  %12035 = vmatpush1.bf16.msra.mxu0 %v11540
  %12036 = vmatprep.subr.bf16.mxu0 0
  %12037 = vmatpush1.bf16.msra.mxu0 %v11537
  %12038 = vmatprep.subr.bf16.mxu0 0
  %12039 = vmatpush2.bf16.msra.mxu0 0
  %12040 = vmatprep.subr.bf16.mxu0 0
  %12041 = vmatpush2.bf16.msra.mxu0 0
  %12042 = vmatprep.subr.bf16.mxu0 0
  %12043 = vmatpush2.bf16.msra.mxu0 0
  %12044 = vmatprep.subr.bf16.mxu0 0
  %12045 = vmatpush2.bf16.msra.mxu0 %v11573
  %12046 = vmatprep.subr.bf16.mxu0 0
  %12047 = vmatpush2.bf16.msra.mxu0 %v11570
  %12048 = vmatprep.subr.bf16.mxu0 0
  %12049 = vmatpush2.bf16.msra.mxu0 %v11567
  %12050 = vmatprep.subr.bf16.mxu0 0
  %12051 = vmatpush2.bf16.msra.mxu0 %v11564
  %12052 = vmatprep.subr.bf16.mxu0 0
  %12053 = vmatpush2.bf16.msra.mxu0 %v11561
  %12054 = vmatprep.mubr.bf16.mxu0 %v11711
  %12055 = vmatmul.mubr.bf16.gmra.mxu0 %v10778
  %v12056 = vpop.f32.mrf.mxu0
  %v12057 = vadd.f32 %v12000, %v12056
  %v12058 = vpop.f32.mrf.mxu0
  %v12059 = vpop.f32.mrf.mxu0
  %v12060 = vadd.f32 %v12003, %v12059
  %v12061 = vpop.f32.mrf.mxu0
  %12062 = vmatprep.mubr.bf16.mxu0 %v11714
  %12063 = vmatmul.mubr.bf16.gmra.mxu0 %v10784
  %v12064 = vpop.f32.mrf.mxu0
  %v12065 = vadd.f32 %v12008, %v12064
  %v12066 = vpop.f32.mrf.mxu0
  %v12067 = vpop.f32.mrf.mxu0
  %v12068 = vadd.f32 %v12011, %v12067
  %v12069 = vpop.f32.mrf.mxu0
  %12070 = vmatprep.mubr.bf16.mxu0 %v11717
  %12071 = vmatmul.mubr.bf16.gmra.mxu0 %v10790
  %v12072 = vpop.f32.mrf.mxu0
  %v12073 = vadd.f32 %v12016, %v12072
  %v12074 = vpop.f32.mrf.mxu0
  %v12075 = vpop.f32.mrf.mxu0
  %v12076 = vadd.f32 %v12019, %v12075
  %v12077 = vpop.f32.mrf.mxu0
  %12078 = vdwg.mxu0
  %v12079 = vmax.f32 %v11880, 0.0
  %v12080 = vmax.f32 %v11882, 0.0
  %v12081 = vmax.f32 %v12057, 0.0
  %v12082 = vmax.f32 %v11884, 0.0
  %v12083 = vmax.f32 %v11886, 0.0
  %v12084 = vmax.f32 %v12060, 0.0
  %v12085 = vmax.f32 %v11890, 0.0
  %v12086 = vmax.f32 %v11892, 0.0
  %v12087 = vmax.f32 %v12065, 0.0
  %v12088 = vmax.f32 %v11894, 0.0
  %v12089 = vmax.f32 %v11896, 0.0
  %v12090 = vmax.f32 %v12068, 0.0
  %v12091 = vmax.f32 %v11900, 0.0
  %v12092 = vmax.f32 %v11902, 0.0
  %v12093 = vmax.f32 %v12073, 0.0
  %v12094 = vmax.f32 %v11904, 0.0
  %v12095 = vmax.f32 %v11906, 0.0
  %v12096 = vmax.f32 %v12076, 0.0
  %12097 = vst [vmem:[%s7] sm:$0xff] %v12079
  %12098 = vst [vmem:[%s7 + $0x8] sm:$0xff] %v12080
  %12099 = vst.msk [vmem:[%s7 + $0x10] sm:$0xff] %vm2661, %v12081
  %12100 = vst [vmem:[%s7 + $0x18] sm:$0xff] %v12082
  %12101 = vst [vmem:[%s7 + $0x20] sm:$0xff] %v12083
  %12102 = vst.msk [vmem:[%s7 + $0x28] sm:$0xff] %vm2661, %v12084
  %12103 = vst [vmem:[%s7 + $0x30] sm:$0xff] %v12085
  %12104 = vst [vmem:[%s7 + $0x38] sm:$0xff] %v12086
  %12105 = vst.msk [vmem:[%s7 + $0x40] sm:$0xff] %vm2661, %v12087
  %12106 = vst [vmem:[%s7 + $0x48] sm:$0xff] %v12088
  %12107 = vst [vmem:[%s7 + $0x50] sm:$0xff] %v12089
  %12108 = vst.msk [vmem:[%s7 + $0x58] sm:$0xff] %vm2661, %v12090
  %12109 = vst [vmem:[%s7 + $0x60] sm:$0xff] %v12091
  %12110 = vst [vmem:[%s7 + $0x68] sm:$0xff] %v12092
  %12111 = vst.msk [vmem:[%s7 + $0x70] sm:$0xff] %vm2661, %v12093
  %12112 = vst [vmem:[%s7 + $0x78] sm:$0xff] %v12094
  %12113 = vst [vmem:[%s7 + $0x80] sm:$0xff] %v12095
  %12114 = vst.msk [vmem:[%s7 + $0x88] sm:$0xff] %vm2661, %v12096
  // Predicated region
  $region30: #{encoder_block_forward.1} parent=0 // pred_check
    _
  $region31: #{encoder_block_forward.1} parent=0 // pred_check_branch
    %12116 = sbr.rel (0) target = $region33
  $region32: #{encoder_block_forward.1} parent=0 // pred_region
    _
  $region33: #{encoder_block_forward.1} parent=0 // pred_fallthru
    _
  // Predicated region
  $region34: #{encoder_block_forward.1} parent=0 // pred_check
    _
  $region35: #{encoder_block_forward.1} parent=0 // pred_check_branch
    %12118 = sbr.rel (0) target = $region37
  $region36: #{encoder_block_forward.1} parent=0 // pred_region
    _
  $region37: #{encoder_block_forward.1} parent=0 // pred_fallthru
    _

</llo_original>
